<compile_context>
chip_gen: v7x
topology: tpu7x:2x2x1
jax: 0.10.0
libtpu: 0.0.40
codegen_flags: <defaults>
</compile_context>

<pallas_src>
import functools

import jax
import jax.numpy as jnp
from jax.experimental import pallas as pl
from jax.experimental.pallas import tpu as pltpu


# ----------------------------------------------------------------------------
# Generic (M, K)-tiled matmul + bias (+ optional ReLU) kernel.
# Used for: conv-as-im2col matmul, FC1, FC2.
# grid = (nm, nk); M axis is "parallel" (megacore), K reduction axis is last.
# ----------------------------------------------------------------------------
def _linear_kernel(x_ref, w_ref, b_ref, o_ref, acc_ref, *, apply_relu):
    k = pl.program_id(1)

    @pl.when(k == 0)
    def _():
        acc_ref[...] = jnp.zeros_like(acc_ref)

    acc_ref[...] += jnp.dot(x_ref[...], w_ref[...],
                            preferred_element_type=jnp.float32)

    @pl.when(k == pl.num_programs(1) - 1)
    def _():
        y = acc_ref[...] + b_ref[...]
        if apply_relu:
            y = jnp.maximum(y, 0.0)
        o_ref[...] = y.astype(o_ref.dtype)


def linear_pallas(x, w, b, *, apply_relu, tm=None, tk=None, out_dtype=None):
    """y = x @ w + b (optionally ReLU). x:(M,K) bf16, w:(K,N) bf16, b:(N,) f32."""
    M, K = x.shape
    K2, N = w.shape
    assert K == K2
    if tk is None or tk > K or K % tk != 0:
        tk = K
    if tm is None or tm > M or M % tm != 0:
        tm = M
    nm, nk = M // tm, K // tk
    if out_dtype is None:
        out_dtype = x.dtype

    kern = functools.partial(_linear_kernel, apply_relu=apply_relu)
    return pl.pallas_call(
        kern,
        out_shape=jax.ShapeDtypeStruct((M, N), out_dtype),
        grid=(nm, nk),
        in_specs=[
            pl.BlockSpec((tm, tk), lambda m, k: (m, k)),
            pl.BlockSpec((tk, N), lambda m, k: (k, 0)),
            pl.BlockSpec((1, N), lambda m, k: (0, 0)),
        ],
        out_specs=pl.BlockSpec((tm, N), lambda m, k: (m, 0)),
        scratch_shapes=[pltpu.VMEM((tm, N), jnp.float32)],
        compiler_params=pltpu.CompilerParams(
            dimension_semantics=("parallel", "arbitrary"),
            vmem_limit_bytes=32 * 1024 * 1024),
    )(x, w, b.astype(jnp.float32).reshape(1, N))


# ----------------------------------------------------------------------------
# 2x2 max-pool (stride 2): elementwise VPU max of the four strided slices.
# Strided slicing is plain-JAX glue; the max itself is a Pallas kernel.
# ----------------------------------------------------------------------------
def _max4_kernel(a_ref, b_ref, c_ref, d_ref, o_ref):
    o_ref[...] = jnp.maximum(jnp.maximum(a_ref[...], b_ref[...]),
                             jnp.maximum(c_ref[...], d_ref[...]))


def maxpool2x2_pallas(x_nhwc):
    """x: (B,H,W,C) -> (B,H//2,W//2,C), 2x2 windows, stride 2."""
    B, H, W, C = x_nhwc.shape
    Ho, Wo = H // 2, W // 2
    R = B * Ho * Wo
    a = x_nhwc[:, 0::2, 0::2, :].reshape(R, C)
    b = x_nhwc[:, 0::2, 1::2, :].reshape(R, C)
    c = x_nhwc[:, 1::2, 0::2, :].reshape(R, C)
    d = x_nhwc[:, 1::2, 1::2, :].reshape(R, C)
    out = pl.pallas_call(
        _max4_kernel,
        out_shape=jax.ShapeDtypeStruct((R, C), x_nhwc.dtype),
        grid=(1,),
        in_specs=[pl.BlockSpec((R, C), lambda i: (0, 0))] * 4,
        out_specs=pl.BlockSpec((R, C), lambda i: (0, 0)),
    )(a, b, c, d)
    return out.reshape(B, Ho, Wo, C)


# ----------------------------------------------------------------------------
# 3x3 'same' conv + ReLU via im2col (glue) + Pallas matmul kernel.
# w_mat is the pre-packed (Kpad=32, Cout) bf16 weight matrix with row order
# cin*9 + kh*3 + kw (rows 27..31 zero), matching PyTorch weight.reshape.
# ----------------------------------------------------------------------------
def conv3x3_relu_pallas(x_nhwc, w_mat, b):
    B, H, W, Cin = x_nhwc.shape
    Kpad, Cout = w_mat.shape
    xp = jnp.pad(x_nhwc, ((0, 0), (1, 1), (1, 1), (0, 0)))
    # glue: im2col; patch feature order (cin, kh, kw) matches w_mat row order.
    cols = [xp[:, kh:kh + H, kw:kw + W, :] for kh in range(3) for kw in range(3)]
    patches = jnp.stack(cols, axis=-1)                     # (B,H,W,Cin,9)
    patches = patches.reshape(B * H * W, Cin * 9)
    patches = jnp.pad(patches, ((0, 0), (0, Kpad - Cin * 9)))  # K: 27 -> 32
    patches = patches.astype(w_mat.dtype)
    y = linear_pallas(patches, w_mat, b, apply_relu=True,
                      tm=256, out_dtype=w_mat.dtype)
    return y.reshape(B, H, W, Cout)


# ----------------------------------------------------------------------------
# VGG8: features = Conv2d(3,128,3,padding=1)+ReLU+MaxPool2d(2,2)
#       classifier = Linear(8192,1024)+ReLU, Linear(1024,num_classes)
# (16x16 input -> 128*8*8 = 8192 flattened features.)
# ----------------------------------------------------------------------------
NUM_CLASSES = 10
_N_PAD = 128   # FC2 output lanes padded for lane-dense stores


def init_params(key):
    ks = jax.random.split(key, 6)
    p = {}
    # Conv weight pre-packed to matmul form: (Cin*9 padded to 32, Cout), bf16.
    conv_w_pt = jax.random.normal(ks[0], (128, 3, 3, 3), jnp.float32) * 0.05
    w_mat = jnp.transpose(conv_w_pt.reshape(128, 27))        # (27, 128)
    w_mat = jnp.pad(w_mat, ((0, 5), (0, 0)))                  # (32, 128)
    p["conv_w_mat"] = w_mat.astype(jnp.bfloat16)
    p["conv_b"] = jax.random.normal(ks[1], (128,), jnp.float32) * 0.01
    # FC weights stored pre-transposed (K, N) in bf16; biases f32.
    p["fc1_w"] = (jax.random.normal(ks[2], (8192, 1024), jnp.float32)
                  * 0.01).astype(jnp.bfloat16)
    p["fc1_b"] = jax.random.normal(ks[3], (1024,), jnp.float32) * 0.01
    fc2_w = jax.random.normal(ks[4], (1024, NUM_CLASSES), jnp.float32) * 0.01
    fc2_b = jax.random.normal(ks[5], (NUM_CLASSES,), jnp.float32) * 0.01
    p["fc2_w"] = jnp.pad(fc2_w, ((0, 0), (0, _N_PAD - NUM_CLASSES))
                         ).astype(jnp.bfloat16)               # (1024, 128)
    p["fc2_b"] = jnp.pad(fc2_b, (0, _N_PAD - NUM_CLASSES))    # (128,)
    return p


def vgg_forward(params, x_nchw):
    B = x_nchw.shape[0]
    # features (NHWC internally, bf16 activations)
    x = jnp.transpose(x_nchw, (0, 2, 3, 1)).astype(jnp.bfloat16)   # NCHW -> NHWC
    x = conv3x3_relu_pallas(x, params["conv_w_mat"], params["conv_b"])  # (B,16,16,128)
    x = maxpool2x2_pallas(x)                                        # (B,8,8,128)
    # flatten exactly like PyTorch x.view(B, -1) on NCHW
    x = jnp.transpose(x, (0, 3, 1, 2)).reshape(B, -1)               # (B, 8192)
    # classifier
    x = linear_pallas(x, params["fc1_w"], params["fc1_b"],
                      apply_relu=True, tk=2048)                     # (B, 1024) bf16
    x = linear_pallas(x, params["fc2_w"], params["fc2_b"],
                      apply_relu=False, out_dtype=jnp.float32)      # (B, 128)
    return x[:, :NUM_CLASSES]


if __name__ == "__main__":
    key = jax.random.PRNGKey(0)
    pkey, xkey = jax.random.split(key)
    params = init_params(pkey)
    x = jax.random.normal(xkey, (2, 3, 16, 16), jnp.float32)        # NCHW, like PyTorch

    out = jax.jit(vgg_forward)(params, x)
    out = jax.block_until_ready(out)
    assert out.shape == (2, NUM_CLASSES), out.shape
    print("KERNEL_OK")
</pallas_src>

<mosaic_0001>
module attributes {stable_mosaic.version = 11 : i64} {
  func.func @_linear_kernel(%arg0: i32, %arg1: i32, %arg2: memref<256x32xbf16, #tpu.memory_space<vmem>>, %arg3: memref<32x128xbf16, #tpu.memory_space<vmem>>, %arg4: memref<1x128xf32, #tpu.memory_space<vmem>>, %arg5: memref<256x128xbf16, #tpu.memory_space<vmem>>, %arg6: memref<256x128xf32, #tpu.memory_space<vmem>>) attributes {dimension_semantics = [#tpu.dimension_semantics<parallel>, #tpu.dimension_semantics<arbitrary>], iteration_bounds = array<i64: 2, 1>, scalar_prefetch = 0 : i64, scratch_operands = 1 : i64, tpu.core_type = #tpu.core_type<tc>, window_params = [{transform_indices = @transform_0, window_bounds = array<i64: 256, 32>}, {transform_indices = @transform_1, window_bounds = array<i64: 32, 128>}, {pipeline_mode = #tpu.pipeline_mode<synchronous>, transform_indices = @transform_2, window_bounds = array<i64: 1, 128>}, {transform_indices = @transform_3, window_bounds = array<i64: 256, 128>}]} {
    %c0_i32 = arith.constant 0 : i32
    %0 = arith.cmpi eq, %arg1, %c0_i32 : i32
    %1 = arith.extui %0 : i1 to i32
    %c0_i32_0 = arith.constant 0 : i32
    %2 = arith.cmpi ne, %1, %c0_i32_0 : i32
    scf.if %2 {
      %cst_10 = arith.constant 0.000000e+00 : f32
      %12 = vector.broadcast %cst_10 : f32 to vector<256x128xf32>
      %c0_11 = arith.constant 0 : index
      %c0_12 = arith.constant 0 : index
      %13 = vector.load %arg6[%c0_11, %c0_12] : memref<256x128xf32, #tpu.memory_space<vmem>>, vector<256x128xf32>
      tpu.vector_store %arg6[%c0_11, %c0_12], %12 {strides = array<i32>} : memref<256x128xf32, #tpu.memory_space<vmem>>, vector<256x128xf32>,
    } else {
    }
    %c0 = arith.constant 0 : index
    %c0_1 = arith.constant 0 : index
    %3 = vector.load %arg6[%c0, %c0_1] : memref<256x128xf32, #tpu.memory_space<vmem>>, vector<256x128xf32>
    %c0_2 = arith.constant 0 : index
    %c0_3 = arith.constant 0 : index
    %4 = vector.load %arg2[%c0_2, %c0_3] : memref<256x32xbf16, #tpu.memory_space<vmem>>, vector<256x32xbf16>
    %c0_4 = arith.constant 0 : index
    %c0_5 = arith.constant 0 : index
    %5 = vector.load %arg3[%c0_4, %c0_5] : memref<32x128xbf16, #tpu.memory_space<vmem>>, vector<32x128xbf16>
    %cst = arith.constant dense<0.000000e+00> : vector<256x128xf32>
    %6 = tpu.matmul %4, %5, %cst {dimension_numbers = #tpu.dot_dimension_numbers<[1], [0], [0], [1], [0, 0, 1, 1], [], []>} : vector<256x32xbf16>, vector<32x128xbf16>, vector<256x128xf32> -> vector<256x128xf32>
    %7 = arith.addf %3, %6 : vector<256x128xf32>
    %c0_6 = arith.constant 0 : index
    %c0_7 = arith.constant 0 : index
    %8 = vector.load %arg6[%c0_6, %c0_7] : memref<256x128xf32, #tpu.memory_space<vmem>>, vector<256x128xf32>
    tpu.vector_store %arg6[%c0_6, %c0_7], %7 {strides = array<i32>} : memref<256x128xf32, #tpu.memory_space<vmem>>, vector<256x128xf32>,
    %c0_i32_8 = arith.constant 0 : i32
    %9 = arith.cmpi eq, %arg1, %c0_i32_8 : i32
    %10 = arith.extui %9 : i1 to i32
    %c0_i32_9 = arith.constant 0 : i32
    %11 = arith.cmpi ne, %10, %c0_i32_9 : i32
    scf.if %11 {
      %c0_10 = arith.constant 0 : index
      %c0_11 = arith.constant 0 : index
      %12 = vector.load %arg6[%c0_10, %c0_11] : memref<256x128xf32, #tpu.memory_space<vmem>>, vector<256x128xf32>
      %c0_12 = arith.constant 0 : index
      %c0_13 = arith.constant 0 : index
      %13 = vector.load %arg4[%c0_12, %c0_13] : memref<1x128xf32, #tpu.memory_space<vmem>>, vector<1x128xf32>
      %14 = vector.broadcast %13 : vector<1x128xf32> to vector<256x128xf32>
      %15 = arith.addf %12, %14 : vector<256x128xf32>
      %cst_14 = arith.constant 0.000000e+00 : f32
      %16 = vector.broadcast %cst_14 : f32 to vector<256x128xf32>
      %17 = arith.maximumf %15, %16 : vector<256x128xf32>
      %18 = arith.truncf %17 : vector<256x128xf32> to vector<256x128xbf16>
      %c0_15 = arith.constant 0 : index
      %c0_16 = arith.constant 0 : index
      %19 = vector.load %arg5[%c0_15, %c0_16] : memref<256x128xbf16, #tpu.memory_space<vmem>>, vector<256x128xbf16>
      tpu.vector_store %arg5[%c0_15, %c0_16], %18 {strides = array<i32>} : memref<256x128xbf16, #tpu.memory_space<vmem>>, vector<256x128xbf16>,
    } else {
    }
    return
  }
  func.func @transform_0(%arg0: i32, %arg1: i32) -> (i32, i32) {
    %c0_i32 = arith.constant 0 : i32
    return %arg0, %arg1 : i32, i32
  }
  func.func @transform_1(%arg0: i32, %arg1: i32) -> (i32, i32) {
    %c0_i32 = arith.constant 0 : i32
    %c0_i32_0 = arith.constant 0 : i32
    return %arg1, %c0_i32 : i32, i32
  }
  func.func @transform_2(%arg0: i32, %arg1: i32) -> (i32, i32) {
    %c0_i32 = arith.constant 0 : i32
    %c0_i32_0 = arith.constant 0 : i32
    %c0_i32_1 = arith.constant 0 : i32
    return %c0_i32, %c0_i32_0 : i32, i32
  }
  func.func @transform_3(%arg0: i32, %arg1: i32) -> (i32, i32) {
    %c0_i32 = arith.constant 0 : i32
    %c0_i32_0 = arith.constant 0 : i32
    return %arg0, %c0_i32 : i32, i32
  }
}

module attributes {stable_mosaic.version = 11 : i64} {
  func.func @_max4_kernel(%arg0: i32, %arg1: memref<128x128xbf16, #tpu.memory_space<vmem>>, %arg2: memref<128x128xbf16, #tpu.memory_space<vmem>>, %arg3: memref<128x128xbf16, #tpu.memory_space<vmem>>, %arg4: memref<128x128xbf16, #tpu.memory_space<vmem>>, %arg5: memref<128x128xbf16, #tpu.memory_space<vmem>>) attributes {dimension_semantics = [#tpu.dimension_semantics<arbitrary>], iteration_bounds = array<i64: 1>, scalar_prefetch = 0 : i64, scratch_operands = 0 : i64, tpu.core_type = #tpu.core_type<tc>, window_params = [{pipeline_mode = #tpu.pipeline_mode<synchronous>, transform_indices = @transform_0, window_bounds = array<i64: 128, 128>}, {pipeline_mode = #tpu.pipeline_mode<synchronous>, transform_indices = @transform_1, window_bounds = array<i64: 128, 128>}, {pipeline_mode = #tpu.pipeline_mode<synchronous>, transform_indices = @transform_2, window_bounds = array<i64: 128, 128>}, {pipeline_mode = #tpu.pipeline_mode<synchronous>, transform_indices = @transform_3, window_bounds = array<i64: 128, 128>}, {pipeline_mode = #tpu.pipeline_mode<synchronous>, transform_indices = @transform_4, window_bounds = array<i64: 128, 128>}]} {
    %c0 = arith.constant 0 : index
    %c0_0 = arith.constant 0 : index
    %0 = vector.load %arg1[%c0, %c0_0] : memref<128x128xbf16, #tpu.memory_space<vmem>>, vector<128x128xbf16>
    %c0_1 = arith.constant 0 : index
    %c0_2 = arith.constant 0 : index
    %1 = vector.load %arg2[%c0_1, %c0_2] : memref<128x128xbf16, #tpu.memory_space<vmem>>, vector<128x128xbf16>
    %2 = arith.maximumf %0, %1 : vector<128x128xbf16>
    %c0_3 = arith.constant 0 : index
    %c0_4 = arith.constant 0 : index
    %3 = vector.load %arg3[%c0_3, %c0_4] : memref<128x128xbf16, #tpu.memory_space<vmem>>, vector<128x128xbf16>
    %c0_5 = arith.constant 0 : index
    %c0_6 = arith.constant 0 : index
    %4 = vector.load %arg4[%c0_5, %c0_6] : memref<128x128xbf16, #tpu.memory_space<vmem>>, vector<128x128xbf16>
    %5 = arith.maximumf %3, %4 : vector<128x128xbf16>
    %6 = arith.maximumf %2, %5 : vector<128x128xbf16>
    %c0_7 = arith.constant 0 : index
    %c0_8 = arith.constant 0 : index
    %7 = vector.load %arg5[%c0_7, %c0_8] : memref<128x128xbf16, #tpu.memory_space<vmem>>, vector<128x128xbf16>
    tpu.vector_store %arg5[%c0_7, %c0_8], %6 {strides = array<i32>} : memref<128x128xbf16, #tpu.memory_space<vmem>>, vector<128x128xbf16>,
    return
  }
  func.func @transform_0(%arg0: i32) -> (i32, i32) {
    %c0_i32 = arith.constant 0 : i32
    %c0_i32_0 = arith.constant 0 : i32
    %c0_i32_1 = arith.constant 0 : i32
    return %c0_i32, %c0_i32_0 : i32, i32
  }
  func.func @transform_1(%arg0: i32) -> (i32, i32) {
    %c0_i32 = arith.constant 0 : i32
    %c0_i32_0 = arith.constant 0 : i32
    %c0_i32_1 = arith.constant 0 : i32
    return %c0_i32, %c0_i32_0 : i32, i32
  }
  func.func @transform_2(%arg0: i32) -> (i32, i32) {
    %c0_i32 = arith.constant 0 : i32
    %c0_i32_0 = arith.constant 0 : i32
    %c0_i32_1 = arith.constant 0 : i32
    return %c0_i32, %c0_i32_0 : i32, i32
  }
  func.func @transform_3(%arg0: i32) -> (i32, i32) {
    %c0_i32 = arith.constant 0 : i32
    %c0_i32_0 = arith.constant 0 : i32
    %c0_i32_1 = arith.constant 0 : i32
    return %c0_i32, %c0_i32_0 : i32, i32
  }
  func.func @transform_4(%arg0: i32) -> (i32, i32) {
    %c0_i32 = arith.constant 0 : i32
    %c0_i32_0 = arith.constant 0 : i32
    %c0_i32_1 = arith.constant 0 : i32
    return %c0_i32, %c0_i32_0 : i32, i32
  }
}

module attributes {stable_mosaic.version = 11 : i64} {
  func.func @_linear_kernel(%arg0: i32, %arg1: i32, %arg2: memref<2x2048xbf16, #tpu.memory_space<vmem>>, %arg3: memref<2048x1024xbf16, #tpu.memory_space<vmem>>, %arg4: memref<1x1024xf32, #tpu.memory_space<vmem>>, %arg5: memref<2x1024xbf16, #tpu.memory_space<vmem>>, %arg6: memref<2x1024xf32, #tpu.memory_space<vmem>>) attributes {dimension_semantics = [#tpu.dimension_semantics<parallel>, #tpu.dimension_semantics<arbitrary>], iteration_bounds = array<i64: 1, 4>, scalar_prefetch = 0 : i64, scratch_operands = 1 : i64, tpu.core_type = #tpu.core_type<tc>, window_params = [{transform_indices = @transform_0, window_bounds = array<i64: 2, 2048>}, {transform_indices = @transform_1, window_bounds = array<i64: 2048, 1024>}, {pipeline_mode = #tpu.pipeline_mode<synchronous>, transform_indices = @transform_2, window_bounds = array<i64: 1, 1024>}, {transform_indices = @transform_3, window_bounds = array<i64: 2, 1024>}]} {
    %c0_i32 = arith.constant 0 : i32
    %0 = arith.cmpi eq, %arg1, %c0_i32 : i32
    %1 = arith.extui %0 : i1 to i32
    %c0_i32_0 = arith.constant 0 : i32
    %2 = arith.cmpi ne, %1, %c0_i32_0 : i32
    scf.if %2 {
      %cst_9 = arith.constant 0.000000e+00 : f32
      %12 = vector.broadcast %cst_9 : f32 to vector<2x1024xf32>
      %c0_10 = arith.constant 0 : index
      %c0_11 = arith.constant 0 : index
      %13 = vector.load %arg6[%c0_10, %c0_11] : memref<2x1024xf32, #tpu.memory_space<vmem>>, vector<2x1024xf32>
      tpu.vector_store %arg6[%c0_10, %c0_11], %12 {strides = array<i32>} : memref<2x1024xf32, #tpu.memory_space<vmem>>, vector<2x1024xf32>,
    } else {
    }
    %c0 = arith.constant 0 : index
    %c0_1 = arith.constant 0 : index
    %3 = vector.load %arg6[%c0, %c0_1] : memref<2x1024xf32, #tpu.memory_space<vmem>>, vector<2x1024xf32>
    %c0_2 = arith.constant 0 : index
    %c0_3 = arith.constant 0 : index
    %4 = vector.load %arg2[%c0_2, %c0_3] : memref<2x2048xbf16, #tpu.memory_space<vmem>>, vector<2x2048xbf16>
    %c0_4 = arith.constant 0 : index
    %c0_5 = arith.constant 0 : index
    %5 = vector.load %arg3[%c0_4, %c0_5] : memref<2048x1024xbf16, #tpu.memory_space<vmem>>, vector<2048x1024xbf16>
    %cst = arith.constant dense<0.000000e+00> : vector<2x1024xf32>
    %6 = tpu.matmul %4, %5, %cst {dimension_numbers = #tpu.dot_dimension_numbers<[1], [0], [0], [1], [0, 0, 1, 1], [], []>} : vector<2x2048xbf16>, vector<2048x1024xbf16>, vector<2x1024xf32> -> vector<2x1024xf32>
    %7 = arith.addf %3, %6 : vector<2x1024xf32>
    %c0_6 = arith.constant 0 : index
    %c0_7 = arith.constant 0 : index
    %8 = vector.load %arg6[%c0_6, %c0_7] : memref<2x1024xf32, #tpu.memory_space<vmem>>, vector<2x1024xf32>
    tpu.vector_store %arg6[%c0_6, %c0_7], %7 {strides = array<i32>} : memref<2x1024xf32, #tpu.memory_space<vmem>>, vector<2x1024xf32>,
    %c3_i32 = arith.constant 3 : i32
    %9 = arith.cmpi eq, %arg1, %c3_i32 : i32
    %10 = arith.extui %9 : i1 to i32
    %c0_i32_8 = arith.constant 0 : i32
    %11 = arith.cmpi ne, %10, %c0_i32_8 : i32
    scf.if %11 {
      %c0_9 = arith.constant 0 : index
      %c0_10 = arith.constant 0 : index
      %12 = vector.load %arg6[%c0_9, %c0_10] : memref<2x1024xf32, #tpu.memory_space<vmem>>, vector<2x1024xf32>
      %c0_11 = arith.constant 0 : index
      %c0_12 = arith.constant 0 : index
      %13 = vector.load %arg4[%c0_11, %c0_12] : memref<1x1024xf32, #tpu.memory_space<vmem>>, vector<1x1024xf32>
      %14 = vector.broadcast %13 : vector<1x1024xf32> to vector<2x1024xf32>
      %15 = arith.addf %12, %14 : vector<2x1024xf32>
      %cst_13 = arith.constant 0.000000e+00 : f32
      %16 = vector.broadcast %cst_13 : f32 to vector<2x1024xf32>
      %17 = arith.maximumf %15, %16 : vector<2x1024xf32>
      %18 = arith.truncf %17 : vector<2x1024xf32> to vector<2x1024xbf16>
      %c0_14 = arith.constant 0 : index
      %c0_15 = arith.constant 0 : index
      %19 = vector.load %arg5[%c0_14, %c0_15] : memref<2x1024xbf16, #tpu.memory_space<vmem>>, vector<2x1024xbf16>
      tpu.vector_store %arg5[%c0_14, %c0_15], %18 {strides = array<i32>} : memref<2x1024xbf16, #tpu.memory_space<vmem>>, vector<2x1024xbf16>,
    } else {
    }
    return
  }
  func.func @transform_0(%arg0: i32, %arg1: i32) -> (i32, i32) {
    %c0_i32 = arith.constant 0 : i32
    return %arg0, %arg1 : i32, i32
  }
  func.func @transform_1(%arg0: i32, %arg1: i32) -> (i32, i32) {
    %c0_i32 = arith.constant 0 : i32
    %c0_i32_0 = arith.constant 0 : i32
    return %arg1, %c0_i32 : i32, i32
  }
  func.func @transform_2(%arg0: i32, %arg1: i32) -> (i32, i32) {
    %c0_i32 = arith.constant 0 : i32
    %c0_i32_0 = arith.constant 0 : i32
    %c0_i32_1 = arith.constant 0 : i32
    return %c0_i32, %c0_i32_0 : i32, i32
  }
  func.func @transform_3(%arg0: i32, %arg1: i32) -> (i32, i32) {
    %c0_i32 = arith.constant 0 : i32
    %c0_i32_0 = arith.constant 0 : i32
    return %arg0, %c0_i32 : i32, i32
  }
}

module attributes {stable_mosaic.version = 11 : i64} {
  func.func @_linear_kernel(%arg0: i32, %arg1: i32, %arg2: memref<2x1024xbf16, #tpu.memory_space<vmem>>, %arg3: memref<1024x128xbf16, #tpu.memory_space<vmem>>, %arg4: memref<1x128xf32, #tpu.memory_space<vmem>>, %arg5: memref<2x128xf32, #tpu.memory_space<vmem>>, %arg6: memref<2x128xf32, #tpu.memory_space<vmem>>) attributes {dimension_semantics = [#tpu.dimension_semantics<parallel>, #tpu.dimension_semantics<arbitrary>], iteration_bounds = array<i64: 1, 1>, scalar_prefetch = 0 : i64, scratch_operands = 1 : i64, tpu.core_type = #tpu.core_type<tc>, window_params = [{transform_indices = @transform_0, window_bounds = array<i64: 2, 1024>}, {transform_indices = @transform_1, window_bounds = array<i64: 1024, 128>}, {pipeline_mode = #tpu.pipeline_mode<synchronous>, transform_indices = @transform_2, window_bounds = array<i64: 1, 128>}, {transform_indices = @transform_3, window_bounds = array<i64: 2, 128>}]} {
    %c0_i32 = arith.constant 0 : i32
    %0 = arith.cmpi eq, %arg1, %c0_i32 : i32
    %1 = arith.extui %0 : i1 to i32
    %c0_i32_0 = arith.constant 0 : i32
    %2 = arith.cmpi ne, %1, %c0_i32_0 : i32
    scf.if %2 {
      %cst_10 = arith.constant 0.000000e+00 : f32
      %12 = vector.broadcast %cst_10 : f32 to vector<2x128xf32>
      %c0_11 = arith.constant 0 : index
      %c0_12 = arith.constant 0 : index
      %13 = vector.load %arg6[%c0_11, %c0_12] : memref<2x128xf32, #tpu.memory_space<vmem>>, vector<2x128xf32>
      tpu.vector_store %arg6[%c0_11, %c0_12], %12 {strides = array<i32>} : memref<2x128xf32, #tpu.memory_space<vmem>>, vector<2x128xf32>,
    } else {
    }
    %c0 = arith.constant 0 : index
    %c0_1 = arith.constant 0 : index
    %3 = vector.load %arg6[%c0, %c0_1] : memref<2x128xf32, #tpu.memory_space<vmem>>, vector<2x128xf32>
    %c0_2 = arith.constant 0 : index
    %c0_3 = arith.constant 0 : index
    %4 = vector.load %arg2[%c0_2, %c0_3] : memref<2x1024xbf16, #tpu.memory_space<vmem>>, vector<2x1024xbf16>
    %c0_4 = arith.constant 0 : index
    %c0_5 = arith.constant 0 : index
    %5 = vector.load %arg3[%c0_4, %c0_5] : memref<1024x128xbf16, #tpu.memory_space<vmem>>, vector<1024x128xbf16>
    %cst = arith.constant dense<0.000000e+00> : vector<2x128xf32>
    %6 = tpu.matmul %4, %5, %cst {dimension_numbers = #tpu.dot_dimension_numbers<[1], [0], [0], [1], [0, 0, 1, 1], [], []>} : vector<2x1024xbf16>, vector<1024x128xbf16>, vector<2x128xf32> -> vector<2x128xf32>
    %7 = arith.addf %3, %6 : vector<2x128xf32>
    %c0_6 = arith.constant 0 : index
    %c0_7 = arith.constant 0 : index
    %8 = vector.load %arg6[%c0_6, %c0_7] : memref<2x128xf32, #tpu.memory_space<vmem>>, vector<2x128xf32>
    tpu.vector_store %arg6[%c0_6, %c0_7], %7 {strides = array<i32>} : memref<2x128xf32, #tpu.memory_space<vmem>>, vector<2x128xf32>,
    %c0_i32_8 = arith.constant 0 : i32
    %9 = arith.cmpi eq, %arg1, %c0_i32_8 : i32
    %10 = arith.extui %9 : i1 to i32
    %c0_i32_9 = arith.constant 0 : i32
    %11 = arith.cmpi ne, %10, %c0_i32_9 : i32
    scf.if %11 {
      %c0_10 = arith.constant 0 : index
      %c0_11 = arith.constant 0 : index
      %12 = vector.load %arg6[%c0_10, %c0_11] : memref<2x128xf32, #tpu.memory_space<vmem>>, vector<2x128xf32>
      %c0_12 = arith.constant 0 : index
      %c0_13 = arith.constant 0 : index
      %13 = vector.load %arg4[%c0_12, %c0_13] : memref<1x128xf32, #tpu.memory_space<vmem>>, vector<1x128xf32>
      %14 = vector.broadcast %13 : vector<1x128xf32> to vector<2x128xf32>
      %15 = arith.addf %12, %14 : vector<2x128xf32>
      %c0_14 = arith.constant 0 : index
      %c0_15 = arith.constant 0 : index
      %16 = vector.load %arg5[%c0_14, %c0_15] : memref<2x128xf32, #tpu.memory_space<vmem>>, vector<2x128xf32>
      tpu.vector_store %arg5[%c0_14, %c0_15], %15 {strides = array<i32>} : memref<2x128xf32, #tpu.memory_space<vmem>>, vector<2x128xf32>,
    } else {
    }
    return
  }
  func.func @transform_0(%arg0: i32, %arg1: i32) -> (i32, i32) {
    %c0_i32 = arith.constant 0 : i32
    return %arg0, %arg1 : i32, i32
  }
  func.func @transform_1(%arg0: i32, %arg1: i32) -> (i32, i32) {
    %c0_i32 = arith.constant 0 : i32
    %c0_i32_0 = arith.constant 0 : i32
    return %arg1, %c0_i32 : i32, i32
  }
  func.func @transform_2(%arg0: i32, %arg1: i32) -> (i32, i32) {
    %c0_i32 = arith.constant 0 : i32
    %c0_i32_0 = arith.constant 0 : i32
    %c0_i32_1 = arith.constant 0 : i32
    return %c0_i32, %c0_i32_0 : i32, i32
  }
  func.func @transform_3(%arg0: i32, %arg1: i32) -> (i32, i32) {
    %c0_i32 = arith.constant 0 : i32
    %c0_i32_0 = arith.constant 0 : i32
    return %arg0, %c0_i32 : i32, i32
  }
}

</mosaic_0001>

<llo_original>
// kernel: vgg_forward.4
$region0: #{vgg_forward.4}
  #allocation0 [shape = 'u32[]', space=smem, size = 0x4, offset = 0x4, fixed_abs, tag = 'smem constant byte address 0x4 - core index']
  #allocation1 [shape = 'u32[144,128]{1,0:T(1,128)}', space=vmem, size = 0x12000, scoped, tag = 'internal scratch']
  #allocation2 [shape = 'f32[256,128]{1,0:T(8,128)}', space=vmem, size = 0x20000, scoped, tag = 'scratch operand']
  %s0 = inlined_call_operand.vmem [shape: bf16[512,32], index: 0, kind: input, shape index: {}]
  %s1 = inlined_call_operand.hbm [shape: bf16[32,128], index: 1, kind: input, shape index: {}]
  %s2 = inlined_call_operand.hbm [shape: f32[1,128], index: 2, kind: input, shape index: {}]
  %s3 = inlined_call_operand.vmem [shape: bf16[512,128], index: 3, kind: output, shape index: {}]
  %s4 = sld [smem:[#allocation0]]
  $region61: #{vgg_forward.4} parent=0
    _
  %s6 = ssub.s32 1, %s4
  %s7 = scalar_select 0, %s6, %s4
  $region1: #{vgg_forward.4} parent=0
    #allocation3 [shape = 'u8[8192]{0}', space=vmem, size = 0x2000, scoped, tag = 'input window, operand 1, single buffered']
    #allocation4 [shape = 's32[2]{0}', space=sflag, size = 0x8, scoped, tag = 'scoped memory for vgg_forward.4']
    #allocation5 [shape = 'u8[512]{0}', space=vmem, size = 0x400, scoped, tag = 'input window, operand 2, single buffered']
    #allocation6 [shape = 's32[1]{0}', space=sflag, size = 0x4, scoped, tag = 'scoped memory for vgg_forward.4']
    %8 = vsyncpa [#allocation4], 0
    %9 = vsyncpa [#allocation6], 0
    loop: start=0, step=1, limit=4
    $region2: #{vgg_forward.4} parent=1 // loop_pre_header
      _
    $region3: #{vgg_forward.4} parent=1 // loop_header
      %s11 = sphi 0, %s15
      %p12 = scmp.ge.s32.totalorder %s11, 4
      %s18 = sphi 0, %s30
      %s19 = sphi 0, %s26
      %s20 = sphi 0, %s18
      %s21 = sphi 0, %s19
      %s22 = sphi 0, %s20
      %s23 = sphi 0, %s21
      %s35 = sphi 0, %s37
      %s38 = sphi 0, %s35
      %s39 = sphi 0, %s38
      %s55 = sphi 0, %s39
      %s61 = sphi 0, %s63
      %s64 = sphi 0, %s61
      %s65 = sphi 0, %s64
      %s81 = sphi 0, %s65
      %s85 = sphi 0, %s85
      %s87 = sphi 0, %s85
      %s88 = sphi 0, %s87
      %s102 = sphi 0, %s88
      %s108 = sphi 0, %s110
      %s111 = sphi 0, %s108
      %s112 = sphi 0, %s111
      %s128 = sphi 0, %s112
    $region4: #{vgg_forward.4} parent=1 // loop_header_branch
      %14 = sbr.rel (%p12) target = $region8
    $region5: #{vgg_forward.4} parent=1 // loop_body
      %s16 = ssub.s32 %s11, 1
      %s17 = ssub.s32 %s11, 2
      %s24 = sadd.s32 1, %s19
      %p25 = scmp.ge.s32.totalorder %s24, 1
      %s26 = scalar_select %p25, 0, %s24
      %s27 = sadd.s32 1, %s18
      %s28 = scalar_select %p25, %s27, %s18
      %p29 = scmp.ge.s32.totalorder %s28, 2
      %s30 = scalar_select %p29, 0, %s28
      %s31 = ssub.s32 %s18, %s30
      %s32 = ssub.s32 %s19, %s26
      %s33 = sor.u32 %s31, %s32
      %p34 = scmp.eq.s32.totalorder %s33, 0
      %s36 = sadd.s32 %s35, 1
      %s37 = scalar_select %p34, %s35, %s36
      %p40 = pneg %p34
      %p41 = scmp.eq.s32.totalorder %s11, 1
      %p42 = por %p40, %p41
      %p43 = scmp.ne.s32.totalorder %s35, %s38
      %p44 = scmp.eq.s32.totalorder %s11, 0
      %p45 = por %p43, %p44
      %p46 = scmp.ne.s32.totalorder %s35, %s38
      %p47 = scmp.eq.s32.totalorder %s16, 1
      %p48 = por %p46, %p47
      %p49 = scmp.ne.s32.totalorder %s38, %s39
      %p50 = scmp.eq.s32.totalorder %s16, 0
      %p51 = por %p49, %p50
      %p52 = scmp.ne.s32.totalorder %s38, %s39
      %p53 = scmp.eq.s32.totalorder %s17, 1
      %p54 = por %p52, %p53
      %p56 = scmp.ne.s32.totalorder %s39, %s55
      %p57 = scmp.eq.s32.totalorder %s17, 0
      %p58 = por %p56, %p57
      %s59 = ssub.s32 %s19, %s26
      %p60 = scmp.eq.s32.totalorder %s59, 0
      %s62 = sadd.s32 %s61, 1
      %s63 = scalar_select %p60, %s61, %s62
      %p66 = pneg %p60
      %p67 = scmp.eq.s32.totalorder %s11, 1
      %p68 = por %p66, %p67
      %p69 = scmp.ne.s32.totalorder %s61, %s64
      %p70 = scmp.eq.s32.totalorder %s11, 0
      %p71 = por %p69, %p70
      %p72 = scmp.ne.s32.totalorder %s61, %s64
      %p73 = scmp.eq.s32.totalorder %s16, 1
      %p74 = por %p72, %p73
      %p75 = scmp.ne.s32.totalorder %s64, %s65
      %p76 = scmp.eq.s32.totalorder %s16, 0
      %p77 = por %p75, %p76
      %p78 = scmp.ne.s32.totalorder %s64, %s65
      %p79 = scmp.eq.s32.totalorder %s17, 1
      %p80 = por %p78, %p79
      %p82 = scmp.ne.s32.totalorder %s65, %s81
      %p83 = scmp.eq.s32.totalorder %s17, 0
      %p84 = por %p82, %p83
      %s86 = sadd.s32 %s85, 1
      %p89 = scmp.eq.s32.totalorder %s11, 1
      %p90 = scmp.ne.s32.totalorder %s85, %s87
      %p91 = scmp.eq.s32.totalorder %s11, 0
      %p92 = por %p90, %p91
      %p93 = scmp.ne.s32.totalorder %s85, %s87
      %p94 = scmp.eq.s32.totalorder %s16, 1
      %p95 = por %p93, %p94
      %p96 = scmp.ne.s32.totalorder %s87, %s88
      %p97 = scmp.eq.s32.totalorder %s16, 0
      %p98 = por %p96, %p97
      %p99 = scmp.ne.s32.totalorder %s87, %s88
      %p100 = scmp.eq.s32.totalorder %s17, 1
      %p101 = por %p99, %p100
      %p103 = scmp.ne.s32.totalorder %s88, %s102
      %p104 = scmp.eq.s32.totalorder %s17, 0
      %p105 = por %p103, %p104
      %s106 = ssub.s32 %s18, %s30
      %p107 = scmp.eq.s32.totalorder %s106, 0
      %s109 = sadd.s32 %s108, 1
      %s110 = scalar_select %p107, %s108, %s109
      %p113 = pneg %p107
      %p114 = scmp.eq.s32.totalorder %s11, 1
      %p115 = por %p113, %p114
      %p116 = scmp.ne.s32.totalorder %s108, %s111
      %p117 = scmp.eq.s32.totalorder %s11, 0
      %p118 = por %p116, %p117
      %p119 = scmp.ne.s32.totalorder %s108, %s111
      %p120 = scmp.eq.s32.totalorder %s16, 1
      %p121 = por %p119, %p120
      %p122 = scmp.ne.s32.totalorder %s111, %s112
      %p123 = scmp.eq.s32.totalorder %s16, 0
      %p124 = por %p122, %p123
      %p125 = scmp.ne.s32.totalorder %s111, %s112
      %p126 = scmp.eq.s32.totalorder %s17, 1
      %p127 = por %p125, %p126
      %p129 = scmp.ne.s32.totalorder %s112, %s128
      %p130 = scmp.eq.s32.totalorder %s17, 0
      %p131 = por %p129, %p130
      %p132 = scmp.le.s32.totalorder 1, %s11
      %p133 = scmp.lt.s32.totalorder %s11, 3
      %p134 = pnand %p132, %p133
      %p135 = pneg %p134
      // Predicated region
      $region9: #{vgg_forward.4} parent=5 // pred_check
        _
      $region10: #{vgg_forward.4} parent=5 // pred_check_branch
        %137 = sbr.rel (%p134) target = $region12
      $region11: #{vgg_forward.4} parent=5 // pred_region
        %s138 = ssub.s32 %s11, 1
        // Predicated region
        $region13: #{vgg_forward.4} parent=11 // pred_check
          %p139 = pneg %p77
        $region14: #{vgg_forward.4} parent=11 // pred_check_branch
          %141 = sbr.rel (%p139) target = $region16
        $region15: #{vgg_forward.4} parent=11 // pred_region
          %s142 = smul.u32 4, %s21
          %s144 = ssub.s32 256, 256
          %145 = vsyncadd [#allocation4], %s144
          %s146 = smul.addr %s142, 64
          %s147 = scalar_lea.hbm %s1, %s146
          %s148 = sshll.u32 [#allocation3], 4
          %s149 = int_to_ptr.vmem [resolvable:$true] %s148
          %154 = dma.hbm_to_vmem [thread:$0]  %s147, 256, %s149, [#allocation4], 64, 64, 4
        $region16: #{vgg_forward.4} parent=11 // pred_fallthru
          _
        // Predicated region
        $region17: #{vgg_forward.4} parent=11 // pred_check
          %p155 = pneg %p98
        $region18: #{vgg_forward.4} parent=11 // pred_check_branch
          %157 = sbr.rel (%p155) target = $region20
        $region19: #{vgg_forward.4} parent=11 // pred_region
          %s159 = ssub.s32 16, 16
          %160 = vsyncadd [#allocation6], %s159
          %s162 = sshll.u32 [#allocation5], 4
          %s163 = int_to_ptr.vmem [resolvable:$true] %s162
          %165 = dma.hbm_to_vmem [thread:$0]  %s2, 16, %s163, [#allocation6]
        $region20: #{vgg_forward.4} parent=11 // pred_fallthru
          _
      $region12: #{vgg_forward.4} parent=5 // pred_fallthru
        _
      %p166 = scmp.lt.s32.totalorder %s11, 2
      // Predicated region
      $region21: #{vgg_forward.4} parent=5 // pred_check
        %p167 = pneg %p166
      $region22: #{vgg_forward.4} parent=5 // pred_check_branch
        %169 = sbr.rel (%p167) target = $region24
      $region23: #{vgg_forward.4} parent=5 // pred_region
        // Predicated region
        $region25: #{vgg_forward.4} parent=23 // pred_check
          %p170 = pneg %p45
        $region26: #{vgg_forward.4} parent=23 // pred_check_branch
          %172 = sbr.rel (%p170) target = $region28
        $region27: #{vgg_forward.4} parent=23 // pred_region
          %s173 = smul.u32 32, %s18
          %p174 = scmp.lt.s32.totalorder %s173, 63
          %s175 = scalar_select %p174, %s173, 63
          %p176 = scmp.lt.s32.totalorder %s19, 0
          %s177 = scalar_select %p176, %s19, 0
          %s178 = sadd.s32 %s177, %s175
          %s179 = smul.addr %s178, 4
          %s180 = scalar_lea.vmem %s0, %s179
          %s181 = smul.u32 32, %s18
        $region28: #{vgg_forward.4} parent=23 // pred_fallthru
          _
      $region24: #{vgg_forward.4} parent=5 // pred_fallthru
        _
      %p182 = scmp.le.s32.totalorder 1, %s11
      %p183 = scmp.lt.s32.totalorder %s11, 3
      %p184 = pnand %p182, %p183
      %p185 = pneg %p184
      // Predicated region
      $region29: #{vgg_forward.4} parent=5 // pred_check
        _
      $region30: #{vgg_forward.4} parent=5 // pred_check_branch
        %187 = sbr.rel (%p184) target = $region32
      $region31: #{vgg_forward.4} parent=5 // pred_region
        %s188 = ssub.s32 %s11, 1
        // Predicated region
        $region33: #{vgg_forward.4} parent=31 // pred_check
          %p189 = pneg %p77
        $region34: #{vgg_forward.4} parent=31 // pred_check_branch
          %191 = sbr.rel (%p189) target = $region36
        $region35: #{vgg_forward.4} parent=31 // pred_region
          %192 = dma.done [#allocation4], 256
        $region36: #{vgg_forward.4} parent=31 // pred_fallthru
          _
        // Predicated region
        $region37: #{vgg_forward.4} parent=31 // pred_check
          %p193 = pneg %p98
        $region38: #{vgg_forward.4} parent=31 // pred_check_branch
          %195 = sbr.rel (%p193) target = $region40
        $region39: #{vgg_forward.4} parent=31 // pred_region
          %196 = dma.done [#allocation6], 16
        $region40: #{vgg_forward.4} parent=31 // pred_fallthru
          _
        %s197 = smul.u32 32, %s20
        %p198 = scmp.lt.s32.totalorder %s197, 63
        %s199 = scalar_select %p198, %s197, 63
        %p200 = scmp.lt.s32.totalorder %s21, 0
        %s201 = scalar_select %p200, %s21, 0
        %s202 = sadd.s32 %s201, %s199
        %s203 = smul.addr %s202, 4
        %s204 = scalar_lea.vmem %s0, %s203
        %p205 = pneg %p51
        %p206 = pneg %p48
        %p207 = pneg %p77
        %p208 = pneg %p74
        %p209 = pneg %p98
        %p210 = pneg %p95
        %p211 = pneg %p124
        %p212 = pneg %p121
        %s213 = smul.u32 32, %s20
        %p214 = scmp.lt.s32.totalorder %s213, 63
        %s215 = scalar_select %p214, %s213, 63
        %s216 = smul.addr %s215, 4
        %s217 = scalar_lea.vmem %s3, %s216
        %s218 = smul.u32 32, %s20
        %p219 = scmp.lt.s32.totalorder %s218, 63
        %s220 = scalar_select %p219, %s218, 63
        %p221 = scmp.lt.s32.totalorder %s21, 0
        %s222 = scalar_select %p221, %s21, 0
        %s223 = sadd.s32 %s222, %s220
        %s224 = smul.addr %s223, 4
        %s225 = scalar_lea.vmem %s0, %s224
        %s226 = smul.u32 32, %s20
        %s227 = smul.u32 4, %s21
        %s228 = smul.u32 32, %s20
        %p229 = scmp.lt.s32.totalorder %s228, 63
        %s230 = scalar_select %p229, %s228, 63
        %s231 = smul.addr %s230, 4
        %s232 = scalar_lea.vmem %s3, %s231
        %s233 = smul.u32 32, %s20
        %p235 = scmp.eq.s32.totalorder %s21, 0
        // Predicated region
        $region41: #{vgg_forward.4} parent=31 // pred_check
          %p236 = pneg %p235
        $region42: #{vgg_forward.4} parent=31 // pred_check_branch
          %238 = sbr.rel (%p236) target = $region44
        $region43: #{vgg_forward.4} parent=31 // pred_region
          %239 = vst [vmem:[#allocation2] sm:$0xff] 0.0
          %240 = vst [vmem:[#allocation2 + $0x8] sm:$0xff] 0.0
          %241 = vst [vmem:[#allocation2 + $0x10] sm:$0xff] 0.0
          %242 = vst [vmem:[#allocation2 + $0x18] sm:$0xff] 0.0
          %243 = vst [vmem:[#allocation2 + $0x20] sm:$0xff] 0.0
          %244 = vst [vmem:[#allocation2 + $0x28] sm:$0xff] 0.0
          %245 = vst [vmem:[#allocation2 + $0x30] sm:$0xff] 0.0
          %246 = vst [vmem:[#allocation2 + $0x38] sm:$0xff] 0.0
          %247 = vst [vmem:[#allocation2 + $0x40] sm:$0xff] 0.0
          %248 = vst [vmem:[#allocation2 + $0x48] sm:$0xff] 0.0
          %249 = vst [vmem:[#allocation2 + $0x50] sm:$0xff] 0.0
          %250 = vst [vmem:[#allocation2 + $0x58] sm:$0xff] 0.0
          %251 = vst [vmem:[#allocation2 + $0x60] sm:$0xff] 0.0
          %252 = vst [vmem:[#allocation2 + $0x68] sm:$0xff] 0.0
          %253 = vst [vmem:[#allocation2 + $0x70] sm:$0xff] 0.0
          %254 = vst [vmem:[#allocation2 + $0x78] sm:$0xff] 0.0
          %255 = vst [vmem:[#allocation2 + $0x80] sm:$0xff] 0.0
          %256 = vst [vmem:[#allocation2 + $0x88] sm:$0xff] 0.0
          %257 = vst [vmem:[#allocation2 + $0x90] sm:$0xff] 0.0
          %258 = vst [vmem:[#allocation2 + $0x98] sm:$0xff] 0.0
          %259 = vst [vmem:[#allocation2 + $0xa0] sm:$0xff] 0.0
          %260 = vst [vmem:[#allocation2 + $0xa8] sm:$0xff] 0.0
          %261 = vst [vmem:[#allocation2 + $0xb0] sm:$0xff] 0.0
          %262 = vst [vmem:[#allocation2 + $0xb8] sm:$0xff] 0.0
          %263 = vst [vmem:[#allocation2 + $0xc0] sm:$0xff] 0.0
          %264 = vst [vmem:[#allocation2 + $0xc8] sm:$0xff] 0.0
          %265 = vst [vmem:[#allocation2 + $0xd0] sm:$0xff] 0.0
          %266 = vst [vmem:[#allocation2 + $0xd8] sm:$0xff] 0.0
          %267 = vst [vmem:[#allocation2 + $0xe0] sm:$0xff] 0.0
          %268 = vst [vmem:[#allocation2 + $0xe8] sm:$0xff] 0.0
          %269 = vst [vmem:[#allocation2 + $0xf0] sm:$0xff] 0.0
          %270 = vst [vmem:[#allocation2 + $0xf8] sm:$0xff] 0.0
        $region44: #{vgg_forward.4} parent=31 // pred_fallthru
          _
        %v271 = vld [vmem:[#allocation2] sm:$0xff]
        %v272 = vld [vmem:[#allocation2 + $0x8] sm:$0xff]
        %v273 = vld [vmem:[#allocation2 + $0x10] sm:$0xff]
        %v274 = vld [vmem:[#allocation2 + $0x18] sm:$0xff]
        %v275 = vld [vmem:[#allocation2 + $0x20] sm:$0xff]
        %v276 = vld [vmem:[#allocation2 + $0x28] sm:$0xff]
        %v277 = vld [vmem:[#allocation2 + $0x30] sm:$0xff]
        %v278 = vld [vmem:[#allocation2 + $0x38] sm:$0xff]
        %v279 = vld [vmem:[#allocation2 + $0x40] sm:$0xff]
        %v280 = vld [vmem:[#allocation2 + $0x48] sm:$0xff]
        %v281 = vld [vmem:[#allocation2 + $0x50] sm:$0xff]
        %v282 = vld [vmem:[#allocation2 + $0x58] sm:$0xff]
        %v283 = vld [vmem:[#allocation2 + $0x60] sm:$0xff]
        %v284 = vld [vmem:[#allocation2 + $0x68] sm:$0xff]
        %v285 = vld [vmem:[#allocation2 + $0x70] sm:$0xff]
        %v286 = vld [vmem:[#allocation2 + $0x78] sm:$0xff]
        %v287 = vld [vmem:[#allocation2 + $0x80] sm:$0xff]
        %v288 = vld [vmem:[#allocation2 + $0x88] sm:$0xff]
        %v289 = vld [vmem:[#allocation2 + $0x90] sm:$0xff]
        %v290 = vld [vmem:[#allocation2 + $0x98] sm:$0xff]
        %v291 = vld [vmem:[#allocation2 + $0xa0] sm:$0xff]
        %v292 = vld [vmem:[#allocation2 + $0xa8] sm:$0xff]
        %v293 = vld [vmem:[#allocation2 + $0xb0] sm:$0xff]
        %v294 = vld [vmem:[#allocation2 + $0xb8] sm:$0xff]
        %v295 = vld [vmem:[#allocation2 + $0xc0] sm:$0xff]
        %v296 = vld [vmem:[#allocation2 + $0xc8] sm:$0xff]
        %v297 = vld [vmem:[#allocation2 + $0xd0] sm:$0xff]
        %v298 = vld [vmem:[#allocation2 + $0xd8] sm:$0xff]
        %v299 = vld [vmem:[#allocation2 + $0xe0] sm:$0xff]
        %v300 = vld [vmem:[#allocation2 + $0xe8] sm:$0xff]
        %v301 = vld [vmem:[#allocation2 + $0xf0] sm:$0xff]
        %v302 = vld [vmem:[#allocation2 + $0xf8] sm:$0xff]
        %v303 = vld [vmem:[%s225] sm:$0xf]
        %v304 = vld [vmem:[%s225 + $0x4] sm:$0xf]
        %v305 = vld [vmem:[%s225 + $0x8] sm:$0xf]
        %v306 = vld [vmem:[%s225 + $0xc] sm:$0xf]
        %v307 = vld [vmem:[%s225 + $0x10] sm:$0xf]
        %v308 = vld [vmem:[%s225 + $0x14] sm:$0xf]
        %v309 = vld [vmem:[%s225 + $0x18] sm:$0xf]
        %v310 = vld [vmem:[%s225 + $0x1c] sm:$0xf]
        %v311 = vld [vmem:[%s225 + $0x20] sm:$0xf]
        %v312 = vld [vmem:[%s225 + $0x24] sm:$0xf]
        %v313 = vld [vmem:[%s225 + $0x28] sm:$0xf]
        %v314 = vld [vmem:[%s225 + $0x2c] sm:$0xf]
        %v315 = vld [vmem:[%s225 + $0x30] sm:$0xf]
        %v316 = vld [vmem:[%s225 + $0x34] sm:$0xf]
        %v317 = vld [vmem:[%s225 + $0x38] sm:$0xf]
        %v318 = vld [vmem:[%s225 + $0x3c] sm:$0xf]
        %v319 = vld [vmem:[%s225 + $0x40] sm:$0xf]
        %v320 = vld [vmem:[%s225 + $0x44] sm:$0xf]
        %v321 = vld [vmem:[%s225 + $0x48] sm:$0xf]
        %v322 = vld [vmem:[%s225 + $0x4c] sm:$0xf]
        %v323 = vld [vmem:[%s225 + $0x50] sm:$0xf]
        %v324 = vld [vmem:[%s225 + $0x54] sm:$0xf]
        %v325 = vld [vmem:[%s225 + $0x58] sm:$0xf]
        %v326 = vld [vmem:[%s225 + $0x5c] sm:$0xf]
        %v327 = vld [vmem:[%s225 + $0x60] sm:$0xf]
        %v328 = vld [vmem:[%s225 + $0x64] sm:$0xf]
        %v329 = vld [vmem:[%s225 + $0x68] sm:$0xf]
        %v330 = vld [vmem:[%s225 + $0x6c] sm:$0xf]
        %v331 = vld [vmem:[%s225 + $0x70] sm:$0xf]
        %v332 = vld [vmem:[%s225 + $0x74] sm:$0xf]
        %v333 = vld [vmem:[%s225 + $0x78] sm:$0xf]
        %v334 = vld [vmem:[%s225 + $0x7c] sm:$0xf]
        %v335 = vld [vmem:[#allocation3] sm:$0xf]
        %v336 = vld [vmem:[#allocation3 + $0x4] sm:$0xf]
        %v337 = vld [vmem:[#allocation3 + $0x8] sm:$0xf]
        %v338 = vld [vmem:[#allocation3 + $0xc] sm:$0xf]
        %v371 = vunpack.c.l.b16 %v303
        %v372 = vunpack.c.l.b16 %v304
        %v373 = vunpack.c.l.b16 %v305
        %v374 = vunpack.c.l.b16 %v306
        %v375 = vunpack.c.l.b16 %v307
        %v376 = vunpack.c.l.b16 %v308
        %v377 = vunpack.c.l.b16 %v309
        %v378 = vunpack.c.l.b16 %v310
        %v379 = vunpack.c.l.b16 %v311
        %v380 = vunpack.c.l.b16 %v312
        %v381 = vunpack.c.l.b16 %v313
        %v382 = vunpack.c.l.b16 %v314
        %v383 = vunpack.c.l.b16 %v315
        %v384 = vunpack.c.l.b16 %v316
        %v385 = vunpack.c.l.b16 %v317
        %v386 = vunpack.c.l.b16 %v318
        %v387 = vunpack.c.l.b16 %v319
        %v388 = vunpack.c.l.b16 %v320
        %v389 = vunpack.c.l.b16 %v321
        %v390 = vunpack.c.l.b16 %v322
        %v391 = vunpack.c.l.b16 %v323
        %v392 = vunpack.c.l.b16 %v324
        %v393 = vunpack.c.l.b16 %v325
        %v394 = vunpack.c.l.b16 %v326
        %v395 = vunpack.c.l.b16 %v327
        %v396 = vunpack.c.l.b16 %v328
        %v397 = vunpack.c.l.b16 %v329
        %v398 = vunpack.c.l.b16 %v330
        %v399 = vunpack.c.l.b16 %v331
        %v400 = vunpack.c.l.b16 %v332
        %v401 = vunpack.c.l.b16 %v333
        %v402 = vunpack.c.l.b16 %v334
        %v403 = vpack.c.b16 %v372, %v371
        %v404 = vpack.c.b16 %v374, %v373
        %v405 = vpack.c.b16 %v376, %v375
        %v406 = vpack.c.b16 %v378, %v377
        %v407 = vpack.c.b16 %v380, %v379
        %v408 = vpack.c.b16 %v382, %v381
        %v409 = vpack.c.b16 %v384, %v383
        %v410 = vpack.c.b16 %v386, %v385
        %v411 = vpack.c.b16 %v388, %v387
        %v412 = vpack.c.b16 %v390, %v389
        %v413 = vpack.c.b16 %v392, %v391
        %v414 = vpack.c.b16 %v394, %v393
        %v415 = vpack.c.b16 %v396, %v395
        %v416 = vpack.c.b16 %v398, %v397
        %v417 = vpack.c.b16 %v400, %v399
        %v418 = vpack.c.b16 %v402, %v401
        %v423 = vunpack.c.l.b16 %v335
        %v424 = vunpack.c.l.b16 %v336
        %v425 = vunpack.c.l.b16 %v337
        %v426 = vunpack.c.l.b16 %v338
        %v427 = vpack.c.b16 %v424, %v423
        %v428 = vpack.c.b16 %v426, %v425
        %vm431 = vcmask 261120
        %v433 = vsel %vm431, %v403, 0
        %v436 = vsel %vm431, %v404, 0
        %v439 = vsel %vm431, %v405, 0
        %v442 = vsel %vm431, %v406, 0
        %v445 = vsel %vm431, %v407, 0
        %v448 = vsel %vm431, %v408, 0
        %v451 = vsel %vm431, %v409, 0
        %v454 = vsel %vm431, %v410, 0
        %v457 = vsel %vm431, %v411, 0
        %v460 = vsel %vm431, %v412, 0
        %v463 = vsel %vm431, %v413, 0
        %v466 = vsel %vm431, %v414, 0
        %v469 = vsel %vm431, %v415, 0
        %v472 = vsel %vm431, %v416, 0
        %v475 = vsel %vm431, %v417, 0
        %v478 = vsel %vm431, %v418, 0
        %480 = vmatprep.subr.bf16.mxu0 0
        %481 = vmatpush1.bf16.msra.mxu0 %v427
        %482 = vmatprep.subr.bf16.mxu0 0
        %483 = vmatpush1.bf16.msra.mxu0 %v428
        %484 = vmatprep.subr.bf16.mxu0 0
        %485 = vmatpush1.bf16.msra.mxu0 0
        %486 = vmatprep.subr.bf16.mxu0 0
        %487 = vmatpush1.bf16.msra.mxu0 0
        %488 = vmatprep.subr.bf16.mxu0 0
        %489 = vmatpush1.bf16.msra.mxu0 0
        %490 = vmatprep.subr.bf16.mxu0 0
        %491 = vmatpush1.bf16.msra.mxu0 0
        %492 = vmatprep.subr.bf16.mxu0 0
        %493 = vmatpush1.bf16.msra.mxu0 0
        %494 = vmatprep.subr.bf16.mxu0 0
        %495 = vmatpush1.bf16.msra.mxu0 0
        %496 = vmatprep.subr.bf16.mxu0 0
        %497 = vmatpush1.bf16.msra.mxu0 0
        %498 = vmatprep.subr.bf16.mxu0 0
        %499 = vmatpush1.bf16.msra.mxu0 0
        %500 = vmatprep.subr.bf16.mxu0 0
        %501 = vmatpush1.bf16.msra.mxu0 0
        %502 = vmatprep.subr.bf16.mxu0 0
        %503 = vmatpush1.bf16.msra.mxu0 0
        %504 = vmatprep.subr.bf16.mxu0 0
        %505 = vmatpush1.bf16.msra.mxu0 0
        %506 = vmatprep.subr.bf16.mxu0 0
        %507 = vmatpush1.bf16.msra.mxu0 0
        %508 = vmatprep.subr.bf16.mxu0 0
        %509 = vmatpush1.bf16.msra.mxu0 0
        %510 = vmatprep.subr.bf16.mxu0 0
        %511 = vmatpush1.bf16.msra.mxu0 0
        %512 = vmatprep.mubr.bf16.mxu0 0
        %513 = vmatmul.mubr.bf16.gmra.mrb[0].mxu0 %v433
        %v514 = vpop.f32.mrb[0].mxu0
        %v515 = vadd.f32 0.0, %v514
        %v516 = vpop.f32.mrb[0].mxu0
        %v517 = vpop.f32.mrb[0].mxu0
        %v518 = vadd.f32 0.0, %v517
        %v519 = vpop.f32.mrb[0].mxu0
        %520 = vmatprep.mubr.bf16.mxu0 0
        %521 = vmatmul.mubr.bf16.gmra.mrb[0].mxu0 %v436
        %v522 = vpop.f32.mrb[0].mxu0
        %v523 = vadd.f32 0.0, %v522
        %v524 = vpop.f32.mrb[0].mxu0
        %v525 = vpop.f32.mrb[0].mxu0
        %v526 = vadd.f32 0.0, %v525
        %v527 = vpop.f32.mrb[0].mxu0
        %528 = vmatprep.mubr.bf16.mxu0 0
        %529 = vmatmul.mubr.bf16.gmra.mrb[0].mxu0 %v439
        %v530 = vpop.f32.mrb[0].mxu0
        %v531 = vadd.f32 0.0, %v530
        %v532 = vpop.f32.mrb[0].mxu0
        %v533 = vpop.f32.mrb[0].mxu0
        %v534 = vadd.f32 0.0, %v533
        %v535 = vpop.f32.mrb[0].mxu0
        %536 = vmatprep.mubr.bf16.mxu0 0
        %537 = vmatmul.mubr.bf16.gmra.mrb[0].mxu0 %v442
        %v538 = vpop.f32.mrb[0].mxu0
        %v539 = vadd.f32 0.0, %v538
        %v540 = vpop.f32.mrb[0].mxu0
        %v541 = vpop.f32.mrb[0].mxu0
        %v542 = vadd.f32 0.0, %v541
        %v543 = vpop.f32.mrb[0].mxu0
        %544 = vmatprep.mubr.bf16.mxu0 0
        %545 = vmatmul.mubr.bf16.gmra.mrb[0].mxu0 %v445
        %v546 = vpop.f32.mrb[0].mxu0
        %v547 = vadd.f32 0.0, %v546
        %v548 = vpop.f32.mrb[0].mxu0
        %v549 = vpop.f32.mrb[0].mxu0
        %v550 = vadd.f32 0.0, %v549
        %v551 = vpop.f32.mrb[0].mxu0
        %552 = vmatprep.mubr.bf16.mxu0 0
        %553 = vmatmul.mubr.bf16.gmra.mrb[0].mxu0 %v448
        %v554 = vpop.f32.mrb[0].mxu0
        %v555 = vadd.f32 0.0, %v554
        %v556 = vpop.f32.mrb[0].mxu0
        %v557 = vpop.f32.mrb[0].mxu0
        %v558 = vadd.f32 0.0, %v557
        %v559 = vpop.f32.mrb[0].mxu0
        %560 = vmatprep.mubr.bf16.mxu0 0
        %561 = vmatmul.mubr.bf16.gmra.mrb[0].mxu0 %v451
        %v562 = vpop.f32.mrb[0].mxu0
        %v563 = vadd.f32 0.0, %v562
        %v564 = vpop.f32.mrb[0].mxu0
        %v565 = vpop.f32.mrb[0].mxu0
        %v566 = vadd.f32 0.0, %v565
        %v567 = vpop.f32.mrb[0].mxu0
        %568 = vmatprep.mubr.bf16.mxu0 0
        %569 = vmatmul.mubr.bf16.gmra.mrb[0].mxu0 %v454
        %v570 = vpop.f32.mrb[0].mxu0
        %v571 = vadd.f32 0.0, %v570
        %v572 = vpop.f32.mrb[0].mxu0
        %v573 = vpop.f32.mrb[0].mxu0
        %v574 = vadd.f32 0.0, %v573
        %v575 = vpop.f32.mrb[0].mxu0
        %576 = vmatprep.mubr.bf16.mxu0 0
        %577 = vmatmul.mubr.bf16.gmra.mrb[0].mxu0 %v457
        %v578 = vpop.f32.mrb[0].mxu0
        %v579 = vadd.f32 0.0, %v578
        %v580 = vpop.f32.mrb[0].mxu0
        %v581 = vpop.f32.mrb[0].mxu0
        %v582 = vadd.f32 0.0, %v581
        %v583 = vpop.f32.mrb[0].mxu0
        %584 = vmatprep.mubr.bf16.mxu0 0
        %585 = vmatmul.mubr.bf16.gmra.mrb[0].mxu0 %v460
        %v586 = vpop.f32.mrb[0].mxu0
        %v587 = vadd.f32 0.0, %v586
        %v588 = vpop.f32.mrb[0].mxu0
        %v589 = vpop.f32.mrb[0].mxu0
        %v590 = vadd.f32 0.0, %v589
        %v591 = vpop.f32.mrb[0].mxu0
        %592 = vmatprep.mubr.bf16.mxu0 0
        %593 = vmatmul.mubr.bf16.gmra.mrb[0].mxu0 %v463
        %v594 = vpop.f32.mrb[0].mxu0
        %v595 = vadd.f32 0.0, %v594
        %v596 = vpop.f32.mrb[0].mxu0
        %v597 = vpop.f32.mrb[0].mxu0
        %v598 = vadd.f32 0.0, %v597
        %v599 = vpop.f32.mrb[0].mxu0
        %600 = vmatprep.mubr.bf16.mxu0 0
        %601 = vmatmul.mubr.bf16.gmra.mrb[0].mxu0 %v466
        %v602 = vpop.f32.mrb[0].mxu0
        %v603 = vadd.f32 0.0, %v602
        %v604 = vpop.f32.mrb[0].mxu0
        %v605 = vpop.f32.mrb[0].mxu0
        %v606 = vadd.f32 0.0, %v605
        %v607 = vpop.f32.mrb[0].mxu0
        %608 = vmatprep.mubr.bf16.mxu0 0
        %609 = vmatmul.mubr.bf16.gmra.mrb[0].mxu0 %v469
        %v610 = vpop.f32.mrb[0].mxu0
        %v611 = vadd.f32 0.0, %v610
        %v612 = vpop.f32.mrb[0].mxu0
        %v613 = vpop.f32.mrb[0].mxu0
        %v614 = vadd.f32 0.0, %v613
        %v615 = vpop.f32.mrb[0].mxu0
        %616 = vmatprep.mubr.bf16.mxu0 0
        %617 = vmatmul.mubr.bf16.gmra.mrb[0].mxu0 %v472
        %v618 = vpop.f32.mrb[0].mxu0
        %v619 = vadd.f32 0.0, %v618
        %v620 = vpop.f32.mrb[0].mxu0
        %v621 = vpop.f32.mrb[0].mxu0
        %v622 = vadd.f32 0.0, %v621
        %v623 = vpop.f32.mrb[0].mxu0
        %624 = vmatprep.mubr.bf16.mxu0 0
        %625 = vmatmul.mubr.bf16.gmra.mrb[0].mxu0 %v475
        %v626 = vpop.f32.mrb[0].mxu0
        %v627 = vadd.f32 0.0, %v626
        %v628 = vpop.f32.mrb[0].mxu0
        %v629 = vpop.f32.mrb[0].mxu0
        %v630 = vadd.f32 0.0, %v629
        %v631 = vpop.f32.mrb[0].mxu0
        %632 = vmatprep.mubr.bf16.mxu0 0
        %633 = vmatmul.mubr.bf16.gmra.mrb[0].mxu0 %v478
        %v634 = vpop.f32.mrb[0].mxu0
        %v635 = vadd.f32 0.0, %v634
        %v636 = vpop.f32.mrb[0].mxu0
        %v637 = vpop.f32.mrb[0].mxu0
        %v638 = vadd.f32 0.0, %v637
        %v639 = vpop.f32.mrb[0].mxu0
        %640 = vdwg.mxu0
        %v641 = vadd.f32 %v271, %v515
        %v642 = vadd.f32 %v272, %v518
        %v643 = vadd.f32 %v273, %v523
        %v644 = vadd.f32 %v274, %v526
        %v645 = vadd.f32 %v275, %v531
        %v646 = vadd.f32 %v276, %v534
        %v647 = vadd.f32 %v277, %v539
        %v648 = vadd.f32 %v278, %v542
        %v649 = vadd.f32 %v279, %v547
        %v650 = vadd.f32 %v280, %v550
        %v651 = vadd.f32 %v281, %v555
        %v652 = vadd.f32 %v282, %v558
        %v653 = vadd.f32 %v283, %v563
        %v654 = vadd.f32 %v284, %v566
        %v655 = vadd.f32 %v285, %v571
        %v656 = vadd.f32 %v286, %v574
        %v657 = vadd.f32 %v287, %v579
        %v658 = vadd.f32 %v288, %v582
        %v659 = vadd.f32 %v289, %v587
        %v660 = vadd.f32 %v290, %v590
        %v661 = vadd.f32 %v291, %v595
        %v662 = vadd.f32 %v292, %v598
        %v663 = vadd.f32 %v293, %v603
        %v664 = vadd.f32 %v294, %v606
        %v665 = vadd.f32 %v295, %v611
        %v666 = vadd.f32 %v296, %v614
        %v667 = vadd.f32 %v297, %v619
        %v668 = vadd.f32 %v298, %v622
        %v669 = vadd.f32 %v299, %v627
        %v670 = vadd.f32 %v300, %v630
        %v671 = vadd.f32 %v301, %v635
        %v672 = vadd.f32 %v302, %v638
        %673 = vst [vmem:[#allocation2] sm:$0xff] %v641
        %674 = vst [vmem:[#allocation2 + $0x8] sm:$0xff] %v642
        %675 = vst [vmem:[#allocation2 + $0x10] sm:$0xff] %v643
        %676 = vst [vmem:[#allocation2 + $0x18] sm:$0xff] %v644
        %677 = vst [vmem:[#allocation2 + $0x20] sm:$0xff] %v645
        %678 = vst [vmem:[#allocation2 + $0x28] sm:$0xff] %v646
        %679 = vst [vmem:[#allocation2 + $0x30] sm:$0xff] %v647
        %680 = vst [vmem:[#allocation2 + $0x38] sm:$0xff] %v648
        %681 = vst [vmem:[#allocation2 + $0x40] sm:$0xff] %v649
        %682 = vst [vmem:[#allocation2 + $0x48] sm:$0xff] %v650
        %683 = vst [vmem:[#allocation2 + $0x50] sm:$0xff] %v651
        %684 = vst [vmem:[#allocation2 + $0x58] sm:$0xff] %v652
        %685 = vst [vmem:[#allocation2 + $0x60] sm:$0xff] %v653
        %686 = vst [vmem:[#allocation2 + $0x68] sm:$0xff] %v654
        %687 = vst [vmem:[#allocation2 + $0x70] sm:$0xff] %v655
        %688 = vst [vmem:[#allocation2 + $0x78] sm:$0xff] %v656
        %689 = vst [vmem:[#allocation2 + $0x80] sm:$0xff] %v657
        %690 = vst [vmem:[#allocation2 + $0x88] sm:$0xff] %v658
        %691 = vst [vmem:[#allocation2 + $0x90] sm:$0xff] %v659
        %692 = vst [vmem:[#allocation2 + $0x98] sm:$0xff] %v660
        %693 = vst [vmem:[#allocation2 + $0xa0] sm:$0xff] %v661
        %694 = vst [vmem:[#allocation2 + $0xa8] sm:$0xff] %v662
        %695 = vst [vmem:[#allocation2 + $0xb0] sm:$0xff] %v663
        %696 = vst [vmem:[#allocation2 + $0xb8] sm:$0xff] %v664
        %697 = vst [vmem:[#allocation2 + $0xc0] sm:$0xff] %v665
        %698 = vst [vmem:[#allocation2 + $0xc8] sm:$0xff] %v666
        %699 = vst [vmem:[#allocation2 + $0xd0] sm:$0xff] %v667
        %700 = vst [vmem:[#allocation2 + $0xd8] sm:$0xff] %v668
        %701 = vst [vmem:[#allocation2 + $0xe0] sm:$0xff] %v669
        %702 = vst [vmem:[#allocation2 + $0xe8] sm:$0xff] %v670
        %703 = vst [vmem:[#allocation2 + $0xf0] sm:$0xff] %v671
        %704 = vst [vmem:[#allocation2 + $0xf8] sm:$0xff] %v672
        // Predicated region
        $region45: #{vgg_forward.4} parent=31 // pred_check
          %p705 = pneg %p235
        $region46: #{vgg_forward.4} parent=31 // pred_check_branch
          %707 = sbr.rel (%p705) target = $region48
        $region47: #{vgg_forward.4} parent=31 // pred_region
          %v708 = vld [vmem:[#allocation2] sm:$0xff]
          %v709 = vld [vmem:[#allocation2 + $0x8] sm:$0xff]
          %v710 = vld [vmem:[#allocation2 + $0x10] sm:$0xff]
          %v711 = vld [vmem:[#allocation2 + $0x18] sm:$0xff]
          %v712 = vld [vmem:[#allocation2 + $0x20] sm:$0xff]
          %v713 = vld [vmem:[#allocation2 + $0x28] sm:$0xff]
          %v714 = vld [vmem:[#allocation2 + $0x30] sm:$0xff]
          %v715 = vld [vmem:[#allocation2 + $0x38] sm:$0xff]
          %v716 = vld [vmem:[#allocation2 + $0x40] sm:$0xff]
          %v717 = vld [vmem:[#allocation2 + $0x48] sm:$0xff]
          %v718 = vld [vmem:[#allocation2 + $0x50] sm:$0xff]
          %v719 = vld [vmem:[#allocation2 + $0x58] sm:$0xff]
          %v720 = vld [vmem:[#allocation2 + $0x60] sm:$0xff]
          %v721 = vld [vmem:[#allocation2 + $0x68] sm:$0xff]
          %v722 = vld [vmem:[#allocation2 + $0x70] sm:$0xff]
          %v723 = vld [vmem:[#allocation2 + $0x78] sm:$0xff]
          %v724 = vld [vmem:[#allocation2 + $0x80] sm:$0xff]
          %v725 = vld [vmem:[#allocation2 + $0x88] sm:$0xff]
          %v726 = vld [vmem:[#allocation2 + $0x90] sm:$0xff]
          %v727 = vld [vmem:[#allocation2 + $0x98] sm:$0xff]
          %v728 = vld [vmem:[#allocation2 + $0xa0] sm:$0xff]
          %v729 = vld [vmem:[#allocation2 + $0xa8] sm:$0xff]
          %v730 = vld [vmem:[#allocation2 + $0xb0] sm:$0xff]
          %v731 = vld [vmem:[#allocation2 + $0xb8] sm:$0xff]
          %v732 = vld [vmem:[#allocation2 + $0xc0] sm:$0xff]
          %v733 = vld [vmem:[#allocation2 + $0xc8] sm:$0xff]
          %v734 = vld [vmem:[#allocation2 + $0xd0] sm:$0xff]
          %v735 = vld [vmem:[#allocation2 + $0xd8] sm:$0xff]
          %v736 = vld [vmem:[#allocation2 + $0xe0] sm:$0xff]
          %v737 = vld [vmem:[#allocation2 + $0xe8] sm:$0xff]
          %v738 = vld [vmem:[#allocation2 + $0xf0] sm:$0xff]
          %v739 = vld [vmem:[#allocation2 + $0xf8] sm:$0xff]
          %v740 = vld [vmem:[#allocation5] sm:$0x1]
          %v742 = vlaneseq
          %v743 = vshrl.u32 %v742, 7
          %v744 = vsub.s32 0, %v743
          %v745 = vrot.slane %v740, %v744
          %v747 = vadd.f32 %v708, %v745
          %v748 = vadd.f32 %v709, %v745
          %v749 = vadd.f32 %v710, %v745
          %v750 = vadd.f32 %v711, %v745
          %v751 = vadd.f32 %v712, %v745
          %v752 = vadd.f32 %v713, %v745
          %v753 = vadd.f32 %v714, %v745
          %v754 = vadd.f32 %v715, %v745
          %v755 = vadd.f32 %v716, %v745
          %v756 = vadd.f32 %v717, %v745
          %v757 = vadd.f32 %v718, %v745
          %v758 = vadd.f32 %v719, %v745
          %v759 = vadd.f32 %v720, %v745
          %v760 = vadd.f32 %v721, %v745
          %v761 = vadd.f32 %v722, %v745
          %v762 = vadd.f32 %v723, %v745
          %v763 = vadd.f32 %v724, %v745
          %v764 = vadd.f32 %v725, %v745
          %v765 = vadd.f32 %v726, %v745
          %v766 = vadd.f32 %v727, %v745
          %v767 = vadd.f32 %v728, %v745
          %v768 = vadd.f32 %v729, %v745
          %v769 = vadd.f32 %v730, %v745
          %v770 = vadd.f32 %v731, %v745
          %v771 = vadd.f32 %v732, %v745
          %v772 = vadd.f32 %v733, %v745
          %v773 = vadd.f32 %v734, %v745
          %v774 = vadd.f32 %v735, %v745
          %v775 = vadd.f32 %v736, %v745
          %v776 = vadd.f32 %v737, %v745
          %v777 = vadd.f32 %v738, %v745
          %v778 = vadd.f32 %v739, %v745
          %v779 = vmax.f32 %v747, 0.0
          %v780 = vmax.f32 %v748, 0.0
          %v781 = vmax.f32 %v749, 0.0
          %v782 = vmax.f32 %v750, 0.0
          %v783 = vmax.f32 %v751, 0.0
          %v784 = vmax.f32 %v752, 0.0
          %v785 = vmax.f32 %v753, 0.0
          %v786 = vmax.f32 %v754, 0.0
          %v787 = vmax.f32 %v755, 0.0
          %v788 = vmax.f32 %v756, 0.0
          %v789 = vmax.f32 %v757, 0.0
          %v790 = vmax.f32 %v758, 0.0
          %v791 = vmax.f32 %v759, 0.0
          %v792 = vmax.f32 %v760, 0.0
          %v793 = vmax.f32 %v761, 0.0
          %v794 = vmax.f32 %v762, 0.0
          %v795 = vmax.f32 %v763, 0.0
          %v796 = vmax.f32 %v764, 0.0
          %v797 = vmax.f32 %v765, 0.0
          %v798 = vmax.f32 %v766, 0.0
          %v799 = vmax.f32 %v767, 0.0
          %v800 = vmax.f32 %v768, 0.0
          %v801 = vmax.f32 %v769, 0.0
          %v802 = vmax.f32 %v770, 0.0
          %v803 = vmax.f32 %v771, 0.0
          %v804 = vmax.f32 %v772, 0.0
          %v805 = vmax.f32 %v773, 0.0
          %v806 = vmax.f32 %v774, 0.0
          %v807 = vmax.f32 %v775, 0.0
          %v808 = vmax.f32 %v776, 0.0
          %v809 = vmax.f32 %v777, 0.0
          %v810 = vmax.f32 %v778, 0.0
          %v811 = vpack.c.bf16 %v780, %v779
          %v812 = vpack.c.bf16 %v782, %v781
          %v813 = vpack.c.bf16 %v784, %v783
          %v814 = vpack.c.bf16 %v786, %v785
          %v815 = vpack.c.bf16 %v788, %v787
          %v816 = vpack.c.bf16 %v790, %v789
          %v817 = vpack.c.bf16 %v792, %v791
          %v818 = vpack.c.bf16 %v794, %v793
          %v819 = vpack.c.bf16 %v796, %v795
          %v820 = vpack.c.bf16 %v798, %v797
          %v821 = vpack.c.bf16 %v800, %v799
          %v822 = vpack.c.bf16 %v802, %v801
          %v823 = vpack.c.bf16 %v804, %v803
          %v824 = vpack.c.bf16 %v806, %v805
          %v825 = vpack.c.bf16 %v808, %v807
          %v826 = vpack.c.bf16 %v810, %v809
          %v843 = vunpack.c.l.b16 %v811
          %v844 = vunpack.c.h.b16 %v811
          %v845 = vunpack.c.l.b16 %v812
          %v846 = vunpack.c.h.b16 %v812
          %v847 = vunpack.c.l.b16 %v813
          %v848 = vunpack.c.h.b16 %v813
          %v849 = vunpack.c.l.b16 %v814
          %v850 = vunpack.c.h.b16 %v814
          %v851 = vunpack.c.l.b16 %v815
          %v852 = vunpack.c.h.b16 %v815
          %v853 = vunpack.c.l.b16 %v816
          %v854 = vunpack.c.h.b16 %v816
          %v855 = vunpack.c.l.b16 %v817
          %v856 = vunpack.c.h.b16 %v817
          %v857 = vunpack.c.l.b16 %v818
          %v858 = vunpack.c.h.b16 %v818
          %v859 = vunpack.c.l.b16 %v819
          %v860 = vunpack.c.h.b16 %v819
          %v861 = vunpack.c.l.b16 %v820
          %v862 = vunpack.c.h.b16 %v820
          %v863 = vunpack.c.l.b16 %v821
          %v864 = vunpack.c.h.b16 %v821
          %v865 = vunpack.c.l.b16 %v822
          %v866 = vunpack.c.h.b16 %v822
          %v867 = vunpack.c.l.b16 %v823
          %v868 = vunpack.c.h.b16 %v823
          %v869 = vunpack.c.l.b16 %v824
          %v870 = vunpack.c.h.b16 %v824
          %v871 = vunpack.c.l.b16 %v825
          %v872 = vunpack.c.h.b16 %v825
          %v873 = vunpack.c.l.b16 %v826
          %v874 = vunpack.c.h.b16 %v826
          %v875 = vpack.c.b16 %v843, %v843
          %v876 = vpack.c.b16 %v844, %v844
          %v877 = vpack.c.b16 %v845, %v845
          %v878 = vpack.c.b16 %v846, %v846
          %v879 = vpack.c.b16 %v847, %v847
          %v880 = vpack.c.b16 %v848, %v848
          %v881 = vpack.c.b16 %v849, %v849
          %v882 = vpack.c.b16 %v850, %v850
          %v883 = vpack.c.b16 %v851, %v851
          %v884 = vpack.c.b16 %v852, %v852
          %v885 = vpack.c.b16 %v853, %v853
          %v886 = vpack.c.b16 %v854, %v854
          %v887 = vpack.c.b16 %v855, %v855
          %v888 = vpack.c.b16 %v856, %v856
          %v889 = vpack.c.b16 %v857, %v857
          %v890 = vpack.c.b16 %v858, %v858
          %v891 = vpack.c.b16 %v859, %v859
          %v892 = vpack.c.b16 %v860, %v860
          %v893 = vpack.c.b16 %v861, %v861
          %v894 = vpack.c.b16 %v862, %v862
          %v895 = vpack.c.b16 %v863, %v863
          %v896 = vpack.c.b16 %v864, %v864
          %v897 = vpack.c.b16 %v865, %v865
          %v898 = vpack.c.b16 %v866, %v866
          %v899 = vpack.c.b16 %v867, %v867
          %v900 = vpack.c.b16 %v868, %v868
          %v901 = vpack.c.b16 %v869, %v869
          %v902 = vpack.c.b16 %v870, %v870
          %v903 = vpack.c.b16 %v871, %v871
          %v904 = vpack.c.b16 %v872, %v872
          %v905 = vpack.c.b16 %v873, %v873
          %v906 = vpack.c.b16 %v874, %v874
          %939 = vst [vmem:[%s232] sm:$0xf] %v875
          %940 = vst [vmem:[%s232 + $0x4] sm:$0xf] %v876
          %941 = vst [vmem:[%s232 + $0x8] sm:$0xf] %v877
          %942 = vst [vmem:[%s232 + $0xc] sm:$0xf] %v878
          %943 = vst [vmem:[%s232 + $0x10] sm:$0xf] %v879
          %944 = vst [vmem:[%s232 + $0x14] sm:$0xf] %v880
          %945 = vst [vmem:[%s232 + $0x18] sm:$0xf] %v881
          %946 = vst [vmem:[%s232 + $0x1c] sm:$0xf] %v882
          %947 = vst [vmem:[%s232 + $0x20] sm:$0xf] %v883
          %948 = vst [vmem:[%s232 + $0x24] sm:$0xf] %v884
          %949 = vst [vmem:[%s232 + $0x28] sm:$0xf] %v885
          %950 = vst [vmem:[%s232 + $0x2c] sm:$0xf] %v886
          %951 = vst [vmem:[%s232 + $0x30] sm:$0xf] %v887
          %952 = vst [vmem:[%s232 + $0x34] sm:$0xf] %v888
          %953 = vst [vmem:[%s232 + $0x38] sm:$0xf] %v889
          %954 = vst [vmem:[%s232 + $0x3c] sm:$0xf] %v890
          %955 = vst [vmem:[%s232 + $0x40] sm:$0xf] %v891
          %956 = vst [vmem:[%s232 + $0x44] sm:$0xf] %v892
          %957 = vst [vmem:[%s232 + $0x48] sm:$0xf] %v893
          %958 = vst [vmem:[%s232 + $0x4c] sm:$0xf] %v894
          %959 = vst [vmem:[%s232 + $0x50] sm:$0xf] %v895
          %960 = vst [vmem:[%s232 + $0x54] sm:$0xf] %v896
          %961 = vst [vmem:[%s232 + $0x58] sm:$0xf] %v897
          %962 = vst [vmem:[%s232 + $0x5c] sm:$0xf] %v898
          %963 = vst [vmem:[%s232 + $0x60] sm:$0xf] %v899
          %964 = vst [vmem:[%s232 + $0x64] sm:$0xf] %v900
          %965 = vst [vmem:[%s232 + $0x68] sm:$0xf] %v901
          %966 = vst [vmem:[%s232 + $0x6c] sm:$0xf] %v902
          %967 = vst [vmem:[%s232 + $0x70] sm:$0xf] %v903
          %968 = vst [vmem:[%s232 + $0x74] sm:$0xf] %v904
          %969 = vst [vmem:[%s232 + $0x78] sm:$0xf] %v905
          %970 = vst [vmem:[%s232 + $0x7c] sm:$0xf] %v906
        $region48: #{vgg_forward.4} parent=31 // pred_fallthru
          _
        %s971 = smul.u32 32, %s20
        %p972 = scmp.lt.s32.totalorder %s971, 63
        %s973 = scalar_select %p972, %s971, 63
        %s974 = smul.addr %s973, 4
        %s975 = scalar_lea.vmem %s3, %s974
        // Predicated region
        $region49: #{vgg_forward.4} parent=31 // pred_check
          %p976 = pneg %p121
        $region50: #{vgg_forward.4} parent=31 // pred_check_branch
          %978 = sbr.rel (%p976) target = $region52
        $region51: #{vgg_forward.4} parent=31 // pred_region
          %s979 = smul.u32 32, %s20
        $region52: #{vgg_forward.4} parent=31 // pred_fallthru
          _
      $region32: #{vgg_forward.4} parent=5 // pred_fallthru
        _
      %p980 = scmp.le.s32.totalorder 2, %s11
      // Predicated region
      $region53: #{vgg_forward.4} parent=5 // pred_check
        %p981 = pneg %p980
      $region54: #{vgg_forward.4} parent=5 // pred_check_branch
        %983 = sbr.rel (%p981) target = $region56
      $region55: #{vgg_forward.4} parent=5 // pred_region
        %s984 = ssub.s32 %s11, 2
        // Predicated region
        $region57: #{vgg_forward.4} parent=55 // pred_check
          %p985 = pneg %p127
        $region58: #{vgg_forward.4} parent=55 // pred_check_branch
          %987 = sbr.rel (%p985) target = $region60
        $region59: #{vgg_forward.4} parent=55 // pred_region
          %s988 = smul.u32 32, %s22
          %p989 = scmp.lt.s32.totalorder %s988, 63
          %s990 = scalar_select %p989, %s988, 63
          %s991 = smul.addr %s990, 4
          %s992 = scalar_lea.vmem %s3, %s991
        $region60: #{vgg_forward.4} parent=55 // pred_fallthru
          _
      $region56: #{vgg_forward.4} parent=5 // pred_fallthru
        _
    $region6: #{vgg_forward.4} parent=1 // loop_footer
      %s15 = sadd.s32 1, %s11
    $region7: #{vgg_forward.4} parent=1 // loop_footer_branch
      %10 = sbr.rel target = $region3
    $region8: #{vgg_forward.4} parent=1 // loop_exit
      _
    %993 = vsyncpa [#allocation4], 1
    %s994 = scalar_lea.sflag [#allocation4], 1
    %995 = vsyncpa %s994, 1
    %996 = vsyncpa [#allocation6], 1

// kernel: vgg_forward.5
$region0: #{vgg_forward.5}
  #allocation0 [shape = 'u32[]', space=smem, size = 0x4, offset = 0x4, fixed_abs, tag = 'smem constant byte address 0x4 - core index']
  #allocation1 [shape = 'u32[144,128]{1,0:T(1,128)}', space=vmem, size = 0x12000, scoped, tag = 'internal scratch']
  %s0 = inlined_call_operand.vmem [shape: bf16[128,128], index: 0, kind: input, shape index: {}]
  %s1 = inlined_call_operand.vmem [shape: bf16[128,128], index: 1, kind: input, shape index: {}]
  %s2 = inlined_call_operand.vmem [shape: bf16[128,128], index: 2, kind: input, shape index: {}]
  %s3 = inlined_call_operand.vmem [shape: bf16[128,128], index: 3, kind: input, shape index: {}]
  %s4 = inlined_call_operand.vmem [shape: bf16[128,128], index: 4, kind: output, shape index: {}]
  %s5 = sld [smem:[#allocation0]]
  $region26: #{vgg_forward.5} parent=0
    _
  %s7 = ssub.s32 1, %s5
  %s8 = scalar_select 0, %s7, %s5
  // Predicated region
  $region2: #{vgg_forward.5} parent=0 // pred_check
    _
  $region3: #{vgg_forward.5} parent=0 // pred_check_branch
    %10 = sbr.rel (0) target = $region5
  $region4: #{vgg_forward.5} parent=0 // pred_region
    _
  $region5: #{vgg_forward.5} parent=0 // pred_fallthru
    _
  // Predicated region
  $region6: #{vgg_forward.5} parent=0 // pred_check
    _
  $region7: #{vgg_forward.5} parent=0 // pred_check_branch
    %12 = sbr.rel (0) target = $region9
  $region8: #{vgg_forward.5} parent=0 // pred_region
    _
  $region9: #{vgg_forward.5} parent=0 // pred_fallthru
    _
  // Predicated region
  $region10: #{vgg_forward.5} parent=0 // pred_check
    _
  $region11: #{vgg_forward.5} parent=0 // pred_check_branch
    %14 = sbr.rel (0) target = $region13
  $region12: #{vgg_forward.5} parent=0 // pred_region
    _
  $region13: #{vgg_forward.5} parent=0 // pred_fallthru
    _
  // Predicated region
  $region14: #{vgg_forward.5} parent=0 // pred_check
    _
  $region15: #{vgg_forward.5} parent=0 // pred_check_branch
    %16 = sbr.rel (0) target = $region17
  $region16: #{vgg_forward.5} parent=0 // pred_region
    _
  $region17: #{vgg_forward.5} parent=0 // pred_fallthru
    _
  %v17 = vld [vmem:[%s0] sm:$0xf]
  %v18 = vld [vmem:[%s0 + $0x4] sm:$0xf]
  %v19 = vld [vmem:[%s0 + $0x8] sm:$0xf]
  %v20 = vld [vmem:[%s0 + $0xc] sm:$0xf]
  %v21 = vld [vmem:[%s0 + $0x10] sm:$0xf]
  %v22 = vld [vmem:[%s0 + $0x14] sm:$0xf]
  %v23 = vld [vmem:[%s0 + $0x18] sm:$0xf]
  %v24 = vld [vmem:[%s0 + $0x1c] sm:$0xf]
  %v25 = vld [vmem:[%s0 + $0x20] sm:$0xf]
  %v26 = vld [vmem:[%s0 + $0x24] sm:$0xf]
  %v27 = vld [vmem:[%s0 + $0x28] sm:$0xf]
  %v28 = vld [vmem:[%s0 + $0x2c] sm:$0xf]
  %v29 = vld [vmem:[%s0 + $0x30] sm:$0xf]
  %v30 = vld [vmem:[%s0 + $0x34] sm:$0xf]
  %v31 = vld [vmem:[%s0 + $0x38] sm:$0xf]
  %v32 = vld [vmem:[%s0 + $0x3c] sm:$0xf]
  %v33 = vld [vmem:[%s1] sm:$0xf]
  %v34 = vld [vmem:[%s1 + $0x4] sm:$0xf]
  %v35 = vld [vmem:[%s1 + $0x8] sm:$0xf]
  %v36 = vld [vmem:[%s1 + $0xc] sm:$0xf]
  %v37 = vld [vmem:[%s1 + $0x10] sm:$0xf]
  %v38 = vld [vmem:[%s1 + $0x14] sm:$0xf]
  %v39 = vld [vmem:[%s1 + $0x18] sm:$0xf]
  %v40 = vld [vmem:[%s1 + $0x1c] sm:$0xf]
  %v41 = vld [vmem:[%s1 + $0x20] sm:$0xf]
  %v42 = vld [vmem:[%s1 + $0x24] sm:$0xf]
  %v43 = vld [vmem:[%s1 + $0x28] sm:$0xf]
  %v44 = vld [vmem:[%s1 + $0x2c] sm:$0xf]
  %v45 = vld [vmem:[%s1 + $0x30] sm:$0xf]
  %v46 = vld [vmem:[%s1 + $0x34] sm:$0xf]
  %v47 = vld [vmem:[%s1 + $0x38] sm:$0xf]
  %v48 = vld [vmem:[%s1 + $0x3c] sm:$0xf]
  %v49 = vmax.bf16 %v17, %v33
  %v50 = vmax.bf16 %v18, %v34
  %v51 = vmax.bf16 %v19, %v35
  %v52 = vmax.bf16 %v20, %v36
  %v53 = vmax.bf16 %v21, %v37
  %v54 = vmax.bf16 %v22, %v38
  %v55 = vmax.bf16 %v23, %v39
  %v56 = vmax.bf16 %v24, %v40
  %v57 = vmax.bf16 %v25, %v41
  %v58 = vmax.bf16 %v26, %v42
  %v59 = vmax.bf16 %v27, %v43
  %v60 = vmax.bf16 %v28, %v44
  %v61 = vmax.bf16 %v29, %v45
  %v62 = vmax.bf16 %v30, %v46
  %v63 = vmax.bf16 %v31, %v47
  %v64 = vmax.bf16 %v32, %v48
  %v65 = vld [vmem:[%s2] sm:$0xf]
  %v66 = vld [vmem:[%s2 + $0x4] sm:$0xf]
  %v67 = vld [vmem:[%s2 + $0x8] sm:$0xf]
  %v68 = vld [vmem:[%s2 + $0xc] sm:$0xf]
  %v69 = vld [vmem:[%s2 + $0x10] sm:$0xf]
  %v70 = vld [vmem:[%s2 + $0x14] sm:$0xf]
  %v71 = vld [vmem:[%s2 + $0x18] sm:$0xf]
  %v72 = vld [vmem:[%s2 + $0x1c] sm:$0xf]
  %v73 = vld [vmem:[%s2 + $0x20] sm:$0xf]
  %v74 = vld [vmem:[%s2 + $0x24] sm:$0xf]
  %v75 = vld [vmem:[%s2 + $0x28] sm:$0xf]
  %v76 = vld [vmem:[%s2 + $0x2c] sm:$0xf]
  %v77 = vld [vmem:[%s2 + $0x30] sm:$0xf]
  %v78 = vld [vmem:[%s2 + $0x34] sm:$0xf]
  %v79 = vld [vmem:[%s2 + $0x38] sm:$0xf]
  %v80 = vld [vmem:[%s2 + $0x3c] sm:$0xf]
  %v81 = vld [vmem:[%s3] sm:$0xf]
  %v82 = vld [vmem:[%s3 + $0x4] sm:$0xf]
  %v83 = vld [vmem:[%s3 + $0x8] sm:$0xf]
  %v84 = vld [vmem:[%s3 + $0xc] sm:$0xf]
  %v85 = vld [vmem:[%s3 + $0x10] sm:$0xf]
  %v86 = vld [vmem:[%s3 + $0x14] sm:$0xf]
  %v87 = vld [vmem:[%s3 + $0x18] sm:$0xf]
  %v88 = vld [vmem:[%s3 + $0x1c] sm:$0xf]
  %v89 = vld [vmem:[%s3 + $0x20] sm:$0xf]
  %v90 = vld [vmem:[%s3 + $0x24] sm:$0xf]
  %v91 = vld [vmem:[%s3 + $0x28] sm:$0xf]
  %v92 = vld [vmem:[%s3 + $0x2c] sm:$0xf]
  %v93 = vld [vmem:[%s3 + $0x30] sm:$0xf]
  %v94 = vld [vmem:[%s3 + $0x34] sm:$0xf]
  %v95 = vld [vmem:[%s3 + $0x38] sm:$0xf]
  %v96 = vld [vmem:[%s3 + $0x3c] sm:$0xf]
  %v97 = vmax.bf16 %v65, %v81
  %v98 = vmax.bf16 %v66, %v82
  %v99 = vmax.bf16 %v67, %v83
  %v100 = vmax.bf16 %v68, %v84
  %v101 = vmax.bf16 %v69, %v85
  %v102 = vmax.bf16 %v70, %v86
  %v103 = vmax.bf16 %v71, %v87
  %v104 = vmax.bf16 %v72, %v88
  %v105 = vmax.bf16 %v73, %v89
  %v106 = vmax.bf16 %v74, %v90
  %v107 = vmax.bf16 %v75, %v91
  %v108 = vmax.bf16 %v76, %v92
  %v109 = vmax.bf16 %v77, %v93
  %v110 = vmax.bf16 %v78, %v94
  %v111 = vmax.bf16 %v79, %v95
  %v112 = vmax.bf16 %v80, %v96
  %v113 = vmax.bf16 %v49, %v97
  %v114 = vmax.bf16 %v50, %v98
  %v115 = vmax.bf16 %v51, %v99
  %v116 = vmax.bf16 %v52, %v100
  %v117 = vmax.bf16 %v53, %v101
  %v118 = vmax.bf16 %v54, %v102
  %v119 = vmax.bf16 %v55, %v103
  %v120 = vmax.bf16 %v56, %v104
  %v121 = vmax.bf16 %v57, %v105
  %v122 = vmax.bf16 %v58, %v106
  %v123 = vmax.bf16 %v59, %v107
  %v124 = vmax.bf16 %v60, %v108
  %v125 = vmax.bf16 %v61, %v109
  %v126 = vmax.bf16 %v62, %v110
  %v127 = vmax.bf16 %v63, %v111
  %v128 = vmax.bf16 %v64, %v112
  %129 = vst [vmem:[%s4] sm:$0xf] %v113
  %130 = vst [vmem:[%s4 + $0x4] sm:$0xf] %v114
  %131 = vst [vmem:[%s4 + $0x8] sm:$0xf] %v115
  %132 = vst [vmem:[%s4 + $0xc] sm:$0xf] %v116
  %133 = vst [vmem:[%s4 + $0x10] sm:$0xf] %v117
  %134 = vst [vmem:[%s4 + $0x14] sm:$0xf] %v118
  %135 = vst [vmem:[%s4 + $0x18] sm:$0xf] %v119
  %136 = vst [vmem:[%s4 + $0x1c] sm:$0xf] %v120
  %137 = vst [vmem:[%s4 + $0x20] sm:$0xf] %v121
  %138 = vst [vmem:[%s4 + $0x24] sm:$0xf] %v122
  %139 = vst [vmem:[%s4 + $0x28] sm:$0xf] %v123
  %140 = vst [vmem:[%s4 + $0x2c] sm:$0xf] %v124
  %141 = vst [vmem:[%s4 + $0x30] sm:$0xf] %v125
  %142 = vst [vmem:[%s4 + $0x34] sm:$0xf] %v126
  %143 = vst [vmem:[%s4 + $0x38] sm:$0xf] %v127
  %144 = vst [vmem:[%s4 + $0x3c] sm:$0xf] %v128
  // Predicated region
  $region18: #{vgg_forward.5} parent=0 // pred_check
    _
  $region19: #{vgg_forward.5} parent=0 // pred_check_branch
    %146 = sbr.rel (0) target = $region21
  $region20: #{vgg_forward.5} parent=0 // pred_region
    _
  $region21: #{vgg_forward.5} parent=0 // pred_fallthru
    _
  // Predicated region
  $region22: #{vgg_forward.5} parent=0 // pred_check
    _
  $region23: #{vgg_forward.5} parent=0 // pred_check_branch
    %148 = sbr.rel (0) target = $region25
  $region24: #{vgg_forward.5} parent=0 // pred_region
    _
  $region25: #{vgg_forward.5} parent=0 // pred_fallthru
    _

// kernel: vgg_forward.7
$region0: #{vgg_forward.7}
  #allocation0 [shape = 'u32[]', space=smem, size = 0x4, offset = 0x4, fixed_abs, tag = 'smem constant byte address 0x4 - core index']
  #allocation1 [shape = 'u32[144,128]{1,0:T(1,128)}', space=vmem, size = 0x12000, scoped, tag = 'internal scratch']
  #allocation2 [shape = 'f32[2,128]{1,0:T(2,128)}', space=vmem, size = 0x400, scoped, tag = 'scratch operand']
  %s0 = inlined_call_operand.vmem [shape: bf16[2,1024], index: 0, kind: input, shape index: {}]
  %s1 = inlined_call_operand.vmem [shape: bf16[1024,128], index: 1, kind: input, shape index: {}]
  %s2 = inlined_call_operand.vmem [shape: f32[1,128], index: 2, kind: input, shape index: {}]
  %s3 = inlined_call_operand.hbm [shape: f32[2,128], index: 3, kind: output, shape index: {}]
  %s4 = sld [smem:[#allocation0]]
  $region30: #{vgg_forward.7} parent=0
    _
  %s6 = ssub.s32 1, %s4
  %s7 = scalar_select 0, %s6, %s4
  $region1: #{vgg_forward.7} parent=0
    #allocation3 [shape = 'u8[1024]{0}', space=vmem, size = 0x400, scoped, tag = 'output window, operand 0, single buffered']
    #allocation4 [shape = 's32[1]{0}', space=sflag, size = 0x4, scoped, tag = 'scoped memory for vgg_forward.7']
    %8 = vsyncpa [#allocation4], 0
    // Predicated region
    $region2: #{vgg_forward.7} parent=1 // pred_check
      _
    $region3: #{vgg_forward.7} parent=1 // pred_check_branch
      %10 = sbr.rel (0) target = $region5
    $region4: #{vgg_forward.7} parent=1 // pred_region
      _
    $region5: #{vgg_forward.7} parent=1 // pred_fallthru
      _
    // Predicated region
    $region6: #{vgg_forward.7} parent=1 // pred_check
      _
    $region7: #{vgg_forward.7} parent=1 // pred_check_branch
      %12 = sbr.rel (0) target = $region9
    $region8: #{vgg_forward.7} parent=1 // pred_region
      _
    $region9: #{vgg_forward.7} parent=1 // pred_fallthru
      _
    // Predicated region
    $region10: #{vgg_forward.7} parent=1 // pred_check
      _
    $region11: #{vgg_forward.7} parent=1 // pred_check_branch
      %14 = sbr.rel (0) target = $region13
    $region12: #{vgg_forward.7} parent=1 // pred_region
      _
    $region13: #{vgg_forward.7} parent=1 // pred_fallthru
      _
    %p16 = scmp.eq.s32.totalorder 0, 0
    // Predicated region
    $region14: #{vgg_forward.7} parent=1 // pred_check
      %p17 = pneg %p16
    $region15: #{vgg_forward.7} parent=1 // pred_check_branch
      %19 = sbr.rel (%p17) target = $region17
    $region16: #{vgg_forward.7} parent=1 // pred_region
      %20 = vst [vmem:[#allocation2] sm:$0x3] 0.0
    $region17: #{vgg_forward.7} parent=1 // pred_fallthru
      _
    %v21 = vld [vmem:[#allocation2] sm:$0x3]
    %v22 = vld [vmem:[%s0] sm:$0xff]
    %v23 = vld [vmem:[%s1] sm:$0xf]
    %v24 = vld [vmem:[%s1 + $0x4] sm:$0xf]
    %v25 = vld [vmem:[%s1 + $0x8] sm:$0xf]
    %v26 = vld [vmem:[%s1 + $0xc] sm:$0xf]
    %v27 = vld [vmem:[%s1 + $0x10] sm:$0xf]
    %v28 = vld [vmem:[%s1 + $0x14] sm:$0xf]
    %v29 = vld [vmem:[%s1 + $0x18] sm:$0xf]
    %v30 = vld [vmem:[%s1 + $0x1c] sm:$0xf]
    %v31 = vld [vmem:[%s1 + $0x20] sm:$0xf]
    %v32 = vld [vmem:[%s1 + $0x24] sm:$0xf]
    %v33 = vld [vmem:[%s1 + $0x28] sm:$0xf]
    %v34 = vld [vmem:[%s1 + $0x2c] sm:$0xf]
    %v35 = vld [vmem:[%s1 + $0x30] sm:$0xf]
    %v36 = vld [vmem:[%s1 + $0x34] sm:$0xf]
    %v37 = vld [vmem:[%s1 + $0x38] sm:$0xf]
    %v38 = vld [vmem:[%s1 + $0x3c] sm:$0xf]
    %v39 = vld [vmem:[%s1 + $0x40] sm:$0xf]
    %v40 = vld [vmem:[%s1 + $0x44] sm:$0xf]
    %v41 = vld [vmem:[%s1 + $0x48] sm:$0xf]
    %v42 = vld [vmem:[%s1 + $0x4c] sm:$0xf]
    %v43 = vld [vmem:[%s1 + $0x50] sm:$0xf]
    %v44 = vld [vmem:[%s1 + $0x54] sm:$0xf]
    %v45 = vld [vmem:[%s1 + $0x58] sm:$0xf]
    %v46 = vld [vmem:[%s1 + $0x5c] sm:$0xf]
    %v47 = vld [vmem:[%s1 + $0x60] sm:$0xf]
    %v48 = vld [vmem:[%s1 + $0x64] sm:$0xf]
    %v49 = vld [vmem:[%s1 + $0x68] sm:$0xf]
    %v50 = vld [vmem:[%s1 + $0x6c] sm:$0xf]
    %v51 = vld [vmem:[%s1 + $0x70] sm:$0xf]
    %v52 = vld [vmem:[%s1 + $0x74] sm:$0xf]
    %v53 = vld [vmem:[%s1 + $0x78] sm:$0xf]
    %v54 = vld [vmem:[%s1 + $0x7c] sm:$0xf]
    %v55 = vld [vmem:[%s1 + $0x80] sm:$0xf]
    %v56 = vld [vmem:[%s1 + $0x84] sm:$0xf]
    %v57 = vld [vmem:[%s1 + $0x88] sm:$0xf]
    %v58 = vld [vmem:[%s1 + $0x8c] sm:$0xf]
    %v59 = vld [vmem:[%s1 + $0x90] sm:$0xf]
    %v60 = vld [vmem:[%s1 + $0x94] sm:$0xf]
    %v61 = vld [vmem:[%s1 + $0x98] sm:$0xf]
    %v62 = vld [vmem:[%s1 + $0x9c] sm:$0xf]
    %v63 = vld [vmem:[%s1 + $0xa0] sm:$0xf]
    %v64 = vld [vmem:[%s1 + $0xa4] sm:$0xf]
    %v65 = vld [vmem:[%s1 + $0xa8] sm:$0xf]
    %v66 = vld [vmem:[%s1 + $0xac] sm:$0xf]
    %v67 = vld [vmem:[%s1 + $0xb0] sm:$0xf]
    %v68 = vld [vmem:[%s1 + $0xb4] sm:$0xf]
    %v69 = vld [vmem:[%s1 + $0xb8] sm:$0xf]
    %v70 = vld [vmem:[%s1 + $0xbc] sm:$0xf]
    %v71 = vld [vmem:[%s1 + $0xc0] sm:$0xf]
    %v72 = vld [vmem:[%s1 + $0xc4] sm:$0xf]
    %v73 = vld [vmem:[%s1 + $0xc8] sm:$0xf]
    %v74 = vld [vmem:[%s1 + $0xcc] sm:$0xf]
    %v75 = vld [vmem:[%s1 + $0xd0] sm:$0xf]
    %v76 = vld [vmem:[%s1 + $0xd4] sm:$0xf]
    %v77 = vld [vmem:[%s1 + $0xd8] sm:$0xf]
    %v78 = vld [vmem:[%s1 + $0xdc] sm:$0xf]
    %v79 = vld [vmem:[%s1 + $0xe0] sm:$0xf]
    %v80 = vld [vmem:[%s1 + $0xe4] sm:$0xf]
    %v81 = vld [vmem:[%s1 + $0xe8] sm:$0xf]
    %v82 = vld [vmem:[%s1 + $0xec] sm:$0xf]
    %v83 = vld [vmem:[%s1 + $0xf0] sm:$0xf]
    %v84 = vld [vmem:[%s1 + $0xf4] sm:$0xf]
    %v85 = vld [vmem:[%s1 + $0xf8] sm:$0xf]
    %v86 = vld [vmem:[%s1 + $0xfc] sm:$0xf]
    %v87 = vld [vmem:[%s1 + $0x100] sm:$0xf]
    %v88 = vld [vmem:[%s1 + $0x104] sm:$0xf]
    %v89 = vld [vmem:[%s1 + $0x108] sm:$0xf]
    %v90 = vld [vmem:[%s1 + $0x10c] sm:$0xf]
    %v91 = vld [vmem:[%s1 + $0x110] sm:$0xf]
    %v92 = vld [vmem:[%s1 + $0x114] sm:$0xf]
    %v93 = vld [vmem:[%s1 + $0x118] sm:$0xf]
    %v94 = vld [vmem:[%s1 + $0x11c] sm:$0xf]
    %v95 = vld [vmem:[%s1 + $0x120] sm:$0xf]
    %v96 = vld [vmem:[%s1 + $0x124] sm:$0xf]
    %v97 = vld [vmem:[%s1 + $0x128] sm:$0xf]
    %v98 = vld [vmem:[%s1 + $0x12c] sm:$0xf]
    %v99 = vld [vmem:[%s1 + $0x130] sm:$0xf]
    %v100 = vld [vmem:[%s1 + $0x134] sm:$0xf]
    %v101 = vld [vmem:[%s1 + $0x138] sm:$0xf]
    %v102 = vld [vmem:[%s1 + $0x13c] sm:$0xf]
    %v103 = vld [vmem:[%s1 + $0x140] sm:$0xf]
    %v104 = vld [vmem:[%s1 + $0x144] sm:$0xf]
    %v105 = vld [vmem:[%s1 + $0x148] sm:$0xf]
    %v106 = vld [vmem:[%s1 + $0x14c] sm:$0xf]
    %v107 = vld [vmem:[%s1 + $0x150] sm:$0xf]
    %v108 = vld [vmem:[%s1 + $0x154] sm:$0xf]
    %v109 = vld [vmem:[%s1 + $0x158] sm:$0xf]
    %v110 = vld [vmem:[%s1 + $0x15c] sm:$0xf]
    %v111 = vld [vmem:[%s1 + $0x160] sm:$0xf]
    %v112 = vld [vmem:[%s1 + $0x164] sm:$0xf]
    %v113 = vld [vmem:[%s1 + $0x168] sm:$0xf]
    %v114 = vld [vmem:[%s1 + $0x16c] sm:$0xf]
    %v115 = vld [vmem:[%s1 + $0x170] sm:$0xf]
    %v116 = vld [vmem:[%s1 + $0x174] sm:$0xf]
    %v117 = vld [vmem:[%s1 + $0x178] sm:$0xf]
    %v118 = vld [vmem:[%s1 + $0x17c] sm:$0xf]
    %v119 = vld [vmem:[%s1 + $0x180] sm:$0xf]
    %v120 = vld [vmem:[%s1 + $0x184] sm:$0xf]
    %v121 = vld [vmem:[%s1 + $0x188] sm:$0xf]
    %v122 = vld [vmem:[%s1 + $0x18c] sm:$0xf]
    %v123 = vld [vmem:[%s1 + $0x190] sm:$0xf]
    %v124 = vld [vmem:[%s1 + $0x194] sm:$0xf]
    %v125 = vld [vmem:[%s1 + $0x198] sm:$0xf]
    %v126 = vld [vmem:[%s1 + $0x19c] sm:$0xf]
    %v127 = vld [vmem:[%s1 + $0x1a0] sm:$0xf]
    %v128 = vld [vmem:[%s1 + $0x1a4] sm:$0xf]
    %v129 = vld [vmem:[%s1 + $0x1a8] sm:$0xf]
    %v130 = vld [vmem:[%s1 + $0x1ac] sm:$0xf]
    %v131 = vld [vmem:[%s1 + $0x1b0] sm:$0xf]
    %v132 = vld [vmem:[%s1 + $0x1b4] sm:$0xf]
    %v133 = vld [vmem:[%s1 + $0x1b8] sm:$0xf]
    %v134 = vld [vmem:[%s1 + $0x1bc] sm:$0xf]
    %v135 = vld [vmem:[%s1 + $0x1c0] sm:$0xf]
    %v136 = vld [vmem:[%s1 + $0x1c4] sm:$0xf]
    %v137 = vld [vmem:[%s1 + $0x1c8] sm:$0xf]
    %v138 = vld [vmem:[%s1 + $0x1cc] sm:$0xf]
    %v139 = vld [vmem:[%s1 + $0x1d0] sm:$0xf]
    %v140 = vld [vmem:[%s1 + $0x1d4] sm:$0xf]
    %v141 = vld [vmem:[%s1 + $0x1d8] sm:$0xf]
    %v142 = vld [vmem:[%s1 + $0x1dc] sm:$0xf]
    %v143 = vld [vmem:[%s1 + $0x1e0] sm:$0xf]
    %v144 = vld [vmem:[%s1 + $0x1e4] sm:$0xf]
    %v145 = vld [vmem:[%s1 + $0x1e8] sm:$0xf]
    %v146 = vld [vmem:[%s1 + $0x1ec] sm:$0xf]
    %v147 = vld [vmem:[%s1 + $0x1f0] sm:$0xf]
    %v148 = vld [vmem:[%s1 + $0x1f4] sm:$0xf]
    %v149 = vld [vmem:[%s1 + $0x1f8] sm:$0xf]
    %v150 = vld [vmem:[%s1 + $0x1fc] sm:$0xf]
    %v152 = vcombine.high %v22, %v22
    %v154 = vunpack.c.l.s4 1966171168
    %v155 = vunpack.c.0.s8 %v154
    %v156 = vlaneseq
    %v157 = vshrl.u32 %v156, 7
    %v158 = vsub.s32 %v155, %v157
    %v159 = vrot.slane %v22, %v158
    %v161 = vunpack.c.l.s4 1966171168
    %v162 = vunpack.c.0.s8 %v161
    %v163 = vlaneseq
    %v164 = vshrl.u32 %v163, 7
    %v165 = vsub.s32 %v162, %v164
    %v166 = vrot.slane %v152, %v165
    %v167 = vcombine.high %v159, %v159
    %v168 = vcombine.high %v166, %v166
    %v170 = vunpack.c.l.s4 1966171168
    %v171 = vunpack.c.0.s8 %v170
    %v172 = vlaneseq
    %v173 = vshrl.u32 %v172, 7
    %v174 = vsub.s32 %v171, %v173
    %v175 = vrot.slane %v159, %v174
    %v177 = vunpack.c.l.s4 1966171168
    %v178 = vunpack.c.0.s8 %v177
    %v179 = vlaneseq
    %v180 = vshrl.u32 %v179, 7
    %v181 = vsub.s32 %v178, %v180
    %v182 = vrot.slane %v166, %v181
    %v184 = vunpack.c.l.s4 1966171168
    %v185 = vunpack.c.0.s8 %v184
    %v186 = vlaneseq
    %v187 = vshrl.u32 %v186, 7
    %v188 = vsub.s32 %v185, %v187
    %v189 = vrot.slane %v167, %v188
    %v191 = vunpack.c.l.s4 1966171168
    %v192 = vunpack.c.0.s8 %v191
    %v193 = vlaneseq
    %v194 = vshrl.u32 %v193, 7
    %v195 = vsub.s32 %v192, %v194
    %v196 = vrot.slane %v168, %v195
    %v197 = vcombine.high %v175, %v175
    %v198 = vcombine.high %v182, %v182
    %v199 = vcombine.high %v189, %v189
    %v200 = vcombine.high %v196, %v196
    %v337 = vunpack.c.l.b16 %v23
    %v338 = vunpack.c.l.b16 %v24
    %v339 = vunpack.c.l.b16 %v25
    %v340 = vunpack.c.l.b16 %v26
    %v341 = vunpack.c.l.b16 %v27
    %v342 = vunpack.c.l.b16 %v28
    %v343 = vunpack.c.l.b16 %v29
    %v344 = vunpack.c.l.b16 %v30
    %v345 = vunpack.c.l.b16 %v31
    %v346 = vunpack.c.l.b16 %v32
    %v347 = vunpack.c.l.b16 %v33
    %v348 = vunpack.c.l.b16 %v34
    %v349 = vunpack.c.l.b16 %v35
    %v350 = vunpack.c.l.b16 %v36
    %v351 = vunpack.c.l.b16 %v37
    %v352 = vunpack.c.l.b16 %v38
    %v353 = vunpack.c.l.b16 %v39
    %v354 = vunpack.c.l.b16 %v40
    %v355 = vunpack.c.l.b16 %v41
    %v356 = vunpack.c.l.b16 %v42
    %v357 = vunpack.c.l.b16 %v43
    %v358 = vunpack.c.l.b16 %v44
    %v359 = vunpack.c.l.b16 %v45
    %v360 = vunpack.c.l.b16 %v46
    %v361 = vunpack.c.l.b16 %v47
    %v362 = vunpack.c.l.b16 %v48
    %v363 = vunpack.c.l.b16 %v49
    %v364 = vunpack.c.l.b16 %v50
    %v365 = vunpack.c.l.b16 %v51
    %v366 = vunpack.c.l.b16 %v52
    %v367 = vunpack.c.l.b16 %v53
    %v368 = vunpack.c.l.b16 %v54
    %v369 = vunpack.c.l.b16 %v55
    %v370 = vunpack.c.l.b16 %v56
    %v371 = vunpack.c.l.b16 %v57
    %v372 = vunpack.c.l.b16 %v58
    %v373 = vunpack.c.l.b16 %v59
    %v374 = vunpack.c.l.b16 %v60
    %v375 = vunpack.c.l.b16 %v61
    %v376 = vunpack.c.l.b16 %v62
    %v377 = vunpack.c.l.b16 %v63
    %v378 = vunpack.c.l.b16 %v64
    %v379 = vunpack.c.l.b16 %v65
    %v380 = vunpack.c.l.b16 %v66
    %v381 = vunpack.c.l.b16 %v67
    %v382 = vunpack.c.l.b16 %v68
    %v383 = vunpack.c.l.b16 %v69
    %v384 = vunpack.c.l.b16 %v70
    %v385 = vunpack.c.l.b16 %v71
    %v386 = vunpack.c.l.b16 %v72
    %v387 = vunpack.c.l.b16 %v73
    %v388 = vunpack.c.l.b16 %v74
    %v389 = vunpack.c.l.b16 %v75
    %v390 = vunpack.c.l.b16 %v76
    %v391 = vunpack.c.l.b16 %v77
    %v392 = vunpack.c.l.b16 %v78
    %v393 = vunpack.c.l.b16 %v79
    %v394 = vunpack.c.l.b16 %v80
    %v395 = vunpack.c.l.b16 %v81
    %v396 = vunpack.c.l.b16 %v82
    %v397 = vunpack.c.l.b16 %v83
    %v398 = vunpack.c.l.b16 %v84
    %v399 = vunpack.c.l.b16 %v85
    %v400 = vunpack.c.l.b16 %v86
    %v401 = vunpack.c.l.b16 %v87
    %v402 = vunpack.c.l.b16 %v88
    %v403 = vunpack.c.l.b16 %v89
    %v404 = vunpack.c.l.b16 %v90
    %v405 = vunpack.c.l.b16 %v91
    %v406 = vunpack.c.l.b16 %v92
    %v407 = vunpack.c.l.b16 %v93
    %v408 = vunpack.c.l.b16 %v94
    %v409 = vunpack.c.l.b16 %v95
    %v410 = vunpack.c.l.b16 %v96
    %v411 = vunpack.c.l.b16 %v97
    %v412 = vunpack.c.l.b16 %v98
    %v413 = vunpack.c.l.b16 %v99
    %v414 = vunpack.c.l.b16 %v100
    %v415 = vunpack.c.l.b16 %v101
    %v416 = vunpack.c.l.b16 %v102
    %v417 = vunpack.c.l.b16 %v103
    %v418 = vunpack.c.l.b16 %v104
    %v419 = vunpack.c.l.b16 %v105
    %v420 = vunpack.c.l.b16 %v106
    %v421 = vunpack.c.l.b16 %v107
    %v422 = vunpack.c.l.b16 %v108
    %v423 = vunpack.c.l.b16 %v109
    %v424 = vunpack.c.l.b16 %v110
    %v425 = vunpack.c.l.b16 %v111
    %v426 = vunpack.c.l.b16 %v112
    %v427 = vunpack.c.l.b16 %v113
    %v428 = vunpack.c.l.b16 %v114
    %v429 = vunpack.c.l.b16 %v115
    %v430 = vunpack.c.l.b16 %v116
    %v431 = vunpack.c.l.b16 %v117
    %v432 = vunpack.c.l.b16 %v118
    %v433 = vunpack.c.l.b16 %v119
    %v434 = vunpack.c.l.b16 %v120
    %v435 = vunpack.c.l.b16 %v121
    %v436 = vunpack.c.l.b16 %v122
    %v437 = vunpack.c.l.b16 %v123
    %v438 = vunpack.c.l.b16 %v124
    %v439 = vunpack.c.l.b16 %v125
    %v440 = vunpack.c.l.b16 %v126
    %v441 = vunpack.c.l.b16 %v127
    %v442 = vunpack.c.l.b16 %v128
    %v443 = vunpack.c.l.b16 %v129
    %v444 = vunpack.c.l.b16 %v130
    %v445 = vunpack.c.l.b16 %v131
    %v446 = vunpack.c.l.b16 %v132
    %v447 = vunpack.c.l.b16 %v133
    %v448 = vunpack.c.l.b16 %v134
    %v449 = vunpack.c.l.b16 %v135
    %v450 = vunpack.c.l.b16 %v136
    %v451 = vunpack.c.l.b16 %v137
    %v452 = vunpack.c.l.b16 %v138
    %v453 = vunpack.c.l.b16 %v139
    %v454 = vunpack.c.l.b16 %v140
    %v455 = vunpack.c.l.b16 %v141
    %v456 = vunpack.c.l.b16 %v142
    %v457 = vunpack.c.l.b16 %v143
    %v458 = vunpack.c.l.b16 %v144
    %v459 = vunpack.c.l.b16 %v145
    %v460 = vunpack.c.l.b16 %v146
    %v461 = vunpack.c.l.b16 %v147
    %v462 = vunpack.c.l.b16 %v148
    %v463 = vunpack.c.l.b16 %v149
    %v464 = vunpack.c.l.b16 %v150
    %v465 = vpack.c.b16 %v338, %v337
    %v466 = vpack.c.b16 %v340, %v339
    %v467 = vpack.c.b16 %v342, %v341
    %v468 = vpack.c.b16 %v344, %v343
    %v469 = vpack.c.b16 %v346, %v345
    %v470 = vpack.c.b16 %v348, %v347
    %v471 = vpack.c.b16 %v350, %v349
    %v472 = vpack.c.b16 %v352, %v351
    %v473 = vpack.c.b16 %v354, %v353
    %v474 = vpack.c.b16 %v356, %v355
    %v475 = vpack.c.b16 %v358, %v357
    %v476 = vpack.c.b16 %v360, %v359
    %v477 = vpack.c.b16 %v362, %v361
    %v478 = vpack.c.b16 %v364, %v363
    %v479 = vpack.c.b16 %v366, %v365
    %v480 = vpack.c.b16 %v368, %v367
    %v481 = vpack.c.b16 %v370, %v369
    %v482 = vpack.c.b16 %v372, %v371
    %v483 = vpack.c.b16 %v374, %v373
    %v484 = vpack.c.b16 %v376, %v375
    %v485 = vpack.c.b16 %v378, %v377
    %v486 = vpack.c.b16 %v380, %v379
    %v487 = vpack.c.b16 %v382, %v381
    %v488 = vpack.c.b16 %v384, %v383
    %v489 = vpack.c.b16 %v386, %v385
    %v490 = vpack.c.b16 %v388, %v387
    %v491 = vpack.c.b16 %v390, %v389
    %v492 = vpack.c.b16 %v392, %v391
    %v493 = vpack.c.b16 %v394, %v393
    %v494 = vpack.c.b16 %v396, %v395
    %v495 = vpack.c.b16 %v398, %v397
    %v496 = vpack.c.b16 %v400, %v399
    %v497 = vpack.c.b16 %v402, %v401
    %v498 = vpack.c.b16 %v404, %v403
    %v499 = vpack.c.b16 %v406, %v405
    %v500 = vpack.c.b16 %v408, %v407
    %v501 = vpack.c.b16 %v410, %v409
    %v502 = vpack.c.b16 %v412, %v411
    %v503 = vpack.c.b16 %v414, %v413
    %v504 = vpack.c.b16 %v416, %v415
    %v505 = vpack.c.b16 %v418, %v417
    %v506 = vpack.c.b16 %v420, %v419
    %v507 = vpack.c.b16 %v422, %v421
    %v508 = vpack.c.b16 %v424, %v423
    %v509 = vpack.c.b16 %v426, %v425
    %v510 = vpack.c.b16 %v428, %v427
    %v511 = vpack.c.b16 %v430, %v429
    %v512 = vpack.c.b16 %v432, %v431
    %v513 = vpack.c.b16 %v434, %v433
    %v514 = vpack.c.b16 %v436, %v435
    %v515 = vpack.c.b16 %v438, %v437
    %v516 = vpack.c.b16 %v440, %v439
    %v517 = vpack.c.b16 %v442, %v441
    %v518 = vpack.c.b16 %v444, %v443
    %v519 = vpack.c.b16 %v446, %v445
    %v520 = vpack.c.b16 %v448, %v447
    %v521 = vpack.c.b16 %v450, %v449
    %v522 = vpack.c.b16 %v452, %v451
    %v523 = vpack.c.b16 %v454, %v453
    %v524 = vpack.c.b16 %v456, %v455
    %v525 = vpack.c.b16 %v458, %v457
    %v526 = vpack.c.b16 %v460, %v459
    %v527 = vpack.c.b16 %v462, %v461
    %v528 = vpack.c.b16 %v464, %v463
    %593 = vmatprep.subr.bf16.mxu0 0
    %594 = vmatpush1.bf16.msra.mxu0 %v465
    %595 = vmatprep.subr.bf16.mxu0 0
    %596 = vmatpush1.bf16.msra.mxu0 %v466
    %597 = vmatprep.subr.bf16.mxu0 0
    %598 = vmatpush1.bf16.msra.mxu0 %v467
    %599 = vmatprep.subr.bf16.mxu0 0
    %600 = vmatpush1.bf16.msra.mxu0 %v468
    %601 = vmatprep.subr.bf16.mxu0 0
    %602 = vmatpush1.bf16.msra.mxu0 %v469
    %603 = vmatprep.subr.bf16.mxu0 0
    %604 = vmatpush1.bf16.msra.mxu0 %v470
    %605 = vmatprep.subr.bf16.mxu0 0
    %606 = vmatpush1.bf16.msra.mxu0 %v471
    %607 = vmatprep.subr.bf16.mxu0 0
    %608 = vmatpush1.bf16.msra.mxu0 %v472
    %609 = vmatprep.subr.bf16.mxu0 0
    %610 = vmatpush1.bf16.msra.mxu0 %v473
    %611 = vmatprep.subr.bf16.mxu0 0
    %612 = vmatpush1.bf16.msra.mxu0 %v474
    %613 = vmatprep.subr.bf16.mxu0 0
    %614 = vmatpush1.bf16.msra.mxu0 %v475
    %615 = vmatprep.subr.bf16.mxu0 0
    %616 = vmatpush1.bf16.msra.mxu0 %v476
    %617 = vmatprep.subr.bf16.mxu0 0
    %618 = vmatpush1.bf16.msra.mxu0 %v477
    %619 = vmatprep.subr.bf16.mxu0 0
    %620 = vmatpush1.bf16.msra.mxu0 %v478
    %621 = vmatprep.subr.bf16.mxu0 0
    %622 = vmatpush1.bf16.msra.mxu0 %v479
    %623 = vmatprep.subr.bf16.mxu0 0
    %624 = vmatpush1.bf16.msra.mxu0 %v480
    %625 = vmatprep.mubr.bf16.mxu0 %v189
    %626 = vmatmul.mubr.bf16.gmra.mrb[0].mxu0 %v175
    %v627 = vpop.f32.mrb[0].mxu0
    %v628 = vadd.f32 0.0, %v627
    %v629 = vpop.f32.mrb[0].mxu0
    %v630 = vpop.f32.mrb[0].mxu0
    %v631 = vpop.f32.mrb[0].mxu0
    %632 = vdwg.mxu0
    %633 = vmatprep.subr.bf16.mxu0 0
    %634 = vmatpush1.bf16.msra.mxu0 %v481
    %635 = vmatprep.subr.bf16.mxu0 0
    %636 = vmatpush1.bf16.msra.mxu0 %v482
    %637 = vmatprep.subr.bf16.mxu0 0
    %638 = vmatpush1.bf16.msra.mxu0 %v483
    %639 = vmatprep.subr.bf16.mxu0 0
    %640 = vmatpush1.bf16.msra.mxu0 %v484
    %641 = vmatprep.subr.bf16.mxu0 0
    %642 = vmatpush1.bf16.msra.mxu0 %v485
    %643 = vmatprep.subr.bf16.mxu0 0
    %644 = vmatpush1.bf16.msra.mxu0 %v486
    %645 = vmatprep.subr.bf16.mxu0 0
    %646 = vmatpush1.bf16.msra.mxu0 %v487
    %647 = vmatprep.subr.bf16.mxu0 0
    %648 = vmatpush1.bf16.msra.mxu0 %v488
    %649 = vmatprep.subr.bf16.mxu0 0
    %650 = vmatpush1.bf16.msra.mxu0 %v489
    %651 = vmatprep.subr.bf16.mxu0 0
    %652 = vmatpush1.bf16.msra.mxu0 %v490
    %653 = vmatprep.subr.bf16.mxu0 0
    %654 = vmatpush1.bf16.msra.mxu0 %v491
    %655 = vmatprep.subr.bf16.mxu0 0
    %656 = vmatpush1.bf16.msra.mxu0 %v492
    %657 = vmatprep.subr.bf16.mxu0 0
    %658 = vmatpush1.bf16.msra.mxu0 %v493
    %659 = vmatprep.subr.bf16.mxu0 0
    %660 = vmatpush1.bf16.msra.mxu0 %v494
    %661 = vmatprep.subr.bf16.mxu0 0
    %662 = vmatpush1.bf16.msra.mxu0 %v495
    %663 = vmatprep.subr.bf16.mxu0 0
    %664 = vmatpush1.bf16.msra.mxu0 %v496
    %665 = vmatprep.mubr.bf16.mxu0 %v199
    %666 = vmatmul.mubr.bf16.gmra.mrb[0].mxu0 %v197
    %v667 = vpop.f32.mrb[0].mxu0
    %v668 = vadd.f32 %v628, %v667
    %v669 = vpop.f32.mrb[0].mxu0
    %v670 = vpop.f32.mrb[0].mxu0
    %v671 = vpop.f32.mrb[0].mxu0
    %672 = vdwg.mxu0
    %673 = vmatprep.subr.bf16.mxu0 0
    %674 = vmatpush1.bf16.msra.mxu0 %v497
    %675 = vmatprep.subr.bf16.mxu0 0
    %676 = vmatpush1.bf16.msra.mxu0 %v498
    %677 = vmatprep.subr.bf16.mxu0 0
    %678 = vmatpush1.bf16.msra.mxu0 %v499
    %679 = vmatprep.subr.bf16.mxu0 0
    %680 = vmatpush1.bf16.msra.mxu0 %v500
    %681 = vmatprep.subr.bf16.mxu0 0
    %682 = vmatpush1.bf16.msra.mxu0 %v501
    %683 = vmatprep.subr.bf16.mxu0 0
    %684 = vmatpush1.bf16.msra.mxu0 %v502
    %685 = vmatprep.subr.bf16.mxu0 0
    %686 = vmatpush1.bf16.msra.mxu0 %v503
    %687 = vmatprep.subr.bf16.mxu0 0
    %688 = vmatpush1.bf16.msra.mxu0 %v504
    %689 = vmatprep.subr.bf16.mxu0 0
    %690 = vmatpush1.bf16.msra.mxu0 %v505
    %691 = vmatprep.subr.bf16.mxu0 0
    %692 = vmatpush1.bf16.msra.mxu0 %v506
    %693 = vmatprep.subr.bf16.mxu0 0
    %694 = vmatpush1.bf16.msra.mxu0 %v507
    %695 = vmatprep.subr.bf16.mxu0 0
    %696 = vmatpush1.bf16.msra.mxu0 %v508
    %697 = vmatprep.subr.bf16.mxu0 0
    %698 = vmatpush1.bf16.msra.mxu0 %v509
    %699 = vmatprep.subr.bf16.mxu0 0
    %700 = vmatpush1.bf16.msra.mxu0 %v510
    %701 = vmatprep.subr.bf16.mxu0 0
    %702 = vmatpush1.bf16.msra.mxu0 %v511
    %703 = vmatprep.subr.bf16.mxu0 0
    %704 = vmatpush1.bf16.msra.mxu0 %v512
    %705 = vmatprep.mubr.bf16.mxu0 %v196
    %706 = vmatmul.mubr.bf16.gmra.mrb[0].mxu0 %v182
    %v707 = vpop.f32.mrb[0].mxu0
    %v708 = vadd.f32 %v668, %v707
    %v709 = vpop.f32.mrb[0].mxu0
    %v710 = vpop.f32.mrb[0].mxu0
    %v711 = vpop.f32.mrb[0].mxu0
    %712 = vdwg.mxu0
    %713 = vmatprep.subr.bf16.mxu0 0
    %714 = vmatpush1.bf16.msra.mxu0 %v513
    %715 = vmatprep.subr.bf16.mxu0 0
    %716 = vmatpush1.bf16.msra.mxu0 %v514
    %717 = vmatprep.subr.bf16.mxu0 0
    %718 = vmatpush1.bf16.msra.mxu0 %v515
    %719 = vmatprep.subr.bf16.mxu0 0
    %720 = vmatpush1.bf16.msra.mxu0 %v516
    %721 = vmatprep.subr.bf16.mxu0 0
    %722 = vmatpush1.bf16.msra.mxu0 %v517
    %723 = vmatprep.subr.bf16.mxu0 0
    %724 = vmatpush1.bf16.msra.mxu0 %v518
    %725 = vmatprep.subr.bf16.mxu0 0
    %726 = vmatpush1.bf16.msra.mxu0 %v519
    %727 = vmatprep.subr.bf16.mxu0 0
    %728 = vmatpush1.bf16.msra.mxu0 %v520
    %729 = vmatprep.subr.bf16.mxu0 0
    %730 = vmatpush1.bf16.msra.mxu0 %v521
    %731 = vmatprep.subr.bf16.mxu0 0
    %732 = vmatpush1.bf16.msra.mxu0 %v522
    %733 = vmatprep.subr.bf16.mxu0 0
    %734 = vmatpush1.bf16.msra.mxu0 %v523
    %735 = vmatprep.subr.bf16.mxu0 0
    %736 = vmatpush1.bf16.msra.mxu0 %v524
    %737 = vmatprep.subr.bf16.mxu0 0
    %738 = vmatpush1.bf16.msra.mxu0 %v525
    %739 = vmatprep.subr.bf16.mxu0 0
    %740 = vmatpush1.bf16.msra.mxu0 %v526
    %741 = vmatprep.subr.bf16.mxu0 0
    %742 = vmatpush1.bf16.msra.mxu0 %v527
    %743 = vmatprep.subr.bf16.mxu0 0
    %744 = vmatpush1.bf16.msra.mxu0 %v528
    %745 = vmatprep.mubr.bf16.mxu0 %v200
    %746 = vmatmul.mubr.bf16.gmra.mrb[0].mxu0 %v198
    %v747 = vpop.f32.mrb[0].mxu0
    %v748 = vadd.f32 %v708, %v747
    %v749 = vpop.f32.mrb[0].mxu0
    %v750 = vpop.f32.mrb[0].mxu0
    %v751 = vpop.f32.mrb[0].mxu0
    %752 = vdwg.mxu0
    %v753 = vadd.f32 %v21, %v748
    %754 = vst [vmem:[#allocation2] sm:$0x3] %v753
    // Predicated region
    $region18: #{vgg_forward.7} parent=1 // pred_check
      %p755 = pneg %p16
    $region19: #{vgg_forward.7} parent=1 // pred_check_branch
      %757 = sbr.rel (%p755) target = $region21
    $region20: #{vgg_forward.7} parent=1 // pred_region
      %v758 = vld [vmem:[#allocation2] sm:$0x3]
      %v759 = vld [vmem:[%s2] sm:$0x1]
      %v761 = vlaneseq
      %v762 = vshrl.u32 %v761, 7
      %v763 = vsub.s32 0, %v762
      %v764 = vrot.slane %v759, %v763
      %v766 = vadd.f32 %v758, %v764
      %767 = vst [vmem:[#allocation3] sm:$0x3] %v766
    $region21: #{vgg_forward.7} parent=1 // pred_fallthru
      _
    // Predicated region
    $region22: #{vgg_forward.7} parent=1 // pred_check
      _
    $region23: #{vgg_forward.7} parent=1 // pred_check_branch
      %769 = sbr.rel (0) target = $region25
    $region24: #{vgg_forward.7} parent=1 // pred_region
      %s771 = ssub.s32 32, 32
      %772 = vsyncadd [#allocation4], %s771
      %s774 = sshll.u32 [#allocation3], 4
      %s775 = int_to_ptr.vmem [resolvable:$true] %s774
      %777 = dma.vmem_to_hbm [thread:$0]  %s775, 32, %s3, [#allocation4]
    $region25: #{vgg_forward.7} parent=1 // pred_fallthru
      _
    // Predicated region
    $region26: #{vgg_forward.7} parent=1 // pred_check
      _
    $region27: #{vgg_forward.7} parent=1 // pred_check_branch
      %779 = sbr.rel (0) target = $region29
    $region28: #{vgg_forward.7} parent=1 // pred_region
      %780 = dma.done [#allocation4], 32
    $region29: #{vgg_forward.7} parent=1 // pred_fallthru
      _
    %781 = vsyncpa [#allocation4], 1

// kernel: vgg_forward.6
$region0: #{vgg_forward.6}
  #allocation0 [shape = 'u32[]', space=smem, size = 0x4, offset = 0x4, fixed_abs, tag = 'smem constant byte address 0x4 - core index']
  #allocation1 [shape = 'u32[144,128]{1,0:T(1,128)}', space=vmem, size = 0x12000, scoped, tag = 'internal scratch']
  #allocation2 [shape = 'f32[2,1024]{1,0:T(2,128)}', space=vmem, size = 0x2000, scoped, tag = 'scratch operand']
  %s0 = inlined_call_operand.vmem [shape: bf16[2,8192], index: 0, kind: input, shape index: {}]
  %s1 = inlined_call_operand.hbm [shape: bf16[8192,1024], index: 1, kind: input, shape index: {}]
  %s2 = inlined_call_operand.hbm [shape: f32[1,1024], index: 2, kind: input, shape index: {}]
  %s3 = inlined_call_operand.vmem [shape: bf16[2,1024], index: 3, kind: output, shape index: {}]
  %s4 = sld [smem:[#allocation0]]
  $region61: #{vgg_forward.6} parent=0
    _
  %s6 = ssub.s32 1, %s4
  %s7 = scalar_select 0, %s6, %s4
  $region1: #{vgg_forward.6} parent=0
    #allocation3 [shape = 'u8[8388608]{0}', space=vmem, size = 0x800000, scoped, tag = 'input window, operand 1']
    #allocation4 [shape = 's32[2]{0}', space=sflag, size = 0x8, scoped, tag = 'scoped memory for vgg_forward.6']
    #allocation5 [shape = 'u8[4096]{0}', space=vmem, size = 0x1000, scoped, tag = 'input window, operand 2, single buffered']
    #allocation6 [shape = 's32[1]{0}', space=sflag, size = 0x4, scoped, tag = 'scoped memory for vgg_forward.6']
    %8 = vsyncpa [#allocation4], 0
    %s9 = scalar_lea.sflag [#allocation4], 1
    %10 = vsyncpa %s9, 0
    %11 = vsyncpa [#allocation6], 0
    loop: start=0, step=1, limit=6
    $region2: #{vgg_forward.6} parent=1 // loop_pre_header
      _
    $region3: #{vgg_forward.6} parent=1 // loop_header
      %s13 = sphi 0, %s17
      %p14 = scmp.ge.s32.totalorder %s13, 6
      %s20 = sphi 0, %s32
      %s21 = sphi 0, %s28
      %s22 = sphi 0, %s20
      %s23 = sphi 0, %s21
      %s24 = sphi 0, %s22
      %s25 = sphi 0, %s23
      %s37 = sphi 0, %s39
      %s40 = sphi 0, %s37
      %s41 = sphi 0, %s40
      %s57 = sphi 0, %s41
      %s63 = sphi 0, %s65
      %s66 = sphi 0, %s63
      %s67 = sphi 0, %s66
      %s83 = sphi 0, %s67
      %s87 = sphi 0, %s87
      %s89 = sphi 0, %s87
      %s90 = sphi 0, %s89
      %s104 = sphi 0, %s90
      %s110 = sphi 0, %s112
      %s113 = sphi 0, %s110
      %s114 = sphi 0, %s113
      %s130 = sphi 0, %s114
    $region4: #{vgg_forward.6} parent=1 // loop_header_branch
      %16 = sbr.rel (%p14) target = $region8
    $region5: #{vgg_forward.6} parent=1 // loop_body
      %s18 = ssub.s32 %s13, 1
      %s19 = ssub.s32 %s13, 2
      %s26 = sadd.s32 1, %s21
      %p27 = scmp.ge.s32.totalorder %s26, 4
      %s28 = scalar_select %p27, 0, %s26
      %s29 = sadd.s32 1, %s20
      %s30 = scalar_select %p27, %s29, %s20
      %p31 = scmp.ge.s32.totalorder %s30, 1
      %s32 = scalar_select %p31, 0, %s30
      %s33 = ssub.s32 %s20, %s32
      %s34 = ssub.s32 %s21, %s28
      %s35 = sor.u32 %s33, %s34
      %p36 = scmp.eq.s32.totalorder %s35, 0
      %s38 = sadd.s32 %s37, 1
      %s39 = scalar_select %p36, %s37, %s38
      %p42 = pneg %p36
      %p43 = scmp.eq.s32.totalorder %s13, 3
      %p44 = por %p42, %p43
      %p45 = scmp.ne.s32.totalorder %s37, %s40
      %p46 = scmp.eq.s32.totalorder %s13, 0
      %p47 = por %p45, %p46
      %p48 = scmp.ne.s32.totalorder %s37, %s40
      %p49 = scmp.eq.s32.totalorder %s18, 3
      %p50 = por %p48, %p49
      %p51 = scmp.ne.s32.totalorder %s40, %s41
      %p52 = scmp.eq.s32.totalorder %s18, 0
      %p53 = por %p51, %p52
      %p54 = scmp.ne.s32.totalorder %s40, %s41
      %p55 = scmp.eq.s32.totalorder %s19, 3
      %p56 = por %p54, %p55
      %p58 = scmp.ne.s32.totalorder %s41, %s57
      %p59 = scmp.eq.s32.totalorder %s19, 0
      %p60 = por %p58, %p59
      %s61 = ssub.s32 %s21, %s28
      %p62 = scmp.eq.s32.totalorder %s61, 0
      %s64 = sadd.s32 %s63, 1
      %s65 = scalar_select %p62, %s63, %s64
      %p68 = pneg %p62
      %p69 = scmp.eq.s32.totalorder %s13, 3
      %p70 = por %p68, %p69
      %p71 = scmp.ne.s32.totalorder %s63, %s66
      %p72 = scmp.eq.s32.totalorder %s13, 0
      %p73 = por %p71, %p72
      %p74 = scmp.ne.s32.totalorder %s63, %s66
      %p75 = scmp.eq.s32.totalorder %s18, 3
      %p76 = por %p74, %p75
      %p77 = scmp.ne.s32.totalorder %s66, %s67
      %p78 = scmp.eq.s32.totalorder %s18, 0
      %p79 = por %p77, %p78
      %p80 = scmp.ne.s32.totalorder %s66, %s67
      %p81 = scmp.eq.s32.totalorder %s19, 3
      %p82 = por %p80, %p81
      %p84 = scmp.ne.s32.totalorder %s67, %s83
      %p85 = scmp.eq.s32.totalorder %s19, 0
      %p86 = por %p84, %p85
      %s88 = sadd.s32 %s87, 1
      %p91 = scmp.eq.s32.totalorder %s13, 3
      %p92 = scmp.ne.s32.totalorder %s87, %s89
      %p93 = scmp.eq.s32.totalorder %s13, 0
      %p94 = por %p92, %p93
      %p95 = scmp.ne.s32.totalorder %s87, %s89
      %p96 = scmp.eq.s32.totalorder %s18, 3
      %p97 = por %p95, %p96
      %p98 = scmp.ne.s32.totalorder %s89, %s90
      %p99 = scmp.eq.s32.totalorder %s18, 0
      %p100 = por %p98, %p99
      %p101 = scmp.ne.s32.totalorder %s89, %s90
      %p102 = scmp.eq.s32.totalorder %s19, 3
      %p103 = por %p101, %p102
      %p105 = scmp.ne.s32.totalorder %s90, %s104
      %p106 = scmp.eq.s32.totalorder %s19, 0
      %p107 = por %p105, %p106
      %s108 = ssub.s32 %s20, %s32
      %p109 = scmp.eq.s32.totalorder %s108, 0
      %s111 = sadd.s32 %s110, 1
      %s112 = scalar_select %p109, %s110, %s111
      %p115 = pneg %p109
      %p116 = scmp.eq.s32.totalorder %s13, 3
      %p117 = por %p115, %p116
      %p118 = scmp.ne.s32.totalorder %s110, %s113
      %p119 = scmp.eq.s32.totalorder %s13, 0
      %p120 = por %p118, %p119
      %p121 = scmp.ne.s32.totalorder %s110, %s113
      %p122 = scmp.eq.s32.totalorder %s18, 3
      %p123 = por %p121, %p122
      %p124 = scmp.ne.s32.totalorder %s113, %s114
      %p125 = scmp.eq.s32.totalorder %s18, 0
      %p126 = por %p124, %p125
      %p127 = scmp.ne.s32.totalorder %s113, %s114
      %p128 = scmp.eq.s32.totalorder %s19, 3
      %p129 = por %p127, %p128
      %p131 = scmp.ne.s32.totalorder %s114, %s130
      %p132 = scmp.eq.s32.totalorder %s19, 0
      %p133 = por %p131, %p132
      %p134 = scmp.le.s32.totalorder 1, %s13
      %p135 = scmp.lt.s32.totalorder %s13, 5
      %p136 = pnand %p134, %p135
      %p137 = pneg %p136
      // Predicated region
      $region9: #{vgg_forward.6} parent=5 // pred_check
        _
      $region10: #{vgg_forward.6} parent=5 // pred_check_branch
        %139 = sbr.rel (%p136) target = $region12
      $region11: #{vgg_forward.6} parent=5 // pred_region
        %s140 = ssub.s32 %s13, 1
        // Predicated region
        $region13: #{vgg_forward.6} parent=11 // pred_check
          %p141 = pneg %p100
        $region14: #{vgg_forward.6} parent=11 // pred_check_branch
          %143 = sbr.rel (%p141) target = $region16
        $region15: #{vgg_forward.6} parent=11 // pred_region
          %s145 = ssub.s32 128, 128
          %146 = vsyncadd [#allocation6], %s145
          %s148 = sshll.u32 [#allocation5], 4
          %s149 = int_to_ptr.vmem [resolvable:$true] %s148
          %151 = dma.hbm_to_vmem [thread:$0]  %s2, 128, %s149, [#allocation6]
        $region16: #{vgg_forward.6} parent=11 // pred_fallthru
          _
      $region12: #{vgg_forward.6} parent=5 // pred_fallthru
        _
      %p152 = scmp.lt.s32.totalorder %s13, 4
      // Predicated region
      $region17: #{vgg_forward.6} parent=5 // pred_check
        %p153 = pneg %p152
      $region18: #{vgg_forward.6} parent=5 // pred_check_branch
        %155 = sbr.rel (%p153) target = $region20
      $region19: #{vgg_forward.6} parent=5 // pred_region
        // Predicated region
        $region21: #{vgg_forward.6} parent=19 // pred_check
          %p156 = pneg %p47
        $region22: #{vgg_forward.6} parent=19 // pred_check_branch
          %158 = sbr.rel (%p156) target = $region24
        $region23: #{vgg_forward.6} parent=19 // pred_region
          %s159 = smul.u32 16, %s21
          %p160 = scmp.lt.s32.totalorder %s20, 0
          %s161 = scalar_select %p160, %s20, 0
          %p162 = scmp.lt.s32.totalorder %s159, 63
          %s163 = scalar_select %p162, %s159, 63
          %s164 = smul.addr %s161, 64
          %s165 = sadd.s32 %s163, %s164
          %s166 = scalar_lea.vmem %s0, %s165
          %s167 = smul.u32 16, %s21
        $region24: #{vgg_forward.6} parent=19 // pred_fallthru
          _
        // Predicated region
        $region25: #{vgg_forward.6} parent=19 // pred_check
          %p168 = pneg %p73
        $region26: #{vgg_forward.6} parent=19 // pred_check_branch
          %170 = sbr.rel (%p168) target = $region28
        $region27: #{vgg_forward.6} parent=19 // pred_region
          %s171 = sand.u32 %s63, 1
          %s172 = scalar_lea.sflag [#allocation4], %s171
          %s173 = sand.u32 %s63, 1
          %s174 = smul.addr %s173, 8192
          %s175 = scalar_lea.vmem [#allocation3], %s174
          %s176 = smul.u32 256, %s21
          %s178 = ssub.s32 131072, 131072
          %179 = vsyncadd %s172, %s178
          %s180 = smul.addr %s176, 8
          %s181 = smul.addr %s180, 64
          %s182 = scalar_lea.hbm %s1, %s181
          %s183 = sshll.u32 %s175, 4
          %s184 = int_to_ptr.vmem [resolvable:$true] %s183
          %189 = dma.hbm_to_vmem [thread:$0]  %s182, 131072, %s184, %s172, 512, 512, 32
        $region28: #{vgg_forward.6} parent=19 // pred_fallthru
          _
      $region20: #{vgg_forward.6} parent=5 // pred_fallthru
        _
      %p190 = scmp.le.s32.totalorder 1, %s13
      %p191 = scmp.lt.s32.totalorder %s13, 5
      %p192 = pnand %p190, %p191
      %p193 = pneg %p192
      // Predicated region
      $region29: #{vgg_forward.6} parent=5 // pred_check
        _
      $region30: #{vgg_forward.6} parent=5 // pred_check_branch
        %195 = sbr.rel (%p192) target = $region32
      $region31: #{vgg_forward.6} parent=5 // pred_region
        %s196 = ssub.s32 %s13, 1
        %s197 = sand.u32 %s66, 1
        %s198 = scalar_lea.sflag [#allocation4], %s197
        %s199 = sand.u32 %s66, 1
        %s200 = smul.addr %s199, 8192
        %s201 = scalar_lea.vmem [#allocation3], %s200
        // Predicated region
        $region33: #{vgg_forward.6} parent=31 // pred_check
          %p202 = pneg %p79
        $region34: #{vgg_forward.6} parent=31 // pred_check_branch
          %204 = sbr.rel (%p202) target = $region36
        $region35: #{vgg_forward.6} parent=31 // pred_region
          %205 = dma.done %s198, 131072
        $region36: #{vgg_forward.6} parent=31 // pred_fallthru
          _
        // Predicated region
        $region37: #{vgg_forward.6} parent=31 // pred_check
          %p206 = pneg %p100
        $region38: #{vgg_forward.6} parent=31 // pred_check_branch
          %208 = sbr.rel (%p206) target = $region40
        $region39: #{vgg_forward.6} parent=31 // pred_region
          %209 = dma.done [#allocation6], 128
        $region40: #{vgg_forward.6} parent=31 // pred_fallthru
          _
        %s210 = smul.u32 16, %s23
        %p211 = scmp.lt.s32.totalorder %s22, 0
        %s212 = scalar_select %p211, %s22, 0
        %p213 = scmp.lt.s32.totalorder %s210, 63
        %s214 = scalar_select %p213, %s210, 63
        %s215 = smul.addr %s212, 64
        %s216 = sadd.s32 %s214, %s215
        %s217 = scalar_lea.vmem %s0, %s216
        %p218 = pneg %p53
        %p219 = pneg %p50
        %s220 = sand.u32 %s66, 1
        %s221 = scalar_lea.sflag [#allocation4], %s220
        %s222 = sand.u32 %s66, 1
        %s223 = smul.addr %s222, 8192
        %s224 = scalar_lea.vmem [#allocation3], %s223
        %p225 = pneg %p79
        %p226 = pneg %p76
        %p227 = pneg %p100
        %p228 = pneg %p97
        %p229 = pneg %p126
        %p230 = pneg %p123
        %p231 = scmp.lt.s32.totalorder %s22, 0
        %s232 = scalar_select %p231, %s22, 0
        %s233 = smul.addr %s232, 8
        %s234 = scalar_lea.vmem %s3, %s233
        %s235 = smul.u32 16, %s23
        %p236 = scmp.lt.s32.totalorder %s22, 0
        %s237 = scalar_select %p236, %s22, 0
        %p238 = scmp.lt.s32.totalorder %s235, 63
        %s239 = scalar_select %p238, %s235, 63
        %s240 = smul.addr %s237, 64
        %s241 = sadd.s32 %s239, %s240
        %s242 = scalar_lea.vmem %s0, %s241
        %s243 = smul.u32 16, %s23
        %s244 = smul.u32 256, %s23
        %p245 = scmp.lt.s32.totalorder %s22, 0
        %s246 = scalar_select %p245, %s22, 0
        %s247 = smul.addr %s246, 8
        %s248 = scalar_lea.vmem %s3, %s247
        %p249 = scmp.eq.s32.totalorder %s23, 0
        // Predicated region
        $region41: #{vgg_forward.6} parent=31 // pred_check
          %p250 = pneg %p249
        $region42: #{vgg_forward.6} parent=31 // pred_check_branch
          %252 = sbr.rel (%p250) target = $region44
        $region43: #{vgg_forward.6} parent=31 // pred_region
          %253 = vst [vmem:[#allocation2] sm:$0xff] 0.0
          %254 = vst [vmem:[#allocation2 + $0x8] sm:$0xff] 0.0
        $region44: #{vgg_forward.6} parent=31 // pred_fallthru
          _
        %v255 = vld [vmem:[#allocation2] sm:$0xff]
        %v256 = vld [vmem:[#allocation2 + $0x8] sm:$0xff]
        %v257 = vld [vmem:[%s242] sm:$0xff]
        %v258 = vld [vmem:[%s242 + $0x8] sm:$0xff]
        %v259 = vld [vmem:[%s201] sm:$0xff]
        %v260 = vld [vmem:[%s201 + $0x8] sm:$0xff]
        %v261 = vld [vmem:[%s201 + $0x10] sm:$0xff]
        %v262 = vld [vmem:[%s201 + $0x18] sm:$0xff]
        %v263 = vld [vmem:[%s201 + $0x20] sm:$0xff]
        %v264 = vld [vmem:[%s201 + $0x28] sm:$0xff]
        %v265 = vld [vmem:[%s201 + $0x30] sm:$0xff]
        %v266 = vld [vmem:[%s201 + $0x38] sm:$0xff]
        %v267 = vld [vmem:[%s201 + $0x40] sm:$0xff]
        %v268 = vld [vmem:[%s201 + $0x48] sm:$0xff]
        %v269 = vld [vmem:[%s201 + $0x50] sm:$0xff]
        %v270 = vld [vmem:[%s201 + $0x58] sm:$0xff]
        %v271 = vld [vmem:[%s201 + $0x60] sm:$0xff]
        %v272 = vld [vmem:[%s201 + $0x68] sm:$0xff]
        %v273 = vld [vmem:[%s201 + $0x70] sm:$0xff]
        %v274 = vld [vmem:[%s201 + $0x78] sm:$0xff]
        %v275 = vld [vmem:[%s201 + $0x80] sm:$0xff]
        %v276 = vld [vmem:[%s201 + $0x88] sm:$0xff]
        %v277 = vld [vmem:[%s201 + $0x90] sm:$0xff]
        %v278 = vld [vmem:[%s201 + $0x98] sm:$0xff]
        %v279 = vld [vmem:[%s201 + $0xa0] sm:$0xff]
        %v280 = vld [vmem:[%s201 + $0xa8] sm:$0xff]
        %v281 = vld [vmem:[%s201 + $0xb0] sm:$0xff]
        %v282 = vld [vmem:[%s201 + $0xb8] sm:$0xff]
        %v283 = vld [vmem:[%s201 + $0xc0] sm:$0xff]
        %v284 = vld [vmem:[%s201 + $0xc8] sm:$0xff]
        %v285 = vld [vmem:[%s201 + $0xd0] sm:$0xff]
        %v286 = vld [vmem:[%s201 + $0xd8] sm:$0xff]
        %v287 = vld [vmem:[%s201 + $0xe0] sm:$0xff]
        %v288 = vld [vmem:[%s201 + $0xe8] sm:$0xff]
        %v289 = vld [vmem:[%s201 + $0xf0] sm:$0xff]
        %v290 = vld [vmem:[%s201 + $0xf8] sm:$0xff]
        %v291 = vld [vmem:[%s201 + $0x100] sm:$0xff]
        %v292 = vld [vmem:[%s201 + $0x108] sm:$0xff]
        %v293 = vld [vmem:[%s201 + $0x110] sm:$0xff]
        %v294 = vld [vmem:[%s201 + $0x118] sm:$0xff]
        %v295 = vld [vmem:[%s201 + $0x120] sm:$0xff]
        %v296 = vld [vmem:[%s201 + $0x128] sm:$0xff]
        %v297 = vld [vmem:[%s201 + $0x130] sm:$0xff]
        %v298 = vld [vmem:[%s201 + $0x138] sm:$0xff]
        %v299 = vld [vmem:[%s201 + $0x140] sm:$0xff]
        %v300 = vld [vmem:[%s201 + $0x148] sm:$0xff]
        %v301 = vld [vmem:[%s201 + $0x150] sm:$0xff]
        %v302 = vld [vmem:[%s201 + $0x158] sm:$0xff]
        %v303 = vld [vmem:[%s201 + $0x160] sm:$0xff]
        %v304 = vld [vmem:[%s201 + $0x168] sm:$0xff]
        %v305 = vld [vmem:[%s201 + $0x170] sm:$0xff]
        %v306 = vld [vmem:[%s201 + $0x178] sm:$0xff]
        %v307 = vld [vmem:[%s201 + $0x180] sm:$0xff]
        %v308 = vld [vmem:[%s201 + $0x188] sm:$0xff]
        %v309 = vld [vmem:[%s201 + $0x190] sm:$0xff]
        %v310 = vld [vmem:[%s201 + $0x198] sm:$0xff]
        %v311 = vld [vmem:[%s201 + $0x1a0] sm:$0xff]
        %v312 = vld [vmem:[%s201 + $0x1a8] sm:$0xff]
        %v313 = vld [vmem:[%s201 + $0x1b0] sm:$0xff]
        %v314 = vld [vmem:[%s201 + $0x1b8] sm:$0xff]
        %v315 = vld [vmem:[%s201 + $0x1c0] sm:$0xff]
        %v316 = vld [vmem:[%s201 + $0x1c8] sm:$0xff]
        %v317 = vld [vmem:[%s201 + $0x1d0] sm:$0xff]
        %v318 = vld [vmem:[%s201 + $0x1d8] sm:$0xff]
        %v319 = vld [vmem:[%s201 + $0x1e0] sm:$0xff]
        %v320 = vld [vmem:[%s201 + $0x1e8] sm:$0xff]
        %v321 = vld [vmem:[%s201 + $0x1f0] sm:$0xff]
        %v322 = vld [vmem:[%s201 + $0x1f8] sm:$0xff]
        %v323 = vld [vmem:[%s201 + $0x200] sm:$0xff]
        %v324 = vld [vmem:[%s201 + $0x208] sm:$0xff]
        %v325 = vld [vmem:[%s201 + $0x210] sm:$0xff]
        %v326 = vld [vmem:[%s201 + $0x218] sm:$0xff]
        %v327 = vld [vmem:[%s201 + $0x220] sm:$0xff]
        %v328 = vld [vmem:[%s201 + $0x228] sm:$0xff]
        %v329 = vld [vmem:[%s201 + $0x230] sm:$0xff]
        %v330 = vld [vmem:[%s201 + $0x238] sm:$0xff]
        %v331 = vld [vmem:[%s201 + $0x240] sm:$0xff]
        %v332 = vld [vmem:[%s201 + $0x248] sm:$0xff]
        %v333 = vld [vmem:[%s201 + $0x250] sm:$0xff]
        %v334 = vld [vmem:[%s201 + $0x258] sm:$0xff]
        %v335 = vld [vmem:[%s201 + $0x260] sm:$0xff]
        %v336 = vld [vmem:[%s201 + $0x268] sm:$0xff]
        %v337 = vld [vmem:[%s201 + $0x270] sm:$0xff]
        %v338 = vld [vmem:[%s201 + $0x278] sm:$0xff]
        %v339 = vld [vmem:[%s201 + $0x280] sm:$0xff]
        %v340 = vld [vmem:[%s201 + $0x288] sm:$0xff]
        %v341 = vld [vmem:[%s201 + $0x290] sm:$0xff]
        %v342 = vld [vmem:[%s201 + $0x298] sm:$0xff]
        %v343 = vld [vmem:[%s201 + $0x2a0] sm:$0xff]
        %v344 = vld [vmem:[%s201 + $0x2a8] sm:$0xff]
        %v345 = vld [vmem:[%s201 + $0x2b0] sm:$0xff]
        %v346 = vld [vmem:[%s201 + $0x2b8] sm:$0xff]
        %v347 = vld [vmem:[%s201 + $0x2c0] sm:$0xff]
        %v348 = vld [vmem:[%s201 + $0x2c8] sm:$0xff]
        %v349 = vld [vmem:[%s201 + $0x2d0] sm:$0xff]
        %v350 = vld [vmem:[%s201 + $0x2d8] sm:$0xff]
        %v351 = vld [vmem:[%s201 + $0x2e0] sm:$0xff]
        %v352 = vld [vmem:[%s201 + $0x2e8] sm:$0xff]
        %v353 = vld [vmem:[%s201 + $0x2f0] sm:$0xff]
        %v354 = vld [vmem:[%s201 + $0x2f8] sm:$0xff]
        %v355 = vld [vmem:[%s201 + $0x300] sm:$0xff]
        %v356 = vld [vmem:[%s201 + $0x308] sm:$0xff]
        %v357 = vld [vmem:[%s201 + $0x310] sm:$0xff]
        %v358 = vld [vmem:[%s201 + $0x318] sm:$0xff]
        %v359 = vld [vmem:[%s201 + $0x320] sm:$0xff]
        %v360 = vld [vmem:[%s201 + $0x328] sm:$0xff]
        %v361 = vld [vmem:[%s201 + $0x330] sm:$0xff]
        %v362 = vld [vmem:[%s201 + $0x338] sm:$0xff]
        %v363 = vld [vmem:[%s201 + $0x340] sm:$0xff]
        %v364 = vld [vmem:[%s201 + $0x348] sm:$0xff]
        %v365 = vld [vmem:[%s201 + $0x350] sm:$0xff]
        %v366 = vld [vmem:[%s201 + $0x358] sm:$0xff]
        %v367 = vld [vmem:[%s201 + $0x360] sm:$0xff]
        %v368 = vld [vmem:[%s201 + $0x368] sm:$0xff]
        %v369 = vld [vmem:[%s201 + $0x370] sm:$0xff]
        %v370 = vld [vmem:[%s201 + $0x378] sm:$0xff]
        %v371 = vld [vmem:[%s201 + $0x380] sm:$0xff]
        %v372 = vld [vmem:[%s201 + $0x388] sm:$0xff]
        %v373 = vld [vmem:[%s201 + $0x390] sm:$0xff]
        %v374 = vld [vmem:[%s201 + $0x398] sm:$0xff]
        %v375 = vld [vmem:[%s201 + $0x3a0] sm:$0xff]
        %v376 = vld [vmem:[%s201 + $0x3a8] sm:$0xff]
        %v377 = vld [vmem:[%s201 + $0x3b0] sm:$0xff]
        %v378 = vld [vmem:[%s201 + $0x3b8] sm:$0xff]
        %v379 = vld [vmem:[%s201 + $0x3c0] sm:$0xff]
        %v380 = vld [vmem:[%s201 + $0x3c8] sm:$0xff]
        %v381 = vld [vmem:[%s201 + $0x3d0] sm:$0xff]
        %v382 = vld [vmem:[%s201 + $0x3d8] sm:$0xff]
        %v383 = vld [vmem:[%s201 + $0x3e0] sm:$0xff]
        %v384 = vld [vmem:[%s201 + $0x3e8] sm:$0xff]
        %v385 = vld [vmem:[%s201 + $0x3f0] sm:$0xff]
        %v386 = vld [vmem:[%s201 + $0x3f8] sm:$0xff]
        %v387 = vld [vmem:[%s201 + $0x400] sm:$0xff]
        %v388 = vld [vmem:[%s201 + $0x408] sm:$0xff]
        %v389 = vld [vmem:[%s201 + $0x410] sm:$0xff]
        %v390 = vld [vmem:[%s201 + $0x418] sm:$0xff]
        %v391 = vld [vmem:[%s201 + $0x420] sm:$0xff]
        %v392 = vld [vmem:[%s201 + $0x428] sm:$0xff]
        %v393 = vld [vmem:[%s201 + $0x430] sm:$0xff]
        %v394 = vld [vmem:[%s201 + $0x438] sm:$0xff]
        %v395 = vld [vmem:[%s201 + $0x440] sm:$0xff]
        %v396 = vld [vmem:[%s201 + $0x448] sm:$0xff]
        %v397 = vld [vmem:[%s201 + $0x450] sm:$0xff]
        %v398 = vld [vmem:[%s201 + $0x458] sm:$0xff]
        %v399 = vld [vmem:[%s201 + $0x460] sm:$0xff]
        %v400 = vld [vmem:[%s201 + $0x468] sm:$0xff]
        %v401 = vld [vmem:[%s201 + $0x470] sm:$0xff]
        %v402 = vld [vmem:[%s201 + $0x478] sm:$0xff]
        %v403 = vld [vmem:[%s201 + $0x480] sm:$0xff]
        %v404 = vld [vmem:[%s201 + $0x488] sm:$0xff]
        %v405 = vld [vmem:[%s201 + $0x490] sm:$0xff]
        %v406 = vld [vmem:[%s201 + $0x498] sm:$0xff]
        %v407 = vld [vmem:[%s201 + $0x4a0] sm:$0xff]
        %v408 = vld [vmem:[%s201 + $0x4a8] sm:$0xff]
        %v409 = vld [vmem:[%s201 + $0x4b0] sm:$0xff]
        %v410 = vld [vmem:[%s201 + $0x4b8] sm:$0xff]
        %v411 = vld [vmem:[%s201 + $0x4c0] sm:$0xff]
        %v412 = vld [vmem:[%s201 + $0x4c8] sm:$0xff]
        %v413 = vld [vmem:[%s201 + $0x4d0] sm:$0xff]
        %v414 = vld [vmem:[%s201 + $0x4d8] sm:$0xff]
        %v415 = vld [vmem:[%s201 + $0x4e0] sm:$0xff]
        %v416 = vld [vmem:[%s201 + $0x4e8] sm:$0xff]
        %v417 = vld [vmem:[%s201 + $0x4f0] sm:$0xff]
        %v418 = vld [vmem:[%s201 + $0x4f8] sm:$0xff]
        %v419 = vld [vmem:[%s201 + $0x500] sm:$0xff]
        %v420 = vld [vmem:[%s201 + $0x508] sm:$0xff]
        %v421 = vld [vmem:[%s201 + $0x510] sm:$0xff]
        %v422 = vld [vmem:[%s201 + $0x518] sm:$0xff]
        %v423 = vld [vmem:[%s201 + $0x520] sm:$0xff]
        %v424 = vld [vmem:[%s201 + $0x528] sm:$0xff]
        %v425 = vld [vmem:[%s201 + $0x530] sm:$0xff]
        %v426 = vld [vmem:[%s201 + $0x538] sm:$0xff]
        %v427 = vld [vmem:[%s201 + $0x540] sm:$0xff]
        %v428 = vld [vmem:[%s201 + $0x548] sm:$0xff]
        %v429 = vld [vmem:[%s201 + $0x550] sm:$0xff]
        %v430 = vld [vmem:[%s201 + $0x558] sm:$0xff]
        %v431 = vld [vmem:[%s201 + $0x560] sm:$0xff]
        %v432 = vld [vmem:[%s201 + $0x568] sm:$0xff]
        %v433 = vld [vmem:[%s201 + $0x570] sm:$0xff]
        %v434 = vld [vmem:[%s201 + $0x578] sm:$0xff]
        %v435 = vld [vmem:[%s201 + $0x580] sm:$0xff]
        %v436 = vld [vmem:[%s201 + $0x588] sm:$0xff]
        %v437 = vld [vmem:[%s201 + $0x590] sm:$0xff]
        %v438 = vld [vmem:[%s201 + $0x598] sm:$0xff]
        %v439 = vld [vmem:[%s201 + $0x5a0] sm:$0xff]
        %v440 = vld [vmem:[%s201 + $0x5a8] sm:$0xff]
        %v441 = vld [vmem:[%s201 + $0x5b0] sm:$0xff]
        %v442 = vld [vmem:[%s201 + $0x5b8] sm:$0xff]
        %v443 = vld [vmem:[%s201 + $0x5c0] sm:$0xff]
        %v444 = vld [vmem:[%s201 + $0x5c8] sm:$0xff]
        %v445 = vld [vmem:[%s201 + $0x5d0] sm:$0xff]
        %v446 = vld [vmem:[%s201 + $0x5d8] sm:$0xff]
        %v447 = vld [vmem:[%s201 + $0x5e0] sm:$0xff]
        %v448 = vld [vmem:[%s201 + $0x5e8] sm:$0xff]
        %v449 = vld [vmem:[%s201 + $0x5f0] sm:$0xff]
        %v450 = vld [vmem:[%s201 + $0x5f8] sm:$0xff]
        %v451 = vld [vmem:[%s201 + $0x600] sm:$0xff]
        %v452 = vld [vmem:[%s201 + $0x608] sm:$0xff]
        %v453 = vld [vmem:[%s201 + $0x610] sm:$0xff]
        %v454 = vld [vmem:[%s201 + $0x618] sm:$0xff]
        %v455 = vld [vmem:[%s201 + $0x620] sm:$0xff]
        %v456 = vld [vmem:[%s201 + $0x628] sm:$0xff]
        %v457 = vld [vmem:[%s201 + $0x630] sm:$0xff]
        %v458 = vld [vmem:[%s201 + $0x638] sm:$0xff]
        %v459 = vld [vmem:[%s201 + $0x640] sm:$0xff]
        %v460 = vld [vmem:[%s201 + $0x648] sm:$0xff]
        %v461 = vld [vmem:[%s201 + $0x650] sm:$0xff]
        %v462 = vld [vmem:[%s201 + $0x658] sm:$0xff]
        %v463 = vld [vmem:[%s201 + $0x660] sm:$0xff]
        %v464 = vld [vmem:[%s201 + $0x668] sm:$0xff]
        %v465 = vld [vmem:[%s201 + $0x670] sm:$0xff]
        %v466 = vld [vmem:[%s201 + $0x678] sm:$0xff]
        %v467 = vld [vmem:[%s201 + $0x680] sm:$0xff]
        %v468 = vld [vmem:[%s201 + $0x688] sm:$0xff]
        %v469 = vld [vmem:[%s201 + $0x690] sm:$0xff]
        %v470 = vld [vmem:[%s201 + $0x698] sm:$0xff]
        %v471 = vld [vmem:[%s201 + $0x6a0] sm:$0xff]
        %v472 = vld [vmem:[%s201 + $0x6a8] sm:$0xff]
        %v473 = vld [vmem:[%s201 + $0x6b0] sm:$0xff]
        %v474 = vld [vmem:[%s201 + $0x6b8] sm:$0xff]
        %v475 = vld [vmem:[%s201 + $0x6c0] sm:$0xff]
        %v476 = vld [vmem:[%s201 + $0x6c8] sm:$0xff]
        %v477 = vld [vmem:[%s201 + $0x6d0] sm:$0xff]
        %v478 = vld [vmem:[%s201 + $0x6d8] sm:$0xff]
        %v479 = vld [vmem:[%s201 + $0x6e0] sm:$0xff]
        %v480 = vld [vmem:[%s201 + $0x6e8] sm:$0xff]
        %v481 = vld [vmem:[%s201 + $0x6f0] sm:$0xff]
        %v482 = vld [vmem:[%s201 + $0x6f8] sm:$0xff]
        %v483 = vld [vmem:[%s201 + $0x700] sm:$0xff]
        %v484 = vld [vmem:[%s201 + $0x708] sm:$0xff]
        %v485 = vld [vmem:[%s201 + $0x710] sm:$0xff]
        %v486 = vld [vmem:[%s201 + $0x718] sm:$0xff]
        %v487 = vld [vmem:[%s201 + $0x720] sm:$0xff]
        %v488 = vld [vmem:[%s201 + $0x728] sm:$0xff]
        %v489 = vld [vmem:[%s201 + $0x730] sm:$0xff]
        %v490 = vld [vmem:[%s201 + $0x738] sm:$0xff]
        %v491 = vld [vmem:[%s201 + $0x740] sm:$0xff]
        %v492 = vld [vmem:[%s201 + $0x748] sm:$0xff]
        %v493 = vld [vmem:[%s201 + $0x750] sm:$0xff]
        %v494 = vld [vmem:[%s201 + $0x758] sm:$0xff]
        %v495 = vld [vmem:[%s201 + $0x760] sm:$0xff]
        %v496 = vld [vmem:[%s201 + $0x768] sm:$0xff]
        %v497 = vld [vmem:[%s201 + $0x770] sm:$0xff]
        %v498 = vld [vmem:[%s201 + $0x778] sm:$0xff]
        %v499 = vld [vmem:[%s201 + $0x780] sm:$0xff]
        %v500 = vld [vmem:[%s201 + $0x788] sm:$0xff]
        %v501 = vld [vmem:[%s201 + $0x790] sm:$0xff]
        %v502 = vld [vmem:[%s201 + $0x798] sm:$0xff]
        %v503 = vld [vmem:[%s201 + $0x7a0] sm:$0xff]
        %v504 = vld [vmem:[%s201 + $0x7a8] sm:$0xff]
        %v505 = vld [vmem:[%s201 + $0x7b0] sm:$0xff]
        %v506 = vld [vmem:[%s201 + $0x7b8] sm:$0xff]
        %v507 = vld [vmem:[%s201 + $0x7c0] sm:$0xff]
        %v508 = vld [vmem:[%s201 + $0x7c8] sm:$0xff]
        %v509 = vld [vmem:[%s201 + $0x7d0] sm:$0xff]
        %v510 = vld [vmem:[%s201 + $0x7d8] sm:$0xff]
        %v511 = vld [vmem:[%s201 + $0x7e0] sm:$0xff]
        %v512 = vld [vmem:[%s201 + $0x7e8] sm:$0xff]
        %v513 = vld [vmem:[%s201 + $0x7f0] sm:$0xff]
        %v514 = vld [vmem:[%s201 + $0x7f8] sm:$0xff]
        %v515 = vld [vmem:[%s201 + $0x800] sm:$0xff]
        %v516 = vld [vmem:[%s201 + $0x808] sm:$0xff]
        %v517 = vld [vmem:[%s201 + $0x810] sm:$0xff]
        %v518 = vld [vmem:[%s201 + $0x818] sm:$0xff]
        %v519 = vld [vmem:[%s201 + $0x820] sm:$0xff]
        %v520 = vld [vmem:[%s201 + $0x828] sm:$0xff]
        %v521 = vld [vmem:[%s201 + $0x830] sm:$0xff]
        %v522 = vld [vmem:[%s201 + $0x838] sm:$0xff]
        %v523 = vld [vmem:[%s201 + $0x840] sm:$0xff]
        %v524 = vld [vmem:[%s201 + $0x848] sm:$0xff]
        %v525 = vld [vmem:[%s201 + $0x850] sm:$0xff]
        %v526 = vld [vmem:[%s201 + $0x858] sm:$0xff]
        %v527 = vld [vmem:[%s201 + $0x860] sm:$0xff]
        %v528 = vld [vmem:[%s201 + $0x868] sm:$0xff]
        %v529 = vld [vmem:[%s201 + $0x870] sm:$0xff]
        %v530 = vld [vmem:[%s201 + $0x878] sm:$0xff]
        %v531 = vld [vmem:[%s201 + $0x880] sm:$0xff]
        %v532 = vld [vmem:[%s201 + $0x888] sm:$0xff]
        %v533 = vld [vmem:[%s201 + $0x890] sm:$0xff]
        %v534 = vld [vmem:[%s201 + $0x898] sm:$0xff]
        %v535 = vld [vmem:[%s201 + $0x8a0] sm:$0xff]
        %v536 = vld [vmem:[%s201 + $0x8a8] sm:$0xff]
        %v537 = vld [vmem:[%s201 + $0x8b0] sm:$0xff]
        %v538 = vld [vmem:[%s201 + $0x8b8] sm:$0xff]
        %v539 = vld [vmem:[%s201 + $0x8c0] sm:$0xff]
        %v540 = vld [vmem:[%s201 + $0x8c8] sm:$0xff]
        %v541 = vld [vmem:[%s201 + $0x8d0] sm:$0xff]
        %v542 = vld [vmem:[%s201 + $0x8d8] sm:$0xff]
        %v543 = vld [vmem:[%s201 + $0x8e0] sm:$0xff]
        %v544 = vld [vmem:[%s201 + $0x8e8] sm:$0xff]
        %v545 = vld [vmem:[%s201 + $0x8f0] sm:$0xff]
        %v546 = vld [vmem:[%s201 + $0x8f8] sm:$0xff]
        %v547 = vld [vmem:[%s201 + $0x900] sm:$0xff]
        %v548 = vld [vmem:[%s201 + $0x908] sm:$0xff]
        %v549 = vld [vmem:[%s201 + $0x910] sm:$0xff]
        %v550 = vld [vmem:[%s201 + $0x918] sm:$0xff]
        %v551 = vld [vmem:[%s201 + $0x920] sm:$0xff]
        %v552 = vld [vmem:[%s201 + $0x928] sm:$0xff]
        %v553 = vld [vmem:[%s201 + $0x930] sm:$0xff]
        %v554 = vld [vmem:[%s201 + $0x938] sm:$0xff]
        %v555 = vld [vmem:[%s201 + $0x940] sm:$0xff]
        %v556 = vld [vmem:[%s201 + $0x948] sm:$0xff]
        %v557 = vld [vmem:[%s201 + $0x950] sm:$0xff]
        %v558 = vld [vmem:[%s201 + $0x958] sm:$0xff]
        %v559 = vld [vmem:[%s201 + $0x960] sm:$0xff]
        %v560 = vld [vmem:[%s201 + $0x968] sm:$0xff]
        %v561 = vld [vmem:[%s201 + $0x970] sm:$0xff]
        %v562 = vld [vmem:[%s201 + $0x978] sm:$0xff]
        %v563 = vld [vmem:[%s201 + $0x980] sm:$0xff]
        %v564 = vld [vmem:[%s201 + $0x988] sm:$0xff]
        %v565 = vld [vmem:[%s201 + $0x990] sm:$0xff]
        %v566 = vld [vmem:[%s201 + $0x998] sm:$0xff]
        %v567 = vld [vmem:[%s201 + $0x9a0] sm:$0xff]
        %v568 = vld [vmem:[%s201 + $0x9a8] sm:$0xff]
        %v569 = vld [vmem:[%s201 + $0x9b0] sm:$0xff]
        %v570 = vld [vmem:[%s201 + $0x9b8] sm:$0xff]
        %v571 = vld [vmem:[%s201 + $0x9c0] sm:$0xff]
        %v572 = vld [vmem:[%s201 + $0x9c8] sm:$0xff]
        %v573 = vld [vmem:[%s201 + $0x9d0] sm:$0xff]
        %v574 = vld [vmem:[%s201 + $0x9d8] sm:$0xff]
        %v575 = vld [vmem:[%s201 + $0x9e0] sm:$0xff]
        %v576 = vld [vmem:[%s201 + $0x9e8] sm:$0xff]
        %v577 = vld [vmem:[%s201 + $0x9f0] sm:$0xff]
        %v578 = vld [vmem:[%s201 + $0x9f8] sm:$0xff]
        %v579 = vld [vmem:[%s201 + $0xa00] sm:$0xff]
        %v580 = vld [vmem:[%s201 + $0xa08] sm:$0xff]
        %v581 = vld [vmem:[%s201 + $0xa10] sm:$0xff]
        %v582 = vld [vmem:[%s201 + $0xa18] sm:$0xff]
        %v583 = vld [vmem:[%s201 + $0xa20] sm:$0xff]
        %v584 = vld [vmem:[%s201 + $0xa28] sm:$0xff]
        %v585 = vld [vmem:[%s201 + $0xa30] sm:$0xff]
        %v586 = vld [vmem:[%s201 + $0xa38] sm:$0xff]
        %v587 = vld [vmem:[%s201 + $0xa40] sm:$0xff]
        %v588 = vld [vmem:[%s201 + $0xa48] sm:$0xff]
        %v589 = vld [vmem:[%s201 + $0xa50] sm:$0xff]
        %v590 = vld [vmem:[%s201 + $0xa58] sm:$0xff]
        %v591 = vld [vmem:[%s201 + $0xa60] sm:$0xff]
        %v592 = vld [vmem:[%s201 + $0xa68] sm:$0xff]
        %v593 = vld [vmem:[%s201 + $0xa70] sm:$0xff]
        %v594 = vld [vmem:[%s201 + $0xa78] sm:$0xff]
        %v595 = vld [vmem:[%s201 + $0xa80] sm:$0xff]
        %v596 = vld [vmem:[%s201 + $0xa88] sm:$0xff]
        %v597 = vld [vmem:[%s201 + $0xa90] sm:$0xff]
        %v598 = vld [vmem:[%s201 + $0xa98] sm:$0xff]
        %v599 = vld [vmem:[%s201 + $0xaa0] sm:$0xff]
        %v600 = vld [vmem:[%s201 + $0xaa8] sm:$0xff]
        %v601 = vld [vmem:[%s201 + $0xab0] sm:$0xff]
        %v602 = vld [vmem:[%s201 + $0xab8] sm:$0xff]
        %v603 = vld [vmem:[%s201 + $0xac0] sm:$0xff]
        %v604 = vld [vmem:[%s201 + $0xac8] sm:$0xff]
        %v605 = vld [vmem:[%s201 + $0xad0] sm:$0xff]
        %v606 = vld [vmem:[%s201 + $0xad8] sm:$0xff]
        %v607 = vld [vmem:[%s201 + $0xae0] sm:$0xff]
        %v608 = vld [vmem:[%s201 + $0xae8] sm:$0xff]
        %v609 = vld [vmem:[%s201 + $0xaf0] sm:$0xff]
        %v610 = vld [vmem:[%s201 + $0xaf8] sm:$0xff]
        %v611 = vld [vmem:[%s201 + $0xb00] sm:$0xff]
        %v612 = vld [vmem:[%s201 + $0xb08] sm:$0xff]
        %v613 = vld [vmem:[%s201 + $0xb10] sm:$0xff]
        %v614 = vld [vmem:[%s201 + $0xb18] sm:$0xff]
        %v615 = vld [vmem:[%s201 + $0xb20] sm:$0xff]
        %v616 = vld [vmem:[%s201 + $0xb28] sm:$0xff]
        %v617 = vld [vmem:[%s201 + $0xb30] sm:$0xff]
        %v618 = vld [vmem:[%s201 + $0xb38] sm:$0xff]
        %v619 = vld [vmem:[%s201 + $0xb40] sm:$0xff]
        %v620 = vld [vmem:[%s201 + $0xb48] sm:$0xff]
        %v621 = vld [vmem:[%s201 + $0xb50] sm:$0xff]
        %v622 = vld [vmem:[%s201 + $0xb58] sm:$0xff]
        %v623 = vld [vmem:[%s201 + $0xb60] sm:$0xff]
        %v624 = vld [vmem:[%s201 + $0xb68] sm:$0xff]
        %v625 = vld [vmem:[%s201 + $0xb70] sm:$0xff]
        %v626 = vld [vmem:[%s201 + $0xb78] sm:$0xff]
        %v627 = vld [vmem:[%s201 + $0xb80] sm:$0xff]
        %v628 = vld [vmem:[%s201 + $0xb88] sm:$0xff]
        %v629 = vld [vmem:[%s201 + $0xb90] sm:$0xff]
        %v630 = vld [vmem:[%s201 + $0xb98] sm:$0xff]
        %v631 = vld [vmem:[%s201 + $0xba0] sm:$0xff]
        %v632 = vld [vmem:[%s201 + $0xba8] sm:$0xff]
        %v633 = vld [vmem:[%s201 + $0xbb0] sm:$0xff]
        %v634 = vld [vmem:[%s201 + $0xbb8] sm:$0xff]
        %v635 = vld [vmem:[%s201 + $0xbc0] sm:$0xff]
        %v636 = vld [vmem:[%s201 + $0xbc8] sm:$0xff]
        %v637 = vld [vmem:[%s201 + $0xbd0] sm:$0xff]
        %v638 = vld [vmem:[%s201 + $0xbd8] sm:$0xff]
        %v639 = vld [vmem:[%s201 + $0xbe0] sm:$0xff]
        %v640 = vld [vmem:[%s201 + $0xbe8] sm:$0xff]
        %v641 = vld [vmem:[%s201 + $0xbf0] sm:$0xff]
        %v642 = vld [vmem:[%s201 + $0xbf8] sm:$0xff]
        %v643 = vld [vmem:[%s201 + $0xc00] sm:$0xff]
        %v644 = vld [vmem:[%s201 + $0xc08] sm:$0xff]
        %v645 = vld [vmem:[%s201 + $0xc10] sm:$0xff]
        %v646 = vld [vmem:[%s201 + $0xc18] sm:$0xff]
        %v647 = vld [vmem:[%s201 + $0xc20] sm:$0xff]
        %v648 = vld [vmem:[%s201 + $0xc28] sm:$0xff]
        %v649 = vld [vmem:[%s201 + $0xc30] sm:$0xff]
        %v650 = vld [vmem:[%s201 + $0xc38] sm:$0xff]
        %v651 = vld [vmem:[%s201 + $0xc40] sm:$0xff]
        %v652 = vld [vmem:[%s201 + $0xc48] sm:$0xff]
        %v653 = vld [vmem:[%s201 + $0xc50] sm:$0xff]
        %v654 = vld [vmem:[%s201 + $0xc58] sm:$0xff]
        %v655 = vld [vmem:[%s201 + $0xc60] sm:$0xff]
        %v656 = vld [vmem:[%s201 + $0xc68] sm:$0xff]
        %v657 = vld [vmem:[%s201 + $0xc70] sm:$0xff]
        %v658 = vld [vmem:[%s201 + $0xc78] sm:$0xff]
        %v659 = vld [vmem:[%s201 + $0xc80] sm:$0xff]
        %v660 = vld [vmem:[%s201 + $0xc88] sm:$0xff]
        %v661 = vld [vmem:[%s201 + $0xc90] sm:$0xff]
        %v662 = vld [vmem:[%s201 + $0xc98] sm:$0xff]
        %v663 = vld [vmem:[%s201 + $0xca0] sm:$0xff]
        %v664 = vld [vmem:[%s201 + $0xca8] sm:$0xff]
        %v665 = vld [vmem:[%s201 + $0xcb0] sm:$0xff]
        %v666 = vld [vmem:[%s201 + $0xcb8] sm:$0xff]
        %v667 = vld [vmem:[%s201 + $0xcc0] sm:$0xff]
        %v668 = vld [vmem:[%s201 + $0xcc8] sm:$0xff]
        %v669 = vld [vmem:[%s201 + $0xcd0] sm:$0xff]
        %v670 = vld [vmem:[%s201 + $0xcd8] sm:$0xff]
        %v671 = vld [vmem:[%s201 + $0xce0] sm:$0xff]
        %v672 = vld [vmem:[%s201 + $0xce8] sm:$0xff]
        %v673 = vld [vmem:[%s201 + $0xcf0] sm:$0xff]
        %v674 = vld [vmem:[%s201 + $0xcf8] sm:$0xff]
        %v675 = vld [vmem:[%s201 + $0xd00] sm:$0xff]
        %v676 = vld [vmem:[%s201 + $0xd08] sm:$0xff]
        %v677 = vld [vmem:[%s201 + $0xd10] sm:$0xff]
        %v678 = vld [vmem:[%s201 + $0xd18] sm:$0xff]
        %v679 = vld [vmem:[%s201 + $0xd20] sm:$0xff]
        %v680 = vld [vmem:[%s201 + $0xd28] sm:$0xff]
        %v681 = vld [vmem:[%s201 + $0xd30] sm:$0xff]
        %v682 = vld [vmem:[%s201 + $0xd38] sm:$0xff]
        %v683 = vld [vmem:[%s201 + $0xd40] sm:$0xff]
        %v684 = vld [vmem:[%s201 + $0xd48] sm:$0xff]
        %v685 = vld [vmem:[%s201 + $0xd50] sm:$0xff]
        %v686 = vld [vmem:[%s201 + $0xd58] sm:$0xff]
        %v687 = vld [vmem:[%s201 + $0xd60] sm:$0xff]
        %v688 = vld [vmem:[%s201 + $0xd68] sm:$0xff]
        %v689 = vld [vmem:[%s201 + $0xd70] sm:$0xff]
        %v690 = vld [vmem:[%s201 + $0xd78] sm:$0xff]
        %v691 = vld [vmem:[%s201 + $0xd80] sm:$0xff]
        %v692 = vld [vmem:[%s201 + $0xd88] sm:$0xff]
        %v693 = vld [vmem:[%s201 + $0xd90] sm:$0xff]
        %v694 = vld [vmem:[%s201 + $0xd98] sm:$0xff]
        %v695 = vld [vmem:[%s201 + $0xda0] sm:$0xff]
        %v696 = vld [vmem:[%s201 + $0xda8] sm:$0xff]
        %v697 = vld [vmem:[%s201 + $0xdb0] sm:$0xff]
        %v698 = vld [vmem:[%s201 + $0xdb8] sm:$0xff]
        %v699 = vld [vmem:[%s201 + $0xdc0] sm:$0xff]
        %v700 = vld [vmem:[%s201 + $0xdc8] sm:$0xff]
        %v701 = vld [vmem:[%s201 + $0xdd0] sm:$0xff]
        %v702 = vld [vmem:[%s201 + $0xdd8] sm:$0xff]
        %v703 = vld [vmem:[%s201 + $0xde0] sm:$0xff]
        %v704 = vld [vmem:[%s201 + $0xde8] sm:$0xff]
        %v705 = vld [vmem:[%s201 + $0xdf0] sm:$0xff]
        %v706 = vld [vmem:[%s201 + $0xdf8] sm:$0xff]
        %v707 = vld [vmem:[%s201 + $0xe00] sm:$0xff]
        %v708 = vld [vmem:[%s201 + $0xe08] sm:$0xff]
        %v709 = vld [vmem:[%s201 + $0xe10] sm:$0xff]
        %v710 = vld [vmem:[%s201 + $0xe18] sm:$0xff]
        %v711 = vld [vmem:[%s201 + $0xe20] sm:$0xff]
        %v712 = vld [vmem:[%s201 + $0xe28] sm:$0xff]
        %v713 = vld [vmem:[%s201 + $0xe30] sm:$0xff]
        %v714 = vld [vmem:[%s201 + $0xe38] sm:$0xff]
        %v715 = vld [vmem:[%s201 + $0xe40] sm:$0xff]
        %v716 = vld [vmem:[%s201 + $0xe48] sm:$0xff]
        %v717 = vld [vmem:[%s201 + $0xe50] sm:$0xff]
        %v718 = vld [vmem:[%s201 + $0xe58] sm:$0xff]
        %v719 = vld [vmem:[%s201 + $0xe60] sm:$0xff]
        %v720 = vld [vmem:[%s201 + $0xe68] sm:$0xff]
        %v721 = vld [vmem:[%s201 + $0xe70] sm:$0xff]
        %v722 = vld [vmem:[%s201 + $0xe78] sm:$0xff]
        %v723 = vld [vmem:[%s201 + $0xe80] sm:$0xff]
        %v724 = vld [vmem:[%s201 + $0xe88] sm:$0xff]
        %v725 = vld [vmem:[%s201 + $0xe90] sm:$0xff]
        %v726 = vld [vmem:[%s201 + $0xe98] sm:$0xff]
        %v727 = vld [vmem:[%s201 + $0xea0] sm:$0xff]
        %v728 = vld [vmem:[%s201 + $0xea8] sm:$0xff]
        %v729 = vld [vmem:[%s201 + $0xeb0] sm:$0xff]
        %v730 = vld [vmem:[%s201 + $0xeb8] sm:$0xff]
        %v731 = vld [vmem:[%s201 + $0xec0] sm:$0xff]
        %v732 = vld [vmem:[%s201 + $0xec8] sm:$0xff]
        %v733 = vld [vmem:[%s201 + $0xed0] sm:$0xff]
        %v734 = vld [vmem:[%s201 + $0xed8] sm:$0xff]
        %v735 = vld [vmem:[%s201 + $0xee0] sm:$0xff]
        %v736 = vld [vmem:[%s201 + $0xee8] sm:$0xff]
        %v737 = vld [vmem:[%s201 + $0xef0] sm:$0xff]
        %v738 = vld [vmem:[%s201 + $0xef8] sm:$0xff]
        %v739 = vld [vmem:[%s201 + $0xf00] sm:$0xff]
        %v740 = vld [vmem:[%s201 + $0xf08] sm:$0xff]
        %v741 = vld [vmem:[%s201 + $0xf10] sm:$0xff]
        %v742 = vld [vmem:[%s201 + $0xf18] sm:$0xff]
        %v743 = vld [vmem:[%s201 + $0xf20] sm:$0xff]
        %v744 = vld [vmem:[%s201 + $0xf28] sm:$0xff]
        %v745 = vld [vmem:[%s201 + $0xf30] sm:$0xff]
        %v746 = vld [vmem:[%s201 + $0xf38] sm:$0xff]
        %v747 = vld [vmem:[%s201 + $0xf40] sm:$0xff]
        %v748 = vld [vmem:[%s201 + $0xf48] sm:$0xff]
        %v749 = vld [vmem:[%s201 + $0xf50] sm:$0xff]
        %v750 = vld [vmem:[%s201 + $0xf58] sm:$0xff]
        %v751 = vld [vmem:[%s201 + $0xf60] sm:$0xff]
        %v752 = vld [vmem:[%s201 + $0xf68] sm:$0xff]
        %v753 = vld [vmem:[%s201 + $0xf70] sm:$0xff]
        %v754 = vld [vmem:[%s201 + $0xf78] sm:$0xff]
        %v755 = vld [vmem:[%s201 + $0xf80] sm:$0xff]
        %v756 = vld [vmem:[%s201 + $0xf88] sm:$0xff]
        %v757 = vld [vmem:[%s201 + $0xf90] sm:$0xff]
        %v758 = vld [vmem:[%s201 + $0xf98] sm:$0xff]
        %v759 = vld [vmem:[%s201 + $0xfa0] sm:$0xff]
        %v760 = vld [vmem:[%s201 + $0xfa8] sm:$0xff]
        %v761 = vld [vmem:[%s201 + $0xfb0] sm:$0xff]
        %v762 = vld [vmem:[%s201 + $0xfb8] sm:$0xff]
        %v763 = vld [vmem:[%s201 + $0xfc0] sm:$0xff]
        %v764 = vld [vmem:[%s201 + $0xfc8] sm:$0xff]
        %v765 = vld [vmem:[%s201 + $0xfd0] sm:$0xff]
        %v766 = vld [vmem:[%s201 + $0xfd8] sm:$0xff]
        %v767 = vld [vmem:[%s201 + $0xfe0] sm:$0xff]
        %v768 = vld [vmem:[%s201 + $0xfe8] sm:$0xff]
        %v769 = vld [vmem:[%s201 + $0xff0] sm:$0xff]
        %v770 = vld [vmem:[%s201 + $0xff8] sm:$0xff]
        %v771 = vld [vmem:[%s201 + $0x1000] sm:$0xff]
        %v772 = vld [vmem:[%s201 + $0x1008] sm:$0xff]
        %v773 = vld [vmem:[%s201 + $0x1010] sm:$0xff]
        %v774 = vld [vmem:[%s201 + $0x1018] sm:$0xff]
        %v775 = vld [vmem:[%s201 + $0x1020] sm:$0xff]
        %v776 = vld [vmem:[%s201 + $0x1028] sm:$0xff]
        %v777 = vld [vmem:[%s201 + $0x1030] sm:$0xff]
        %v778 = vld [vmem:[%s201 + $0x1038] sm:$0xff]
        %v779 = vld [vmem:[%s201 + $0x1040] sm:$0xff]
        %v780 = vld [vmem:[%s201 + $0x1048] sm:$0xff]
        %v781 = vld [vmem:[%s201 + $0x1050] sm:$0xff]
        %v782 = vld [vmem:[%s201 + $0x1058] sm:$0xff]
        %v783 = vld [vmem:[%s201 + $0x1060] sm:$0xff]
        %v784 = vld [vmem:[%s201 + $0x1068] sm:$0xff]
        %v785 = vld [vmem:[%s201 + $0x1070] sm:$0xff]
        %v786 = vld [vmem:[%s201 + $0x1078] sm:$0xff]
        %v787 = vld [vmem:[%s201 + $0x1080] sm:$0xff]
        %v788 = vld [vmem:[%s201 + $0x1088] sm:$0xff]
        %v789 = vld [vmem:[%s201 + $0x1090] sm:$0xff]
        %v790 = vld [vmem:[%s201 + $0x1098] sm:$0xff]
        %v791 = vld [vmem:[%s201 + $0x10a0] sm:$0xff]
        %v792 = vld [vmem:[%s201 + $0x10a8] sm:$0xff]
        %v793 = vld [vmem:[%s201 + $0x10b0] sm:$0xff]
        %v794 = vld [vmem:[%s201 + $0x10b8] sm:$0xff]
        %v795 = vld [vmem:[%s201 + $0x10c0] sm:$0xff]
        %v796 = vld [vmem:[%s201 + $0x10c8] sm:$0xff]
        %v797 = vld [vmem:[%s201 + $0x10d0] sm:$0xff]
        %v798 = vld [vmem:[%s201 + $0x10d8] sm:$0xff]
        %v799 = vld [vmem:[%s201 + $0x10e0] sm:$0xff]
        %v800 = vld [vmem:[%s201 + $0x10e8] sm:$0xff]
        %v801 = vld [vmem:[%s201 + $0x10f0] sm:$0xff]
        %v802 = vld [vmem:[%s201 + $0x10f8] sm:$0xff]
        %v803 = vld [vmem:[%s201 + $0x1100] sm:$0xff]
        %v804 = vld [vmem:[%s201 + $0x1108] sm:$0xff]
        %v805 = vld [vmem:[%s201 + $0x1110] sm:$0xff]
        %v806 = vld [vmem:[%s201 + $0x1118] sm:$0xff]
        %v807 = vld [vmem:[%s201 + $0x1120] sm:$0xff]
        %v808 = vld [vmem:[%s201 + $0x1128] sm:$0xff]
        %v809 = vld [vmem:[%s201 + $0x1130] sm:$0xff]
        %v810 = vld [vmem:[%s201 + $0x1138] sm:$0xff]
        %v811 = vld [vmem:[%s201 + $0x1140] sm:$0xff]
        %v812 = vld [vmem:[%s201 + $0x1148] sm:$0xff]
        %v813 = vld [vmem:[%s201 + $0x1150] sm:$0xff]
        %v814 = vld [vmem:[%s201 + $0x1158] sm:$0xff]
        %v815 = vld [vmem:[%s201 + $0x1160] sm:$0xff]
        %v816 = vld [vmem:[%s201 + $0x1168] sm:$0xff]
        %v817 = vld [vmem:[%s201 + $0x1170] sm:$0xff]
        %v818 = vld [vmem:[%s201 + $0x1178] sm:$0xff]
        %v819 = vld [vmem:[%s201 + $0x1180] sm:$0xff]
        %v820 = vld [vmem:[%s201 + $0x1188] sm:$0xff]
        %v821 = vld [vmem:[%s201 + $0x1190] sm:$0xff]
        %v822 = vld [vmem:[%s201 + $0x1198] sm:$0xff]
        %v823 = vld [vmem:[%s201 + $0x11a0] sm:$0xff]
        %v824 = vld [vmem:[%s201 + $0x11a8] sm:$0xff]
        %v825 = vld [vmem:[%s201 + $0x11b0] sm:$0xff]
        %v826 = vld [vmem:[%s201 + $0x11b8] sm:$0xff]
        %v827 = vld [vmem:[%s201 + $0x11c0] sm:$0xff]
        %v828 = vld [vmem:[%s201 + $0x11c8] sm:$0xff]
        %v829 = vld [vmem:[%s201 + $0x11d0] sm:$0xff]
        %v830 = vld [vmem:[%s201 + $0x11d8] sm:$0xff]
        %v831 = vld [vmem:[%s201 + $0x11e0] sm:$0xff]
        %v832 = vld [vmem:[%s201 + $0x11e8] sm:$0xff]
        %v833 = vld [vmem:[%s201 + $0x11f0] sm:$0xff]
        %v834 = vld [vmem:[%s201 + $0x11f8] sm:$0xff]
        %v835 = vld [vmem:[%s201 + $0x1200] sm:$0xff]
        %v836 = vld [vmem:[%s201 + $0x1208] sm:$0xff]
        %v837 = vld [vmem:[%s201 + $0x1210] sm:$0xff]
        %v838 = vld [vmem:[%s201 + $0x1218] sm:$0xff]
        %v839 = vld [vmem:[%s201 + $0x1220] sm:$0xff]
        %v840 = vld [vmem:[%s201 + $0x1228] sm:$0xff]
        %v841 = vld [vmem:[%s201 + $0x1230] sm:$0xff]
        %v842 = vld [vmem:[%s201 + $0x1238] sm:$0xff]
        %v843 = vld [vmem:[%s201 + $0x1240] sm:$0xff]
        %v844 = vld [vmem:[%s201 + $0x1248] sm:$0xff]
        %v845 = vld [vmem:[%s201 + $0x1250] sm:$0xff]
        %v846 = vld [vmem:[%s201 + $0x1258] sm:$0xff]
        %v847 = vld [vmem:[%s201 + $0x1260] sm:$0xff]
        %v848 = vld [vmem:[%s201 + $0x1268] sm:$0xff]
        %v849 = vld [vmem:[%s201 + $0x1270] sm:$0xff]
        %v850 = vld [vmem:[%s201 + $0x1278] sm:$0xff]
        %v851 = vld [vmem:[%s201 + $0x1280] sm:$0xff]
        %v852 = vld [vmem:[%s201 + $0x1288] sm:$0xff]
        %v853 = vld [vmem:[%s201 + $0x1290] sm:$0xff]
        %v854 = vld [vmem:[%s201 + $0x1298] sm:$0xff]
        %v855 = vld [vmem:[%s201 + $0x12a0] sm:$0xff]
        %v856 = vld [vmem:[%s201 + $0x12a8] sm:$0xff]
        %v857 = vld [vmem:[%s201 + $0x12b0] sm:$0xff]
        %v858 = vld [vmem:[%s201 + $0x12b8] sm:$0xff]
        %v859 = vld [vmem:[%s201 + $0x12c0] sm:$0xff]
        %v860 = vld [vmem:[%s201 + $0x12c8] sm:$0xff]
        %v861 = vld [vmem:[%s201 + $0x12d0] sm:$0xff]
        %v862 = vld [vmem:[%s201 + $0x12d8] sm:$0xff]
        %v863 = vld [vmem:[%s201 + $0x12e0] sm:$0xff]
        %v864 = vld [vmem:[%s201 + $0x12e8] sm:$0xff]
        %v865 = vld [vmem:[%s201 + $0x12f0] sm:$0xff]
        %v866 = vld [vmem:[%s201 + $0x12f8] sm:$0xff]
        %v867 = vld [vmem:[%s201 + $0x1300] sm:$0xff]
        %v868 = vld [vmem:[%s201 + $0x1308] sm:$0xff]
        %v869 = vld [vmem:[%s201 + $0x1310] sm:$0xff]
        %v870 = vld [vmem:[%s201 + $0x1318] sm:$0xff]
        %v871 = vld [vmem:[%s201 + $0x1320] sm:$0xff]
        %v872 = vld [vmem:[%s201 + $0x1328] sm:$0xff]
        %v873 = vld [vmem:[%s201 + $0x1330] sm:$0xff]
        %v874 = vld [vmem:[%s201 + $0x1338] sm:$0xff]
        %v875 = vld [vmem:[%s201 + $0x1340] sm:$0xff]
        %v876 = vld [vmem:[%s201 + $0x1348] sm:$0xff]
        %v877 = vld [vmem:[%s201 + $0x1350] sm:$0xff]
        %v878 = vld [vmem:[%s201 + $0x1358] sm:$0xff]
        %v879 = vld [vmem:[%s201 + $0x1360] sm:$0xff]
        %v880 = vld [vmem:[%s201 + $0x1368] sm:$0xff]
        %v881 = vld [vmem:[%s201 + $0x1370] sm:$0xff]
        %v882 = vld [vmem:[%s201 + $0x1378] sm:$0xff]
        %v883 = vld [vmem:[%s201 + $0x1380] sm:$0xff]
        %v884 = vld [vmem:[%s201 + $0x1388] sm:$0xff]
        %v885 = vld [vmem:[%s201 + $0x1390] sm:$0xff]
        %v886 = vld [vmem:[%s201 + $0x1398] sm:$0xff]
        %v887 = vld [vmem:[%s201 + $0x13a0] sm:$0xff]
        %v888 = vld [vmem:[%s201 + $0x13a8] sm:$0xff]
        %v889 = vld [vmem:[%s201 + $0x13b0] sm:$0xff]
        %v890 = vld [vmem:[%s201 + $0x13b8] sm:$0xff]
        %v891 = vld [vmem:[%s201 + $0x13c0] sm:$0xff]
        %v892 = vld [vmem:[%s201 + $0x13c8] sm:$0xff]
        %v893 = vld [vmem:[%s201 + $0x13d0] sm:$0xff]
        %v894 = vld [vmem:[%s201 + $0x13d8] sm:$0xff]
        %v895 = vld [vmem:[%s201 + $0x13e0] sm:$0xff]
        %v896 = vld [vmem:[%s201 + $0x13e8] sm:$0xff]
        %v897 = vld [vmem:[%s201 + $0x13f0] sm:$0xff]
        %v898 = vld [vmem:[%s201 + $0x13f8] sm:$0xff]
        %v899 = vld [vmem:[%s201 + $0x1400] sm:$0xff]
        %v900 = vld [vmem:[%s201 + $0x1408] sm:$0xff]
        %v901 = vld [vmem:[%s201 + $0x1410] sm:$0xff]
        %v902 = vld [vmem:[%s201 + $0x1418] sm:$0xff]
        %v903 = vld [vmem:[%s201 + $0x1420] sm:$0xff]
        %v904 = vld [vmem:[%s201 + $0x1428] sm:$0xff]
        %v905 = vld [vmem:[%s201 + $0x1430] sm:$0xff]
        %v906 = vld [vmem:[%s201 + $0x1438] sm:$0xff]
        %v907 = vld [vmem:[%s201 + $0x1440] sm:$0xff]
        %v908 = vld [vmem:[%s201 + $0x1448] sm:$0xff]
        %v909 = vld [vmem:[%s201 + $0x1450] sm:$0xff]
        %v910 = vld [vmem:[%s201 + $0x1458] sm:$0xff]
        %v911 = vld [vmem:[%s201 + $0x1460] sm:$0xff]
        %v912 = vld [vmem:[%s201 + $0x1468] sm:$0xff]
        %v913 = vld [vmem:[%s201 + $0x1470] sm:$0xff]
        %v914 = vld [vmem:[%s201 + $0x1478] sm:$0xff]
        %v915 = vld [vmem:[%s201 + $0x1480] sm:$0xff]
        %v916 = vld [vmem:[%s201 + $0x1488] sm:$0xff]
        %v917 = vld [vmem:[%s201 + $0x1490] sm:$0xff]
        %v918 = vld [vmem:[%s201 + $0x1498] sm:$0xff]
        %v919 = vld [vmem:[%s201 + $0x14a0] sm:$0xff]
        %v920 = vld [vmem:[%s201 + $0x14a8] sm:$0xff]
        %v921 = vld [vmem:[%s201 + $0x14b0] sm:$0xff]
        %v922 = vld [vmem:[%s201 + $0x14b8] sm:$0xff]
        %v923 = vld [vmem:[%s201 + $0x14c0] sm:$0xff]
        %v924 = vld [vmem:[%s201 + $0x14c8] sm:$0xff]
        %v925 = vld [vmem:[%s201 + $0x14d0] sm:$0xff]
        %v926 = vld [vmem:[%s201 + $0x14d8] sm:$0xff]
        %v927 = vld [vmem:[%s201 + $0x14e0] sm:$0xff]
        %v928 = vld [vmem:[%s201 + $0x14e8] sm:$0xff]
        %v929 = vld [vmem:[%s201 + $0x14f0] sm:$0xff]
        %v930 = vld [vmem:[%s201 + $0x14f8] sm:$0xff]
        %v931 = vld [vmem:[%s201 + $0x1500] sm:$0xff]
        %v932 = vld [vmem:[%s201 + $0x1508] sm:$0xff]
        %v933 = vld [vmem:[%s201 + $0x1510] sm:$0xff]
        %v934 = vld [vmem:[%s201 + $0x1518] sm:$0xff]
        %v935 = vld [vmem:[%s201 + $0x1520] sm:$0xff]
        %v936 = vld [vmem:[%s201 + $0x1528] sm:$0xff]
        %v937 = vld [vmem:[%s201 + $0x1530] sm:$0xff]
        %v938 = vld [vmem:[%s201 + $0x1538] sm:$0xff]
        %v939 = vld [vmem:[%s201 + $0x1540] sm:$0xff]
        %v940 = vld [vmem:[%s201 + $0x1548] sm:$0xff]
        %v941 = vld [vmem:[%s201 + $0x1550] sm:$0xff]
        %v942 = vld [vmem:[%s201 + $0x1558] sm:$0xff]
        %v943 = vld [vmem:[%s201 + $0x1560] sm:$0xff]
        %v944 = vld [vmem:[%s201 + $0x1568] sm:$0xff]
        %v945 = vld [vmem:[%s201 + $0x1570] sm:$0xff]
        %v946 = vld [vmem:[%s201 + $0x1578] sm:$0xff]
        %v947 = vld [vmem:[%s201 + $0x1580] sm:$0xff]
        %v948 = vld [vmem:[%s201 + $0x1588] sm:$0xff]
        %v949 = vld [vmem:[%s201 + $0x1590] sm:$0xff]
        %v950 = vld [vmem:[%s201 + $0x1598] sm:$0xff]
        %v951 = vld [vmem:[%s201 + $0x15a0] sm:$0xff]
        %v952 = vld [vmem:[%s201 + $0x15a8] sm:$0xff]
        %v953 = vld [vmem:[%s201 + $0x15b0] sm:$0xff]
        %v954 = vld [vmem:[%s201 + $0x15b8] sm:$0xff]
        %v955 = vld [vmem:[%s201 + $0x15c0] sm:$0xff]
        %v956 = vld [vmem:[%s201 + $0x15c8] sm:$0xff]
        %v957 = vld [vmem:[%s201 + $0x15d0] sm:$0xff]
        %v958 = vld [vmem:[%s201 + $0x15d8] sm:$0xff]
        %v959 = vld [vmem:[%s201 + $0x15e0] sm:$0xff]
        %v960 = vld [vmem:[%s201 + $0x15e8] sm:$0xff]
        %v961 = vld [vmem:[%s201 + $0x15f0] sm:$0xff]
        %v962 = vld [vmem:[%s201 + $0x15f8] sm:$0xff]
        %v963 = vld [vmem:[%s201 + $0x1600] sm:$0xff]
        %v964 = vld [vmem:[%s201 + $0x1608] sm:$0xff]
        %v965 = vld [vmem:[%s201 + $0x1610] sm:$0xff]
        %v966 = vld [vmem:[%s201 + $0x1618] sm:$0xff]
        %v967 = vld [vmem:[%s201 + $0x1620] sm:$0xff]
        %v968 = vld [vmem:[%s201 + $0x1628] sm:$0xff]
        %v969 = vld [vmem:[%s201 + $0x1630] sm:$0xff]
        %v970 = vld [vmem:[%s201 + $0x1638] sm:$0xff]
        %v971 = vld [vmem:[%s201 + $0x1640] sm:$0xff]
        %v972 = vld [vmem:[%s201 + $0x1648] sm:$0xff]
        %v973 = vld [vmem:[%s201 + $0x1650] sm:$0xff]
        %v974 = vld [vmem:[%s201 + $0x1658] sm:$0xff]
        %v975 = vld [vmem:[%s201 + $0x1660] sm:$0xff]
        %v976 = vld [vmem:[%s201 + $0x1668] sm:$0xff]
        %v977 = vld [vmem:[%s201 + $0x1670] sm:$0xff]
        %v978 = vld [vmem:[%s201 + $0x1678] sm:$0xff]
        %v979 = vld [vmem:[%s201 + $0x1680] sm:$0xff]
        %v980 = vld [vmem:[%s201 + $0x1688] sm:$0xff]
        %v981 = vld [vmem:[%s201 + $0x1690] sm:$0xff]
        %v982 = vld [vmem:[%s201 + $0x1698] sm:$0xff]
        %v983 = vld [vmem:[%s201 + $0x16a0] sm:$0xff]
        %v984 = vld [vmem:[%s201 + $0x16a8] sm:$0xff]
        %v985 = vld [vmem:[%s201 + $0x16b0] sm:$0xff]
        %v986 = vld [vmem:[%s201 + $0x16b8] sm:$0xff]
        %v987 = vld [vmem:[%s201 + $0x16c0] sm:$0xff]
        %v988 = vld [vmem:[%s201 + $0x16c8] sm:$0xff]
        %v989 = vld [vmem:[%s201 + $0x16d0] sm:$0xff]
        %v990 = vld [vmem:[%s201 + $0x16d8] sm:$0xff]
        %v991 = vld [vmem:[%s201 + $0x16e0] sm:$0xff]
        %v992 = vld [vmem:[%s201 + $0x16e8] sm:$0xff]
        %v993 = vld [vmem:[%s201 + $0x16f0] sm:$0xff]
        %v994 = vld [vmem:[%s201 + $0x16f8] sm:$0xff]
        %v995 = vld [vmem:[%s201 + $0x1700] sm:$0xff]
        %v996 = vld [vmem:[%s201 + $0x1708] sm:$0xff]
        %v997 = vld [vmem:[%s201 + $0x1710] sm:$0xff]
        %v998 = vld [vmem:[%s201 + $0x1718] sm:$0xff]
        %v999 = vld [vmem:[%s201 + $0x1720] sm:$0xff]
        %v1000 = vld [vmem:[%s201 + $0x1728] sm:$0xff]
        %v1001 = vld [vmem:[%s201 + $0x1730] sm:$0xff]
        %v1002 = vld [vmem:[%s201 + $0x1738] sm:$0xff]
        %v1003 = vld [vmem:[%s201 + $0x1740] sm:$0xff]
        %v1004 = vld [vmem:[%s201 + $0x1748] sm:$0xff]
        %v1005 = vld [vmem:[%s201 + $0x1750] sm:$0xff]
        %v1006 = vld [vmem:[%s201 + $0x1758] sm:$0xff]
        %v1007 = vld [vmem:[%s201 + $0x1760] sm:$0xff]
        %v1008 = vld [vmem:[%s201 + $0x1768] sm:$0xff]
        %v1009 = vld [vmem:[%s201 + $0x1770] sm:$0xff]
        %v1010 = vld [vmem:[%s201 + $0x1778] sm:$0xff]
        %v1011 = vld [vmem:[%s201 + $0x1780] sm:$0xff]
        %v1012 = vld [vmem:[%s201 + $0x1788] sm:$0xff]
        %v1013 = vld [vmem:[%s201 + $0x1790] sm:$0xff]
        %v1014 = vld [vmem:[%s201 + $0x1798] sm:$0xff]
        %v1015 = vld [vmem:[%s201 + $0x17a0] sm:$0xff]
        %v1016 = vld [vmem:[%s201 + $0x17a8] sm:$0xff]
        %v1017 = vld [vmem:[%s201 + $0x17b0] sm:$0xff]
        %v1018 = vld [vmem:[%s201 + $0x17b8] sm:$0xff]
        %v1019 = vld [vmem:[%s201 + $0x17c0] sm:$0xff]
        %v1020 = vld [vmem:[%s201 + $0x17c8] sm:$0xff]
        %v1021 = vld [vmem:[%s201 + $0x17d0] sm:$0xff]
        %v1022 = vld [vmem:[%s201 + $0x17d8] sm:$0xff]
        %v1023 = vld [vmem:[%s201 + $0x17e0] sm:$0xff]
        %v1024 = vld [vmem:[%s201 + $0x17e8] sm:$0xff]
        %v1025 = vld [vmem:[%s201 + $0x17f0] sm:$0xff]
        %v1026 = vld [vmem:[%s201 + $0x17f8] sm:$0xff]
        %v1027 = vld [vmem:[%s201 + $0x1800] sm:$0xff]
        %v1028 = vld [vmem:[%s201 + $0x1808] sm:$0xff]
        %v1029 = vld [vmem:[%s201 + $0x1810] sm:$0xff]
        %v1030 = vld [vmem:[%s201 + $0x1818] sm:$0xff]
        %v1031 = vld [vmem:[%s201 + $0x1820] sm:$0xff]
        %v1032 = vld [vmem:[%s201 + $0x1828] sm:$0xff]
        %v1033 = vld [vmem:[%s201 + $0x1830] sm:$0xff]
        %v1034 = vld [vmem:[%s201 + $0x1838] sm:$0xff]
        %v1035 = vld [vmem:[%s201 + $0x1840] sm:$0xff]
        %v1036 = vld [vmem:[%s201 + $0x1848] sm:$0xff]
        %v1037 = vld [vmem:[%s201 + $0x1850] sm:$0xff]
        %v1038 = vld [vmem:[%s201 + $0x1858] sm:$0xff]
        %v1039 = vld [vmem:[%s201 + $0x1860] sm:$0xff]
        %v1040 = vld [vmem:[%s201 + $0x1868] sm:$0xff]
        %v1041 = vld [vmem:[%s201 + $0x1870] sm:$0xff]
        %v1042 = vld [vmem:[%s201 + $0x1878] sm:$0xff]
        %v1043 = vld [vmem:[%s201 + $0x1880] sm:$0xff]
        %v1044 = vld [vmem:[%s201 + $0x1888] sm:$0xff]
        %v1045 = vld [vmem:[%s201 + $0x1890] sm:$0xff]
        %v1046 = vld [vmem:[%s201 + $0x1898] sm:$0xff]
        %v1047 = vld [vmem:[%s201 + $0x18a0] sm:$0xff]
        %v1048 = vld [vmem:[%s201 + $0x18a8] sm:$0xff]
        %v1049 = vld [vmem:[%s201 + $0x18b0] sm:$0xff]
        %v1050 = vld [vmem:[%s201 + $0x18b8] sm:$0xff]
        %v1051 = vld [vmem:[%s201 + $0x18c0] sm:$0xff]
        %v1052 = vld [vmem:[%s201 + $0x18c8] sm:$0xff]
        %v1053 = vld [vmem:[%s201 + $0x18d0] sm:$0xff]
        %v1054 = vld [vmem:[%s201 + $0x18d8] sm:$0xff]
        %v1055 = vld [vmem:[%s201 + $0x18e0] sm:$0xff]
        %v1056 = vld [vmem:[%s201 + $0x18e8] sm:$0xff]
        %v1057 = vld [vmem:[%s201 + $0x18f0] sm:$0xff]
        %v1058 = vld [vmem:[%s201 + $0x18f8] sm:$0xff]
        %v1059 = vld [vmem:[%s201 + $0x1900] sm:$0xff]
        %v1060 = vld [vmem:[%s201 + $0x1908] sm:$0xff]
        %v1061 = vld [vmem:[%s201 + $0x1910] sm:$0xff]
        %v1062 = vld [vmem:[%s201 + $0x1918] sm:$0xff]
        %v1063 = vld [vmem:[%s201 + $0x1920] sm:$0xff]
        %v1064 = vld [vmem:[%s201 + $0x1928] sm:$0xff]
        %v1065 = vld [vmem:[%s201 + $0x1930] sm:$0xff]
        %v1066 = vld [vmem:[%s201 + $0x1938] sm:$0xff]
        %v1067 = vld [vmem:[%s201 + $0x1940] sm:$0xff]
        %v1068 = vld [vmem:[%s201 + $0x1948] sm:$0xff]
        %v1069 = vld [vmem:[%s201 + $0x1950] sm:$0xff]
        %v1070 = vld [vmem:[%s201 + $0x1958] sm:$0xff]
        %v1071 = vld [vmem:[%s201 + $0x1960] sm:$0xff]
        %v1072 = vld [vmem:[%s201 + $0x1968] sm:$0xff]
        %v1073 = vld [vmem:[%s201 + $0x1970] sm:$0xff]
        %v1074 = vld [vmem:[%s201 + $0x1978] sm:$0xff]
        %v1075 = vld [vmem:[%s201 + $0x1980] sm:$0xff]
        %v1076 = vld [vmem:[%s201 + $0x1988] sm:$0xff]
        %v1077 = vld [vmem:[%s201 + $0x1990] sm:$0xff]
        %v1078 = vld [vmem:[%s201 + $0x1998] sm:$0xff]
        %v1079 = vld [vmem:[%s201 + $0x19a0] sm:$0xff]
        %v1080 = vld [vmem:[%s201 + $0x19a8] sm:$0xff]
        %v1081 = vld [vmem:[%s201 + $0x19b0] sm:$0xff]
        %v1082 = vld [vmem:[%s201 + $0x19b8] sm:$0xff]
        %v1083 = vld [vmem:[%s201 + $0x19c0] sm:$0xff]
        %v1084 = vld [vmem:[%s201 + $0x19c8] sm:$0xff]
        %v1085 = vld [vmem:[%s201 + $0x19d0] sm:$0xff]
        %v1086 = vld [vmem:[%s201 + $0x19d8] sm:$0xff]
        %v1087 = vld [vmem:[%s201 + $0x19e0] sm:$0xff]
        %v1088 = vld [vmem:[%s201 + $0x19e8] sm:$0xff]
        %v1089 = vld [vmem:[%s201 + $0x19f0] sm:$0xff]
        %v1090 = vld [vmem:[%s201 + $0x19f8] sm:$0xff]
        %v1091 = vld [vmem:[%s201 + $0x1a00] sm:$0xff]
        %v1092 = vld [vmem:[%s201 + $0x1a08] sm:$0xff]
        %v1093 = vld [vmem:[%s201 + $0x1a10] sm:$0xff]
        %v1094 = vld [vmem:[%s201 + $0x1a18] sm:$0xff]
        %v1095 = vld [vmem:[%s201 + $0x1a20] sm:$0xff]
        %v1096 = vld [vmem:[%s201 + $0x1a28] sm:$0xff]
        %v1097 = vld [vmem:[%s201 + $0x1a30] sm:$0xff]
        %v1098 = vld [vmem:[%s201 + $0x1a38] sm:$0xff]
        %v1099 = vld [vmem:[%s201 + $0x1a40] sm:$0xff]
        %v1100 = vld [vmem:[%s201 + $0x1a48] sm:$0xff]
        %v1101 = vld [vmem:[%s201 + $0x1a50] sm:$0xff]
        %v1102 = vld [vmem:[%s201 + $0x1a58] sm:$0xff]
        %v1103 = vld [vmem:[%s201 + $0x1a60] sm:$0xff]
        %v1104 = vld [vmem:[%s201 + $0x1a68] sm:$0xff]
        %v1105 = vld [vmem:[%s201 + $0x1a70] sm:$0xff]
        %v1106 = vld [vmem:[%s201 + $0x1a78] sm:$0xff]
        %v1107 = vld [vmem:[%s201 + $0x1a80] sm:$0xff]
        %v1108 = vld [vmem:[%s201 + $0x1a88] sm:$0xff]
        %v1109 = vld [vmem:[%s201 + $0x1a90] sm:$0xff]
        %v1110 = vld [vmem:[%s201 + $0x1a98] sm:$0xff]
        %v1111 = vld [vmem:[%s201 + $0x1aa0] sm:$0xff]
        %v1112 = vld [vmem:[%s201 + $0x1aa8] sm:$0xff]
        %v1113 = vld [vmem:[%s201 + $0x1ab0] sm:$0xff]
        %v1114 = vld [vmem:[%s201 + $0x1ab8] sm:$0xff]
        %v1115 = vld [vmem:[%s201 + $0x1ac0] sm:$0xff]
        %v1116 = vld [vmem:[%s201 + $0x1ac8] sm:$0xff]
        %v1117 = vld [vmem:[%s201 + $0x1ad0] sm:$0xff]
        %v1118 = vld [vmem:[%s201 + $0x1ad8] sm:$0xff]
        %v1119 = vld [vmem:[%s201 + $0x1ae0] sm:$0xff]
        %v1120 = vld [vmem:[%s201 + $0x1ae8] sm:$0xff]
        %v1121 = vld [vmem:[%s201 + $0x1af0] sm:$0xff]
        %v1122 = vld [vmem:[%s201 + $0x1af8] sm:$0xff]
        %v1123 = vld [vmem:[%s201 + $0x1b00] sm:$0xff]
        %v1124 = vld [vmem:[%s201 + $0x1b08] sm:$0xff]
        %v1125 = vld [vmem:[%s201 + $0x1b10] sm:$0xff]
        %v1126 = vld [vmem:[%s201 + $0x1b18] sm:$0xff]
        %v1127 = vld [vmem:[%s201 + $0x1b20] sm:$0xff]
        %v1128 = vld [vmem:[%s201 + $0x1b28] sm:$0xff]
        %v1129 = vld [vmem:[%s201 + $0x1b30] sm:$0xff]
        %v1130 = vld [vmem:[%s201 + $0x1b38] sm:$0xff]
        %v1131 = vld [vmem:[%s201 + $0x1b40] sm:$0xff]
        %v1132 = vld [vmem:[%s201 + $0x1b48] sm:$0xff]
        %v1133 = vld [vmem:[%s201 + $0x1b50] sm:$0xff]
        %v1134 = vld [vmem:[%s201 + $0x1b58] sm:$0xff]
        %v1135 = vld [vmem:[%s201 + $0x1b60] sm:$0xff]
        %v1136 = vld [vmem:[%s201 + $0x1b68] sm:$0xff]
        %v1137 = vld [vmem:[%s201 + $0x1b70] sm:$0xff]
        %v1138 = vld [vmem:[%s201 + $0x1b78] sm:$0xff]
        %v1139 = vld [vmem:[%s201 + $0x1b80] sm:$0xff]
        %v1140 = vld [vmem:[%s201 + $0x1b88] sm:$0xff]
        %v1141 = vld [vmem:[%s201 + $0x1b90] sm:$0xff]
        %v1142 = vld [vmem:[%s201 + $0x1b98] sm:$0xff]
        %v1143 = vld [vmem:[%s201 + $0x1ba0] sm:$0xff]
        %v1144 = vld [vmem:[%s201 + $0x1ba8] sm:$0xff]
        %v1145 = vld [vmem:[%s201 + $0x1bb0] sm:$0xff]
        %v1146 = vld [vmem:[%s201 + $0x1bb8] sm:$0xff]
        %v1147 = vld [vmem:[%s201 + $0x1bc0] sm:$0xff]
        %v1148 = vld [vmem:[%s201 + $0x1bc8] sm:$0xff]
        %v1149 = vld [vmem:[%s201 + $0x1bd0] sm:$0xff]
        %v1150 = vld [vmem:[%s201 + $0x1bd8] sm:$0xff]
        %v1151 = vld [vmem:[%s201 + $0x1be0] sm:$0xff]
        %v1152 = vld [vmem:[%s201 + $0x1be8] sm:$0xff]
        %v1153 = vld [vmem:[%s201 + $0x1bf0] sm:$0xff]
        %v1154 = vld [vmem:[%s201 + $0x1bf8] sm:$0xff]
        %v1155 = vld [vmem:[%s201 + $0x1c00] sm:$0xff]
        %v1156 = vld [vmem:[%s201 + $0x1c08] sm:$0xff]
        %v1157 = vld [vmem:[%s201 + $0x1c10] sm:$0xff]
        %v1158 = vld [vmem:[%s201 + $0x1c18] sm:$0xff]
        %v1159 = vld [vmem:[%s201 + $0x1c20] sm:$0xff]
        %v1160 = vld [vmem:[%s201 + $0x1c28] sm:$0xff]
        %v1161 = vld [vmem:[%s201 + $0x1c30] sm:$0xff]
        %v1162 = vld [vmem:[%s201 + $0x1c38] sm:$0xff]
        %v1163 = vld [vmem:[%s201 + $0x1c40] sm:$0xff]
        %v1164 = vld [vmem:[%s201 + $0x1c48] sm:$0xff]
        %v1165 = vld [vmem:[%s201 + $0x1c50] sm:$0xff]
        %v1166 = vld [vmem:[%s201 + $0x1c58] sm:$0xff]
        %v1167 = vld [vmem:[%s201 + $0x1c60] sm:$0xff]
        %v1168 = vld [vmem:[%s201 + $0x1c68] sm:$0xff]
        %v1169 = vld [vmem:[%s201 + $0x1c70] sm:$0xff]
        %v1170 = vld [vmem:[%s201 + $0x1c78] sm:$0xff]
        %v1171 = vld [vmem:[%s201 + $0x1c80] sm:$0xff]
        %v1172 = vld [vmem:[%s201 + $0x1c88] sm:$0xff]
        %v1173 = vld [vmem:[%s201 + $0x1c90] sm:$0xff]
        %v1174 = vld [vmem:[%s201 + $0x1c98] sm:$0xff]
        %v1175 = vld [vmem:[%s201 + $0x1ca0] sm:$0xff]
        %v1176 = vld [vmem:[%s201 + $0x1ca8] sm:$0xff]
        %v1177 = vld [vmem:[%s201 + $0x1cb0] sm:$0xff]
        %v1178 = vld [vmem:[%s201 + $0x1cb8] sm:$0xff]
        %v1179 = vld [vmem:[%s201 + $0x1cc0] sm:$0xff]
        %v1180 = vld [vmem:[%s201 + $0x1cc8] sm:$0xff]
        %v1181 = vld [vmem:[%s201 + $0x1cd0] sm:$0xff]
        %v1182 = vld [vmem:[%s201 + $0x1cd8] sm:$0xff]
        %v1183 = vld [vmem:[%s201 + $0x1ce0] sm:$0xff]
        %v1184 = vld [vmem:[%s201 + $0x1ce8] sm:$0xff]
        %v1185 = vld [vmem:[%s201 + $0x1cf0] sm:$0xff]
        %v1186 = vld [vmem:[%s201 + $0x1cf8] sm:$0xff]
        %v1187 = vld [vmem:[%s201 + $0x1d00] sm:$0xff]
        %v1188 = vld [vmem:[%s201 + $0x1d08] sm:$0xff]
        %v1189 = vld [vmem:[%s201 + $0x1d10] sm:$0xff]
        %v1190 = vld [vmem:[%s201 + $0x1d18] sm:$0xff]
        %v1191 = vld [vmem:[%s201 + $0x1d20] sm:$0xff]
        %v1192 = vld [vmem:[%s201 + $0x1d28] sm:$0xff]
        %v1193 = vld [vmem:[%s201 + $0x1d30] sm:$0xff]
        %v1194 = vld [vmem:[%s201 + $0x1d38] sm:$0xff]
        %v1195 = vld [vmem:[%s201 + $0x1d40] sm:$0xff]
        %v1196 = vld [vmem:[%s201 + $0x1d48] sm:$0xff]
        %v1197 = vld [vmem:[%s201 + $0x1d50] sm:$0xff]
        %v1198 = vld [vmem:[%s201 + $0x1d58] sm:$0xff]
        %v1199 = vld [vmem:[%s201 + $0x1d60] sm:$0xff]
        %v1200 = vld [vmem:[%s201 + $0x1d68] sm:$0xff]
        %v1201 = vld [vmem:[%s201 + $0x1d70] sm:$0xff]
        %v1202 = vld [vmem:[%s201 + $0x1d78] sm:$0xff]
        %v1203 = vld [vmem:[%s201 + $0x1d80] sm:$0xff]
        %v1204 = vld [vmem:[%s201 + $0x1d88] sm:$0xff]
        %v1205 = vld [vmem:[%s201 + $0x1d90] sm:$0xff]
        %v1206 = vld [vmem:[%s201 + $0x1d98] sm:$0xff]
        %v1207 = vld [vmem:[%s201 + $0x1da0] sm:$0xff]
        %v1208 = vld [vmem:[%s201 + $0x1da8] sm:$0xff]
        %v1209 = vld [vmem:[%s201 + $0x1db0] sm:$0xff]
        %v1210 = vld [vmem:[%s201 + $0x1db8] sm:$0xff]
        %v1211 = vld [vmem:[%s201 + $0x1dc0] sm:$0xff]
        %v1212 = vld [vmem:[%s201 + $0x1dc8] sm:$0xff]
        %v1213 = vld [vmem:[%s201 + $0x1dd0] sm:$0xff]
        %v1214 = vld [vmem:[%s201 + $0x1dd8] sm:$0xff]
        %v1215 = vld [vmem:[%s201 + $0x1de0] sm:$0xff]
        %v1216 = vld [vmem:[%s201 + $0x1de8] sm:$0xff]
        %v1217 = vld [vmem:[%s201 + $0x1df0] sm:$0xff]
        %v1218 = vld [vmem:[%s201 + $0x1df8] sm:$0xff]
        %v1219 = vld [vmem:[%s201 + $0x1e00] sm:$0xff]
        %v1220 = vld [vmem:[%s201 + $0x1e08] sm:$0xff]
        %v1221 = vld [vmem:[%s201 + $0x1e10] sm:$0xff]
        %v1222 = vld [vmem:[%s201 + $0x1e18] sm:$0xff]
        %v1223 = vld [vmem:[%s201 + $0x1e20] sm:$0xff]
        %v1224 = vld [vmem:[%s201 + $0x1e28] sm:$0xff]
        %v1225 = vld [vmem:[%s201 + $0x1e30] sm:$0xff]
        %v1226 = vld [vmem:[%s201 + $0x1e38] sm:$0xff]
        %v1227 = vld [vmem:[%s201 + $0x1e40] sm:$0xff]
        %v1228 = vld [vmem:[%s201 + $0x1e48] sm:$0xff]
        %v1229 = vld [vmem:[%s201 + $0x1e50] sm:$0xff]
        %v1230 = vld [vmem:[%s201 + $0x1e58] sm:$0xff]
        %v1231 = vld [vmem:[%s201 + $0x1e60] sm:$0xff]
        %v1232 = vld [vmem:[%s201 + $0x1e68] sm:$0xff]
        %v1233 = vld [vmem:[%s201 + $0x1e70] sm:$0xff]
        %v1234 = vld [vmem:[%s201 + $0x1e78] sm:$0xff]
        %v1235 = vld [vmem:[%s201 + $0x1e80] sm:$0xff]
        %v1236 = vld [vmem:[%s201 + $0x1e88] sm:$0xff]
        %v1237 = vld [vmem:[%s201 + $0x1e90] sm:$0xff]
        %v1238 = vld [vmem:[%s201 + $0x1e98] sm:$0xff]
        %v1239 = vld [vmem:[%s201 + $0x1ea0] sm:$0xff]
        %v1240 = vld [vmem:[%s201 + $0x1ea8] sm:$0xff]
        %v1241 = vld [vmem:[%s201 + $0x1eb0] sm:$0xff]
        %v1242 = vld [vmem:[%s201 + $0x1eb8] sm:$0xff]
        %v1243 = vld [vmem:[%s201 + $0x1ec0] sm:$0xff]
        %v1244 = vld [vmem:[%s201 + $0x1ec8] sm:$0xff]
        %v1245 = vld [vmem:[%s201 + $0x1ed0] sm:$0xff]
        %v1246 = vld [vmem:[%s201 + $0x1ed8] sm:$0xff]
        %v1247 = vld [vmem:[%s201 + $0x1ee0] sm:$0xff]
        %v1248 = vld [vmem:[%s201 + $0x1ee8] sm:$0xff]
        %v1249 = vld [vmem:[%s201 + $0x1ef0] sm:$0xff]
        %v1250 = vld [vmem:[%s201 + $0x1ef8] sm:$0xff]
        %v1251 = vld [vmem:[%s201 + $0x1f00] sm:$0xff]
        %v1252 = vld [vmem:[%s201 + $0x1f08] sm:$0xff]
        %v1253 = vld [vmem:[%s201 + $0x1f10] sm:$0xff]
        %v1254 = vld [vmem:[%s201 + $0x1f18] sm:$0xff]
        %v1255 = vld [vmem:[%s201 + $0x1f20] sm:$0xff]
        %v1256 = vld [vmem:[%s201 + $0x1f28] sm:$0xff]
        %v1257 = vld [vmem:[%s201 + $0x1f30] sm:$0xff]
        %v1258 = vld [vmem:[%s201 + $0x1f38] sm:$0xff]
        %v1259 = vld [vmem:[%s201 + $0x1f40] sm:$0xff]
        %v1260 = vld [vmem:[%s201 + $0x1f48] sm:$0xff]
        %v1261 = vld [vmem:[%s201 + $0x1f50] sm:$0xff]
        %v1262 = vld [vmem:[%s201 + $0x1f58] sm:$0xff]
        %v1263 = vld [vmem:[%s201 + $0x1f60] sm:$0xff]
        %v1264 = vld [vmem:[%s201 + $0x1f68] sm:$0xff]
        %v1265 = vld [vmem:[%s201 + $0x1f70] sm:$0xff]
        %v1266 = vld [vmem:[%s201 + $0x1f78] sm:$0xff]
        %v1267 = vld [vmem:[%s201 + $0x1f80] sm:$0xff]
        %v1268 = vld [vmem:[%s201 + $0x1f88] sm:$0xff]
        %v1269 = vld [vmem:[%s201 + $0x1f90] sm:$0xff]
        %v1270 = vld [vmem:[%s201 + $0x1f98] sm:$0xff]
        %v1271 = vld [vmem:[%s201 + $0x1fa0] sm:$0xff]
        %v1272 = vld [vmem:[%s201 + $0x1fa8] sm:$0xff]
        %v1273 = vld [vmem:[%s201 + $0x1fb0] sm:$0xff]
        %v1274 = vld [vmem:[%s201 + $0x1fb8] sm:$0xff]
        %v1275 = vld [vmem:[%s201 + $0x1fc0] sm:$0xff]
        %v1276 = vld [vmem:[%s201 + $0x1fc8] sm:$0xff]
        %v1277 = vld [vmem:[%s201 + $0x1fd0] sm:$0xff]
        %v1278 = vld [vmem:[%s201 + $0x1fd8] sm:$0xff]
        %v1279 = vld [vmem:[%s201 + $0x1fe0] sm:$0xff]
        %v1280 = vld [vmem:[%s201 + $0x1fe8] sm:$0xff]
        %v1281 = vld [vmem:[%s201 + $0x1ff0] sm:$0xff]
        %v1282 = vld [vmem:[%s201 + $0x1ff8] sm:$0xff]
        %v1285 = vcombine.high %v257, %v257
        %v1287 = vunpack.c.l.s4 1966171168
        %v1288 = vunpack.c.0.s8 %v1287
        %v1289 = vlaneseq
        %v1290 = vshrl.u32 %v1289, 7
        %v1291 = vsub.s32 %v1288, %v1290
        %v1292 = vrot.slane %v257, %v1291
        %v1294 = vunpack.c.l.s4 1966171168
        %v1295 = vunpack.c.0.s8 %v1294
        %v1296 = vlaneseq
        %v1297 = vshrl.u32 %v1296, 7
        %v1298 = vsub.s32 %v1295, %v1297
        %v1299 = vrot.slane %v1285, %v1298
        %v1300 = vcombine.high %v1292, %v1292
        %v1301 = vcombine.high %v1299, %v1299
        %v1303 = vunpack.c.l.s4 1966171168
        %v1304 = vunpack.c.0.s8 %v1303
        %v1305 = vlaneseq
        %v1306 = vshrl.u32 %v1305, 7
        %v1307 = vsub.s32 %v1304, %v1306
        %v1308 = vrot.slane %v1292, %v1307
        %v1310 = vunpack.c.l.s4 1966171168
        %v1311 = vunpack.c.0.s8 %v1310
        %v1312 = vlaneseq
        %v1313 = vshrl.u32 %v1312, 7
        %v1314 = vsub.s32 %v1311, %v1313
        %v1315 = vrot.slane %v1299, %v1314
        %v1317 = vunpack.c.l.s4 1966171168
        %v1318 = vunpack.c.0.s8 %v1317
        %v1319 = vlaneseq
        %v1320 = vshrl.u32 %v1319, 7
        %v1321 = vsub.s32 %v1318, %v1320
        %v1322 = vrot.slane %v1300, %v1321
        %v1324 = vunpack.c.l.s4 1966171168
        %v1325 = vunpack.c.0.s8 %v1324
        %v1326 = vlaneseq
        %v1327 = vshrl.u32 %v1326, 7
        %v1328 = vsub.s32 %v1325, %v1327
        %v1329 = vrot.slane %v1301, %v1328
        %v1330 = vcombine.high %v1308, %v1308
        %v1331 = vcombine.high %v1315, %v1315
        %v1332 = vcombine.high %v1322, %v1322
        %v1333 = vcombine.high %v1329, %v1329
        %v1334 = vcombine.high %v258, %v258
        %v1336 = vunpack.c.l.s4 1966171168
        %v1337 = vunpack.c.0.s8 %v1336
        %v1338 = vlaneseq
        %v1339 = vshrl.u32 %v1338, 7
        %v1340 = vsub.s32 %v1337, %v1339
        %v1341 = vrot.slane %v258, %v1340
        %v1343 = vunpack.c.l.s4 1966171168
        %v1344 = vunpack.c.0.s8 %v1343
        %v1345 = vlaneseq
        %v1346 = vshrl.u32 %v1345, 7
        %v1347 = vsub.s32 %v1344, %v1346
        %v1348 = vrot.slane %v1334, %v1347
        %v1349 = vcombine.high %v1341, %v1341
        %v1350 = vcombine.high %v1348, %v1348
        %v1352 = vunpack.c.l.s4 1966171168
        %v1353 = vunpack.c.0.s8 %v1352
        %v1354 = vlaneseq
        %v1355 = vshrl.u32 %v1354, 7
        %v1356 = vsub.s32 %v1353, %v1355
        %v1357 = vrot.slane %v1341, %v1356
        %v1359 = vunpack.c.l.s4 1966171168
        %v1360 = vunpack.c.0.s8 %v1359
        %v1361 = vlaneseq
        %v1362 = vshrl.u32 %v1361, 7
        %v1363 = vsub.s32 %v1360, %v1362
        %v1364 = vrot.slane %v1348, %v1363
        %v1366 = vunpack.c.l.s4 1966171168
        %v1367 = vunpack.c.0.s8 %v1366
        %v1368 = vlaneseq
        %v1369 = vshrl.u32 %v1368, 7
        %v1370 = vsub.s32 %v1367, %v1369
        %v1371 = vrot.slane %v1349, %v1370
        %v1373 = vunpack.c.l.s4 1966171168
        %v1374 = vunpack.c.0.s8 %v1373
        %v1375 = vlaneseq
        %v1376 = vshrl.u32 %v1375, 7
        %v1377 = vsub.s32 %v1374, %v1376
        %v1378 = vrot.slane %v1350, %v1377
        %v1379 = vcombine.high %v1357, %v1357
        %v1380 = vcombine.high %v1364, %v1364
        %v1381 = vcombine.high %v1371, %v1371
        %v1382 = vcombine.high %v1378, %v1378
        %v2423 = vunpack.c.l.b16 %v259
        %v2424 = vunpack.c.h.b16 %v259
        %v2425 = vunpack.c.l.b16 %v260
        %v2426 = vunpack.c.h.b16 %v260
        %v2427 = vunpack.c.l.b16 %v261
        %v2428 = vunpack.c.h.b16 %v261
        %v2429 = vunpack.c.l.b16 %v262
        %v2430 = vunpack.c.h.b16 %v262
        %v2431 = vunpack.c.l.b16 %v263
        %v2432 = vunpack.c.h.b16 %v263
        %v2433 = vunpack.c.l.b16 %v264
        %v2434 = vunpack.c.h.b16 %v264
        %v2435 = vunpack.c.l.b16 %v265
        %v2436 = vunpack.c.h.b16 %v265
        %v2437 = vunpack.c.l.b16 %v266
        %v2438 = vunpack.c.h.b16 %v266
        %v2439 = vunpack.c.l.b16 %v267
        %v2440 = vunpack.c.h.b16 %v267
        %v2441 = vunpack.c.l.b16 %v268
        %v2442 = vunpack.c.h.b16 %v268
        %v2443 = vunpack.c.l.b16 %v269
        %v2444 = vunpack.c.h.b16 %v269
        %v2445 = vunpack.c.l.b16 %v270
        %v2446 = vunpack.c.h.b16 %v270
        %v2447 = vunpack.c.l.b16 %v271
        %v2448 = vunpack.c.h.b16 %v271
        %v2449 = vunpack.c.l.b16 %v272
        %v2450 = vunpack.c.h.b16 %v272
        %v2451 = vunpack.c.l.b16 %v273
        %v2452 = vunpack.c.h.b16 %v273
        %v2453 = vunpack.c.l.b16 %v274
        %v2454 = vunpack.c.h.b16 %v274
        %v2455 = vunpack.c.l.b16 %v275
        %v2456 = vunpack.c.h.b16 %v275
        %v2457 = vunpack.c.l.b16 %v276
        %v2458 = vunpack.c.h.b16 %v276
        %v2459 = vunpack.c.l.b16 %v277
        %v2460 = vunpack.c.h.b16 %v277
        %v2461 = vunpack.c.l.b16 %v278
        %v2462 = vunpack.c.h.b16 %v278
        %v2463 = vunpack.c.l.b16 %v279
        %v2464 = vunpack.c.h.b16 %v279
        %v2465 = vunpack.c.l.b16 %v280
        %v2466 = vunpack.c.h.b16 %v280
        %v2467 = vunpack.c.l.b16 %v281
        %v2468 = vunpack.c.h.b16 %v281
        %v2469 = vunpack.c.l.b16 %v282
        %v2470 = vunpack.c.h.b16 %v282
        %v2471 = vunpack.c.l.b16 %v283
        %v2472 = vunpack.c.h.b16 %v283
        %v2473 = vunpack.c.l.b16 %v284
        %v2474 = vunpack.c.h.b16 %v284
        %v2475 = vunpack.c.l.b16 %v285
        %v2476 = vunpack.c.h.b16 %v285
        %v2477 = vunpack.c.l.b16 %v286
        %v2478 = vunpack.c.h.b16 %v286
        %v2479 = vunpack.c.l.b16 %v287
        %v2480 = vunpack.c.h.b16 %v287
        %v2481 = vunpack.c.l.b16 %v288
        %v2482 = vunpack.c.h.b16 %v288
        %v2483 = vunpack.c.l.b16 %v289
        %v2484 = vunpack.c.h.b16 %v289
        %v2485 = vunpack.c.l.b16 %v290
        %v2486 = vunpack.c.h.b16 %v290
        %v2487 = vunpack.c.l.b16 %v291
        %v2488 = vunpack.c.h.b16 %v291
        %v2489 = vunpack.c.l.b16 %v292
        %v2490 = vunpack.c.h.b16 %v292
        %v2491 = vunpack.c.l.b16 %v293
        %v2492 = vunpack.c.h.b16 %v293
        %v2493 = vunpack.c.l.b16 %v294
        %v2494 = vunpack.c.h.b16 %v294
        %v2495 = vunpack.c.l.b16 %v295
        %v2496 = vunpack.c.h.b16 %v295
        %v2497 = vunpack.c.l.b16 %v296
        %v2498 = vunpack.c.h.b16 %v296
        %v2499 = vunpack.c.l.b16 %v297
        %v2500 = vunpack.c.h.b16 %v297
        %v2501 = vunpack.c.l.b16 %v298
        %v2502 = vunpack.c.h.b16 %v298
        %v2503 = vunpack.c.l.b16 %v299
        %v2504 = vunpack.c.h.b16 %v299
        %v2505 = vunpack.c.l.b16 %v300
        %v2506 = vunpack.c.h.b16 %v300
        %v2507 = vunpack.c.l.b16 %v301
        %v2508 = vunpack.c.h.b16 %v301
        %v2509 = vunpack.c.l.b16 %v302
        %v2510 = vunpack.c.h.b16 %v302
        %v2511 = vunpack.c.l.b16 %v303
        %v2512 = vunpack.c.h.b16 %v303
        %v2513 = vunpack.c.l.b16 %v304
        %v2514 = vunpack.c.h.b16 %v304
        %v2515 = vunpack.c.l.b16 %v305
        %v2516 = vunpack.c.h.b16 %v305
        %v2517 = vunpack.c.l.b16 %v306
        %v2518 = vunpack.c.h.b16 %v306
        %v2519 = vunpack.c.l.b16 %v307
        %v2520 = vunpack.c.h.b16 %v307
        %v2521 = vunpack.c.l.b16 %v308
        %v2522 = vunpack.c.h.b16 %v308
        %v2523 = vunpack.c.l.b16 %v309
        %v2524 = vunpack.c.h.b16 %v309
        %v2525 = vunpack.c.l.b16 %v310
        %v2526 = vunpack.c.h.b16 %v310
        %v2527 = vunpack.c.l.b16 %v311
        %v2528 = vunpack.c.h.b16 %v311
        %v2529 = vunpack.c.l.b16 %v312
        %v2530 = vunpack.c.h.b16 %v312
        %v2531 = vunpack.c.l.b16 %v313
        %v2532 = vunpack.c.h.b16 %v313
        %v2533 = vunpack.c.l.b16 %v314
        %v2534 = vunpack.c.h.b16 %v314
        %v2535 = vunpack.c.l.b16 %v315
        %v2536 = vunpack.c.h.b16 %v315
        %v2537 = vunpack.c.l.b16 %v316
        %v2538 = vunpack.c.h.b16 %v316
        %v2539 = vunpack.c.l.b16 %v317
        %v2540 = vunpack.c.h.b16 %v317
        %v2541 = vunpack.c.l.b16 %v318
        %v2542 = vunpack.c.h.b16 %v318
        %v2543 = vunpack.c.l.b16 %v319
        %v2544 = vunpack.c.h.b16 %v319
        %v2545 = vunpack.c.l.b16 %v320
        %v2546 = vunpack.c.h.b16 %v320
        %v2547 = vunpack.c.l.b16 %v321
        %v2548 = vunpack.c.h.b16 %v321
        %v2549 = vunpack.c.l.b16 %v322
        %v2550 = vunpack.c.h.b16 %v322
        %v2551 = vunpack.c.l.b16 %v323
        %v2552 = vunpack.c.h.b16 %v323
        %v2553 = vunpack.c.l.b16 %v324
        %v2554 = vunpack.c.h.b16 %v324
        %v2555 = vunpack.c.l.b16 %v325
        %v2556 = vunpack.c.h.b16 %v325
        %v2557 = vunpack.c.l.b16 %v326
        %v2558 = vunpack.c.h.b16 %v326
        %v2559 = vunpack.c.l.b16 %v327
        %v2560 = vunpack.c.h.b16 %v327
        %v2561 = vunpack.c.l.b16 %v328
        %v2562 = vunpack.c.h.b16 %v328
        %v2563 = vunpack.c.l.b16 %v329
        %v2564 = vunpack.c.h.b16 %v329
        %v2565 = vunpack.c.l.b16 %v330
        %v2566 = vunpack.c.h.b16 %v330
        %v2567 = vunpack.c.l.b16 %v331
        %v2568 = vunpack.c.h.b16 %v331
        %v2569 = vunpack.c.l.b16 %v332
        %v2570 = vunpack.c.h.b16 %v332
        %v2571 = vunpack.c.l.b16 %v333
        %v2572 = vunpack.c.h.b16 %v333
        %v2573 = vunpack.c.l.b16 %v334
        %v2574 = vunpack.c.h.b16 %v334
        %v2575 = vunpack.c.l.b16 %v335
        %v2576 = vunpack.c.h.b16 %v335
        %v2577 = vunpack.c.l.b16 %v336
        %v2578 = vunpack.c.h.b16 %v336
        %v2579 = vunpack.c.l.b16 %v337
        %v2580 = vunpack.c.h.b16 %v337
        %v2581 = vunpack.c.l.b16 %v338
        %v2582 = vunpack.c.h.b16 %v338
        %v2583 = vunpack.c.l.b16 %v339
        %v2584 = vunpack.c.h.b16 %v339
        %v2585 = vunpack.c.l.b16 %v340
        %v2586 = vunpack.c.h.b16 %v340
        %v2587 = vunpack.c.l.b16 %v341
        %v2588 = vunpack.c.h.b16 %v341
        %v2589 = vunpack.c.l.b16 %v342
        %v2590 = vunpack.c.h.b16 %v342
        %v2591 = vunpack.c.l.b16 %v343
        %v2592 = vunpack.c.h.b16 %v343
        %v2593 = vunpack.c.l.b16 %v344
        %v2594 = vunpack.c.h.b16 %v344
        %v2595 = vunpack.c.l.b16 %v345
        %v2596 = vunpack.c.h.b16 %v345
        %v2597 = vunpack.c.l.b16 %v346
        %v2598 = vunpack.c.h.b16 %v346
        %v2599 = vunpack.c.l.b16 %v347
        %v2600 = vunpack.c.h.b16 %v347
        %v2601 = vunpack.c.l.b16 %v348
        %v2602 = vunpack.c.h.b16 %v348
        %v2603 = vunpack.c.l.b16 %v349
        %v2604 = vunpack.c.h.b16 %v349
        %v2605 = vunpack.c.l.b16 %v350
        %v2606 = vunpack.c.h.b16 %v350
        %v2607 = vunpack.c.l.b16 %v351
        %v2608 = vunpack.c.h.b16 %v351
        %v2609 = vunpack.c.l.b16 %v352
        %v2610 = vunpack.c.h.b16 %v352
        %v2611 = vunpack.c.l.b16 %v353
        %v2612 = vunpack.c.h.b16 %v353
        %v2613 = vunpack.c.l.b16 %v354
        %v2614 = vunpack.c.h.b16 %v354
        %v2615 = vunpack.c.l.b16 %v355
        %v2616 = vunpack.c.h.b16 %v355
        %v2617 = vunpack.c.l.b16 %v356
        %v2618 = vunpack.c.h.b16 %v356
        %v2619 = vunpack.c.l.b16 %v357
        %v2620 = vunpack.c.h.b16 %v357
        %v2621 = vunpack.c.l.b16 %v358
        %v2622 = vunpack.c.h.b16 %v358
        %v2623 = vunpack.c.l.b16 %v359
        %v2624 = vunpack.c.h.b16 %v359
        %v2625 = vunpack.c.l.b16 %v360
        %v2626 = vunpack.c.h.b16 %v360
        %v2627 = vunpack.c.l.b16 %v361
        %v2628 = vunpack.c.h.b16 %v361
        %v2629 = vunpack.c.l.b16 %v362
        %v2630 = vunpack.c.h.b16 %v362
        %v2631 = vunpack.c.l.b16 %v363
        %v2632 = vunpack.c.h.b16 %v363
        %v2633 = vunpack.c.l.b16 %v364
        %v2634 = vunpack.c.h.b16 %v364
        %v2635 = vunpack.c.l.b16 %v365
        %v2636 = vunpack.c.h.b16 %v365
        %v2637 = vunpack.c.l.b16 %v366
        %v2638 = vunpack.c.h.b16 %v366
        %v2639 = vunpack.c.l.b16 %v367
        %v2640 = vunpack.c.h.b16 %v367
        %v2641 = vunpack.c.l.b16 %v368
        %v2642 = vunpack.c.h.b16 %v368
        %v2643 = vunpack.c.l.b16 %v369
        %v2644 = vunpack.c.h.b16 %v369
        %v2645 = vunpack.c.l.b16 %v370
        %v2646 = vunpack.c.h.b16 %v370
        %v2647 = vunpack.c.l.b16 %v371
        %v2648 = vunpack.c.h.b16 %v371
        %v2649 = vunpack.c.l.b16 %v372
        %v2650 = vunpack.c.h.b16 %v372
        %v2651 = vunpack.c.l.b16 %v373
        %v2652 = vunpack.c.h.b16 %v373
        %v2653 = vunpack.c.l.b16 %v374
        %v2654 = vunpack.c.h.b16 %v374
        %v2655 = vunpack.c.l.b16 %v375
        %v2656 = vunpack.c.h.b16 %v375
        %v2657 = vunpack.c.l.b16 %v376
        %v2658 = vunpack.c.h.b16 %v376
        %v2659 = vunpack.c.l.b16 %v377
        %v2660 = vunpack.c.h.b16 %v377
        %v2661 = vunpack.c.l.b16 %v378
        %v2662 = vunpack.c.h.b16 %v378
        %v2663 = vunpack.c.l.b16 %v379
        %v2664 = vunpack.c.h.b16 %v379
        %v2665 = vunpack.c.l.b16 %v380
        %v2666 = vunpack.c.h.b16 %v380
        %v2667 = vunpack.c.l.b16 %v381
        %v2668 = vunpack.c.h.b16 %v381
        %v2669 = vunpack.c.l.b16 %v382
        %v2670 = vunpack.c.h.b16 %v382
        %v2671 = vunpack.c.l.b16 %v383
        %v2672 = vunpack.c.h.b16 %v383
        %v2673 = vunpack.c.l.b16 %v384
        %v2674 = vunpack.c.h.b16 %v384
        %v2675 = vunpack.c.l.b16 %v385
        %v2676 = vunpack.c.h.b16 %v385
        %v2677 = vunpack.c.l.b16 %v386
        %v2678 = vunpack.c.h.b16 %v386
        %v2679 = vunpack.c.l.b16 %v387
        %v2680 = vunpack.c.h.b16 %v387
        %v2681 = vunpack.c.l.b16 %v388
        %v2682 = vunpack.c.h.b16 %v388
        %v2683 = vunpack.c.l.b16 %v389
        %v2684 = vunpack.c.h.b16 %v389
        %v2685 = vunpack.c.l.b16 %v390
        %v2686 = vunpack.c.h.b16 %v390
        %v2687 = vunpack.c.l.b16 %v391
        %v2688 = vunpack.c.h.b16 %v391
        %v2689 = vunpack.c.l.b16 %v392
        %v2690 = vunpack.c.h.b16 %v392
        %v2691 = vunpack.c.l.b16 %v393
        %v2692 = vunpack.c.h.b16 %v393
        %v2693 = vunpack.c.l.b16 %v394
        %v2694 = vunpack.c.h.b16 %v394
        %v2695 = vunpack.c.l.b16 %v395
        %v2696 = vunpack.c.h.b16 %v395
        %v2697 = vunpack.c.l.b16 %v396
        %v2698 = vunpack.c.h.b16 %v396
        %v2699 = vunpack.c.l.b16 %v397
        %v2700 = vunpack.c.h.b16 %v397
        %v2701 = vunpack.c.l.b16 %v398
        %v2702 = vunpack.c.h.b16 %v398
        %v2703 = vunpack.c.l.b16 %v399
        %v2704 = vunpack.c.h.b16 %v399
        %v2705 = vunpack.c.l.b16 %v400
        %v2706 = vunpack.c.h.b16 %v400
        %v2707 = vunpack.c.l.b16 %v401
        %v2708 = vunpack.c.h.b16 %v401
        %v2709 = vunpack.c.l.b16 %v402
        %v2710 = vunpack.c.h.b16 %v402
        %v2711 = vunpack.c.l.b16 %v403
        %v2712 = vunpack.c.h.b16 %v403
        %v2713 = vunpack.c.l.b16 %v404
        %v2714 = vunpack.c.h.b16 %v404
        %v2715 = vunpack.c.l.b16 %v405
        %v2716 = vunpack.c.h.b16 %v405
        %v2717 = vunpack.c.l.b16 %v406
        %v2718 = vunpack.c.h.b16 %v406
        %v2719 = vunpack.c.l.b16 %v407
        %v2720 = vunpack.c.h.b16 %v407
        %v2721 = vunpack.c.l.b16 %v408
        %v2722 = vunpack.c.h.b16 %v408
        %v2723 = vunpack.c.l.b16 %v409
        %v2724 = vunpack.c.h.b16 %v409
        %v2725 = vunpack.c.l.b16 %v410
        %v2726 = vunpack.c.h.b16 %v410
        %v2727 = vunpack.c.l.b16 %v411
        %v2728 = vunpack.c.h.b16 %v411
        %v2729 = vunpack.c.l.b16 %v412
        %v2730 = vunpack.c.h.b16 %v412
        %v2731 = vunpack.c.l.b16 %v413
        %v2732 = vunpack.c.h.b16 %v413
        %v2733 = vunpack.c.l.b16 %v414
        %v2734 = vunpack.c.h.b16 %v414
        %v2735 = vunpack.c.l.b16 %v415
        %v2736 = vunpack.c.h.b16 %v415
        %v2737 = vunpack.c.l.b16 %v416
        %v2738 = vunpack.c.h.b16 %v416
        %v2739 = vunpack.c.l.b16 %v417
        %v2740 = vunpack.c.h.b16 %v417
        %v2741 = vunpack.c.l.b16 %v418
        %v2742 = vunpack.c.h.b16 %v418
        %v2743 = vunpack.c.l.b16 %v419
        %v2744 = vunpack.c.h.b16 %v419
        %v2745 = vunpack.c.l.b16 %v420
        %v2746 = vunpack.c.h.b16 %v420
        %v2747 = vunpack.c.l.b16 %v421
        %v2748 = vunpack.c.h.b16 %v421
        %v2749 = vunpack.c.l.b16 %v422
        %v2750 = vunpack.c.h.b16 %v422
        %v2751 = vunpack.c.l.b16 %v423
        %v2752 = vunpack.c.h.b16 %v423
        %v2753 = vunpack.c.l.b16 %v424
        %v2754 = vunpack.c.h.b16 %v424
        %v2755 = vunpack.c.l.b16 %v425
        %v2756 = vunpack.c.h.b16 %v425
        %v2757 = vunpack.c.l.b16 %v426
        %v2758 = vunpack.c.h.b16 %v426
        %v2759 = vunpack.c.l.b16 %v427
        %v2760 = vunpack.c.h.b16 %v427
        %v2761 = vunpack.c.l.b16 %v428
        %v2762 = vunpack.c.h.b16 %v428
        %v2763 = vunpack.c.l.b16 %v429
        %v2764 = vunpack.c.h.b16 %v429
        %v2765 = vunpack.c.l.b16 %v430
        %v2766 = vunpack.c.h.b16 %v430
        %v2767 = vunpack.c.l.b16 %v431
        %v2768 = vunpack.c.h.b16 %v431
        %v2769 = vunpack.c.l.b16 %v432
        %v2770 = vunpack.c.h.b16 %v432
        %v2771 = vunpack.c.l.b16 %v433
        %v2772 = vunpack.c.h.b16 %v433
        %v2773 = vunpack.c.l.b16 %v434
        %v2774 = vunpack.c.h.b16 %v434
        %v2775 = vunpack.c.l.b16 %v435
        %v2776 = vunpack.c.h.b16 %v435
        %v2777 = vunpack.c.l.b16 %v436
        %v2778 = vunpack.c.h.b16 %v436
        %v2779 = vunpack.c.l.b16 %v437
        %v2780 = vunpack.c.h.b16 %v437
        %v2781 = vunpack.c.l.b16 %v438
        %v2782 = vunpack.c.h.b16 %v438
        %v2783 = vunpack.c.l.b16 %v439
        %v2784 = vunpack.c.h.b16 %v439
        %v2785 = vunpack.c.l.b16 %v440
        %v2786 = vunpack.c.h.b16 %v440
        %v2787 = vunpack.c.l.b16 %v441
        %v2788 = vunpack.c.h.b16 %v441
        %v2789 = vunpack.c.l.b16 %v442
        %v2790 = vunpack.c.h.b16 %v442
        %v2791 = vunpack.c.l.b16 %v443
        %v2792 = vunpack.c.h.b16 %v443
        %v2793 = vunpack.c.l.b16 %v444
        %v2794 = vunpack.c.h.b16 %v444
        %v2795 = vunpack.c.l.b16 %v445
        %v2796 = vunpack.c.h.b16 %v445
        %v2797 = vunpack.c.l.b16 %v446
        %v2798 = vunpack.c.h.b16 %v446
        %v2799 = vunpack.c.l.b16 %v447
        %v2800 = vunpack.c.h.b16 %v447
        %v2801 = vunpack.c.l.b16 %v448
        %v2802 = vunpack.c.h.b16 %v448
        %v2803 = vunpack.c.l.b16 %v449
        %v2804 = vunpack.c.h.b16 %v449
        %v2805 = vunpack.c.l.b16 %v450
        %v2806 = vunpack.c.h.b16 %v450
        %v2807 = vunpack.c.l.b16 %v451
        %v2808 = vunpack.c.h.b16 %v451
        %v2809 = vunpack.c.l.b16 %v452
        %v2810 = vunpack.c.h.b16 %v452
        %v2811 = vunpack.c.l.b16 %v453
        %v2812 = vunpack.c.h.b16 %v453
        %v2813 = vunpack.c.l.b16 %v454
        %v2814 = vunpack.c.h.b16 %v454
        %v2815 = vunpack.c.l.b16 %v455
        %v2816 = vunpack.c.h.b16 %v455
        %v2817 = vunpack.c.l.b16 %v456
        %v2818 = vunpack.c.h.b16 %v456
        %v2819 = vunpack.c.l.b16 %v457
        %v2820 = vunpack.c.h.b16 %v457
        %v2821 = vunpack.c.l.b16 %v458
        %v2822 = vunpack.c.h.b16 %v458
        %v2823 = vunpack.c.l.b16 %v459
        %v2824 = vunpack.c.h.b16 %v459
        %v2825 = vunpack.c.l.b16 %v460
        %v2826 = vunpack.c.h.b16 %v460
        %v2827 = vunpack.c.l.b16 %v461
        %v2828 = vunpack.c.h.b16 %v461
        %v2829 = vunpack.c.l.b16 %v462
        %v2830 = vunpack.c.h.b16 %v462
        %v2831 = vunpack.c.l.b16 %v463
        %v2832 = vunpack.c.h.b16 %v463
        %v2833 = vunpack.c.l.b16 %v464
        %v2834 = vunpack.c.h.b16 %v464
        %v2835 = vunpack.c.l.b16 %v465
        %v2836 = vunpack.c.h.b16 %v465
        %v2837 = vunpack.c.l.b16 %v466
        %v2838 = vunpack.c.h.b16 %v466
        %v2839 = vunpack.c.l.b16 %v467
        %v2840 = vunpack.c.h.b16 %v467
        %v2841 = vunpack.c.l.b16 %v468
        %v2842 = vunpack.c.h.b16 %v468
        %v2843 = vunpack.c.l.b16 %v469
        %v2844 = vunpack.c.h.b16 %v469
        %v2845 = vunpack.c.l.b16 %v470
        %v2846 = vunpack.c.h.b16 %v470
        %v2847 = vunpack.c.l.b16 %v471
        %v2848 = vunpack.c.h.b16 %v471
        %v2849 = vunpack.c.l.b16 %v472
        %v2850 = vunpack.c.h.b16 %v472
        %v2851 = vunpack.c.l.b16 %v473
        %v2852 = vunpack.c.h.b16 %v473
        %v2853 = vunpack.c.l.b16 %v474
        %v2854 = vunpack.c.h.b16 %v474
        %v2855 = vunpack.c.l.b16 %v475
        %v2856 = vunpack.c.h.b16 %v475
        %v2857 = vunpack.c.l.b16 %v476
        %v2858 = vunpack.c.h.b16 %v476
        %v2859 = vunpack.c.l.b16 %v477
        %v2860 = vunpack.c.h.b16 %v477
        %v2861 = vunpack.c.l.b16 %v478
        %v2862 = vunpack.c.h.b16 %v478
        %v2863 = vunpack.c.l.b16 %v479
        %v2864 = vunpack.c.h.b16 %v479
        %v2865 = vunpack.c.l.b16 %v480
        %v2866 = vunpack.c.h.b16 %v480
        %v2867 = vunpack.c.l.b16 %v481
        %v2868 = vunpack.c.h.b16 %v481
        %v2869 = vunpack.c.l.b16 %v482
        %v2870 = vunpack.c.h.b16 %v482
        %v2871 = vunpack.c.l.b16 %v483
        %v2872 = vunpack.c.h.b16 %v483
        %v2873 = vunpack.c.l.b16 %v484
        %v2874 = vunpack.c.h.b16 %v484
        %v2875 = vunpack.c.l.b16 %v485
        %v2876 = vunpack.c.h.b16 %v485
        %v2877 = vunpack.c.l.b16 %v486
        %v2878 = vunpack.c.h.b16 %v486
        %v2879 = vunpack.c.l.b16 %v487
        %v2880 = vunpack.c.h.b16 %v487
        %v2881 = vunpack.c.l.b16 %v488
        %v2882 = vunpack.c.h.b16 %v488
        %v2883 = vunpack.c.l.b16 %v489
        %v2884 = vunpack.c.h.b16 %v489
        %v2885 = vunpack.c.l.b16 %v490
        %v2886 = vunpack.c.h.b16 %v490
        %v2887 = vunpack.c.l.b16 %v491
        %v2888 = vunpack.c.h.b16 %v491
        %v2889 = vunpack.c.l.b16 %v492
        %v2890 = vunpack.c.h.b16 %v492
        %v2891 = vunpack.c.l.b16 %v493
        %v2892 = vunpack.c.h.b16 %v493
        %v2893 = vunpack.c.l.b16 %v494
        %v2894 = vunpack.c.h.b16 %v494
        %v2895 = vunpack.c.l.b16 %v495
        %v2896 = vunpack.c.h.b16 %v495
        %v2897 = vunpack.c.l.b16 %v496
        %v2898 = vunpack.c.h.b16 %v496
        %v2899 = vunpack.c.l.b16 %v497
        %v2900 = vunpack.c.h.b16 %v497
        %v2901 = vunpack.c.l.b16 %v498
        %v2902 = vunpack.c.h.b16 %v498
        %v2903 = vunpack.c.l.b16 %v499
        %v2904 = vunpack.c.h.b16 %v499
        %v2905 = vunpack.c.l.b16 %v500
        %v2906 = vunpack.c.h.b16 %v500
        %v2907 = vunpack.c.l.b16 %v501
        %v2908 = vunpack.c.h.b16 %v501
        %v2909 = vunpack.c.l.b16 %v502
        %v2910 = vunpack.c.h.b16 %v502
        %v2911 = vunpack.c.l.b16 %v503
        %v2912 = vunpack.c.h.b16 %v503
        %v2913 = vunpack.c.l.b16 %v504
        %v2914 = vunpack.c.h.b16 %v504
        %v2915 = vunpack.c.l.b16 %v505
        %v2916 = vunpack.c.h.b16 %v505
        %v2917 = vunpack.c.l.b16 %v506
        %v2918 = vunpack.c.h.b16 %v506
        %v2919 = vunpack.c.l.b16 %v507
        %v2920 = vunpack.c.h.b16 %v507
        %v2921 = vunpack.c.l.b16 %v508
        %v2922 = vunpack.c.h.b16 %v508
        %v2923 = vunpack.c.l.b16 %v509
        %v2924 = vunpack.c.h.b16 %v509
        %v2925 = vunpack.c.l.b16 %v510
        %v2926 = vunpack.c.h.b16 %v510
        %v2927 = vunpack.c.l.b16 %v511
        %v2928 = vunpack.c.h.b16 %v511
        %v2929 = vunpack.c.l.b16 %v512
        %v2930 = vunpack.c.h.b16 %v512
        %v2931 = vunpack.c.l.b16 %v513
        %v2932 = vunpack.c.h.b16 %v513
        %v2933 = vunpack.c.l.b16 %v514
        %v2934 = vunpack.c.h.b16 %v514
        %v2935 = vunpack.c.l.b16 %v515
        %v2936 = vunpack.c.h.b16 %v515
        %v2937 = vunpack.c.l.b16 %v516
        %v2938 = vunpack.c.h.b16 %v516
        %v2939 = vunpack.c.l.b16 %v517
        %v2940 = vunpack.c.h.b16 %v517
        %v2941 = vunpack.c.l.b16 %v518
        %v2942 = vunpack.c.h.b16 %v518
        %v2943 = vunpack.c.l.b16 %v519
        %v2944 = vunpack.c.h.b16 %v519
        %v2945 = vunpack.c.l.b16 %v520
        %v2946 = vunpack.c.h.b16 %v520
        %v2947 = vunpack.c.l.b16 %v521
        %v2948 = vunpack.c.h.b16 %v521
        %v2949 = vunpack.c.l.b16 %v522
        %v2950 = vunpack.c.h.b16 %v522
        %v2951 = vunpack.c.l.b16 %v523
        %v2952 = vunpack.c.h.b16 %v523
        %v2953 = vunpack.c.l.b16 %v524
        %v2954 = vunpack.c.h.b16 %v524
        %v2955 = vunpack.c.l.b16 %v525
        %v2956 = vunpack.c.h.b16 %v525
        %v2957 = vunpack.c.l.b16 %v526
        %v2958 = vunpack.c.h.b16 %v526
        %v2959 = vunpack.c.l.b16 %v527
        %v2960 = vunpack.c.h.b16 %v527
        %v2961 = vunpack.c.l.b16 %v528
        %v2962 = vunpack.c.h.b16 %v528
        %v2963 = vunpack.c.l.b16 %v529
        %v2964 = vunpack.c.h.b16 %v529
        %v2965 = vunpack.c.l.b16 %v530
        %v2966 = vunpack.c.h.b16 %v530
        %v2967 = vunpack.c.l.b16 %v531
        %v2968 = vunpack.c.h.b16 %v531
        %v2969 = vunpack.c.l.b16 %v532
        %v2970 = vunpack.c.h.b16 %v532
        %v2971 = vunpack.c.l.b16 %v533
        %v2972 = vunpack.c.h.b16 %v533
        %v2973 = vunpack.c.l.b16 %v534
        %v2974 = vunpack.c.h.b16 %v534
        %v2975 = vunpack.c.l.b16 %v535
        %v2976 = vunpack.c.h.b16 %v535
        %v2977 = vunpack.c.l.b16 %v536
        %v2978 = vunpack.c.h.b16 %v536
        %v2979 = vunpack.c.l.b16 %v537
        %v2980 = vunpack.c.h.b16 %v537
        %v2981 = vunpack.c.l.b16 %v538
        %v2982 = vunpack.c.h.b16 %v538
        %v2983 = vunpack.c.l.b16 %v539
        %v2984 = vunpack.c.h.b16 %v539
        %v2985 = vunpack.c.l.b16 %v540
        %v2986 = vunpack.c.h.b16 %v540
        %v2987 = vunpack.c.l.b16 %v541
        %v2988 = vunpack.c.h.b16 %v541
        %v2989 = vunpack.c.l.b16 %v542
        %v2990 = vunpack.c.h.b16 %v542
        %v2991 = vunpack.c.l.b16 %v543
        %v2992 = vunpack.c.h.b16 %v543
        %v2993 = vunpack.c.l.b16 %v544
        %v2994 = vunpack.c.h.b16 %v544
        %v2995 = vunpack.c.l.b16 %v545
        %v2996 = vunpack.c.h.b16 %v545
        %v2997 = vunpack.c.l.b16 %v546
        %v2998 = vunpack.c.h.b16 %v546
        %v2999 = vunpack.c.l.b16 %v547
        %v3000 = vunpack.c.h.b16 %v547
        %v3001 = vunpack.c.l.b16 %v548
        %v3002 = vunpack.c.h.b16 %v548
        %v3003 = vunpack.c.l.b16 %v549
        %v3004 = vunpack.c.h.b16 %v549
        %v3005 = vunpack.c.l.b16 %v550
        %v3006 = vunpack.c.h.b16 %v550
        %v3007 = vunpack.c.l.b16 %v551
        %v3008 = vunpack.c.h.b16 %v551
        %v3009 = vunpack.c.l.b16 %v552
        %v3010 = vunpack.c.h.b16 %v552
        %v3011 = vunpack.c.l.b16 %v553
        %v3012 = vunpack.c.h.b16 %v553
        %v3013 = vunpack.c.l.b16 %v554
        %v3014 = vunpack.c.h.b16 %v554
        %v3015 = vunpack.c.l.b16 %v555
        %v3016 = vunpack.c.h.b16 %v555
        %v3017 = vunpack.c.l.b16 %v556
        %v3018 = vunpack.c.h.b16 %v556
        %v3019 = vunpack.c.l.b16 %v557
        %v3020 = vunpack.c.h.b16 %v557
        %v3021 = vunpack.c.l.b16 %v558
        %v3022 = vunpack.c.h.b16 %v558
        %v3023 = vunpack.c.l.b16 %v559
        %v3024 = vunpack.c.h.b16 %v559
        %v3025 = vunpack.c.l.b16 %v560
        %v3026 = vunpack.c.h.b16 %v560
        %v3027 = vunpack.c.l.b16 %v561
        %v3028 = vunpack.c.h.b16 %v561
        %v3029 = vunpack.c.l.b16 %v562
        %v3030 = vunpack.c.h.b16 %v562
        %v3031 = vunpack.c.l.b16 %v563
        %v3032 = vunpack.c.h.b16 %v563
        %v3033 = vunpack.c.l.b16 %v564
        %v3034 = vunpack.c.h.b16 %v564
        %v3035 = vunpack.c.l.b16 %v565
        %v3036 = vunpack.c.h.b16 %v565
        %v3037 = vunpack.c.l.b16 %v566
        %v3038 = vunpack.c.h.b16 %v566
        %v3039 = vunpack.c.l.b16 %v567
        %v3040 = vunpack.c.h.b16 %v567
        %v3041 = vunpack.c.l.b16 %v568
        %v3042 = vunpack.c.h.b16 %v568
        %v3043 = vunpack.c.l.b16 %v569
        %v3044 = vunpack.c.h.b16 %v569
        %v3045 = vunpack.c.l.b16 %v570
        %v3046 = vunpack.c.h.b16 %v570
        %v3047 = vunpack.c.l.b16 %v571
        %v3048 = vunpack.c.h.b16 %v571
        %v3049 = vunpack.c.l.b16 %v572
        %v3050 = vunpack.c.h.b16 %v572
        %v3051 = vunpack.c.l.b16 %v573
        %v3052 = vunpack.c.h.b16 %v573
        %v3053 = vunpack.c.l.b16 %v574
        %v3054 = vunpack.c.h.b16 %v574
        %v3055 = vunpack.c.l.b16 %v575
        %v3056 = vunpack.c.h.b16 %v575
        %v3057 = vunpack.c.l.b16 %v576
        %v3058 = vunpack.c.h.b16 %v576
        %v3059 = vunpack.c.l.b16 %v577
        %v3060 = vunpack.c.h.b16 %v577
        %v3061 = vunpack.c.l.b16 %v578
        %v3062 = vunpack.c.h.b16 %v578
        %v3063 = vunpack.c.l.b16 %v579
        %v3064 = vunpack.c.h.b16 %v579
        %v3065 = vunpack.c.l.b16 %v580
        %v3066 = vunpack.c.h.b16 %v580
        %v3067 = vunpack.c.l.b16 %v581
        %v3068 = vunpack.c.h.b16 %v581
        %v3069 = vunpack.c.l.b16 %v582
        %v3070 = vunpack.c.h.b16 %v582
        %v3071 = vunpack.c.l.b16 %v583
        %v3072 = vunpack.c.h.b16 %v583
        %v3073 = vunpack.c.l.b16 %v584
        %v3074 = vunpack.c.h.b16 %v584
        %v3075 = vunpack.c.l.b16 %v585
        %v3076 = vunpack.c.h.b16 %v585
        %v3077 = vunpack.c.l.b16 %v586
        %v3078 = vunpack.c.h.b16 %v586
        %v3079 = vunpack.c.l.b16 %v587
        %v3080 = vunpack.c.h.b16 %v587
        %v3081 = vunpack.c.l.b16 %v588
        %v3082 = vunpack.c.h.b16 %v588
        %v3083 = vunpack.c.l.b16 %v589
        %v3084 = vunpack.c.h.b16 %v589
        %v3085 = vunpack.c.l.b16 %v590
        %v3086 = vunpack.c.h.b16 %v590
        %v3087 = vunpack.c.l.b16 %v591
        %v3088 = vunpack.c.h.b16 %v591
        %v3089 = vunpack.c.l.b16 %v592
        %v3090 = vunpack.c.h.b16 %v592
        %v3091 = vunpack.c.l.b16 %v593
        %v3092 = vunpack.c.h.b16 %v593
        %v3093 = vunpack.c.l.b16 %v594
        %v3094 = vunpack.c.h.b16 %v594
        %v3095 = vunpack.c.l.b16 %v595
        %v3096 = vunpack.c.h.b16 %v595
        %v3097 = vunpack.c.l.b16 %v596
        %v3098 = vunpack.c.h.b16 %v596
        %v3099 = vunpack.c.l.b16 %v597
        %v3100 = vunpack.c.h.b16 %v597
        %v3101 = vunpack.c.l.b16 %v598
        %v3102 = vunpack.c.h.b16 %v598
        %v3103 = vunpack.c.l.b16 %v599
        %v3104 = vunpack.c.h.b16 %v599
        %v3105 = vunpack.c.l.b16 %v600
        %v3106 = vunpack.c.h.b16 %v600
        %v3107 = vunpack.c.l.b16 %v601
        %v3108 = vunpack.c.h.b16 %v601
        %v3109 = vunpack.c.l.b16 %v602
        %v3110 = vunpack.c.h.b16 %v602
        %v3111 = vunpack.c.l.b16 %v603
        %v3112 = vunpack.c.h.b16 %v603
        %v3113 = vunpack.c.l.b16 %v604
        %v3114 = vunpack.c.h.b16 %v604
        %v3115 = vunpack.c.l.b16 %v605
        %v3116 = vunpack.c.h.b16 %v605
        %v3117 = vunpack.c.l.b16 %v606
        %v3118 = vunpack.c.h.b16 %v606
        %v3119 = vunpack.c.l.b16 %v607
        %v3120 = vunpack.c.h.b16 %v607
        %v3121 = vunpack.c.l.b16 %v608
        %v3122 = vunpack.c.h.b16 %v608
        %v3123 = vunpack.c.l.b16 %v609
        %v3124 = vunpack.c.h.b16 %v609
        %v3125 = vunpack.c.l.b16 %v610
        %v3126 = vunpack.c.h.b16 %v610
        %v3127 = vunpack.c.l.b16 %v611
        %v3128 = vunpack.c.h.b16 %v611
        %v3129 = vunpack.c.l.b16 %v612
        %v3130 = vunpack.c.h.b16 %v612
        %v3131 = vunpack.c.l.b16 %v613
        %v3132 = vunpack.c.h.b16 %v613
        %v3133 = vunpack.c.l.b16 %v614
        %v3134 = vunpack.c.h.b16 %v614
        %v3135 = vunpack.c.l.b16 %v615
        %v3136 = vunpack.c.h.b16 %v615
        %v3137 = vunpack.c.l.b16 %v616
        %v3138 = vunpack.c.h.b16 %v616
        %v3139 = vunpack.c.l.b16 %v617
        %v3140 = vunpack.c.h.b16 %v617
        %v3141 = vunpack.c.l.b16 %v618
        %v3142 = vunpack.c.h.b16 %v618
        %v3143 = vunpack.c.l.b16 %v619
        %v3144 = vunpack.c.h.b16 %v619
        %v3145 = vunpack.c.l.b16 %v620
        %v3146 = vunpack.c.h.b16 %v620
        %v3147 = vunpack.c.l.b16 %v621
        %v3148 = vunpack.c.h.b16 %v621
        %v3149 = vunpack.c.l.b16 %v622
        %v3150 = vunpack.c.h.b16 %v622
        %v3151 = vunpack.c.l.b16 %v623
        %v3152 = vunpack.c.h.b16 %v623
        %v3153 = vunpack.c.l.b16 %v624
        %v3154 = vunpack.c.h.b16 %v624
        %v3155 = vunpack.c.l.b16 %v625
        %v3156 = vunpack.c.h.b16 %v625
        %v3157 = vunpack.c.l.b16 %v626
        %v3158 = vunpack.c.h.b16 %v626
        %v3159 = vunpack.c.l.b16 %v627
        %v3160 = vunpack.c.h.b16 %v627
        %v3161 = vunpack.c.l.b16 %v628
        %v3162 = vunpack.c.h.b16 %v628
        %v3163 = vunpack.c.l.b16 %v629
        %v3164 = vunpack.c.h.b16 %v629
        %v3165 = vunpack.c.l.b16 %v630
        %v3166 = vunpack.c.h.b16 %v630
        %v3167 = vunpack.c.l.b16 %v631
        %v3168 = vunpack.c.h.b16 %v631
        %v3169 = vunpack.c.l.b16 %v632
        %v3170 = vunpack.c.h.b16 %v632
        %v3171 = vunpack.c.l.b16 %v633
        %v3172 = vunpack.c.h.b16 %v633
        %v3173 = vunpack.c.l.b16 %v634
        %v3174 = vunpack.c.h.b16 %v634
        %v3175 = vunpack.c.l.b16 %v635
        %v3176 = vunpack.c.h.b16 %v635
        %v3177 = vunpack.c.l.b16 %v636
        %v3178 = vunpack.c.h.b16 %v636
        %v3179 = vunpack.c.l.b16 %v637
        %v3180 = vunpack.c.h.b16 %v637
        %v3181 = vunpack.c.l.b16 %v638
        %v3182 = vunpack.c.h.b16 %v638
        %v3183 = vunpack.c.l.b16 %v639
        %v3184 = vunpack.c.h.b16 %v639
        %v3185 = vunpack.c.l.b16 %v640
        %v3186 = vunpack.c.h.b16 %v640
        %v3187 = vunpack.c.l.b16 %v641
        %v3188 = vunpack.c.h.b16 %v641
        %v3189 = vunpack.c.l.b16 %v642
        %v3190 = vunpack.c.h.b16 %v642
        %v3191 = vunpack.c.l.b16 %v643
        %v3192 = vunpack.c.h.b16 %v643
        %v3193 = vunpack.c.l.b16 %v644
        %v3194 = vunpack.c.h.b16 %v644
        %v3195 = vunpack.c.l.b16 %v645
        %v3196 = vunpack.c.h.b16 %v645
        %v3197 = vunpack.c.l.b16 %v646
        %v3198 = vunpack.c.h.b16 %v646
        %v3199 = vunpack.c.l.b16 %v647
        %v3200 = vunpack.c.h.b16 %v647
        %v3201 = vunpack.c.l.b16 %v648
        %v3202 = vunpack.c.h.b16 %v648
        %v3203 = vunpack.c.l.b16 %v649
        %v3204 = vunpack.c.h.b16 %v649
        %v3205 = vunpack.c.l.b16 %v650
        %v3206 = vunpack.c.h.b16 %v650
        %v3207 = vunpack.c.l.b16 %v651
        %v3208 = vunpack.c.h.b16 %v651
        %v3209 = vunpack.c.l.b16 %v652
        %v3210 = vunpack.c.h.b16 %v652
        %v3211 = vunpack.c.l.b16 %v653
        %v3212 = vunpack.c.h.b16 %v653
        %v3213 = vunpack.c.l.b16 %v654
        %v3214 = vunpack.c.h.b16 %v654
        %v3215 = vunpack.c.l.b16 %v655
        %v3216 = vunpack.c.h.b16 %v655
        %v3217 = vunpack.c.l.b16 %v656
        %v3218 = vunpack.c.h.b16 %v656
        %v3219 = vunpack.c.l.b16 %v657
        %v3220 = vunpack.c.h.b16 %v657
        %v3221 = vunpack.c.l.b16 %v658
        %v3222 = vunpack.c.h.b16 %v658
        %v3223 = vunpack.c.l.b16 %v659
        %v3224 = vunpack.c.h.b16 %v659
        %v3225 = vunpack.c.l.b16 %v660
        %v3226 = vunpack.c.h.b16 %v660
        %v3227 = vunpack.c.l.b16 %v661
        %v3228 = vunpack.c.h.b16 %v661
        %v3229 = vunpack.c.l.b16 %v662
        %v3230 = vunpack.c.h.b16 %v662
        %v3231 = vunpack.c.l.b16 %v663
        %v3232 = vunpack.c.h.b16 %v663
        %v3233 = vunpack.c.l.b16 %v664
        %v3234 = vunpack.c.h.b16 %v664
        %v3235 = vunpack.c.l.b16 %v665
        %v3236 = vunpack.c.h.b16 %v665
        %v3237 = vunpack.c.l.b16 %v666
        %v3238 = vunpack.c.h.b16 %v666
        %v3239 = vunpack.c.l.b16 %v667
        %v3240 = vunpack.c.h.b16 %v667
        %v3241 = vunpack.c.l.b16 %v668
        %v3242 = vunpack.c.h.b16 %v668
        %v3243 = vunpack.c.l.b16 %v669
        %v3244 = vunpack.c.h.b16 %v669
        %v3245 = vunpack.c.l.b16 %v670
        %v3246 = vunpack.c.h.b16 %v670
        %v3247 = vunpack.c.l.b16 %v671
        %v3248 = vunpack.c.h.b16 %v671
        %v3249 = vunpack.c.l.b16 %v672
        %v3250 = vunpack.c.h.b16 %v672
        %v3251 = vunpack.c.l.b16 %v673
        %v3252 = vunpack.c.h.b16 %v673
        %v3253 = vunpack.c.l.b16 %v674
        %v3254 = vunpack.c.h.b16 %v674
        %v3255 = vunpack.c.l.b16 %v675
        %v3256 = vunpack.c.h.b16 %v675
        %v3257 = vunpack.c.l.b16 %v676
        %v3258 = vunpack.c.h.b16 %v676
        %v3259 = vunpack.c.l.b16 %v677
        %v3260 = vunpack.c.h.b16 %v677
        %v3261 = vunpack.c.l.b16 %v678
        %v3262 = vunpack.c.h.b16 %v678
        %v3263 = vunpack.c.l.b16 %v679
        %v3264 = vunpack.c.h.b16 %v679
        %v3265 = vunpack.c.l.b16 %v680
        %v3266 = vunpack.c.h.b16 %v680
        %v3267 = vunpack.c.l.b16 %v681
        %v3268 = vunpack.c.h.b16 %v681
        %v3269 = vunpack.c.l.b16 %v682
        %v3270 = vunpack.c.h.b16 %v682
        %v3271 = vunpack.c.l.b16 %v683
        %v3272 = vunpack.c.h.b16 %v683
        %v3273 = vunpack.c.l.b16 %v684
        %v3274 = vunpack.c.h.b16 %v684
        %v3275 = vunpack.c.l.b16 %v685
        %v3276 = vunpack.c.h.b16 %v685
        %v3277 = vunpack.c.l.b16 %v686
        %v3278 = vunpack.c.h.b16 %v686
        %v3279 = vunpack.c.l.b16 %v687
        %v3280 = vunpack.c.h.b16 %v687
        %v3281 = vunpack.c.l.b16 %v688
        %v3282 = vunpack.c.h.b16 %v688
        %v3283 = vunpack.c.l.b16 %v689
        %v3284 = vunpack.c.h.b16 %v689
        %v3285 = vunpack.c.l.b16 %v690
        %v3286 = vunpack.c.h.b16 %v690
        %v3287 = vunpack.c.l.b16 %v691
        %v3288 = vunpack.c.h.b16 %v691
        %v3289 = vunpack.c.l.b16 %v692
        %v3290 = vunpack.c.h.b16 %v692
        %v3291 = vunpack.c.l.b16 %v693
        %v3292 = vunpack.c.h.b16 %v693
        %v3293 = vunpack.c.l.b16 %v694
        %v3294 = vunpack.c.h.b16 %v694
        %v3295 = vunpack.c.l.b16 %v695
        %v3296 = vunpack.c.h.b16 %v695
        %v3297 = vunpack.c.l.b16 %v696
        %v3298 = vunpack.c.h.b16 %v696
        %v3299 = vunpack.c.l.b16 %v697
        %v3300 = vunpack.c.h.b16 %v697
        %v3301 = vunpack.c.l.b16 %v698
        %v3302 = vunpack.c.h.b16 %v698
        %v3303 = vunpack.c.l.b16 %v699
        %v3304 = vunpack.c.h.b16 %v699
        %v3305 = vunpack.c.l.b16 %v700
        %v3306 = vunpack.c.h.b16 %v700
        %v3307 = vunpack.c.l.b16 %v701
        %v3308 = vunpack.c.h.b16 %v701
        %v3309 = vunpack.c.l.b16 %v702
        %v3310 = vunpack.c.h.b16 %v702
        %v3311 = vunpack.c.l.b16 %v703
        %v3312 = vunpack.c.h.b16 %v703
        %v3313 = vunpack.c.l.b16 %v704
        %v3314 = vunpack.c.h.b16 %v704
        %v3315 = vunpack.c.l.b16 %v705
        %v3316 = vunpack.c.h.b16 %v705
        %v3317 = vunpack.c.l.b16 %v706
        %v3318 = vunpack.c.h.b16 %v706
        %v3319 = vunpack.c.l.b16 %v707
        %v3320 = vunpack.c.h.b16 %v707
        %v3321 = vunpack.c.l.b16 %v708
        %v3322 = vunpack.c.h.b16 %v708
        %v3323 = vunpack.c.l.b16 %v709
        %v3324 = vunpack.c.h.b16 %v709
        %v3325 = vunpack.c.l.b16 %v710
        %v3326 = vunpack.c.h.b16 %v710
        %v3327 = vunpack.c.l.b16 %v711
        %v3328 = vunpack.c.h.b16 %v711
        %v3329 = vunpack.c.l.b16 %v712
        %v3330 = vunpack.c.h.b16 %v712
        %v3331 = vunpack.c.l.b16 %v713
        %v3332 = vunpack.c.h.b16 %v713
        %v3333 = vunpack.c.l.b16 %v714
        %v3334 = vunpack.c.h.b16 %v714
        %v3335 = vunpack.c.l.b16 %v715
        %v3336 = vunpack.c.h.b16 %v715
        %v3337 = vunpack.c.l.b16 %v716
        %v3338 = vunpack.c.h.b16 %v716
        %v3339 = vunpack.c.l.b16 %v717
        %v3340 = vunpack.c.h.b16 %v717
        %v3341 = vunpack.c.l.b16 %v718
        %v3342 = vunpack.c.h.b16 %v718
        %v3343 = vunpack.c.l.b16 %v719
        %v3344 = vunpack.c.h.b16 %v719
        %v3345 = vunpack.c.l.b16 %v720
        %v3346 = vunpack.c.h.b16 %v720
        %v3347 = vunpack.c.l.b16 %v721
        %v3348 = vunpack.c.h.b16 %v721
        %v3349 = vunpack.c.l.b16 %v722
        %v3350 = vunpack.c.h.b16 %v722
        %v3351 = vunpack.c.l.b16 %v723
        %v3352 = vunpack.c.h.b16 %v723
        %v3353 = vunpack.c.l.b16 %v724
        %v3354 = vunpack.c.h.b16 %v724
        %v3355 = vunpack.c.l.b16 %v725
        %v3356 = vunpack.c.h.b16 %v725
        %v3357 = vunpack.c.l.b16 %v726
        %v3358 = vunpack.c.h.b16 %v726
        %v3359 = vunpack.c.l.b16 %v727
        %v3360 = vunpack.c.h.b16 %v727
        %v3361 = vunpack.c.l.b16 %v728
        %v3362 = vunpack.c.h.b16 %v728
        %v3363 = vunpack.c.l.b16 %v729
        %v3364 = vunpack.c.h.b16 %v729
        %v3365 = vunpack.c.l.b16 %v730
        %v3366 = vunpack.c.h.b16 %v730
        %v3367 = vunpack.c.l.b16 %v731
        %v3368 = vunpack.c.h.b16 %v731
        %v3369 = vunpack.c.l.b16 %v732
        %v3370 = vunpack.c.h.b16 %v732
        %v3371 = vunpack.c.l.b16 %v733
        %v3372 = vunpack.c.h.b16 %v733
        %v3373 = vunpack.c.l.b16 %v734
        %v3374 = vunpack.c.h.b16 %v734
        %v3375 = vunpack.c.l.b16 %v735
        %v3376 = vunpack.c.h.b16 %v735
        %v3377 = vunpack.c.l.b16 %v736
        %v3378 = vunpack.c.h.b16 %v736
        %v3379 = vunpack.c.l.b16 %v737
        %v3380 = vunpack.c.h.b16 %v737
        %v3381 = vunpack.c.l.b16 %v738
        %v3382 = vunpack.c.h.b16 %v738
        %v3383 = vunpack.c.l.b16 %v739
        %v3384 = vunpack.c.h.b16 %v739
        %v3385 = vunpack.c.l.b16 %v740
        %v3386 = vunpack.c.h.b16 %v740
        %v3387 = vunpack.c.l.b16 %v741
        %v3388 = vunpack.c.h.b16 %v741
        %v3389 = vunpack.c.l.b16 %v742
        %v3390 = vunpack.c.h.b16 %v742
        %v3391 = vunpack.c.l.b16 %v743
        %v3392 = vunpack.c.h.b16 %v743
        %v3393 = vunpack.c.l.b16 %v744
        %v3394 = vunpack.c.h.b16 %v744
        %v3395 = vunpack.c.l.b16 %v745
        %v3396 = vunpack.c.h.b16 %v745
        %v3397 = vunpack.c.l.b16 %v746
        %v3398 = vunpack.c.h.b16 %v746
        %v3399 = vunpack.c.l.b16 %v747
        %v3400 = vunpack.c.h.b16 %v747
        %v3401 = vunpack.c.l.b16 %v748
        %v3402 = vunpack.c.h.b16 %v748
        %v3403 = vunpack.c.l.b16 %v749
        %v3404 = vunpack.c.h.b16 %v749
        %v3405 = vunpack.c.l.b16 %v750
        %v3406 = vunpack.c.h.b16 %v750
        %v3407 = vunpack.c.l.b16 %v751
        %v3408 = vunpack.c.h.b16 %v751
        %v3409 = vunpack.c.l.b16 %v752
        %v3410 = vunpack.c.h.b16 %v752
        %v3411 = vunpack.c.l.b16 %v753
        %v3412 = vunpack.c.h.b16 %v753
        %v3413 = vunpack.c.l.b16 %v754
        %v3414 = vunpack.c.h.b16 %v754
        %v3415 = vunpack.c.l.b16 %v755
        %v3416 = vunpack.c.h.b16 %v755
        %v3417 = vunpack.c.l.b16 %v756
        %v3418 = vunpack.c.h.b16 %v756
        %v3419 = vunpack.c.l.b16 %v757
        %v3420 = vunpack.c.h.b16 %v757
        %v3421 = vunpack.c.l.b16 %v758
        %v3422 = vunpack.c.h.b16 %v758
        %v3423 = vunpack.c.l.b16 %v759
        %v3424 = vunpack.c.h.b16 %v759
        %v3425 = vunpack.c.l.b16 %v760
        %v3426 = vunpack.c.h.b16 %v760
        %v3427 = vunpack.c.l.b16 %v761
        %v3428 = vunpack.c.h.b16 %v761
        %v3429 = vunpack.c.l.b16 %v762
        %v3430 = vunpack.c.h.b16 %v762
        %v3431 = vunpack.c.l.b16 %v763
        %v3432 = vunpack.c.h.b16 %v763
        %v3433 = vunpack.c.l.b16 %v764
        %v3434 = vunpack.c.h.b16 %v764
        %v3435 = vunpack.c.l.b16 %v765
        %v3436 = vunpack.c.h.b16 %v765
        %v3437 = vunpack.c.l.b16 %v766
        %v3438 = vunpack.c.h.b16 %v766
        %v3439 = vunpack.c.l.b16 %v767
        %v3440 = vunpack.c.h.b16 %v767
        %v3441 = vunpack.c.l.b16 %v768
        %v3442 = vunpack.c.h.b16 %v768
        %v3443 = vunpack.c.l.b16 %v769
        %v3444 = vunpack.c.h.b16 %v769
        %v3445 = vunpack.c.l.b16 %v770
        %v3446 = vunpack.c.h.b16 %v770
        %v3447 = vunpack.c.l.b16 %v771
        %v3448 = vunpack.c.h.b16 %v771
        %v3449 = vunpack.c.l.b16 %v772
        %v3450 = vunpack.c.h.b16 %v772
        %v3451 = vunpack.c.l.b16 %v773
        %v3452 = vunpack.c.h.b16 %v773
        %v3453 = vunpack.c.l.b16 %v774
        %v3454 = vunpack.c.h.b16 %v774
        %v3455 = vunpack.c.l.b16 %v775
        %v3456 = vunpack.c.h.b16 %v775
        %v3457 = vunpack.c.l.b16 %v776
        %v3458 = vunpack.c.h.b16 %v776
        %v3459 = vunpack.c.l.b16 %v777
        %v3460 = vunpack.c.h.b16 %v777
        %v3461 = vunpack.c.l.b16 %v778
        %v3462 = vunpack.c.h.b16 %v778
        %v3463 = vunpack.c.l.b16 %v779
        %v3464 = vunpack.c.h.b16 %v779
        %v3465 = vunpack.c.l.b16 %v780
        %v3466 = vunpack.c.h.b16 %v780
        %v3467 = vunpack.c.l.b16 %v781
        %v3468 = vunpack.c.h.b16 %v781
        %v3469 = vunpack.c.l.b16 %v782
        %v3470 = vunpack.c.h.b16 %v782
        %v3471 = vunpack.c.l.b16 %v783
        %v3472 = vunpack.c.h.b16 %v783
        %v3473 = vunpack.c.l.b16 %v784
        %v3474 = vunpack.c.h.b16 %v784
        %v3475 = vunpack.c.l.b16 %v785
        %v3476 = vunpack.c.h.b16 %v785
        %v3477 = vunpack.c.l.b16 %v786
        %v3478 = vunpack.c.h.b16 %v786
        %v3479 = vunpack.c.l.b16 %v787
        %v3480 = vunpack.c.h.b16 %v787
        %v3481 = vunpack.c.l.b16 %v788
        %v3482 = vunpack.c.h.b16 %v788
        %v3483 = vunpack.c.l.b16 %v789
        %v3484 = vunpack.c.h.b16 %v789
        %v3485 = vunpack.c.l.b16 %v790
        %v3486 = vunpack.c.h.b16 %v790
        %v3487 = vunpack.c.l.b16 %v791
        %v3488 = vunpack.c.h.b16 %v791
        %v3489 = vunpack.c.l.b16 %v792
        %v3490 = vunpack.c.h.b16 %v792
        %v3491 = vunpack.c.l.b16 %v793
        %v3492 = vunpack.c.h.b16 %v793
        %v3493 = vunpack.c.l.b16 %v794
        %v3494 = vunpack.c.h.b16 %v794
        %v3495 = vunpack.c.l.b16 %v795
        %v3496 = vunpack.c.h.b16 %v795
        %v3497 = vunpack.c.l.b16 %v796
        %v3498 = vunpack.c.h.b16 %v796
        %v3499 = vunpack.c.l.b16 %v797
        %v3500 = vunpack.c.h.b16 %v797
        %v3501 = vunpack.c.l.b16 %v798
        %v3502 = vunpack.c.h.b16 %v798
        %v3503 = vunpack.c.l.b16 %v799
        %v3504 = vunpack.c.h.b16 %v799
        %v3505 = vunpack.c.l.b16 %v800
        %v3506 = vunpack.c.h.b16 %v800
        %v3507 = vunpack.c.l.b16 %v801
        %v3508 = vunpack.c.h.b16 %v801
        %v3509 = vunpack.c.l.b16 %v802
        %v3510 = vunpack.c.h.b16 %v802
        %v3511 = vunpack.c.l.b16 %v803
        %v3512 = vunpack.c.h.b16 %v803
        %v3513 = vunpack.c.l.b16 %v804
        %v3514 = vunpack.c.h.b16 %v804
        %v3515 = vunpack.c.l.b16 %v805
        %v3516 = vunpack.c.h.b16 %v805
        %v3517 = vunpack.c.l.b16 %v806
        %v3518 = vunpack.c.h.b16 %v806
        %v3519 = vunpack.c.l.b16 %v807
        %v3520 = vunpack.c.h.b16 %v807
        %v3521 = vunpack.c.l.b16 %v808
        %v3522 = vunpack.c.h.b16 %v808
        %v3523 = vunpack.c.l.b16 %v809
        %v3524 = vunpack.c.h.b16 %v809
        %v3525 = vunpack.c.l.b16 %v810
        %v3526 = vunpack.c.h.b16 %v810
        %v3527 = vunpack.c.l.b16 %v811
        %v3528 = vunpack.c.h.b16 %v811
        %v3529 = vunpack.c.l.b16 %v812
        %v3530 = vunpack.c.h.b16 %v812
        %v3531 = vunpack.c.l.b16 %v813
        %v3532 = vunpack.c.h.b16 %v813
        %v3533 = vunpack.c.l.b16 %v814
        %v3534 = vunpack.c.h.b16 %v814
        %v3535 = vunpack.c.l.b16 %v815
        %v3536 = vunpack.c.h.b16 %v815
        %v3537 = vunpack.c.l.b16 %v816
        %v3538 = vunpack.c.h.b16 %v816
        %v3539 = vunpack.c.l.b16 %v817
        %v3540 = vunpack.c.h.b16 %v817
        %v3541 = vunpack.c.l.b16 %v818
        %v3542 = vunpack.c.h.b16 %v818
        %v3543 = vunpack.c.l.b16 %v819
        %v3544 = vunpack.c.h.b16 %v819
        %v3545 = vunpack.c.l.b16 %v820
        %v3546 = vunpack.c.h.b16 %v820
        %v3547 = vunpack.c.l.b16 %v821
        %v3548 = vunpack.c.h.b16 %v821
        %v3549 = vunpack.c.l.b16 %v822
        %v3550 = vunpack.c.h.b16 %v822
        %v3551 = vunpack.c.l.b16 %v823
        %v3552 = vunpack.c.h.b16 %v823
        %v3553 = vunpack.c.l.b16 %v824
        %v3554 = vunpack.c.h.b16 %v824
        %v3555 = vunpack.c.l.b16 %v825
        %v3556 = vunpack.c.h.b16 %v825
        %v3557 = vunpack.c.l.b16 %v826
        %v3558 = vunpack.c.h.b16 %v826
        %v3559 = vunpack.c.l.b16 %v827
        %v3560 = vunpack.c.h.b16 %v827
        %v3561 = vunpack.c.l.b16 %v828
        %v3562 = vunpack.c.h.b16 %v828
        %v3563 = vunpack.c.l.b16 %v829
        %v3564 = vunpack.c.h.b16 %v829
        %v3565 = vunpack.c.l.b16 %v830
        %v3566 = vunpack.c.h.b16 %v830
        %v3567 = vunpack.c.l.b16 %v831
        %v3568 = vunpack.c.h.b16 %v831
        %v3569 = vunpack.c.l.b16 %v832
        %v3570 = vunpack.c.h.b16 %v832
        %v3571 = vunpack.c.l.b16 %v833
        %v3572 = vunpack.c.h.b16 %v833
        %v3573 = vunpack.c.l.b16 %v834
        %v3574 = vunpack.c.h.b16 %v834
        %v3575 = vunpack.c.l.b16 %v835
        %v3576 = vunpack.c.h.b16 %v835
        %v3577 = vunpack.c.l.b16 %v836
        %v3578 = vunpack.c.h.b16 %v836
        %v3579 = vunpack.c.l.b16 %v837
        %v3580 = vunpack.c.h.b16 %v837
        %v3581 = vunpack.c.l.b16 %v838
        %v3582 = vunpack.c.h.b16 %v838
        %v3583 = vunpack.c.l.b16 %v839
        %v3584 = vunpack.c.h.b16 %v839
        %v3585 = vunpack.c.l.b16 %v840
        %v3586 = vunpack.c.h.b16 %v840
        %v3587 = vunpack.c.l.b16 %v841
        %v3588 = vunpack.c.h.b16 %v841
        %v3589 = vunpack.c.l.b16 %v842
        %v3590 = vunpack.c.h.b16 %v842
        %v3591 = vunpack.c.l.b16 %v843
        %v3592 = vunpack.c.h.b16 %v843
        %v3593 = vunpack.c.l.b16 %v844
        %v3594 = vunpack.c.h.b16 %v844
        %v3595 = vunpack.c.l.b16 %v845
        %v3596 = vunpack.c.h.b16 %v845
        %v3597 = vunpack.c.l.b16 %v846
        %v3598 = vunpack.c.h.b16 %v846
        %v3599 = vunpack.c.l.b16 %v847
        %v3600 = vunpack.c.h.b16 %v847
        %v3601 = vunpack.c.l.b16 %v848
        %v3602 = vunpack.c.h.b16 %v848
        %v3603 = vunpack.c.l.b16 %v849
        %v3604 = vunpack.c.h.b16 %v849
        %v3605 = vunpack.c.l.b16 %v850
        %v3606 = vunpack.c.h.b16 %v850
        %v3607 = vunpack.c.l.b16 %v851
        %v3608 = vunpack.c.h.b16 %v851
        %v3609 = vunpack.c.l.b16 %v852
        %v3610 = vunpack.c.h.b16 %v852
        %v3611 = vunpack.c.l.b16 %v853
        %v3612 = vunpack.c.h.b16 %v853
        %v3613 = vunpack.c.l.b16 %v854
        %v3614 = vunpack.c.h.b16 %v854
        %v3615 = vunpack.c.l.b16 %v855
        %v3616 = vunpack.c.h.b16 %v855
        %v3617 = vunpack.c.l.b16 %v856
        %v3618 = vunpack.c.h.b16 %v856
        %v3619 = vunpack.c.l.b16 %v857
        %v3620 = vunpack.c.h.b16 %v857
        %v3621 = vunpack.c.l.b16 %v858
        %v3622 = vunpack.c.h.b16 %v858
        %v3623 = vunpack.c.l.b16 %v859
        %v3624 = vunpack.c.h.b16 %v859
        %v3625 = vunpack.c.l.b16 %v860
        %v3626 = vunpack.c.h.b16 %v860
        %v3627 = vunpack.c.l.b16 %v861
        %v3628 = vunpack.c.h.b16 %v861
        %v3629 = vunpack.c.l.b16 %v862
        %v3630 = vunpack.c.h.b16 %v862
        %v3631 = vunpack.c.l.b16 %v863
        %v3632 = vunpack.c.h.b16 %v863
        %v3633 = vunpack.c.l.b16 %v864
        %v3634 = vunpack.c.h.b16 %v864
        %v3635 = vunpack.c.l.b16 %v865
        %v3636 = vunpack.c.h.b16 %v865
        %v3637 = vunpack.c.l.b16 %v866
        %v3638 = vunpack.c.h.b16 %v866
        %v3639 = vunpack.c.l.b16 %v867
        %v3640 = vunpack.c.h.b16 %v867
        %v3641 = vunpack.c.l.b16 %v868
        %v3642 = vunpack.c.h.b16 %v868
        %v3643 = vunpack.c.l.b16 %v869
        %v3644 = vunpack.c.h.b16 %v869
        %v3645 = vunpack.c.l.b16 %v870
        %v3646 = vunpack.c.h.b16 %v870
        %v3647 = vunpack.c.l.b16 %v871
        %v3648 = vunpack.c.h.b16 %v871
        %v3649 = vunpack.c.l.b16 %v872
        %v3650 = vunpack.c.h.b16 %v872
        %v3651 = vunpack.c.l.b16 %v873
        %v3652 = vunpack.c.h.b16 %v873
        %v3653 = vunpack.c.l.b16 %v874
        %v3654 = vunpack.c.h.b16 %v874
        %v3655 = vunpack.c.l.b16 %v875
        %v3656 = vunpack.c.h.b16 %v875
        %v3657 = vunpack.c.l.b16 %v876
        %v3658 = vunpack.c.h.b16 %v876
        %v3659 = vunpack.c.l.b16 %v877
        %v3660 = vunpack.c.h.b16 %v877
        %v3661 = vunpack.c.l.b16 %v878
        %v3662 = vunpack.c.h.b16 %v878
        %v3663 = vunpack.c.l.b16 %v879
        %v3664 = vunpack.c.h.b16 %v879
        %v3665 = vunpack.c.l.b16 %v880
        %v3666 = vunpack.c.h.b16 %v880
        %v3667 = vunpack.c.l.b16 %v881
        %v3668 = vunpack.c.h.b16 %v881
        %v3669 = vunpack.c.l.b16 %v882
        %v3670 = vunpack.c.h.b16 %v882
        %v3671 = vunpack.c.l.b16 %v883
        %v3672 = vunpack.c.h.b16 %v883
        %v3673 = vunpack.c.l.b16 %v884
        %v3674 = vunpack.c.h.b16 %v884
        %v3675 = vunpack.c.l.b16 %v885
        %v3676 = vunpack.c.h.b16 %v885
        %v3677 = vunpack.c.l.b16 %v886
        %v3678 = vunpack.c.h.b16 %v886
        %v3679 = vunpack.c.l.b16 %v887
        %v3680 = vunpack.c.h.b16 %v887
        %v3681 = vunpack.c.l.b16 %v888
        %v3682 = vunpack.c.h.b16 %v888
        %v3683 = vunpack.c.l.b16 %v889
        %v3684 = vunpack.c.h.b16 %v889
        %v3685 = vunpack.c.l.b16 %v890
        %v3686 = vunpack.c.h.b16 %v890
        %v3687 = vunpack.c.l.b16 %v891
        %v3688 = vunpack.c.h.b16 %v891
        %v3689 = vunpack.c.l.b16 %v892
        %v3690 = vunpack.c.h.b16 %v892
        %v3691 = vunpack.c.l.b16 %v893
        %v3692 = vunpack.c.h.b16 %v893
        %v3693 = vunpack.c.l.b16 %v894
        %v3694 = vunpack.c.h.b16 %v894
        %v3695 = vunpack.c.l.b16 %v895
        %v3696 = vunpack.c.h.b16 %v895
        %v3697 = vunpack.c.l.b16 %v896
        %v3698 = vunpack.c.h.b16 %v896
        %v3699 = vunpack.c.l.b16 %v897
        %v3700 = vunpack.c.h.b16 %v897
        %v3701 = vunpack.c.l.b16 %v898
        %v3702 = vunpack.c.h.b16 %v898
        %v3703 = vunpack.c.l.b16 %v899
        %v3704 = vunpack.c.h.b16 %v899
        %v3705 = vunpack.c.l.b16 %v900
        %v3706 = vunpack.c.h.b16 %v900
        %v3707 = vunpack.c.l.b16 %v901
        %v3708 = vunpack.c.h.b16 %v901
        %v3709 = vunpack.c.l.b16 %v902
        %v3710 = vunpack.c.h.b16 %v902
        %v3711 = vunpack.c.l.b16 %v903
        %v3712 = vunpack.c.h.b16 %v903
        %v3713 = vunpack.c.l.b16 %v904
        %v3714 = vunpack.c.h.b16 %v904
        %v3715 = vunpack.c.l.b16 %v905
        %v3716 = vunpack.c.h.b16 %v905
        %v3717 = vunpack.c.l.b16 %v906
        %v3718 = vunpack.c.h.b16 %v906
        %v3719 = vunpack.c.l.b16 %v907
        %v3720 = vunpack.c.h.b16 %v907
        %v3721 = vunpack.c.l.b16 %v908
        %v3722 = vunpack.c.h.b16 %v908
        %v3723 = vunpack.c.l.b16 %v909
        %v3724 = vunpack.c.h.b16 %v909
        %v3725 = vunpack.c.l.b16 %v910
        %v3726 = vunpack.c.h.b16 %v910
        %v3727 = vunpack.c.l.b16 %v911
        %v3728 = vunpack.c.h.b16 %v911
        %v3729 = vunpack.c.l.b16 %v912
        %v3730 = vunpack.c.h.b16 %v912
        %v3731 = vunpack.c.l.b16 %v913
        %v3732 = vunpack.c.h.b16 %v913
        %v3733 = vunpack.c.l.b16 %v914
        %v3734 = vunpack.c.h.b16 %v914
        %v3735 = vunpack.c.l.b16 %v915
        %v3736 = vunpack.c.h.b16 %v915
        %v3737 = vunpack.c.l.b16 %v916
        %v3738 = vunpack.c.h.b16 %v916
        %v3739 = vunpack.c.l.b16 %v917
        %v3740 = vunpack.c.h.b16 %v917
        %v3741 = vunpack.c.l.b16 %v918
        %v3742 = vunpack.c.h.b16 %v918
        %v3743 = vunpack.c.l.b16 %v919
        %v3744 = vunpack.c.h.b16 %v919
        %v3745 = vunpack.c.l.b16 %v920
        %v3746 = vunpack.c.h.b16 %v920
        %v3747 = vunpack.c.l.b16 %v921
        %v3748 = vunpack.c.h.b16 %v921
        %v3749 = vunpack.c.l.b16 %v922
        %v3750 = vunpack.c.h.b16 %v922
        %v3751 = vunpack.c.l.b16 %v923
        %v3752 = vunpack.c.h.b16 %v923
        %v3753 = vunpack.c.l.b16 %v924
        %v3754 = vunpack.c.h.b16 %v924
        %v3755 = vunpack.c.l.b16 %v925
        %v3756 = vunpack.c.h.b16 %v925
        %v3757 = vunpack.c.l.b16 %v926
        %v3758 = vunpack.c.h.b16 %v926
        %v3759 = vunpack.c.l.b16 %v927
        %v3760 = vunpack.c.h.b16 %v927
        %v3761 = vunpack.c.l.b16 %v928
        %v3762 = vunpack.c.h.b16 %v928
        %v3763 = vunpack.c.l.b16 %v929
        %v3764 = vunpack.c.h.b16 %v929
        %v3765 = vunpack.c.l.b16 %v930
        %v3766 = vunpack.c.h.b16 %v930
        %v3767 = vunpack.c.l.b16 %v931
        %v3768 = vunpack.c.h.b16 %v931
        %v3769 = vunpack.c.l.b16 %v932
        %v3770 = vunpack.c.h.b16 %v932
        %v3771 = vunpack.c.l.b16 %v933
        %v3772 = vunpack.c.h.b16 %v933
        %v3773 = vunpack.c.l.b16 %v934
        %v3774 = vunpack.c.h.b16 %v934
        %v3775 = vunpack.c.l.b16 %v935
        %v3776 = vunpack.c.h.b16 %v935
        %v3777 = vunpack.c.l.b16 %v936
        %v3778 = vunpack.c.h.b16 %v936
        %v3779 = vunpack.c.l.b16 %v937
        %v3780 = vunpack.c.h.b16 %v937
        %v3781 = vunpack.c.l.b16 %v938
        %v3782 = vunpack.c.h.b16 %v938
        %v3783 = vunpack.c.l.b16 %v939
        %v3784 = vunpack.c.h.b16 %v939
        %v3785 = vunpack.c.l.b16 %v940
        %v3786 = vunpack.c.h.b16 %v940
        %v3787 = vunpack.c.l.b16 %v941
        %v3788 = vunpack.c.h.b16 %v941
        %v3789 = vunpack.c.l.b16 %v942
        %v3790 = vunpack.c.h.b16 %v942
        %v3791 = vunpack.c.l.b16 %v943
        %v3792 = vunpack.c.h.b16 %v943
        %v3793 = vunpack.c.l.b16 %v944
        %v3794 = vunpack.c.h.b16 %v944
        %v3795 = vunpack.c.l.b16 %v945
        %v3796 = vunpack.c.h.b16 %v945
        %v3797 = vunpack.c.l.b16 %v946
        %v3798 = vunpack.c.h.b16 %v946
        %v3799 = vunpack.c.l.b16 %v947
        %v3800 = vunpack.c.h.b16 %v947
        %v3801 = vunpack.c.l.b16 %v948
        %v3802 = vunpack.c.h.b16 %v948
        %v3803 = vunpack.c.l.b16 %v949
        %v3804 = vunpack.c.h.b16 %v949
        %v3805 = vunpack.c.l.b16 %v950
        %v3806 = vunpack.c.h.b16 %v950
        %v3807 = vunpack.c.l.b16 %v951
        %v3808 = vunpack.c.h.b16 %v951
        %v3809 = vunpack.c.l.b16 %v952
        %v3810 = vunpack.c.h.b16 %v952
        %v3811 = vunpack.c.l.b16 %v953
        %v3812 = vunpack.c.h.b16 %v953
        %v3813 = vunpack.c.l.b16 %v954
        %v3814 = vunpack.c.h.b16 %v954
        %v3815 = vunpack.c.l.b16 %v955
        %v3816 = vunpack.c.h.b16 %v955
        %v3817 = vunpack.c.l.b16 %v956
        %v3818 = vunpack.c.h.b16 %v956
        %v3819 = vunpack.c.l.b16 %v957
        %v3820 = vunpack.c.h.b16 %v957
        %v3821 = vunpack.c.l.b16 %v958
        %v3822 = vunpack.c.h.b16 %v958
        %v3823 = vunpack.c.l.b16 %v959
        %v3824 = vunpack.c.h.b16 %v959
        %v3825 = vunpack.c.l.b16 %v960
        %v3826 = vunpack.c.h.b16 %v960
        %v3827 = vunpack.c.l.b16 %v961
        %v3828 = vunpack.c.h.b16 %v961
        %v3829 = vunpack.c.l.b16 %v962
        %v3830 = vunpack.c.h.b16 %v962
        %v3831 = vunpack.c.l.b16 %v963
        %v3832 = vunpack.c.h.b16 %v963
        %v3833 = vunpack.c.l.b16 %v964
        %v3834 = vunpack.c.h.b16 %v964
        %v3835 = vunpack.c.l.b16 %v965
        %v3836 = vunpack.c.h.b16 %v965
        %v3837 = vunpack.c.l.b16 %v966
        %v3838 = vunpack.c.h.b16 %v966
        %v3839 = vunpack.c.l.b16 %v967
        %v3840 = vunpack.c.h.b16 %v967
        %v3841 = vunpack.c.l.b16 %v968
        %v3842 = vunpack.c.h.b16 %v968
        %v3843 = vunpack.c.l.b16 %v969
        %v3844 = vunpack.c.h.b16 %v969
        %v3845 = vunpack.c.l.b16 %v970
        %v3846 = vunpack.c.h.b16 %v970
        %v3847 = vunpack.c.l.b16 %v971
        %v3848 = vunpack.c.h.b16 %v971
        %v3849 = vunpack.c.l.b16 %v972
        %v3850 = vunpack.c.h.b16 %v972
        %v3851 = vunpack.c.l.b16 %v973
        %v3852 = vunpack.c.h.b16 %v973
        %v3853 = vunpack.c.l.b16 %v974
        %v3854 = vunpack.c.h.b16 %v974
        %v3855 = vunpack.c.l.b16 %v975
        %v3856 = vunpack.c.h.b16 %v975
        %v3857 = vunpack.c.l.b16 %v976
        %v3858 = vunpack.c.h.b16 %v976
        %v3859 = vunpack.c.l.b16 %v977
        %v3860 = vunpack.c.h.b16 %v977
        %v3861 = vunpack.c.l.b16 %v978
        %v3862 = vunpack.c.h.b16 %v978
        %v3863 = vunpack.c.l.b16 %v979
        %v3864 = vunpack.c.h.b16 %v979
        %v3865 = vunpack.c.l.b16 %v980
        %v3866 = vunpack.c.h.b16 %v980
        %v3867 = vunpack.c.l.b16 %v981
        %v3868 = vunpack.c.h.b16 %v981
        %v3869 = vunpack.c.l.b16 %v982
        %v3870 = vunpack.c.h.b16 %v982
        %v3871 = vunpack.c.l.b16 %v983
        %v3872 = vunpack.c.h.b16 %v983
        %v3873 = vunpack.c.l.b16 %v984
        %v3874 = vunpack.c.h.b16 %v984
        %v3875 = vunpack.c.l.b16 %v985
        %v3876 = vunpack.c.h.b16 %v985
        %v3877 = vunpack.c.l.b16 %v986
        %v3878 = vunpack.c.h.b16 %v986
        %v3879 = vunpack.c.l.b16 %v987
        %v3880 = vunpack.c.h.b16 %v987
        %v3881 = vunpack.c.l.b16 %v988
        %v3882 = vunpack.c.h.b16 %v988
        %v3883 = vunpack.c.l.b16 %v989
        %v3884 = vunpack.c.h.b16 %v989
        %v3885 = vunpack.c.l.b16 %v990
        %v3886 = vunpack.c.h.b16 %v990
        %v3887 = vunpack.c.l.b16 %v991
        %v3888 = vunpack.c.h.b16 %v991
        %v3889 = vunpack.c.l.b16 %v992
        %v3890 = vunpack.c.h.b16 %v992
        %v3891 = vunpack.c.l.b16 %v993
        %v3892 = vunpack.c.h.b16 %v993
        %v3893 = vunpack.c.l.b16 %v994
        %v3894 = vunpack.c.h.b16 %v994
        %v3895 = vunpack.c.l.b16 %v995
        %v3896 = vunpack.c.h.b16 %v995
        %v3897 = vunpack.c.l.b16 %v996
        %v3898 = vunpack.c.h.b16 %v996
        %v3899 = vunpack.c.l.b16 %v997
        %v3900 = vunpack.c.h.b16 %v997
        %v3901 = vunpack.c.l.b16 %v998
        %v3902 = vunpack.c.h.b16 %v998
        %v3903 = vunpack.c.l.b16 %v999
        %v3904 = vunpack.c.h.b16 %v999
        %v3905 = vunpack.c.l.b16 %v1000
        %v3906 = vunpack.c.h.b16 %v1000
        %v3907 = vunpack.c.l.b16 %v1001
        %v3908 = vunpack.c.h.b16 %v1001
        %v3909 = vunpack.c.l.b16 %v1002
        %v3910 = vunpack.c.h.b16 %v1002
        %v3911 = vunpack.c.l.b16 %v1003
        %v3912 = vunpack.c.h.b16 %v1003
        %v3913 = vunpack.c.l.b16 %v1004
        %v3914 = vunpack.c.h.b16 %v1004
        %v3915 = vunpack.c.l.b16 %v1005
        %v3916 = vunpack.c.h.b16 %v1005
        %v3917 = vunpack.c.l.b16 %v1006
        %v3918 = vunpack.c.h.b16 %v1006
        %v3919 = vunpack.c.l.b16 %v1007
        %v3920 = vunpack.c.h.b16 %v1007
        %v3921 = vunpack.c.l.b16 %v1008
        %v3922 = vunpack.c.h.b16 %v1008
        %v3923 = vunpack.c.l.b16 %v1009
        %v3924 = vunpack.c.h.b16 %v1009
        %v3925 = vunpack.c.l.b16 %v1010
        %v3926 = vunpack.c.h.b16 %v1010
        %v3927 = vunpack.c.l.b16 %v1011
        %v3928 = vunpack.c.h.b16 %v1011
        %v3929 = vunpack.c.l.b16 %v1012
        %v3930 = vunpack.c.h.b16 %v1012
        %v3931 = vunpack.c.l.b16 %v1013
        %v3932 = vunpack.c.h.b16 %v1013
        %v3933 = vunpack.c.l.b16 %v1014
        %v3934 = vunpack.c.h.b16 %v1014
        %v3935 = vunpack.c.l.b16 %v1015
        %v3936 = vunpack.c.h.b16 %v1015
        %v3937 = vunpack.c.l.b16 %v1016
        %v3938 = vunpack.c.h.b16 %v1016
        %v3939 = vunpack.c.l.b16 %v1017
        %v3940 = vunpack.c.h.b16 %v1017
        %v3941 = vunpack.c.l.b16 %v1018
        %v3942 = vunpack.c.h.b16 %v1018
        %v3943 = vunpack.c.l.b16 %v1019
        %v3944 = vunpack.c.h.b16 %v1019
        %v3945 = vunpack.c.l.b16 %v1020
        %v3946 = vunpack.c.h.b16 %v1020
        %v3947 = vunpack.c.l.b16 %v1021
        %v3948 = vunpack.c.h.b16 %v1021
        %v3949 = vunpack.c.l.b16 %v1022
        %v3950 = vunpack.c.h.b16 %v1022
        %v3951 = vunpack.c.l.b16 %v1023
        %v3952 = vunpack.c.h.b16 %v1023
        %v3953 = vunpack.c.l.b16 %v1024
        %v3954 = vunpack.c.h.b16 %v1024
        %v3955 = vunpack.c.l.b16 %v1025
        %v3956 = vunpack.c.h.b16 %v1025
        %v3957 = vunpack.c.l.b16 %v1026
        %v3958 = vunpack.c.h.b16 %v1026
        %v3959 = vunpack.c.l.b16 %v1027
        %v3960 = vunpack.c.h.b16 %v1027
        %v3961 = vunpack.c.l.b16 %v1028
        %v3962 = vunpack.c.h.b16 %v1028
        %v3963 = vunpack.c.l.b16 %v1029
        %v3964 = vunpack.c.h.b16 %v1029
        %v3965 = vunpack.c.l.b16 %v1030
        %v3966 = vunpack.c.h.b16 %v1030
        %v3967 = vunpack.c.l.b16 %v1031
        %v3968 = vunpack.c.h.b16 %v1031
        %v3969 = vunpack.c.l.b16 %v1032
        %v3970 = vunpack.c.h.b16 %v1032
        %v3971 = vunpack.c.l.b16 %v1033
        %v3972 = vunpack.c.h.b16 %v1033
        %v3973 = vunpack.c.l.b16 %v1034
        %v3974 = vunpack.c.h.b16 %v1034
        %v3975 = vunpack.c.l.b16 %v1035
        %v3976 = vunpack.c.h.b16 %v1035
        %v3977 = vunpack.c.l.b16 %v1036
        %v3978 = vunpack.c.h.b16 %v1036
        %v3979 = vunpack.c.l.b16 %v1037
        %v3980 = vunpack.c.h.b16 %v1037
        %v3981 = vunpack.c.l.b16 %v1038
        %v3982 = vunpack.c.h.b16 %v1038
        %v3983 = vunpack.c.l.b16 %v1039
        %v3984 = vunpack.c.h.b16 %v1039
        %v3985 = vunpack.c.l.b16 %v1040
        %v3986 = vunpack.c.h.b16 %v1040
        %v3987 = vunpack.c.l.b16 %v1041
        %v3988 = vunpack.c.h.b16 %v1041
        %v3989 = vunpack.c.l.b16 %v1042
        %v3990 = vunpack.c.h.b16 %v1042
        %v3991 = vunpack.c.l.b16 %v1043
        %v3992 = vunpack.c.h.b16 %v1043
        %v3993 = vunpack.c.l.b16 %v1044
        %v3994 = vunpack.c.h.b16 %v1044
        %v3995 = vunpack.c.l.b16 %v1045
        %v3996 = vunpack.c.h.b16 %v1045
        %v3997 = vunpack.c.l.b16 %v1046
        %v3998 = vunpack.c.h.b16 %v1046
        %v3999 = vunpack.c.l.b16 %v1047
        %v4000 = vunpack.c.h.b16 %v1047
        %v4001 = vunpack.c.l.b16 %v1048
        %v4002 = vunpack.c.h.b16 %v1048
        %v4003 = vunpack.c.l.b16 %v1049
        %v4004 = vunpack.c.h.b16 %v1049
        %v4005 = vunpack.c.l.b16 %v1050
        %v4006 = vunpack.c.h.b16 %v1050
        %v4007 = vunpack.c.l.b16 %v1051
        %v4008 = vunpack.c.h.b16 %v1051
        %v4009 = vunpack.c.l.b16 %v1052
        %v4010 = vunpack.c.h.b16 %v1052
        %v4011 = vunpack.c.l.b16 %v1053
        %v4012 = vunpack.c.h.b16 %v1053
        %v4013 = vunpack.c.l.b16 %v1054
        %v4014 = vunpack.c.h.b16 %v1054
        %v4015 = vunpack.c.l.b16 %v1055
        %v4016 = vunpack.c.h.b16 %v1055
        %v4017 = vunpack.c.l.b16 %v1056
        %v4018 = vunpack.c.h.b16 %v1056
        %v4019 = vunpack.c.l.b16 %v1057
        %v4020 = vunpack.c.h.b16 %v1057
        %v4021 = vunpack.c.l.b16 %v1058
        %v4022 = vunpack.c.h.b16 %v1058
        %v4023 = vunpack.c.l.b16 %v1059
        %v4024 = vunpack.c.h.b16 %v1059
        %v4025 = vunpack.c.l.b16 %v1060
        %v4026 = vunpack.c.h.b16 %v1060
        %v4027 = vunpack.c.l.b16 %v1061
        %v4028 = vunpack.c.h.b16 %v1061
        %v4029 = vunpack.c.l.b16 %v1062
        %v4030 = vunpack.c.h.b16 %v1062
        %v4031 = vunpack.c.l.b16 %v1063
        %v4032 = vunpack.c.h.b16 %v1063
        %v4033 = vunpack.c.l.b16 %v1064
        %v4034 = vunpack.c.h.b16 %v1064
        %v4035 = vunpack.c.l.b16 %v1065
        %v4036 = vunpack.c.h.b16 %v1065
        %v4037 = vunpack.c.l.b16 %v1066
        %v4038 = vunpack.c.h.b16 %v1066
        %v4039 = vunpack.c.l.b16 %v1067
        %v4040 = vunpack.c.h.b16 %v1067
        %v4041 = vunpack.c.l.b16 %v1068
        %v4042 = vunpack.c.h.b16 %v1068
        %v4043 = vunpack.c.l.b16 %v1069
        %v4044 = vunpack.c.h.b16 %v1069
        %v4045 = vunpack.c.l.b16 %v1070
        %v4046 = vunpack.c.h.b16 %v1070
        %v4047 = vunpack.c.l.b16 %v1071
        %v4048 = vunpack.c.h.b16 %v1071
        %v4049 = vunpack.c.l.b16 %v1072
        %v4050 = vunpack.c.h.b16 %v1072
        %v4051 = vunpack.c.l.b16 %v1073
        %v4052 = vunpack.c.h.b16 %v1073
        %v4053 = vunpack.c.l.b16 %v1074
        %v4054 = vunpack.c.h.b16 %v1074
        %v4055 = vunpack.c.l.b16 %v1075
        %v4056 = vunpack.c.h.b16 %v1075
        %v4057 = vunpack.c.l.b16 %v1076
        %v4058 = vunpack.c.h.b16 %v1076
        %v4059 = vunpack.c.l.b16 %v1077
        %v4060 = vunpack.c.h.b16 %v1077
        %v4061 = vunpack.c.l.b16 %v1078
        %v4062 = vunpack.c.h.b16 %v1078
        %v4063 = vunpack.c.l.b16 %v1079
        %v4064 = vunpack.c.h.b16 %v1079
        %v4065 = vunpack.c.l.b16 %v1080
        %v4066 = vunpack.c.h.b16 %v1080
        %v4067 = vunpack.c.l.b16 %v1081
        %v4068 = vunpack.c.h.b16 %v1081
        %v4069 = vunpack.c.l.b16 %v1082
        %v4070 = vunpack.c.h.b16 %v1082
        %v4071 = vunpack.c.l.b16 %v1083
        %v4072 = vunpack.c.h.b16 %v1083
        %v4073 = vunpack.c.l.b16 %v1084
        %v4074 = vunpack.c.h.b16 %v1084
        %v4075 = vunpack.c.l.b16 %v1085
        %v4076 = vunpack.c.h.b16 %v1085
        %v4077 = vunpack.c.l.b16 %v1086
        %v4078 = vunpack.c.h.b16 %v1086
        %v4079 = vunpack.c.l.b16 %v1087
        %v4080 = vunpack.c.h.b16 %v1087
        %v4081 = vunpack.c.l.b16 %v1088
        %v4082 = vunpack.c.h.b16 %v1088
        %v4083 = vunpack.c.l.b16 %v1089
        %v4084 = vunpack.c.h.b16 %v1089
        %v4085 = vunpack.c.l.b16 %v1090
        %v4086 = vunpack.c.h.b16 %v1090
        %v4087 = vunpack.c.l.b16 %v1091
        %v4088 = vunpack.c.h.b16 %v1091
        %v4089 = vunpack.c.l.b16 %v1092
        %v4090 = vunpack.c.h.b16 %v1092
        %v4091 = vunpack.c.l.b16 %v1093
        %v4092 = vunpack.c.h.b16 %v1093
        %v4093 = vunpack.c.l.b16 %v1094
        %v4094 = vunpack.c.h.b16 %v1094
        %v4095 = vunpack.c.l.b16 %v1095
        %v4096 = vunpack.c.h.b16 %v1095
        %v4097 = vunpack.c.l.b16 %v1096
        %v4098 = vunpack.c.h.b16 %v1096
        %v4099 = vunpack.c.l.b16 %v1097
        %v4100 = vunpack.c.h.b16 %v1097
        %v4101 = vunpack.c.l.b16 %v1098
        %v4102 = vunpack.c.h.b16 %v1098
        %v4103 = vunpack.c.l.b16 %v1099
        %v4104 = vunpack.c.h.b16 %v1099
        %v4105 = vunpack.c.l.b16 %v1100
        %v4106 = vunpack.c.h.b16 %v1100
        %v4107 = vunpack.c.l.b16 %v1101
        %v4108 = vunpack.c.h.b16 %v1101
        %v4109 = vunpack.c.l.b16 %v1102
        %v4110 = vunpack.c.h.b16 %v1102
        %v4111 = vunpack.c.l.b16 %v1103
        %v4112 = vunpack.c.h.b16 %v1103
        %v4113 = vunpack.c.l.b16 %v1104
        %v4114 = vunpack.c.h.b16 %v1104
        %v4115 = vunpack.c.l.b16 %v1105
        %v4116 = vunpack.c.h.b16 %v1105
        %v4117 = vunpack.c.l.b16 %v1106
        %v4118 = vunpack.c.h.b16 %v1106
        %v4119 = vunpack.c.l.b16 %v1107
        %v4120 = vunpack.c.h.b16 %v1107
        %v4121 = vunpack.c.l.b16 %v1108
        %v4122 = vunpack.c.h.b16 %v1108
        %v4123 = vunpack.c.l.b16 %v1109
        %v4124 = vunpack.c.h.b16 %v1109
        %v4125 = vunpack.c.l.b16 %v1110
        %v4126 = vunpack.c.h.b16 %v1110
        %v4127 = vunpack.c.l.b16 %v1111
        %v4128 = vunpack.c.h.b16 %v1111
        %v4129 = vunpack.c.l.b16 %v1112
        %v4130 = vunpack.c.h.b16 %v1112
        %v4131 = vunpack.c.l.b16 %v1113
        %v4132 = vunpack.c.h.b16 %v1113
        %v4133 = vunpack.c.l.b16 %v1114
        %v4134 = vunpack.c.h.b16 %v1114
        %v4135 = vunpack.c.l.b16 %v1115
        %v4136 = vunpack.c.h.b16 %v1115
        %v4137 = vunpack.c.l.b16 %v1116
        %v4138 = vunpack.c.h.b16 %v1116
        %v4139 = vunpack.c.l.b16 %v1117
        %v4140 = vunpack.c.h.b16 %v1117
        %v4141 = vunpack.c.l.b16 %v1118
        %v4142 = vunpack.c.h.b16 %v1118
        %v4143 = vunpack.c.l.b16 %v1119
        %v4144 = vunpack.c.h.b16 %v1119
        %v4145 = vunpack.c.l.b16 %v1120
        %v4146 = vunpack.c.h.b16 %v1120
        %v4147 = vunpack.c.l.b16 %v1121
        %v4148 = vunpack.c.h.b16 %v1121
        %v4149 = vunpack.c.l.b16 %v1122
        %v4150 = vunpack.c.h.b16 %v1122
        %v4151 = vunpack.c.l.b16 %v1123
        %v4152 = vunpack.c.h.b16 %v1123
        %v4153 = vunpack.c.l.b16 %v1124
        %v4154 = vunpack.c.h.b16 %v1124
        %v4155 = vunpack.c.l.b16 %v1125
        %v4156 = vunpack.c.h.b16 %v1125
        %v4157 = vunpack.c.l.b16 %v1126
        %v4158 = vunpack.c.h.b16 %v1126
        %v4159 = vunpack.c.l.b16 %v1127
        %v4160 = vunpack.c.h.b16 %v1127
        %v4161 = vunpack.c.l.b16 %v1128
        %v4162 = vunpack.c.h.b16 %v1128
        %v4163 = vunpack.c.l.b16 %v1129
        %v4164 = vunpack.c.h.b16 %v1129
        %v4165 = vunpack.c.l.b16 %v1130
        %v4166 = vunpack.c.h.b16 %v1130
        %v4167 = vunpack.c.l.b16 %v1131
        %v4168 = vunpack.c.h.b16 %v1131
        %v4169 = vunpack.c.l.b16 %v1132
        %v4170 = vunpack.c.h.b16 %v1132
        %v4171 = vunpack.c.l.b16 %v1133
        %v4172 = vunpack.c.h.b16 %v1133
        %v4173 = vunpack.c.l.b16 %v1134
        %v4174 = vunpack.c.h.b16 %v1134
        %v4175 = vunpack.c.l.b16 %v1135
        %v4176 = vunpack.c.h.b16 %v1135
        %v4177 = vunpack.c.l.b16 %v1136
        %v4178 = vunpack.c.h.b16 %v1136
        %v4179 = vunpack.c.l.b16 %v1137
        %v4180 = vunpack.c.h.b16 %v1137
        %v4181 = vunpack.c.l.b16 %v1138
        %v4182 = vunpack.c.h.b16 %v1138
        %v4183 = vunpack.c.l.b16 %v1139
        %v4184 = vunpack.c.h.b16 %v1139
        %v4185 = vunpack.c.l.b16 %v1140
        %v4186 = vunpack.c.h.b16 %v1140
        %v4187 = vunpack.c.l.b16 %v1141
        %v4188 = vunpack.c.h.b16 %v1141
        %v4189 = vunpack.c.l.b16 %v1142
        %v4190 = vunpack.c.h.b16 %v1142
        %v4191 = vunpack.c.l.b16 %v1143
        %v4192 = vunpack.c.h.b16 %v1143
        %v4193 = vunpack.c.l.b16 %v1144
        %v4194 = vunpack.c.h.b16 %v1144
        %v4195 = vunpack.c.l.b16 %v1145
        %v4196 = vunpack.c.h.b16 %v1145
        %v4197 = vunpack.c.l.b16 %v1146
        %v4198 = vunpack.c.h.b16 %v1146
        %v4199 = vunpack.c.l.b16 %v1147
        %v4200 = vunpack.c.h.b16 %v1147
        %v4201 = vunpack.c.l.b16 %v1148
        %v4202 = vunpack.c.h.b16 %v1148
        %v4203 = vunpack.c.l.b16 %v1149
        %v4204 = vunpack.c.h.b16 %v1149
        %v4205 = vunpack.c.l.b16 %v1150
        %v4206 = vunpack.c.h.b16 %v1150
        %v4207 = vunpack.c.l.b16 %v1151
        %v4208 = vunpack.c.h.b16 %v1151
        %v4209 = vunpack.c.l.b16 %v1152
        %v4210 = vunpack.c.h.b16 %v1152
        %v4211 = vunpack.c.l.b16 %v1153
        %v4212 = vunpack.c.h.b16 %v1153
        %v4213 = vunpack.c.l.b16 %v1154
        %v4214 = vunpack.c.h.b16 %v1154
        %v4215 = vunpack.c.l.b16 %v1155
        %v4216 = vunpack.c.h.b16 %v1155
        %v4217 = vunpack.c.l.b16 %v1156
        %v4218 = vunpack.c.h.b16 %v1156
        %v4219 = vunpack.c.l.b16 %v1157
        %v4220 = vunpack.c.h.b16 %v1157
        %v4221 = vunpack.c.l.b16 %v1158
        %v4222 = vunpack.c.h.b16 %v1158
        %v4223 = vunpack.c.l.b16 %v1159
        %v4224 = vunpack.c.h.b16 %v1159
        %v4225 = vunpack.c.l.b16 %v1160
        %v4226 = vunpack.c.h.b16 %v1160
        %v4227 = vunpack.c.l.b16 %v1161
        %v4228 = vunpack.c.h.b16 %v1161
        %v4229 = vunpack.c.l.b16 %v1162
        %v4230 = vunpack.c.h.b16 %v1162
        %v4231 = vunpack.c.l.b16 %v1163
        %v4232 = vunpack.c.h.b16 %v1163
        %v4233 = vunpack.c.l.b16 %v1164
        %v4234 = vunpack.c.h.b16 %v1164
        %v4235 = vunpack.c.l.b16 %v1165
        %v4236 = vunpack.c.h.b16 %v1165
        %v4237 = vunpack.c.l.b16 %v1166
        %v4238 = vunpack.c.h.b16 %v1166
        %v4239 = vunpack.c.l.b16 %v1167
        %v4240 = vunpack.c.h.b16 %v1167
        %v4241 = vunpack.c.l.b16 %v1168
        %v4242 = vunpack.c.h.b16 %v1168
        %v4243 = vunpack.c.l.b16 %v1169
        %v4244 = vunpack.c.h.b16 %v1169
        %v4245 = vunpack.c.l.b16 %v1170
        %v4246 = vunpack.c.h.b16 %v1170
        %v4247 = vunpack.c.l.b16 %v1171
        %v4248 = vunpack.c.h.b16 %v1171
        %v4249 = vunpack.c.l.b16 %v1172
        %v4250 = vunpack.c.h.b16 %v1172
        %v4251 = vunpack.c.l.b16 %v1173
        %v4252 = vunpack.c.h.b16 %v1173
        %v4253 = vunpack.c.l.b16 %v1174
        %v4254 = vunpack.c.h.b16 %v1174
        %v4255 = vunpack.c.l.b16 %v1175
        %v4256 = vunpack.c.h.b16 %v1175
        %v4257 = vunpack.c.l.b16 %v1176
        %v4258 = vunpack.c.h.b16 %v1176
        %v4259 = vunpack.c.l.b16 %v1177
        %v4260 = vunpack.c.h.b16 %v1177
        %v4261 = vunpack.c.l.b16 %v1178
        %v4262 = vunpack.c.h.b16 %v1178
        %v4263 = vunpack.c.l.b16 %v1179
        %v4264 = vunpack.c.h.b16 %v1179
        %v4265 = vunpack.c.l.b16 %v1180
        %v4266 = vunpack.c.h.b16 %v1180
        %v4267 = vunpack.c.l.b16 %v1181
        %v4268 = vunpack.c.h.b16 %v1181
        %v4269 = vunpack.c.l.b16 %v1182
        %v4270 = vunpack.c.h.b16 %v1182
        %v4271 = vunpack.c.l.b16 %v1183
        %v4272 = vunpack.c.h.b16 %v1183
        %v4273 = vunpack.c.l.b16 %v1184
        %v4274 = vunpack.c.h.b16 %v1184
        %v4275 = vunpack.c.l.b16 %v1185
        %v4276 = vunpack.c.h.b16 %v1185
        %v4277 = vunpack.c.l.b16 %v1186
        %v4278 = vunpack.c.h.b16 %v1186
        %v4279 = vunpack.c.l.b16 %v1187
        %v4280 = vunpack.c.h.b16 %v1187
        %v4281 = vunpack.c.l.b16 %v1188
        %v4282 = vunpack.c.h.b16 %v1188
        %v4283 = vunpack.c.l.b16 %v1189
        %v4284 = vunpack.c.h.b16 %v1189
        %v4285 = vunpack.c.l.b16 %v1190
        %v4286 = vunpack.c.h.b16 %v1190
        %v4287 = vunpack.c.l.b16 %v1191
        %v4288 = vunpack.c.h.b16 %v1191
        %v4289 = vunpack.c.l.b16 %v1192
        %v4290 = vunpack.c.h.b16 %v1192
        %v4291 = vunpack.c.l.b16 %v1193
        %v4292 = vunpack.c.h.b16 %v1193
        %v4293 = vunpack.c.l.b16 %v1194
        %v4294 = vunpack.c.h.b16 %v1194
        %v4295 = vunpack.c.l.b16 %v1195
        %v4296 = vunpack.c.h.b16 %v1195
        %v4297 = vunpack.c.l.b16 %v1196
        %v4298 = vunpack.c.h.b16 %v1196
        %v4299 = vunpack.c.l.b16 %v1197
        %v4300 = vunpack.c.h.b16 %v1197
        %v4301 = vunpack.c.l.b16 %v1198
        %v4302 = vunpack.c.h.b16 %v1198
        %v4303 = vunpack.c.l.b16 %v1199
        %v4304 = vunpack.c.h.b16 %v1199
        %v4305 = vunpack.c.l.b16 %v1200
        %v4306 = vunpack.c.h.b16 %v1200
        %v4307 = vunpack.c.l.b16 %v1201
        %v4308 = vunpack.c.h.b16 %v1201
        %v4309 = vunpack.c.l.b16 %v1202
        %v4310 = vunpack.c.h.b16 %v1202
        %v4311 = vunpack.c.l.b16 %v1203
        %v4312 = vunpack.c.h.b16 %v1203
        %v4313 = vunpack.c.l.b16 %v1204
        %v4314 = vunpack.c.h.b16 %v1204
        %v4315 = vunpack.c.l.b16 %v1205
        %v4316 = vunpack.c.h.b16 %v1205
        %v4317 = vunpack.c.l.b16 %v1206
        %v4318 = vunpack.c.h.b16 %v1206
        %v4319 = vunpack.c.l.b16 %v1207
        %v4320 = vunpack.c.h.b16 %v1207
        %v4321 = vunpack.c.l.b16 %v1208
        %v4322 = vunpack.c.h.b16 %v1208
        %v4323 = vunpack.c.l.b16 %v1209
        %v4324 = vunpack.c.h.b16 %v1209
        %v4325 = vunpack.c.l.b16 %v1210
        %v4326 = vunpack.c.h.b16 %v1210
        %v4327 = vunpack.c.l.b16 %v1211
        %v4328 = vunpack.c.h.b16 %v1211
        %v4329 = vunpack.c.l.b16 %v1212
        %v4330 = vunpack.c.h.b16 %v1212
        %v4331 = vunpack.c.l.b16 %v1213
        %v4332 = vunpack.c.h.b16 %v1213
        %v4333 = vunpack.c.l.b16 %v1214
        %v4334 = vunpack.c.h.b16 %v1214
        %v4335 = vunpack.c.l.b16 %v1215
        %v4336 = vunpack.c.h.b16 %v1215
        %v4337 = vunpack.c.l.b16 %v1216
        %v4338 = vunpack.c.h.b16 %v1216
        %v4339 = vunpack.c.l.b16 %v1217
        %v4340 = vunpack.c.h.b16 %v1217
        %v4341 = vunpack.c.l.b16 %v1218
        %v4342 = vunpack.c.h.b16 %v1218
        %v4343 = vunpack.c.l.b16 %v1219
        %v4344 = vunpack.c.h.b16 %v1219
        %v4345 = vunpack.c.l.b16 %v1220
        %v4346 = vunpack.c.h.b16 %v1220
        %v4347 = vunpack.c.l.b16 %v1221
        %v4348 = vunpack.c.h.b16 %v1221
        %v4349 = vunpack.c.l.b16 %v1222
        %v4350 = vunpack.c.h.b16 %v1222
        %v4351 = vunpack.c.l.b16 %v1223
        %v4352 = vunpack.c.h.b16 %v1223
        %v4353 = vunpack.c.l.b16 %v1224
        %v4354 = vunpack.c.h.b16 %v1224
        %v4355 = vunpack.c.l.b16 %v1225
        %v4356 = vunpack.c.h.b16 %v1225
        %v4357 = vunpack.c.l.b16 %v1226
        %v4358 = vunpack.c.h.b16 %v1226
        %v4359 = vunpack.c.l.b16 %v1227
        %v4360 = vunpack.c.h.b16 %v1227
        %v4361 = vunpack.c.l.b16 %v1228
        %v4362 = vunpack.c.h.b16 %v1228
        %v4363 = vunpack.c.l.b16 %v1229
        %v4364 = vunpack.c.h.b16 %v1229
        %v4365 = vunpack.c.l.b16 %v1230
        %v4366 = vunpack.c.h.b16 %v1230
        %v4367 = vunpack.c.l.b16 %v1231
        %v4368 = vunpack.c.h.b16 %v1231
        %v4369 = vunpack.c.l.b16 %v1232
        %v4370 = vunpack.c.h.b16 %v1232
        %v4371 = vunpack.c.l.b16 %v1233
        %v4372 = vunpack.c.h.b16 %v1233
        %v4373 = vunpack.c.l.b16 %v1234
        %v4374 = vunpack.c.h.b16 %v1234
        %v4375 = vunpack.c.l.b16 %v1235
        %v4376 = vunpack.c.h.b16 %v1235
        %v4377 = vunpack.c.l.b16 %v1236
        %v4378 = vunpack.c.h.b16 %v1236
        %v4379 = vunpack.c.l.b16 %v1237
        %v4380 = vunpack.c.h.b16 %v1237
        %v4381 = vunpack.c.l.b16 %v1238
        %v4382 = vunpack.c.h.b16 %v1238
        %v4383 = vunpack.c.l.b16 %v1239
        %v4384 = vunpack.c.h.b16 %v1239
        %v4385 = vunpack.c.l.b16 %v1240
        %v4386 = vunpack.c.h.b16 %v1240
        %v4387 = vunpack.c.l.b16 %v1241
        %v4388 = vunpack.c.h.b16 %v1241
        %v4389 = vunpack.c.l.b16 %v1242
        %v4390 = vunpack.c.h.b16 %v1242
        %v4391 = vunpack.c.l.b16 %v1243
        %v4392 = vunpack.c.h.b16 %v1243
        %v4393 = vunpack.c.l.b16 %v1244
        %v4394 = vunpack.c.h.b16 %v1244
        %v4395 = vunpack.c.l.b16 %v1245
        %v4396 = vunpack.c.h.b16 %v1245
        %v4397 = vunpack.c.l.b16 %v1246
        %v4398 = vunpack.c.h.b16 %v1246
        %v4399 = vunpack.c.l.b16 %v1247
        %v4400 = vunpack.c.h.b16 %v1247
        %v4401 = vunpack.c.l.b16 %v1248
        %v4402 = vunpack.c.h.b16 %v1248
        %v4403 = vunpack.c.l.b16 %v1249
        %v4404 = vunpack.c.h.b16 %v1249
        %v4405 = vunpack.c.l.b16 %v1250
        %v4406 = vunpack.c.h.b16 %v1250
        %v4407 = vunpack.c.l.b16 %v1251
        %v4408 = vunpack.c.h.b16 %v1251
        %v4409 = vunpack.c.l.b16 %v1252
        %v4410 = vunpack.c.h.b16 %v1252
        %v4411 = vunpack.c.l.b16 %v1253
        %v4412 = vunpack.c.h.b16 %v1253
        %v4413 = vunpack.c.l.b16 %v1254
        %v4414 = vunpack.c.h.b16 %v1254
        %v4415 = vunpack.c.l.b16 %v1255
        %v4416 = vunpack.c.h.b16 %v1255
        %v4417 = vunpack.c.l.b16 %v1256
        %v4418 = vunpack.c.h.b16 %v1256
        %v4419 = vunpack.c.l.b16 %v1257
        %v4420 = vunpack.c.h.b16 %v1257
        %v4421 = vunpack.c.l.b16 %v1258
        %v4422 = vunpack.c.h.b16 %v1258
        %v4423 = vunpack.c.l.b16 %v1259
        %v4424 = vunpack.c.h.b16 %v1259
        %v4425 = vunpack.c.l.b16 %v1260
        %v4426 = vunpack.c.h.b16 %v1260
        %v4427 = vunpack.c.l.b16 %v1261
        %v4428 = vunpack.c.h.b16 %v1261
        %v4429 = vunpack.c.l.b16 %v1262
        %v4430 = vunpack.c.h.b16 %v1262
        %v4431 = vunpack.c.l.b16 %v1263
        %v4432 = vunpack.c.h.b16 %v1263
        %v4433 = vunpack.c.l.b16 %v1264
        %v4434 = vunpack.c.h.b16 %v1264
        %v4435 = vunpack.c.l.b16 %v1265
        %v4436 = vunpack.c.h.b16 %v1265
        %v4437 = vunpack.c.l.b16 %v1266
        %v4438 = vunpack.c.h.b16 %v1266
        %v4439 = vunpack.c.l.b16 %v1267
        %v4440 = vunpack.c.h.b16 %v1267
        %v4441 = vunpack.c.l.b16 %v1268
        %v4442 = vunpack.c.h.b16 %v1268
        %v4443 = vunpack.c.l.b16 %v1269
        %v4444 = vunpack.c.h.b16 %v1269
        %v4445 = vunpack.c.l.b16 %v1270
        %v4446 = vunpack.c.h.b16 %v1270
        %v4447 = vunpack.c.l.b16 %v1271
        %v4448 = vunpack.c.h.b16 %v1271
        %v4449 = vunpack.c.l.b16 %v1272
        %v4450 = vunpack.c.h.b16 %v1272
        %v4451 = vunpack.c.l.b16 %v1273
        %v4452 = vunpack.c.h.b16 %v1273
        %v4453 = vunpack.c.l.b16 %v1274
        %v4454 = vunpack.c.h.b16 %v1274
        %v4455 = vunpack.c.l.b16 %v1275
        %v4456 = vunpack.c.h.b16 %v1275
        %v4457 = vunpack.c.l.b16 %v1276
        %v4458 = vunpack.c.h.b16 %v1276
        %v4459 = vunpack.c.l.b16 %v1277
        %v4460 = vunpack.c.h.b16 %v1277
        %v4461 = vunpack.c.l.b16 %v1278
        %v4462 = vunpack.c.h.b16 %v1278
        %v4463 = vunpack.c.l.b16 %v1279
        %v4464 = vunpack.c.h.b16 %v1279
        %v4465 = vunpack.c.l.b16 %v1280
        %v4466 = vunpack.c.h.b16 %v1280
        %v4467 = vunpack.c.l.b16 %v1281
        %v4468 = vunpack.c.h.b16 %v1281
        %v4469 = vunpack.c.l.b16 %v1282
        %v4470 = vunpack.c.h.b16 %v1282
        %v4471 = vpack.c.b16 %v2431, %v2423
        %v4472 = vpack.c.b16 %v2432, %v2424
        %v4473 = vpack.c.b16 %v2433, %v2425
        %v4474 = vpack.c.b16 %v2434, %v2426
        %v4475 = vpack.c.b16 %v2435, %v2427
        %v4476 = vpack.c.b16 %v2436, %v2428
        %v4477 = vpack.c.b16 %v2437, %v2429
        %v4478 = vpack.c.b16 %v2438, %v2430
        %v4479 = vpack.c.b16 %v2447, %v2439
        %v4480 = vpack.c.b16 %v2448, %v2440
        %v4481 = vpack.c.b16 %v2449, %v2441
        %v4482 = vpack.c.b16 %v2450, %v2442
        %v4483 = vpack.c.b16 %v2451, %v2443
        %v4484 = vpack.c.b16 %v2452, %v2444
        %v4485 = vpack.c.b16 %v2453, %v2445
        %v4486 = vpack.c.b16 %v2454, %v2446
        %v4487 = vpack.c.b16 %v2463, %v2455
        %v4488 = vpack.c.b16 %v2464, %v2456
        %v4489 = vpack.c.b16 %v2465, %v2457
        %v4490 = vpack.c.b16 %v2466, %v2458
        %v4491 = vpack.c.b16 %v2467, %v2459
        %v4492 = vpack.c.b16 %v2468, %v2460
        %v4493 = vpack.c.b16 %v2469, %v2461
        %v4494 = vpack.c.b16 %v2470, %v2462
        %v4495 = vpack.c.b16 %v2479, %v2471
        %v4496 = vpack.c.b16 %v2480, %v2472
        %v4497 = vpack.c.b16 %v2481, %v2473
        %v4498 = vpack.c.b16 %v2482, %v2474
        %v4499 = vpack.c.b16 %v2483, %v2475
        %v4500 = vpack.c.b16 %v2484, %v2476
        %v4501 = vpack.c.b16 %v2485, %v2477
        %v4502 = vpack.c.b16 %v2486, %v2478
        %v4503 = vpack.c.b16 %v2495, %v2487
        %v4504 = vpack.c.b16 %v2496, %v2488
        %v4505 = vpack.c.b16 %v2497, %v2489
        %v4506 = vpack.c.b16 %v2498, %v2490
        %v4507 = vpack.c.b16 %v2499, %v2491
        %v4508 = vpack.c.b16 %v2500, %v2492
        %v4509 = vpack.c.b16 %v2501, %v2493
        %v4510 = vpack.c.b16 %v2502, %v2494
        %v4511 = vpack.c.b16 %v2511, %v2503
        %v4512 = vpack.c.b16 %v2512, %v2504
        %v4513 = vpack.c.b16 %v2513, %v2505
        %v4514 = vpack.c.b16 %v2514, %v2506
        %v4515 = vpack.c.b16 %v2515, %v2507
        %v4516 = vpack.c.b16 %v2516, %v2508
        %v4517 = vpack.c.b16 %v2517, %v2509
        %v4518 = vpack.c.b16 %v2518, %v2510
        %v4519 = vpack.c.b16 %v2527, %v2519
        %v4520 = vpack.c.b16 %v2528, %v2520
        %v4521 = vpack.c.b16 %v2529, %v2521
        %v4522 = vpack.c.b16 %v2530, %v2522
        %v4523 = vpack.c.b16 %v2531, %v2523
        %v4524 = vpack.c.b16 %v2532, %v2524
        %v4525 = vpack.c.b16 %v2533, %v2525
        %v4526 = vpack.c.b16 %v2534, %v2526
        %v4527 = vpack.c.b16 %v2543, %v2535
        %v4528 = vpack.c.b16 %v2544, %v2536
        %v4529 = vpack.c.b16 %v2545, %v2537
        %v4530 = vpack.c.b16 %v2546, %v2538
        %v4531 = vpack.c.b16 %v2547, %v2539
        %v4532 = vpack.c.b16 %v2548, %v2540
        %v4533 = vpack.c.b16 %v2549, %v2541
        %v4534 = vpack.c.b16 %v2550, %v2542
        %v4535 = vpack.c.b16 %v2559, %v2551
        %v4536 = vpack.c.b16 %v2560, %v2552
        %v4537 = vpack.c.b16 %v2561, %v2553
        %v4538 = vpack.c.b16 %v2562, %v2554
        %v4539 = vpack.c.b16 %v2563, %v2555
        %v4540 = vpack.c.b16 %v2564, %v2556
        %v4541 = vpack.c.b16 %v2565, %v2557
        %v4542 = vpack.c.b16 %v2566, %v2558
        %v4543 = vpack.c.b16 %v2575, %v2567
        %v4544 = vpack.c.b16 %v2576, %v2568
        %v4545 = vpack.c.b16 %v2577, %v2569
        %v4546 = vpack.c.b16 %v2578, %v2570
        %v4547 = vpack.c.b16 %v2579, %v2571
        %v4548 = vpack.c.b16 %v2580, %v2572
        %v4549 = vpack.c.b16 %v2581, %v2573
        %v4550 = vpack.c.b16 %v2582, %v2574
        %v4551 = vpack.c.b16 %v2591, %v2583
        %v4552 = vpack.c.b16 %v2592, %v2584
        %v4553 = vpack.c.b16 %v2593, %v2585
        %v4554 = vpack.c.b16 %v2594, %v2586
        %v4555 = vpack.c.b16 %v2595, %v2587
        %v4556 = vpack.c.b16 %v2596, %v2588
        %v4557 = vpack.c.b16 %v2597, %v2589
        %v4558 = vpack.c.b16 %v2598, %v2590
        %v4559 = vpack.c.b16 %v2607, %v2599
        %v4560 = vpack.c.b16 %v2608, %v2600
        %v4561 = vpack.c.b16 %v2609, %v2601
        %v4562 = vpack.c.b16 %v2610, %v2602
        %v4563 = vpack.c.b16 %v2611, %v2603
        %v4564 = vpack.c.b16 %v2612, %v2604
        %v4565 = vpack.c.b16 %v2613, %v2605
        %v4566 = vpack.c.b16 %v2614, %v2606
        %v4567 = vpack.c.b16 %v2623, %v2615
        %v4568 = vpack.c.b16 %v2624, %v2616
        %v4569 = vpack.c.b16 %v2625, %v2617
        %v4570 = vpack.c.b16 %v2626, %v2618
        %v4571 = vpack.c.b16 %v2627, %v2619
        %v4572 = vpack.c.b16 %v2628, %v2620
        %v4573 = vpack.c.b16 %v2629, %v2621
        %v4574 = vpack.c.b16 %v2630, %v2622
        %v4575 = vpack.c.b16 %v2639, %v2631
        %v4576 = vpack.c.b16 %v2640, %v2632
        %v4577 = vpack.c.b16 %v2641, %v2633
        %v4578 = vpack.c.b16 %v2642, %v2634
        %v4579 = vpack.c.b16 %v2643, %v2635
        %v4580 = vpack.c.b16 %v2644, %v2636
        %v4581 = vpack.c.b16 %v2645, %v2637
        %v4582 = vpack.c.b16 %v2646, %v2638
        %v4583 = vpack.c.b16 %v2655, %v2647
        %v4584 = vpack.c.b16 %v2656, %v2648
        %v4585 = vpack.c.b16 %v2657, %v2649
        %v4586 = vpack.c.b16 %v2658, %v2650
        %v4587 = vpack.c.b16 %v2659, %v2651
        %v4588 = vpack.c.b16 %v2660, %v2652
        %v4589 = vpack.c.b16 %v2661, %v2653
        %v4590 = vpack.c.b16 %v2662, %v2654
        %v4591 = vpack.c.b16 %v2671, %v2663
        %v4592 = vpack.c.b16 %v2672, %v2664
        %v4593 = vpack.c.b16 %v2673, %v2665
        %v4594 = vpack.c.b16 %v2674, %v2666
        %v4595 = vpack.c.b16 %v2675, %v2667
        %v4596 = vpack.c.b16 %v2676, %v2668
        %v4597 = vpack.c.b16 %v2677, %v2669
        %v4598 = vpack.c.b16 %v2678, %v2670
        %v4599 = vpack.c.b16 %v2687, %v2679
        %v4600 = vpack.c.b16 %v2688, %v2680
        %v4601 = vpack.c.b16 %v2689, %v2681
        %v4602 = vpack.c.b16 %v2690, %v2682
        %v4603 = vpack.c.b16 %v2691, %v2683
        %v4604 = vpack.c.b16 %v2692, %v2684
        %v4605 = vpack.c.b16 %v2693, %v2685
        %v4606 = vpack.c.b16 %v2694, %v2686
        %v4607 = vpack.c.b16 %v2703, %v2695
        %v4608 = vpack.c.b16 %v2704, %v2696
        %v4609 = vpack.c.b16 %v2705, %v2697
        %v4610 = vpack.c.b16 %v2706, %v2698
        %v4611 = vpack.c.b16 %v2707, %v2699
        %v4612 = vpack.c.b16 %v2708, %v2700
        %v4613 = vpack.c.b16 %v2709, %v2701
        %v4614 = vpack.c.b16 %v2710, %v2702
        %v4615 = vpack.c.b16 %v2719, %v2711
        %v4616 = vpack.c.b16 %v2720, %v2712
        %v4617 = vpack.c.b16 %v2721, %v2713
        %v4618 = vpack.c.b16 %v2722, %v2714
        %v4619 = vpack.c.b16 %v2723, %v2715
        %v4620 = vpack.c.b16 %v2724, %v2716
        %v4621 = vpack.c.b16 %v2725, %v2717
        %v4622 = vpack.c.b16 %v2726, %v2718
        %v4623 = vpack.c.b16 %v2735, %v2727
        %v4624 = vpack.c.b16 %v2736, %v2728
        %v4625 = vpack.c.b16 %v2737, %v2729
        %v4626 = vpack.c.b16 %v2738, %v2730
        %v4627 = vpack.c.b16 %v2739, %v2731
        %v4628 = vpack.c.b16 %v2740, %v2732
        %v4629 = vpack.c.b16 %v2741, %v2733
        %v4630 = vpack.c.b16 %v2742, %v2734
        %v4631 = vpack.c.b16 %v2751, %v2743
        %v4632 = vpack.c.b16 %v2752, %v2744
        %v4633 = vpack.c.b16 %v2753, %v2745
        %v4634 = vpack.c.b16 %v2754, %v2746
        %v4635 = vpack.c.b16 %v2755, %v2747
        %v4636 = vpack.c.b16 %v2756, %v2748
        %v4637 = vpack.c.b16 %v2757, %v2749
        %v4638 = vpack.c.b16 %v2758, %v2750
        %v4639 = vpack.c.b16 %v2767, %v2759
        %v4640 = vpack.c.b16 %v2768, %v2760
        %v4641 = vpack.c.b16 %v2769, %v2761
        %v4642 = vpack.c.b16 %v2770, %v2762
        %v4643 = vpack.c.b16 %v2771, %v2763
        %v4644 = vpack.c.b16 %v2772, %v2764
        %v4645 = vpack.c.b16 %v2773, %v2765
        %v4646 = vpack.c.b16 %v2774, %v2766
        %v4647 = vpack.c.b16 %v2783, %v2775
        %v4648 = vpack.c.b16 %v2784, %v2776
        %v4649 = vpack.c.b16 %v2785, %v2777
        %v4650 = vpack.c.b16 %v2786, %v2778
        %v4651 = vpack.c.b16 %v2787, %v2779
        %v4652 = vpack.c.b16 %v2788, %v2780
        %v4653 = vpack.c.b16 %v2789, %v2781
        %v4654 = vpack.c.b16 %v2790, %v2782
        %v4655 = vpack.c.b16 %v2799, %v2791
        %v4656 = vpack.c.b16 %v2800, %v2792
        %v4657 = vpack.c.b16 %v2801, %v2793
        %v4658 = vpack.c.b16 %v2802, %v2794
        %v4659 = vpack.c.b16 %v2803, %v2795
        %v4660 = vpack.c.b16 %v2804, %v2796
        %v4661 = vpack.c.b16 %v2805, %v2797
        %v4662 = vpack.c.b16 %v2806, %v2798
        %v4663 = vpack.c.b16 %v2815, %v2807
        %v4664 = vpack.c.b16 %v2816, %v2808
        %v4665 = vpack.c.b16 %v2817, %v2809
        %v4666 = vpack.c.b16 %v2818, %v2810
        %v4667 = vpack.c.b16 %v2819, %v2811
        %v4668 = vpack.c.b16 %v2820, %v2812
        %v4669 = vpack.c.b16 %v2821, %v2813
        %v4670 = vpack.c.b16 %v2822, %v2814
        %v4671 = vpack.c.b16 %v2831, %v2823
        %v4672 = vpack.c.b16 %v2832, %v2824
        %v4673 = vpack.c.b16 %v2833, %v2825
        %v4674 = vpack.c.b16 %v2834, %v2826
        %v4675 = vpack.c.b16 %v2835, %v2827
        %v4676 = vpack.c.b16 %v2836, %v2828
        %v4677 = vpack.c.b16 %v2837, %v2829
        %v4678 = vpack.c.b16 %v2838, %v2830
        %v4679 = vpack.c.b16 %v2847, %v2839
        %v4680 = vpack.c.b16 %v2848, %v2840
        %v4681 = vpack.c.b16 %v2849, %v2841
        %v4682 = vpack.c.b16 %v2850, %v2842
        %v4683 = vpack.c.b16 %v2851, %v2843
        %v4684 = vpack.c.b16 %v2852, %v2844
        %v4685 = vpack.c.b16 %v2853, %v2845
        %v4686 = vpack.c.b16 %v2854, %v2846
        %v4687 = vpack.c.b16 %v2863, %v2855
        %v4688 = vpack.c.b16 %v2864, %v2856
        %v4689 = vpack.c.b16 %v2865, %v2857
        %v4690 = vpack.c.b16 %v2866, %v2858
        %v4691 = vpack.c.b16 %v2867, %v2859
        %v4692 = vpack.c.b16 %v2868, %v2860
        %v4693 = vpack.c.b16 %v2869, %v2861
        %v4694 = vpack.c.b16 %v2870, %v2862
        %v4695 = vpack.c.b16 %v2879, %v2871
        %v4696 = vpack.c.b16 %v2880, %v2872
        %v4697 = vpack.c.b16 %v2881, %v2873
        %v4698 = vpack.c.b16 %v2882, %v2874
        %v4699 = vpack.c.b16 %v2883, %v2875
        %v4700 = vpack.c.b16 %v2884, %v2876
        %v4701 = vpack.c.b16 %v2885, %v2877
        %v4702 = vpack.c.b16 %v2886, %v2878
        %v4703 = vpack.c.b16 %v2895, %v2887
        %v4704 = vpack.c.b16 %v2896, %v2888
        %v4705 = vpack.c.b16 %v2897, %v2889
        %v4706 = vpack.c.b16 %v2898, %v2890
        %v4707 = vpack.c.b16 %v2899, %v2891
        %v4708 = vpack.c.b16 %v2900, %v2892
        %v4709 = vpack.c.b16 %v2901, %v2893
        %v4710 = vpack.c.b16 %v2902, %v2894
        %v4711 = vpack.c.b16 %v2911, %v2903
        %v4712 = vpack.c.b16 %v2912, %v2904
        %v4713 = vpack.c.b16 %v2913, %v2905
        %v4714 = vpack.c.b16 %v2914, %v2906
        %v4715 = vpack.c.b16 %v2915, %v2907
        %v4716 = vpack.c.b16 %v2916, %v2908
        %v4717 = vpack.c.b16 %v2917, %v2909
        %v4718 = vpack.c.b16 %v2918, %v2910
        %v4719 = vpack.c.b16 %v2927, %v2919
        %v4720 = vpack.c.b16 %v2928, %v2920
        %v4721 = vpack.c.b16 %v2929, %v2921
        %v4722 = vpack.c.b16 %v2930, %v2922
        %v4723 = vpack.c.b16 %v2931, %v2923
        %v4724 = vpack.c.b16 %v2932, %v2924
        %v4725 = vpack.c.b16 %v2933, %v2925
        %v4726 = vpack.c.b16 %v2934, %v2926
        %v4727 = vpack.c.b16 %v2943, %v2935
        %v4728 = vpack.c.b16 %v2944, %v2936
        %v4729 = vpack.c.b16 %v2945, %v2937
        %v4730 = vpack.c.b16 %v2946, %v2938
        %v4731 = vpack.c.b16 %v2947, %v2939
        %v4732 = vpack.c.b16 %v2948, %v2940
        %v4733 = vpack.c.b16 %v2949, %v2941
        %v4734 = vpack.c.b16 %v2950, %v2942
        %v4735 = vpack.c.b16 %v2959, %v2951
        %v4736 = vpack.c.b16 %v2960, %v2952
        %v4737 = vpack.c.b16 %v2961, %v2953
        %v4738 = vpack.c.b16 %v2962, %v2954
        %v4739 = vpack.c.b16 %v2963, %v2955
        %v4740 = vpack.c.b16 %v2964, %v2956
        %v4741 = vpack.c.b16 %v2965, %v2957
        %v4742 = vpack.c.b16 %v2966, %v2958
        %v4743 = vpack.c.b16 %v2975, %v2967
        %v4744 = vpack.c.b16 %v2976, %v2968
        %v4745 = vpack.c.b16 %v2977, %v2969
        %v4746 = vpack.c.b16 %v2978, %v2970
        %v4747 = vpack.c.b16 %v2979, %v2971
        %v4748 = vpack.c.b16 %v2980, %v2972
        %v4749 = vpack.c.b16 %v2981, %v2973
        %v4750 = vpack.c.b16 %v2982, %v2974
        %v4751 = vpack.c.b16 %v2991, %v2983
        %v4752 = vpack.c.b16 %v2992, %v2984
        %v4753 = vpack.c.b16 %v2993, %v2985
        %v4754 = vpack.c.b16 %v2994, %v2986
        %v4755 = vpack.c.b16 %v2995, %v2987
        %v4756 = vpack.c.b16 %v2996, %v2988
        %v4757 = vpack.c.b16 %v2997, %v2989
        %v4758 = vpack.c.b16 %v2998, %v2990
        %v4759 = vpack.c.b16 %v3007, %v2999
        %v4760 = vpack.c.b16 %v3008, %v3000
        %v4761 = vpack.c.b16 %v3009, %v3001
        %v4762 = vpack.c.b16 %v3010, %v3002
        %v4763 = vpack.c.b16 %v3011, %v3003
        %v4764 = vpack.c.b16 %v3012, %v3004
        %v4765 = vpack.c.b16 %v3013, %v3005
        %v4766 = vpack.c.b16 %v3014, %v3006
        %v4767 = vpack.c.b16 %v3023, %v3015
        %v4768 = vpack.c.b16 %v3024, %v3016
        %v4769 = vpack.c.b16 %v3025, %v3017
        %v4770 = vpack.c.b16 %v3026, %v3018
        %v4771 = vpack.c.b16 %v3027, %v3019
        %v4772 = vpack.c.b16 %v3028, %v3020
        %v4773 = vpack.c.b16 %v3029, %v3021
        %v4774 = vpack.c.b16 %v3030, %v3022
        %v4775 = vpack.c.b16 %v3039, %v3031
        %v4776 = vpack.c.b16 %v3040, %v3032
        %v4777 = vpack.c.b16 %v3041, %v3033
        %v4778 = vpack.c.b16 %v3042, %v3034
        %v4779 = vpack.c.b16 %v3043, %v3035
        %v4780 = vpack.c.b16 %v3044, %v3036
        %v4781 = vpack.c.b16 %v3045, %v3037
        %v4782 = vpack.c.b16 %v3046, %v3038
        %v4783 = vpack.c.b16 %v3055, %v3047
        %v4784 = vpack.c.b16 %v3056, %v3048
        %v4785 = vpack.c.b16 %v3057, %v3049
        %v4786 = vpack.c.b16 %v3058, %v3050
        %v4787 = vpack.c.b16 %v3059, %v3051
        %v4788 = vpack.c.b16 %v3060, %v3052
        %v4789 = vpack.c.b16 %v3061, %v3053
        %v4790 = vpack.c.b16 %v3062, %v3054
        %v4791 = vpack.c.b16 %v3071, %v3063
        %v4792 = vpack.c.b16 %v3072, %v3064
        %v4793 = vpack.c.b16 %v3073, %v3065
        %v4794 = vpack.c.b16 %v3074, %v3066
        %v4795 = vpack.c.b16 %v3075, %v3067
        %v4796 = vpack.c.b16 %v3076, %v3068
        %v4797 = vpack.c.b16 %v3077, %v3069
        %v4798 = vpack.c.b16 %v3078, %v3070
        %v4799 = vpack.c.b16 %v3087, %v3079
        %v4800 = vpack.c.b16 %v3088, %v3080
        %v4801 = vpack.c.b16 %v3089, %v3081
        %v4802 = vpack.c.b16 %v3090, %v3082
        %v4803 = vpack.c.b16 %v3091, %v3083
        %v4804 = vpack.c.b16 %v3092, %v3084
        %v4805 = vpack.c.b16 %v3093, %v3085
        %v4806 = vpack.c.b16 %v3094, %v3086
        %v4807 = vpack.c.b16 %v3103, %v3095
        %v4808 = vpack.c.b16 %v3104, %v3096
        %v4809 = vpack.c.b16 %v3105, %v3097
        %v4810 = vpack.c.b16 %v3106, %v3098
        %v4811 = vpack.c.b16 %v3107, %v3099
        %v4812 = vpack.c.b16 %v3108, %v3100
        %v4813 = vpack.c.b16 %v3109, %v3101
        %v4814 = vpack.c.b16 %v3110, %v3102
        %v4815 = vpack.c.b16 %v3119, %v3111
        %v4816 = vpack.c.b16 %v3120, %v3112
        %v4817 = vpack.c.b16 %v3121, %v3113
        %v4818 = vpack.c.b16 %v3122, %v3114
        %v4819 = vpack.c.b16 %v3123, %v3115
        %v4820 = vpack.c.b16 %v3124, %v3116
        %v4821 = vpack.c.b16 %v3125, %v3117
        %v4822 = vpack.c.b16 %v3126, %v3118
        %v4823 = vpack.c.b16 %v3135, %v3127
        %v4824 = vpack.c.b16 %v3136, %v3128
        %v4825 = vpack.c.b16 %v3137, %v3129
        %v4826 = vpack.c.b16 %v3138, %v3130
        %v4827 = vpack.c.b16 %v3139, %v3131
        %v4828 = vpack.c.b16 %v3140, %v3132
        %v4829 = vpack.c.b16 %v3141, %v3133
        %v4830 = vpack.c.b16 %v3142, %v3134
        %v4831 = vpack.c.b16 %v3151, %v3143
        %v4832 = vpack.c.b16 %v3152, %v3144
        %v4833 = vpack.c.b16 %v3153, %v3145
        %v4834 = vpack.c.b16 %v3154, %v3146
        %v4835 = vpack.c.b16 %v3155, %v3147
        %v4836 = vpack.c.b16 %v3156, %v3148
        %v4837 = vpack.c.b16 %v3157, %v3149
        %v4838 = vpack.c.b16 %v3158, %v3150
        %v4839 = vpack.c.b16 %v3167, %v3159
        %v4840 = vpack.c.b16 %v3168, %v3160
        %v4841 = vpack.c.b16 %v3169, %v3161
        %v4842 = vpack.c.b16 %v3170, %v3162
        %v4843 = vpack.c.b16 %v3171, %v3163
        %v4844 = vpack.c.b16 %v3172, %v3164
        %v4845 = vpack.c.b16 %v3173, %v3165
        %v4846 = vpack.c.b16 %v3174, %v3166
        %v4847 = vpack.c.b16 %v3183, %v3175
        %v4848 = vpack.c.b16 %v3184, %v3176
        %v4849 = vpack.c.b16 %v3185, %v3177
        %v4850 = vpack.c.b16 %v3186, %v3178
        %v4851 = vpack.c.b16 %v3187, %v3179
        %v4852 = vpack.c.b16 %v3188, %v3180
        %v4853 = vpack.c.b16 %v3189, %v3181
        %v4854 = vpack.c.b16 %v3190, %v3182
        %v4855 = vpack.c.b16 %v3199, %v3191
        %v4856 = vpack.c.b16 %v3200, %v3192
        %v4857 = vpack.c.b16 %v3201, %v3193
        %v4858 = vpack.c.b16 %v3202, %v3194
        %v4859 = vpack.c.b16 %v3203, %v3195
        %v4860 = vpack.c.b16 %v3204, %v3196
        %v4861 = vpack.c.b16 %v3205, %v3197
        %v4862 = vpack.c.b16 %v3206, %v3198
        %v4863 = vpack.c.b16 %v3215, %v3207
        %v4864 = vpack.c.b16 %v3216, %v3208
        %v4865 = vpack.c.b16 %v3217, %v3209
        %v4866 = vpack.c.b16 %v3218, %v3210
        %v4867 = vpack.c.b16 %v3219, %v3211
        %v4868 = vpack.c.b16 %v3220, %v3212
        %v4869 = vpack.c.b16 %v3221, %v3213
        %v4870 = vpack.c.b16 %v3222, %v3214
        %v4871 = vpack.c.b16 %v3231, %v3223
        %v4872 = vpack.c.b16 %v3232, %v3224
        %v4873 = vpack.c.b16 %v3233, %v3225
        %v4874 = vpack.c.b16 %v3234, %v3226
        %v4875 = vpack.c.b16 %v3235, %v3227
        %v4876 = vpack.c.b16 %v3236, %v3228
        %v4877 = vpack.c.b16 %v3237, %v3229
        %v4878 = vpack.c.b16 %v3238, %v3230
        %v4879 = vpack.c.b16 %v3247, %v3239
        %v4880 = vpack.c.b16 %v3248, %v3240
        %v4881 = vpack.c.b16 %v3249, %v3241
        %v4882 = vpack.c.b16 %v3250, %v3242
        %v4883 = vpack.c.b16 %v3251, %v3243
        %v4884 = vpack.c.b16 %v3252, %v3244
        %v4885 = vpack.c.b16 %v3253, %v3245
        %v4886 = vpack.c.b16 %v3254, %v3246
        %v4887 = vpack.c.b16 %v3263, %v3255
        %v4888 = vpack.c.b16 %v3264, %v3256
        %v4889 = vpack.c.b16 %v3265, %v3257
        %v4890 = vpack.c.b16 %v3266, %v3258
        %v4891 = vpack.c.b16 %v3267, %v3259
        %v4892 = vpack.c.b16 %v3268, %v3260
        %v4893 = vpack.c.b16 %v3269, %v3261
        %v4894 = vpack.c.b16 %v3270, %v3262
        %v4895 = vpack.c.b16 %v3279, %v3271
        %v4896 = vpack.c.b16 %v3280, %v3272
        %v4897 = vpack.c.b16 %v3281, %v3273
        %v4898 = vpack.c.b16 %v3282, %v3274
        %v4899 = vpack.c.b16 %v3283, %v3275
        %v4900 = vpack.c.b16 %v3284, %v3276
        %v4901 = vpack.c.b16 %v3285, %v3277
        %v4902 = vpack.c.b16 %v3286, %v3278
        %v4903 = vpack.c.b16 %v3295, %v3287
        %v4904 = vpack.c.b16 %v3296, %v3288
        %v4905 = vpack.c.b16 %v3297, %v3289
        %v4906 = vpack.c.b16 %v3298, %v3290
        %v4907 = vpack.c.b16 %v3299, %v3291
        %v4908 = vpack.c.b16 %v3300, %v3292
        %v4909 = vpack.c.b16 %v3301, %v3293
        %v4910 = vpack.c.b16 %v3302, %v3294
        %v4911 = vpack.c.b16 %v3311, %v3303
        %v4912 = vpack.c.b16 %v3312, %v3304
        %v4913 = vpack.c.b16 %v3313, %v3305
        %v4914 = vpack.c.b16 %v3314, %v3306
        %v4915 = vpack.c.b16 %v3315, %v3307
        %v4916 = vpack.c.b16 %v3316, %v3308
        %v4917 = vpack.c.b16 %v3317, %v3309
        %v4918 = vpack.c.b16 %v3318, %v3310
        %v4919 = vpack.c.b16 %v3327, %v3319
        %v4920 = vpack.c.b16 %v3328, %v3320
        %v4921 = vpack.c.b16 %v3329, %v3321
        %v4922 = vpack.c.b16 %v3330, %v3322
        %v4923 = vpack.c.b16 %v3331, %v3323
        %v4924 = vpack.c.b16 %v3332, %v3324
        %v4925 = vpack.c.b16 %v3333, %v3325
        %v4926 = vpack.c.b16 %v3334, %v3326
        %v4927 = vpack.c.b16 %v3343, %v3335
        %v4928 = vpack.c.b16 %v3344, %v3336
        %v4929 = vpack.c.b16 %v3345, %v3337
        %v4930 = vpack.c.b16 %v3346, %v3338
        %v4931 = vpack.c.b16 %v3347, %v3339
        %v4932 = vpack.c.b16 %v3348, %v3340
        %v4933 = vpack.c.b16 %v3349, %v3341
        %v4934 = vpack.c.b16 %v3350, %v3342
        %v4935 = vpack.c.b16 %v3359, %v3351
        %v4936 = vpack.c.b16 %v3360, %v3352
        %v4937 = vpack.c.b16 %v3361, %v3353
        %v4938 = vpack.c.b16 %v3362, %v3354
        %v4939 = vpack.c.b16 %v3363, %v3355
        %v4940 = vpack.c.b16 %v3364, %v3356
        %v4941 = vpack.c.b16 %v3365, %v3357
        %v4942 = vpack.c.b16 %v3366, %v3358
        %v4943 = vpack.c.b16 %v3375, %v3367
        %v4944 = vpack.c.b16 %v3376, %v3368
        %v4945 = vpack.c.b16 %v3377, %v3369
        %v4946 = vpack.c.b16 %v3378, %v3370
        %v4947 = vpack.c.b16 %v3379, %v3371
        %v4948 = vpack.c.b16 %v3380, %v3372
        %v4949 = vpack.c.b16 %v3381, %v3373
        %v4950 = vpack.c.b16 %v3382, %v3374
        %v4951 = vpack.c.b16 %v3391, %v3383
        %v4952 = vpack.c.b16 %v3392, %v3384
        %v4953 = vpack.c.b16 %v3393, %v3385
        %v4954 = vpack.c.b16 %v3394, %v3386
        %v4955 = vpack.c.b16 %v3395, %v3387
        %v4956 = vpack.c.b16 %v3396, %v3388
        %v4957 = vpack.c.b16 %v3397, %v3389
        %v4958 = vpack.c.b16 %v3398, %v3390
        %v4959 = vpack.c.b16 %v3407, %v3399
        %v4960 = vpack.c.b16 %v3408, %v3400
        %v4961 = vpack.c.b16 %v3409, %v3401
        %v4962 = vpack.c.b16 %v3410, %v3402
        %v4963 = vpack.c.b16 %v3411, %v3403
        %v4964 = vpack.c.b16 %v3412, %v3404
        %v4965 = vpack.c.b16 %v3413, %v3405
        %v4966 = vpack.c.b16 %v3414, %v3406
        %v4967 = vpack.c.b16 %v3423, %v3415
        %v4968 = vpack.c.b16 %v3424, %v3416
        %v4969 = vpack.c.b16 %v3425, %v3417
        %v4970 = vpack.c.b16 %v3426, %v3418
        %v4971 = vpack.c.b16 %v3427, %v3419
        %v4972 = vpack.c.b16 %v3428, %v3420
        %v4973 = vpack.c.b16 %v3429, %v3421
        %v4974 = vpack.c.b16 %v3430, %v3422
        %v4975 = vpack.c.b16 %v3439, %v3431
        %v4976 = vpack.c.b16 %v3440, %v3432
        %v4977 = vpack.c.b16 %v3441, %v3433
        %v4978 = vpack.c.b16 %v3442, %v3434
        %v4979 = vpack.c.b16 %v3443, %v3435
        %v4980 = vpack.c.b16 %v3444, %v3436
        %v4981 = vpack.c.b16 %v3445, %v3437
        %v4982 = vpack.c.b16 %v3446, %v3438
        %v4983 = vpack.c.b16 %v3455, %v3447
        %v4984 = vpack.c.b16 %v3456, %v3448
        %v4985 = vpack.c.b16 %v3457, %v3449
        %v4986 = vpack.c.b16 %v3458, %v3450
        %v4987 = vpack.c.b16 %v3459, %v3451
        %v4988 = vpack.c.b16 %v3460, %v3452
        %v4989 = vpack.c.b16 %v3461, %v3453
        %v4990 = vpack.c.b16 %v3462, %v3454
        %v4991 = vpack.c.b16 %v3471, %v3463
        %v4992 = vpack.c.b16 %v3472, %v3464
        %v4993 = vpack.c.b16 %v3473, %v3465
        %v4994 = vpack.c.b16 %v3474, %v3466
        %v4995 = vpack.c.b16 %v3475, %v3467
        %v4996 = vpack.c.b16 %v3476, %v3468
        %v4997 = vpack.c.b16 %v3477, %v3469
        %v4998 = vpack.c.b16 %v3478, %v3470
        %v4999 = vpack.c.b16 %v3487, %v3479
        %v5000 = vpack.c.b16 %v3488, %v3480
        %v5001 = vpack.c.b16 %v3489, %v3481
        %v5002 = vpack.c.b16 %v3490, %v3482
        %v5003 = vpack.c.b16 %v3491, %v3483
        %v5004 = vpack.c.b16 %v3492, %v3484
        %v5005 = vpack.c.b16 %v3493, %v3485
        %v5006 = vpack.c.b16 %v3494, %v3486
        %v5007 = vpack.c.b16 %v3503, %v3495
        %v5008 = vpack.c.b16 %v3504, %v3496
        %v5009 = vpack.c.b16 %v3505, %v3497
        %v5010 = vpack.c.b16 %v3506, %v3498
        %v5011 = vpack.c.b16 %v3507, %v3499
        %v5012 = vpack.c.b16 %v3508, %v3500
        %v5013 = vpack.c.b16 %v3509, %v3501
        %v5014 = vpack.c.b16 %v3510, %v3502
        %v5015 = vpack.c.b16 %v3519, %v3511
        %v5016 = vpack.c.b16 %v3520, %v3512
        %v5017 = vpack.c.b16 %v3521, %v3513
        %v5018 = vpack.c.b16 %v3522, %v3514
        %v5019 = vpack.c.b16 %v3523, %v3515
        %v5020 = vpack.c.b16 %v3524, %v3516
        %v5021 = vpack.c.b16 %v3525, %v3517
        %v5022 = vpack.c.b16 %v3526, %v3518
        %v5023 = vpack.c.b16 %v3535, %v3527
        %v5024 = vpack.c.b16 %v3536, %v3528
        %v5025 = vpack.c.b16 %v3537, %v3529
        %v5026 = vpack.c.b16 %v3538, %v3530
        %v5027 = vpack.c.b16 %v3539, %v3531
        %v5028 = vpack.c.b16 %v3540, %v3532
        %v5029 = vpack.c.b16 %v3541, %v3533
        %v5030 = vpack.c.b16 %v3542, %v3534
        %v5031 = vpack.c.b16 %v3551, %v3543
        %v5032 = vpack.c.b16 %v3552, %v3544
        %v5033 = vpack.c.b16 %v3553, %v3545
        %v5034 = vpack.c.b16 %v3554, %v3546
        %v5035 = vpack.c.b16 %v3555, %v3547
        %v5036 = vpack.c.b16 %v3556, %v3548
        %v5037 = vpack.c.b16 %v3557, %v3549
        %v5038 = vpack.c.b16 %v3558, %v3550
        %v5039 = vpack.c.b16 %v3567, %v3559
        %v5040 = vpack.c.b16 %v3568, %v3560
        %v5041 = vpack.c.b16 %v3569, %v3561
        %v5042 = vpack.c.b16 %v3570, %v3562
        %v5043 = vpack.c.b16 %v3571, %v3563
        %v5044 = vpack.c.b16 %v3572, %v3564
        %v5045 = vpack.c.b16 %v3573, %v3565
        %v5046 = vpack.c.b16 %v3574, %v3566
        %v5047 = vpack.c.b16 %v3583, %v3575
        %v5048 = vpack.c.b16 %v3584, %v3576
        %v5049 = vpack.c.b16 %v3585, %v3577
        %v5050 = vpack.c.b16 %v3586, %v3578
        %v5051 = vpack.c.b16 %v3587, %v3579
        %v5052 = vpack.c.b16 %v3588, %v3580
        %v5053 = vpack.c.b16 %v3589, %v3581
        %v5054 = vpack.c.b16 %v3590, %v3582
        %v5055 = vpack.c.b16 %v3599, %v3591
        %v5056 = vpack.c.b16 %v3600, %v3592
        %v5057 = vpack.c.b16 %v3601, %v3593
        %v5058 = vpack.c.b16 %v3602, %v3594
        %v5059 = vpack.c.b16 %v3603, %v3595
        %v5060 = vpack.c.b16 %v3604, %v3596
        %v5061 = vpack.c.b16 %v3605, %v3597
        %v5062 = vpack.c.b16 %v3606, %v3598
        %v5063 = vpack.c.b16 %v3615, %v3607
        %v5064 = vpack.c.b16 %v3616, %v3608
        %v5065 = vpack.c.b16 %v3617, %v3609
        %v5066 = vpack.c.b16 %v3618, %v3610
        %v5067 = vpack.c.b16 %v3619, %v3611
        %v5068 = vpack.c.b16 %v3620, %v3612
        %v5069 = vpack.c.b16 %v3621, %v3613
        %v5070 = vpack.c.b16 %v3622, %v3614
        %v5071 = vpack.c.b16 %v3631, %v3623
        %v5072 = vpack.c.b16 %v3632, %v3624
        %v5073 = vpack.c.b16 %v3633, %v3625
        %v5074 = vpack.c.b16 %v3634, %v3626
        %v5075 = vpack.c.b16 %v3635, %v3627
        %v5076 = vpack.c.b16 %v3636, %v3628
        %v5077 = vpack.c.b16 %v3637, %v3629
        %v5078 = vpack.c.b16 %v3638, %v3630
        %v5079 = vpack.c.b16 %v3647, %v3639
        %v5080 = vpack.c.b16 %v3648, %v3640
        %v5081 = vpack.c.b16 %v3649, %v3641
        %v5082 = vpack.c.b16 %v3650, %v3642
        %v5083 = vpack.c.b16 %v3651, %v3643
        %v5084 = vpack.c.b16 %v3652, %v3644
        %v5085 = vpack.c.b16 %v3653, %v3645
        %v5086 = vpack.c.b16 %v3654, %v3646
        %v5087 = vpack.c.b16 %v3663, %v3655
        %v5088 = vpack.c.b16 %v3664, %v3656
        %v5089 = vpack.c.b16 %v3665, %v3657
        %v5090 = vpack.c.b16 %v3666, %v3658
        %v5091 = vpack.c.b16 %v3667, %v3659
        %v5092 = vpack.c.b16 %v3668, %v3660
        %v5093 = vpack.c.b16 %v3669, %v3661
        %v5094 = vpack.c.b16 %v3670, %v3662
        %v5095 = vpack.c.b16 %v3679, %v3671
        %v5096 = vpack.c.b16 %v3680, %v3672
        %v5097 = vpack.c.b16 %v3681, %v3673
        %v5098 = vpack.c.b16 %v3682, %v3674
        %v5099 = vpack.c.b16 %v3683, %v3675
        %v5100 = vpack.c.b16 %v3684, %v3676
        %v5101 = vpack.c.b16 %v3685, %v3677
        %v5102 = vpack.c.b16 %v3686, %v3678
        %v5103 = vpack.c.b16 %v3695, %v3687
        %v5104 = vpack.c.b16 %v3696, %v3688
        %v5105 = vpack.c.b16 %v3697, %v3689
        %v5106 = vpack.c.b16 %v3698, %v3690
        %v5107 = vpack.c.b16 %v3699, %v3691
        %v5108 = vpack.c.b16 %v3700, %v3692
        %v5109 = vpack.c.b16 %v3701, %v3693
        %v5110 = vpack.c.b16 %v3702, %v3694
        %v5111 = vpack.c.b16 %v3711, %v3703
        %v5112 = vpack.c.b16 %v3712, %v3704
        %v5113 = vpack.c.b16 %v3713, %v3705
        %v5114 = vpack.c.b16 %v3714, %v3706
        %v5115 = vpack.c.b16 %v3715, %v3707
        %v5116 = vpack.c.b16 %v3716, %v3708
        %v5117 = vpack.c.b16 %v3717, %v3709
        %v5118 = vpack.c.b16 %v3718, %v3710
        %v5119 = vpack.c.b16 %v3727, %v3719
        %v5120 = vpack.c.b16 %v3728, %v3720
        %v5121 = vpack.c.b16 %v3729, %v3721
        %v5122 = vpack.c.b16 %v3730, %v3722
        %v5123 = vpack.c.b16 %v3731, %v3723
        %v5124 = vpack.c.b16 %v3732, %v3724
        %v5125 = vpack.c.b16 %v3733, %v3725
        %v5126 = vpack.c.b16 %v3734, %v3726
        %v5127 = vpack.c.b16 %v3743, %v3735
        %v5128 = vpack.c.b16 %v3744, %v3736
        %v5129 = vpack.c.b16 %v3745, %v3737
        %v5130 = vpack.c.b16 %v3746, %v3738
        %v5131 = vpack.c.b16 %v3747, %v3739
        %v5132 = vpack.c.b16 %v3748, %v3740
        %v5133 = vpack.c.b16 %v3749, %v3741
        %v5134 = vpack.c.b16 %v3750, %v3742
        %v5135 = vpack.c.b16 %v3759, %v3751
        %v5136 = vpack.c.b16 %v3760, %v3752
        %v5137 = vpack.c.b16 %v3761, %v3753
        %v5138 = vpack.c.b16 %v3762, %v3754
        %v5139 = vpack.c.b16 %v3763, %v3755
        %v5140 = vpack.c.b16 %v3764, %v3756
        %v5141 = vpack.c.b16 %v3765, %v3757
        %v5142 = vpack.c.b16 %v3766, %v3758
        %v5143 = vpack.c.b16 %v3775, %v3767
        %v5144 = vpack.c.b16 %v3776, %v3768
        %v5145 = vpack.c.b16 %v3777, %v3769
        %v5146 = vpack.c.b16 %v3778, %v3770
        %v5147 = vpack.c.b16 %v3779, %v3771
        %v5148 = vpack.c.b16 %v3780, %v3772
        %v5149 = vpack.c.b16 %v3781, %v3773
        %v5150 = vpack.c.b16 %v3782, %v3774
        %v5151 = vpack.c.b16 %v3791, %v3783
        %v5152 = vpack.c.b16 %v3792, %v3784
        %v5153 = vpack.c.b16 %v3793, %v3785
        %v5154 = vpack.c.b16 %v3794, %v3786
        %v5155 = vpack.c.b16 %v3795, %v3787
        %v5156 = vpack.c.b16 %v3796, %v3788
        %v5157 = vpack.c.b16 %v3797, %v3789
        %v5158 = vpack.c.b16 %v3798, %v3790
        %v5159 = vpack.c.b16 %v3807, %v3799
        %v5160 = vpack.c.b16 %v3808, %v3800
        %v5161 = vpack.c.b16 %v3809, %v3801
        %v5162 = vpack.c.b16 %v3810, %v3802
        %v5163 = vpack.c.b16 %v3811, %v3803
        %v5164 = vpack.c.b16 %v3812, %v3804
        %v5165 = vpack.c.b16 %v3813, %v3805
        %v5166 = vpack.c.b16 %v3814, %v3806
        %v5167 = vpack.c.b16 %v3823, %v3815
        %v5168 = vpack.c.b16 %v3824, %v3816
        %v5169 = vpack.c.b16 %v3825, %v3817
        %v5170 = vpack.c.b16 %v3826, %v3818
        %v5171 = vpack.c.b16 %v3827, %v3819
        %v5172 = vpack.c.b16 %v3828, %v3820
        %v5173 = vpack.c.b16 %v3829, %v3821
        %v5174 = vpack.c.b16 %v3830, %v3822
        %v5175 = vpack.c.b16 %v3839, %v3831
        %v5176 = vpack.c.b16 %v3840, %v3832
        %v5177 = vpack.c.b16 %v3841, %v3833
        %v5178 = vpack.c.b16 %v3842, %v3834
        %v5179 = vpack.c.b16 %v3843, %v3835
        %v5180 = vpack.c.b16 %v3844, %v3836
        %v5181 = vpack.c.b16 %v3845, %v3837
        %v5182 = vpack.c.b16 %v3846, %v3838
        %v5183 = vpack.c.b16 %v3855, %v3847
        %v5184 = vpack.c.b16 %v3856, %v3848
        %v5185 = vpack.c.b16 %v3857, %v3849
        %v5186 = vpack.c.b16 %v3858, %v3850
        %v5187 = vpack.c.b16 %v3859, %v3851
        %v5188 = vpack.c.b16 %v3860, %v3852
        %v5189 = vpack.c.b16 %v3861, %v3853
        %v5190 = vpack.c.b16 %v3862, %v3854
        %v5191 = vpack.c.b16 %v3871, %v3863
        %v5192 = vpack.c.b16 %v3872, %v3864
        %v5193 = vpack.c.b16 %v3873, %v3865
        %v5194 = vpack.c.b16 %v3874, %v3866
        %v5195 = vpack.c.b16 %v3875, %v3867
        %v5196 = vpack.c.b16 %v3876, %v3868
        %v5197 = vpack.c.b16 %v3877, %v3869
        %v5198 = vpack.c.b16 %v3878, %v3870
        %v5199 = vpack.c.b16 %v3887, %v3879
        %v5200 = vpack.c.b16 %v3888, %v3880
        %v5201 = vpack.c.b16 %v3889, %v3881
        %v5202 = vpack.c.b16 %v3890, %v3882
        %v5203 = vpack.c.b16 %v3891, %v3883
        %v5204 = vpack.c.b16 %v3892, %v3884
        %v5205 = vpack.c.b16 %v3893, %v3885
        %v5206 = vpack.c.b16 %v3894, %v3886
        %v5207 = vpack.c.b16 %v3903, %v3895
        %v5208 = vpack.c.b16 %v3904, %v3896
        %v5209 = vpack.c.b16 %v3905, %v3897
        %v5210 = vpack.c.b16 %v3906, %v3898
        %v5211 = vpack.c.b16 %v3907, %v3899
        %v5212 = vpack.c.b16 %v3908, %v3900
        %v5213 = vpack.c.b16 %v3909, %v3901
        %v5214 = vpack.c.b16 %v3910, %v3902
        %v5215 = vpack.c.b16 %v3919, %v3911
        %v5216 = vpack.c.b16 %v3920, %v3912
        %v5217 = vpack.c.b16 %v3921, %v3913
        %v5218 = vpack.c.b16 %v3922, %v3914
        %v5219 = vpack.c.b16 %v3923, %v3915
        %v5220 = vpack.c.b16 %v3924, %v3916
        %v5221 = vpack.c.b16 %v3925, %v3917
        %v5222 = vpack.c.b16 %v3926, %v3918
        %v5223 = vpack.c.b16 %v3935, %v3927
        %v5224 = vpack.c.b16 %v3936, %v3928
        %v5225 = vpack.c.b16 %v3937, %v3929
        %v5226 = vpack.c.b16 %v3938, %v3930
        %v5227 = vpack.c.b16 %v3939, %v3931
        %v5228 = vpack.c.b16 %v3940, %v3932
        %v5229 = vpack.c.b16 %v3941, %v3933
        %v5230 = vpack.c.b16 %v3942, %v3934
        %v5231 = vpack.c.b16 %v3951, %v3943
        %v5232 = vpack.c.b16 %v3952, %v3944
        %v5233 = vpack.c.b16 %v3953, %v3945
        %v5234 = vpack.c.b16 %v3954, %v3946
        %v5235 = vpack.c.b16 %v3955, %v3947
        %v5236 = vpack.c.b16 %v3956, %v3948
        %v5237 = vpack.c.b16 %v3957, %v3949
        %v5238 = vpack.c.b16 %v3958, %v3950
        %v5239 = vpack.c.b16 %v3967, %v3959
        %v5240 = vpack.c.b16 %v3968, %v3960
        %v5241 = vpack.c.b16 %v3969, %v3961
        %v5242 = vpack.c.b16 %v3970, %v3962
        %v5243 = vpack.c.b16 %v3971, %v3963
        %v5244 = vpack.c.b16 %v3972, %v3964
        %v5245 = vpack.c.b16 %v3973, %v3965
        %v5246 = vpack.c.b16 %v3974, %v3966
        %v5247 = vpack.c.b16 %v3983, %v3975
        %v5248 = vpack.c.b16 %v3984, %v3976
        %v5249 = vpack.c.b16 %v3985, %v3977
        %v5250 = vpack.c.b16 %v3986, %v3978
        %v5251 = vpack.c.b16 %v3987, %v3979
        %v5252 = vpack.c.b16 %v3988, %v3980
        %v5253 = vpack.c.b16 %v3989, %v3981
        %v5254 = vpack.c.b16 %v3990, %v3982
        %v5255 = vpack.c.b16 %v3999, %v3991
        %v5256 = vpack.c.b16 %v4000, %v3992
        %v5257 = vpack.c.b16 %v4001, %v3993
        %v5258 = vpack.c.b16 %v4002, %v3994
        %v5259 = vpack.c.b16 %v4003, %v3995
        %v5260 = vpack.c.b16 %v4004, %v3996
        %v5261 = vpack.c.b16 %v4005, %v3997
        %v5262 = vpack.c.b16 %v4006, %v3998
        %v5263 = vpack.c.b16 %v4015, %v4007
        %v5264 = vpack.c.b16 %v4016, %v4008
        %v5265 = vpack.c.b16 %v4017, %v4009
        %v5266 = vpack.c.b16 %v4018, %v4010
        %v5267 = vpack.c.b16 %v4019, %v4011
        %v5268 = vpack.c.b16 %v4020, %v4012
        %v5269 = vpack.c.b16 %v4021, %v4013
        %v5270 = vpack.c.b16 %v4022, %v4014
        %v5271 = vpack.c.b16 %v4031, %v4023
        %v5272 = vpack.c.b16 %v4032, %v4024
        %v5273 = vpack.c.b16 %v4033, %v4025
        %v5274 = vpack.c.b16 %v4034, %v4026
        %v5275 = vpack.c.b16 %v4035, %v4027
        %v5276 = vpack.c.b16 %v4036, %v4028
        %v5277 = vpack.c.b16 %v4037, %v4029
        %v5278 = vpack.c.b16 %v4038, %v4030
        %v5279 = vpack.c.b16 %v4047, %v4039
        %v5280 = vpack.c.b16 %v4048, %v4040
        %v5281 = vpack.c.b16 %v4049, %v4041
        %v5282 = vpack.c.b16 %v4050, %v4042
        %v5283 = vpack.c.b16 %v4051, %v4043
        %v5284 = vpack.c.b16 %v4052, %v4044
        %v5285 = vpack.c.b16 %v4053, %v4045
        %v5286 = vpack.c.b16 %v4054, %v4046
        %v5287 = vpack.c.b16 %v4063, %v4055
        %v5288 = vpack.c.b16 %v4064, %v4056
        %v5289 = vpack.c.b16 %v4065, %v4057
        %v5290 = vpack.c.b16 %v4066, %v4058
        %v5291 = vpack.c.b16 %v4067, %v4059
        %v5292 = vpack.c.b16 %v4068, %v4060
        %v5293 = vpack.c.b16 %v4069, %v4061
        %v5294 = vpack.c.b16 %v4070, %v4062
        %v5295 = vpack.c.b16 %v4079, %v4071
        %v5296 = vpack.c.b16 %v4080, %v4072
        %v5297 = vpack.c.b16 %v4081, %v4073
        %v5298 = vpack.c.b16 %v4082, %v4074
        %v5299 = vpack.c.b16 %v4083, %v4075
        %v5300 = vpack.c.b16 %v4084, %v4076
        %v5301 = vpack.c.b16 %v4085, %v4077
        %v5302 = vpack.c.b16 %v4086, %v4078
        %v5303 = vpack.c.b16 %v4095, %v4087
        %v5304 = vpack.c.b16 %v4096, %v4088
        %v5305 = vpack.c.b16 %v4097, %v4089
        %v5306 = vpack.c.b16 %v4098, %v4090
        %v5307 = vpack.c.b16 %v4099, %v4091
        %v5308 = vpack.c.b16 %v4100, %v4092
        %v5309 = vpack.c.b16 %v4101, %v4093
        %v5310 = vpack.c.b16 %v4102, %v4094
        %v5311 = vpack.c.b16 %v4111, %v4103
        %v5312 = vpack.c.b16 %v4112, %v4104
        %v5313 = vpack.c.b16 %v4113, %v4105
        %v5314 = vpack.c.b16 %v4114, %v4106
        %v5315 = vpack.c.b16 %v4115, %v4107
        %v5316 = vpack.c.b16 %v4116, %v4108
        %v5317 = vpack.c.b16 %v4117, %v4109
        %v5318 = vpack.c.b16 %v4118, %v4110
        %v5319 = vpack.c.b16 %v4127, %v4119
        %v5320 = vpack.c.b16 %v4128, %v4120
        %v5321 = vpack.c.b16 %v4129, %v4121
        %v5322 = vpack.c.b16 %v4130, %v4122
        %v5323 = vpack.c.b16 %v4131, %v4123
        %v5324 = vpack.c.b16 %v4132, %v4124
        %v5325 = vpack.c.b16 %v4133, %v4125
        %v5326 = vpack.c.b16 %v4134, %v4126
        %v5327 = vpack.c.b16 %v4143, %v4135
        %v5328 = vpack.c.b16 %v4144, %v4136
        %v5329 = vpack.c.b16 %v4145, %v4137
        %v5330 = vpack.c.b16 %v4146, %v4138
        %v5331 = vpack.c.b16 %v4147, %v4139
        %v5332 = vpack.c.b16 %v4148, %v4140
        %v5333 = vpack.c.b16 %v4149, %v4141
        %v5334 = vpack.c.b16 %v4150, %v4142
        %v5335 = vpack.c.b16 %v4159, %v4151
        %v5336 = vpack.c.b16 %v4160, %v4152
        %v5337 = vpack.c.b16 %v4161, %v4153
        %v5338 = vpack.c.b16 %v4162, %v4154
        %v5339 = vpack.c.b16 %v4163, %v4155
        %v5340 = vpack.c.b16 %v4164, %v4156
        %v5341 = vpack.c.b16 %v4165, %v4157
        %v5342 = vpack.c.b16 %v4166, %v4158
        %v5343 = vpack.c.b16 %v4175, %v4167
        %v5344 = vpack.c.b16 %v4176, %v4168
        %v5345 = vpack.c.b16 %v4177, %v4169
        %v5346 = vpack.c.b16 %v4178, %v4170
        %v5347 = vpack.c.b16 %v4179, %v4171
        %v5348 = vpack.c.b16 %v4180, %v4172
        %v5349 = vpack.c.b16 %v4181, %v4173
        %v5350 = vpack.c.b16 %v4182, %v4174
        %v5351 = vpack.c.b16 %v4191, %v4183
        %v5352 = vpack.c.b16 %v4192, %v4184
        %v5353 = vpack.c.b16 %v4193, %v4185
        %v5354 = vpack.c.b16 %v4194, %v4186
        %v5355 = vpack.c.b16 %v4195, %v4187
        %v5356 = vpack.c.b16 %v4196, %v4188
        %v5357 = vpack.c.b16 %v4197, %v4189
        %v5358 = vpack.c.b16 %v4198, %v4190
        %v5359 = vpack.c.b16 %v4207, %v4199
        %v5360 = vpack.c.b16 %v4208, %v4200
        %v5361 = vpack.c.b16 %v4209, %v4201
        %v5362 = vpack.c.b16 %v4210, %v4202
        %v5363 = vpack.c.b16 %v4211, %v4203
        %v5364 = vpack.c.b16 %v4212, %v4204
        %v5365 = vpack.c.b16 %v4213, %v4205
        %v5366 = vpack.c.b16 %v4214, %v4206
        %v5367 = vpack.c.b16 %v4223, %v4215
        %v5368 = vpack.c.b16 %v4224, %v4216
        %v5369 = vpack.c.b16 %v4225, %v4217
        %v5370 = vpack.c.b16 %v4226, %v4218
        %v5371 = vpack.c.b16 %v4227, %v4219
        %v5372 = vpack.c.b16 %v4228, %v4220
        %v5373 = vpack.c.b16 %v4229, %v4221
        %v5374 = vpack.c.b16 %v4230, %v4222
        %v5375 = vpack.c.b16 %v4239, %v4231
        %v5376 = vpack.c.b16 %v4240, %v4232
        %v5377 = vpack.c.b16 %v4241, %v4233
        %v5378 = vpack.c.b16 %v4242, %v4234
        %v5379 = vpack.c.b16 %v4243, %v4235
        %v5380 = vpack.c.b16 %v4244, %v4236
        %v5381 = vpack.c.b16 %v4245, %v4237
        %v5382 = vpack.c.b16 %v4246, %v4238
        %v5383 = vpack.c.b16 %v4255, %v4247
        %v5384 = vpack.c.b16 %v4256, %v4248
        %v5385 = vpack.c.b16 %v4257, %v4249
        %v5386 = vpack.c.b16 %v4258, %v4250
        %v5387 = vpack.c.b16 %v4259, %v4251
        %v5388 = vpack.c.b16 %v4260, %v4252
        %v5389 = vpack.c.b16 %v4261, %v4253
        %v5390 = vpack.c.b16 %v4262, %v4254
        %v5391 = vpack.c.b16 %v4271, %v4263
        %v5392 = vpack.c.b16 %v4272, %v4264
        %v5393 = vpack.c.b16 %v4273, %v4265
        %v5394 = vpack.c.b16 %v4274, %v4266
        %v5395 = vpack.c.b16 %v4275, %v4267
        %v5396 = vpack.c.b16 %v4276, %v4268
        %v5397 = vpack.c.b16 %v4277, %v4269
        %v5398 = vpack.c.b16 %v4278, %v4270
        %v5399 = vpack.c.b16 %v4287, %v4279
        %v5400 = vpack.c.b16 %v4288, %v4280
        %v5401 = vpack.c.b16 %v4289, %v4281
        %v5402 = vpack.c.b16 %v4290, %v4282
        %v5403 = vpack.c.b16 %v4291, %v4283
        %v5404 = vpack.c.b16 %v4292, %v4284
        %v5405 = vpack.c.b16 %v4293, %v4285
        %v5406 = vpack.c.b16 %v4294, %v4286
        %v5407 = vpack.c.b16 %v4303, %v4295
        %v5408 = vpack.c.b16 %v4304, %v4296
        %v5409 = vpack.c.b16 %v4305, %v4297
        %v5410 = vpack.c.b16 %v4306, %v4298
        %v5411 = vpack.c.b16 %v4307, %v4299
        %v5412 = vpack.c.b16 %v4308, %v4300
        %v5413 = vpack.c.b16 %v4309, %v4301
        %v5414 = vpack.c.b16 %v4310, %v4302
        %v5415 = vpack.c.b16 %v4319, %v4311
        %v5416 = vpack.c.b16 %v4320, %v4312
        %v5417 = vpack.c.b16 %v4321, %v4313
        %v5418 = vpack.c.b16 %v4322, %v4314
        %v5419 = vpack.c.b16 %v4323, %v4315
        %v5420 = vpack.c.b16 %v4324, %v4316
        %v5421 = vpack.c.b16 %v4325, %v4317
        %v5422 = vpack.c.b16 %v4326, %v4318
        %v5423 = vpack.c.b16 %v4335, %v4327
        %v5424 = vpack.c.b16 %v4336, %v4328
        %v5425 = vpack.c.b16 %v4337, %v4329
        %v5426 = vpack.c.b16 %v4338, %v4330
        %v5427 = vpack.c.b16 %v4339, %v4331
        %v5428 = vpack.c.b16 %v4340, %v4332
        %v5429 = vpack.c.b16 %v4341, %v4333
        %v5430 = vpack.c.b16 %v4342, %v4334
        %v5431 = vpack.c.b16 %v4351, %v4343
        %v5432 = vpack.c.b16 %v4352, %v4344
        %v5433 = vpack.c.b16 %v4353, %v4345
        %v5434 = vpack.c.b16 %v4354, %v4346
        %v5435 = vpack.c.b16 %v4355, %v4347
        %v5436 = vpack.c.b16 %v4356, %v4348
        %v5437 = vpack.c.b16 %v4357, %v4349
        %v5438 = vpack.c.b16 %v4358, %v4350
        %v5439 = vpack.c.b16 %v4367, %v4359
        %v5440 = vpack.c.b16 %v4368, %v4360
        %v5441 = vpack.c.b16 %v4369, %v4361
        %v5442 = vpack.c.b16 %v4370, %v4362
        %v5443 = vpack.c.b16 %v4371, %v4363
        %v5444 = vpack.c.b16 %v4372, %v4364
        %v5445 = vpack.c.b16 %v4373, %v4365
        %v5446 = vpack.c.b16 %v4374, %v4366
        %v5447 = vpack.c.b16 %v4383, %v4375
        %v5448 = vpack.c.b16 %v4384, %v4376
        %v5449 = vpack.c.b16 %v4385, %v4377
        %v5450 = vpack.c.b16 %v4386, %v4378
        %v5451 = vpack.c.b16 %v4387, %v4379
        %v5452 = vpack.c.b16 %v4388, %v4380
        %v5453 = vpack.c.b16 %v4389, %v4381
        %v5454 = vpack.c.b16 %v4390, %v4382
        %v5455 = vpack.c.b16 %v4399, %v4391
        %v5456 = vpack.c.b16 %v4400, %v4392
        %v5457 = vpack.c.b16 %v4401, %v4393
        %v5458 = vpack.c.b16 %v4402, %v4394
        %v5459 = vpack.c.b16 %v4403, %v4395
        %v5460 = vpack.c.b16 %v4404, %v4396
        %v5461 = vpack.c.b16 %v4405, %v4397
        %v5462 = vpack.c.b16 %v4406, %v4398
        %v5463 = vpack.c.b16 %v4415, %v4407
        %v5464 = vpack.c.b16 %v4416, %v4408
        %v5465 = vpack.c.b16 %v4417, %v4409
        %v5466 = vpack.c.b16 %v4418, %v4410
        %v5467 = vpack.c.b16 %v4419, %v4411
        %v5468 = vpack.c.b16 %v4420, %v4412
        %v5469 = vpack.c.b16 %v4421, %v4413
        %v5470 = vpack.c.b16 %v4422, %v4414
        %v5471 = vpack.c.b16 %v4431, %v4423
        %v5472 = vpack.c.b16 %v4432, %v4424
        %v5473 = vpack.c.b16 %v4433, %v4425
        %v5474 = vpack.c.b16 %v4434, %v4426
        %v5475 = vpack.c.b16 %v4435, %v4427
        %v5476 = vpack.c.b16 %v4436, %v4428
        %v5477 = vpack.c.b16 %v4437, %v4429
        %v5478 = vpack.c.b16 %v4438, %v4430
        %v5479 = vpack.c.b16 %v4447, %v4439
        %v5480 = vpack.c.b16 %v4448, %v4440
        %v5481 = vpack.c.b16 %v4449, %v4441
        %v5482 = vpack.c.b16 %v4450, %v4442
        %v5483 = vpack.c.b16 %v4451, %v4443
        %v5484 = vpack.c.b16 %v4452, %v4444
        %v5485 = vpack.c.b16 %v4453, %v4445
        %v5486 = vpack.c.b16 %v4454, %v4446
        %v5487 = vpack.c.b16 %v4463, %v4455
        %v5488 = vpack.c.b16 %v4464, %v4456
        %v5489 = vpack.c.b16 %v4465, %v4457
        %v5490 = vpack.c.b16 %v4466, %v4458
        %v5491 = vpack.c.b16 %v4467, %v4459
        %v5492 = vpack.c.b16 %v4468, %v4460
        %v5493 = vpack.c.b16 %v4469, %v4461
        %v5494 = vpack.c.b16 %v4470, %v4462
        %6519 = vmatprep.subr.bf16.mxu0 %v4472
        %6520 = vmatpush1.bf16.msra.mxu0 %v4471
        %6521 = vmatprep.subr.bf16.mxu0 %v4480
        %6522 = vmatpush1.bf16.msra.mxu0 %v4479
        %6523 = vmatprep.subr.bf16.mxu0 %v4488
        %6524 = vmatpush1.bf16.msra.mxu0 %v4487
        %6525 = vmatprep.subr.bf16.mxu0 %v4496
        %6526 = vmatpush1.bf16.msra.mxu0 %v4495
        %6527 = vmatprep.subr.bf16.mxu0 %v4504
        %6528 = vmatpush1.bf16.msra.mxu0 %v4503
        %6529 = vmatprep.subr.bf16.mxu0 %v4512
        %6530 = vmatpush1.bf16.msra.mxu0 %v4511
        %6531 = vmatprep.subr.bf16.mxu0 %v4520
        %6532 = vmatpush1.bf16.msra.mxu0 %v4519
        %6533 = vmatprep.subr.bf16.mxu0 %v4528
        %6534 = vmatpush1.bf16.msra.mxu0 %v4527
        %6535 = vmatprep.subr.bf16.mxu0 %v4536
        %6536 = vmatpush1.bf16.msra.mxu0 %v4535
        %6537 = vmatprep.subr.bf16.mxu0 %v4544
        %6538 = vmatpush1.bf16.msra.mxu0 %v4543
        %6539 = vmatprep.subr.bf16.mxu0 %v4552
        %6540 = vmatpush1.bf16.msra.mxu0 %v4551
        %6541 = vmatprep.subr.bf16.mxu0 %v4560
        %6542 = vmatpush1.bf16.msra.mxu0 %v4559
        %6543 = vmatprep.subr.bf16.mxu0 %v4568
        %6544 = vmatpush1.bf16.msra.mxu0 %v4567
        %6545 = vmatprep.subr.bf16.mxu0 %v4576
        %6546 = vmatpush1.bf16.msra.mxu0 %v4575
        %6547 = vmatprep.subr.bf16.mxu0 %v4584
        %6548 = vmatpush1.bf16.msra.mxu0 %v4583
        %6549 = vmatprep.subr.bf16.mxu0 %v4592
        %6550 = vmatpush1.bf16.msra.mxu0 %v4591
        %6551 = vmatprep.mubr.bf16.mxu0 %v1322
        %6552 = vmatmul.mubr.bf16.gmra.mrb[0].mxu0 %v1308
        %v6553 = vpop.f32.mrb[0].mxu0
        %v6554 = vadd.f32 0.0, %v6553
        %v6555 = vpop.f32.mrb[0].mxu0
        %v6556 = vadd.f32 0.0, %v6555
        %v6557 = vpop.f32.mrb[0].mxu0
        %v6558 = vpop.f32.mrb[0].mxu0
        %6559 = vdwg.mxu0
        %6560 = vmatprep.subr.bf16.mxu0 %v4600
        %6561 = vmatpush1.bf16.msra.mxu0 %v4599
        %6562 = vmatprep.subr.bf16.mxu0 %v4608
        %6563 = vmatpush1.bf16.msra.mxu0 %v4607
        %6564 = vmatprep.subr.bf16.mxu0 %v4616
        %6565 = vmatpush1.bf16.msra.mxu0 %v4615
        %6566 = vmatprep.subr.bf16.mxu0 %v4624
        %6567 = vmatpush1.bf16.msra.mxu0 %v4623
        %6568 = vmatprep.subr.bf16.mxu0 %v4632
        %6569 = vmatpush1.bf16.msra.mxu0 %v4631
        %6570 = vmatprep.subr.bf16.mxu0 %v4640
        %6571 = vmatpush1.bf16.msra.mxu0 %v4639
        %6572 = vmatprep.subr.bf16.mxu0 %v4648
        %6573 = vmatpush1.bf16.msra.mxu0 %v4647
        %6574 = vmatprep.subr.bf16.mxu0 %v4656
        %6575 = vmatpush1.bf16.msra.mxu0 %v4655
        %6576 = vmatprep.subr.bf16.mxu0 %v4664
        %6577 = vmatpush1.bf16.msra.mxu0 %v4663
        %6578 = vmatprep.subr.bf16.mxu0 %v4672
        %6579 = vmatpush1.bf16.msra.mxu0 %v4671
        %6580 = vmatprep.subr.bf16.mxu0 %v4680
        %6581 = vmatpush1.bf16.msra.mxu0 %v4679
        %6582 = vmatprep.subr.bf16.mxu0 %v4688
        %6583 = vmatpush1.bf16.msra.mxu0 %v4687
        %6584 = vmatprep.subr.bf16.mxu0 %v4696
        %6585 = vmatpush1.bf16.msra.mxu0 %v4695
        %6586 = vmatprep.subr.bf16.mxu0 %v4704
        %6587 = vmatpush1.bf16.msra.mxu0 %v4703
        %6588 = vmatprep.subr.bf16.mxu0 %v4712
        %6589 = vmatpush1.bf16.msra.mxu0 %v4711
        %6590 = vmatprep.subr.bf16.mxu0 %v4720
        %6591 = vmatpush1.bf16.msra.mxu0 %v4719
        %6592 = vmatprep.mubr.bf16.mxu0 %v1332
        %6593 = vmatmul.mubr.bf16.gmra.mrb[0].mxu0 %v1330
        %v6594 = vpop.f32.mrb[0].mxu0
        %v6595 = vadd.f32 %v6554, %v6594
        %v6596 = vpop.f32.mrb[0].mxu0
        %v6597 = vadd.f32 %v6556, %v6596
        %v6598 = vpop.f32.mrb[0].mxu0
        %v6599 = vpop.f32.mrb[0].mxu0
        %6600 = vdwg.mxu0
        %6601 = vmatprep.subr.bf16.mxu0 %v4728
        %6602 = vmatpush1.bf16.msra.mxu0 %v4727
        %6603 = vmatprep.subr.bf16.mxu0 %v4736
        %6604 = vmatpush1.bf16.msra.mxu0 %v4735
        %6605 = vmatprep.subr.bf16.mxu0 %v4744
        %6606 = vmatpush1.bf16.msra.mxu0 %v4743
        %6607 = vmatprep.subr.bf16.mxu0 %v4752
        %6608 = vmatpush1.bf16.msra.mxu0 %v4751
        %6609 = vmatprep.subr.bf16.mxu0 %v4760
        %6610 = vmatpush1.bf16.msra.mxu0 %v4759
        %6611 = vmatprep.subr.bf16.mxu0 %v4768
        %6612 = vmatpush1.bf16.msra.mxu0 %v4767
        %6613 = vmatprep.subr.bf16.mxu0 %v4776
        %6614 = vmatpush1.bf16.msra.mxu0 %v4775
        %6615 = vmatprep.subr.bf16.mxu0 %v4784
        %6616 = vmatpush1.bf16.msra.mxu0 %v4783
        %6617 = vmatprep.subr.bf16.mxu0 %v4792
        %6618 = vmatpush1.bf16.msra.mxu0 %v4791
        %6619 = vmatprep.subr.bf16.mxu0 %v4800
        %6620 = vmatpush1.bf16.msra.mxu0 %v4799
        %6621 = vmatprep.subr.bf16.mxu0 %v4808
        %6622 = vmatpush1.bf16.msra.mxu0 %v4807
        %6623 = vmatprep.subr.bf16.mxu0 %v4816
        %6624 = vmatpush1.bf16.msra.mxu0 %v4815
        %6625 = vmatprep.subr.bf16.mxu0 %v4824
        %6626 = vmatpush1.bf16.msra.mxu0 %v4823
        %6627 = vmatprep.subr.bf16.mxu0 %v4832
        %6628 = vmatpush1.bf16.msra.mxu0 %v4831
        %6629 = vmatprep.subr.bf16.mxu0 %v4840
        %6630 = vmatpush1.bf16.msra.mxu0 %v4839
        %6631 = vmatprep.subr.bf16.mxu0 %v4848
        %6632 = vmatpush1.bf16.msra.mxu0 %v4847
        %6633 = vmatprep.mubr.bf16.mxu0 %v1329
        %6634 = vmatmul.mubr.bf16.gmra.mrb[0].mxu0 %v1315
        %v6635 = vpop.f32.mrb[0].mxu0
        %v6636 = vadd.f32 %v6595, %v6635
        %v6637 = vpop.f32.mrb[0].mxu0
        %v6638 = vadd.f32 %v6597, %v6637
        %v6639 = vpop.f32.mrb[0].mxu0
        %v6640 = vpop.f32.mrb[0].mxu0
        %6641 = vdwg.mxu0
        %6642 = vmatprep.subr.bf16.mxu0 %v4856
        %6643 = vmatpush1.bf16.msra.mxu0 %v4855
        %6644 = vmatprep.subr.bf16.mxu0 %v4864
        %6645 = vmatpush1.bf16.msra.mxu0 %v4863
        %6646 = vmatprep.subr.bf16.mxu0 %v4872
        %6647 = vmatpush1.bf16.msra.mxu0 %v4871
        %6648 = vmatprep.subr.bf16.mxu0 %v4880
        %6649 = vmatpush1.bf16.msra.mxu0 %v4879
        %6650 = vmatprep.subr.bf16.mxu0 %v4888
        %6651 = vmatpush1.bf16.msra.mxu0 %v4887
        %6652 = vmatprep.subr.bf16.mxu0 %v4896
        %6653 = vmatpush1.bf16.msra.mxu0 %v4895
        %6654 = vmatprep.subr.bf16.mxu0 %v4904
        %6655 = vmatpush1.bf16.msra.mxu0 %v4903
        %6656 = vmatprep.subr.bf16.mxu0 %v4912
        %6657 = vmatpush1.bf16.msra.mxu0 %v4911
        %6658 = vmatprep.subr.bf16.mxu0 %v4920
        %6659 = vmatpush1.bf16.msra.mxu0 %v4919
        %6660 = vmatprep.subr.bf16.mxu0 %v4928
        %6661 = vmatpush1.bf16.msra.mxu0 %v4927
        %6662 = vmatprep.subr.bf16.mxu0 %v4936
        %6663 = vmatpush1.bf16.msra.mxu0 %v4935
        %6664 = vmatprep.subr.bf16.mxu0 %v4944
        %6665 = vmatpush1.bf16.msra.mxu0 %v4943
        %6666 = vmatprep.subr.bf16.mxu0 %v4952
        %6667 = vmatpush1.bf16.msra.mxu0 %v4951
        %6668 = vmatprep.subr.bf16.mxu0 %v4960
        %6669 = vmatpush1.bf16.msra.mxu0 %v4959
        %6670 = vmatprep.subr.bf16.mxu0 %v4968
        %6671 = vmatpush1.bf16.msra.mxu0 %v4967
        %6672 = vmatprep.subr.bf16.mxu0 %v4976
        %6673 = vmatpush1.bf16.msra.mxu0 %v4975
        %6674 = vmatprep.mubr.bf16.mxu0 %v1333
        %6675 = vmatmul.mubr.bf16.gmra.mrb[0].mxu0 %v1331
        %v6676 = vpop.f32.mrb[0].mxu0
        %v6677 = vadd.f32 %v6636, %v6676
        %v6678 = vpop.f32.mrb[0].mxu0
        %v6679 = vadd.f32 %v6638, %v6678
        %v6680 = vpop.f32.mrb[0].mxu0
        %v6681 = vpop.f32.mrb[0].mxu0
        %6682 = vdwg.mxu0
        %6683 = vmatprep.subr.bf16.mxu0 %v4984
        %6684 = vmatpush1.bf16.msra.mxu0 %v4983
        %6685 = vmatprep.subr.bf16.mxu0 %v4992
        %6686 = vmatpush1.bf16.msra.mxu0 %v4991
        %6687 = vmatprep.subr.bf16.mxu0 %v5000
        %6688 = vmatpush1.bf16.msra.mxu0 %v4999
        %6689 = vmatprep.subr.bf16.mxu0 %v5008
        %6690 = vmatpush1.bf16.msra.mxu0 %v5007
        %6691 = vmatprep.subr.bf16.mxu0 %v5016
        %6692 = vmatpush1.bf16.msra.mxu0 %v5015
        %6693 = vmatprep.subr.bf16.mxu0 %v5024
        %6694 = vmatpush1.bf16.msra.mxu0 %v5023
        %6695 = vmatprep.subr.bf16.mxu0 %v5032
        %6696 = vmatpush1.bf16.msra.mxu0 %v5031
        %6697 = vmatprep.subr.bf16.mxu0 %v5040
        %6698 = vmatpush1.bf16.msra.mxu0 %v5039
        %6699 = vmatprep.subr.bf16.mxu0 %v5048
        %6700 = vmatpush1.bf16.msra.mxu0 %v5047
        %6701 = vmatprep.subr.bf16.mxu0 %v5056
        %6702 = vmatpush1.bf16.msra.mxu0 %v5055
        %6703 = vmatprep.subr.bf16.mxu0 %v5064
        %6704 = vmatpush1.bf16.msra.mxu0 %v5063
        %6705 = vmatprep.subr.bf16.mxu0 %v5072
        %6706 = vmatpush1.bf16.msra.mxu0 %v5071
        %6707 = vmatprep.subr.bf16.mxu0 %v5080
        %6708 = vmatpush1.bf16.msra.mxu0 %v5079
        %6709 = vmatprep.subr.bf16.mxu0 %v5088
        %6710 = vmatpush1.bf16.msra.mxu0 %v5087
        %6711 = vmatprep.subr.bf16.mxu0 %v5096
        %6712 = vmatpush1.bf16.msra.mxu0 %v5095
        %6713 = vmatprep.subr.bf16.mxu0 %v5104
        %6714 = vmatpush1.bf16.msra.mxu0 %v5103
        %6715 = vmatprep.mubr.bf16.mxu0 %v1371
        %6716 = vmatmul.mubr.bf16.gmra.mrb[0].mxu0 %v1357
        %v6717 = vpop.f32.mrb[0].mxu0
        %v6718 = vadd.f32 %v6677, %v6717
        %v6719 = vpop.f32.mrb[0].mxu0
        %v6720 = vadd.f32 %v6679, %v6719
        %v6721 = vpop.f32.mrb[0].mxu0
        %v6722 = vpop.f32.mrb[0].mxu0
        %6723 = vdwg.mxu0
        %6724 = vmatprep.subr.bf16.mxu0 %v5112
        %6725 = vmatpush1.bf16.msra.mxu0 %v5111
        %6726 = vmatprep.subr.bf16.mxu0 %v5120
        %6727 = vmatpush1.bf16.msra.mxu0 %v5119
        %6728 = vmatprep.subr.bf16.mxu0 %v5128
        %6729 = vmatpush1.bf16.msra.mxu0 %v5127
        %6730 = vmatprep.subr.bf16.mxu0 %v5136
        %6731 = vmatpush1.bf16.msra.mxu0 %v5135
        %6732 = vmatprep.subr.bf16.mxu0 %v5144
        %6733 = vmatpush1.bf16.msra.mxu0 %v5143
        %6734 = vmatprep.subr.bf16.mxu0 %v5152
        %6735 = vmatpush1.bf16.msra.mxu0 %v5151
        %6736 = vmatprep.subr.bf16.mxu0 %v5160
        %6737 = vmatpush1.bf16.msra.mxu0 %v5159
        %6738 = vmatprep.subr.bf16.mxu0 %v5168
        %6739 = vmatpush1.bf16.msra.mxu0 %v5167
        %6740 = vmatprep.subr.bf16.mxu0 %v5176
        %6741 = vmatpush1.bf16.msra.mxu0 %v5175
        %6742 = vmatprep.subr.bf16.mxu0 %v5184
        %6743 = vmatpush1.bf16.msra.mxu0 %v5183
        %6744 = vmatprep.subr.bf16.mxu0 %v5192
        %6745 = vmatpush1.bf16.msra.mxu0 %v5191
        %6746 = vmatprep.subr.bf16.mxu0 %v5200
        %6747 = vmatpush1.bf16.msra.mxu0 %v5199
        %6748 = vmatprep.subr.bf16.mxu0 %v5208
        %6749 = vmatpush1.bf16.msra.mxu0 %v5207
        %6750 = vmatprep.subr.bf16.mxu0 %v5216
        %6751 = vmatpush1.bf16.msra.mxu0 %v5215
        %6752 = vmatprep.subr.bf16.mxu0 %v5224
        %6753 = vmatpush1.bf16.msra.mxu0 %v5223
        %6754 = vmatprep.subr.bf16.mxu0 %v5232
        %6755 = vmatpush1.bf16.msra.mxu0 %v5231
        %6756 = vmatprep.mubr.bf16.mxu0 %v1381
        %6757 = vmatmul.mubr.bf16.gmra.mrb[0].mxu0 %v1379
        %v6758 = vpop.f32.mrb[0].mxu0
        %v6759 = vadd.f32 %v6718, %v6758
        %v6760 = vpop.f32.mrb[0].mxu0
        %v6761 = vadd.f32 %v6720, %v6760
        %v6762 = vpop.f32.mrb[0].mxu0
        %v6763 = vpop.f32.mrb[0].mxu0
        %6764 = vdwg.mxu0
        %6765 = vmatprep.subr.bf16.mxu0 %v5240
        %6766 = vmatpush1.bf16.msra.mxu0 %v5239
        %6767 = vmatprep.subr.bf16.mxu0 %v5248
        %6768 = vmatpush1.bf16.msra.mxu0 %v5247
        %6769 = vmatprep.subr.bf16.mxu0 %v5256
        %6770 = vmatpush1.bf16.msra.mxu0 %v5255
        %6771 = vmatprep.subr.bf16.mxu0 %v5264
        %6772 = vmatpush1.bf16.msra.mxu0 %v5263
        %6773 = vmatprep.subr.bf16.mxu0 %v5272
        %6774 = vmatpush1.bf16.msra.mxu0 %v5271
        %6775 = vmatprep.subr.bf16.mxu0 %v5280
        %6776 = vmatpush1.bf16.msra.mxu0 %v5279
        %6777 = vmatprep.subr.bf16.mxu0 %v5288
        %6778 = vmatpush1.bf16.msra.mxu0 %v5287
        %6779 = vmatprep.subr.bf16.mxu0 %v5296
        %6780 = vmatpush1.bf16.msra.mxu0 %v5295
        %6781 = vmatprep.subr.bf16.mxu0 %v5304
        %6782 = vmatpush1.bf16.msra.mxu0 %v5303
        %6783 = vmatprep.subr.bf16.mxu0 %v5312
        %6784 = vmatpush1.bf16.msra.mxu0 %v5311
        %6785 = vmatprep.subr.bf16.mxu0 %v5320
        %6786 = vmatpush1.bf16.msra.mxu0 %v5319
        %6787 = vmatprep.subr.bf16.mxu0 %v5328
        %6788 = vmatpush1.bf16.msra.mxu0 %v5327
        %6789 = vmatprep.subr.bf16.mxu0 %v5336
        %6790 = vmatpush1.bf16.msra.mxu0 %v5335
        %6791 = vmatprep.subr.bf16.mxu0 %v5344
        %6792 = vmatpush1.bf16.msra.mxu0 %v5343
        %6793 = vmatprep.subr.bf16.mxu0 %v5352
        %6794 = vmatpush1.bf16.msra.mxu0 %v5351
        %6795 = vmatprep.subr.bf16.mxu0 %v5360
        %6796 = vmatpush1.bf16.msra.mxu0 %v5359
        %6797 = vmatprep.mubr.bf16.mxu0 %v1378
        %6798 = vmatmul.mubr.bf16.gmra.mrb[0].mxu0 %v1364
        %v6799 = vpop.f32.mrb[0].mxu0
        %v6800 = vadd.f32 %v6759, %v6799
        %v6801 = vpop.f32.mrb[0].mxu0
        %v6802 = vadd.f32 %v6761, %v6801
        %v6803 = vpop.f32.mrb[0].mxu0
        %v6804 = vpop.f32.mrb[0].mxu0
        %6805 = vdwg.mxu0
        %6806 = vmatprep.subr.bf16.mxu0 %v5368
        %6807 = vmatpush1.bf16.msra.mxu0 %v5367
        %6808 = vmatprep.subr.bf16.mxu0 %v5376
        %6809 = vmatpush1.bf16.msra.mxu0 %v5375
        %6810 = vmatprep.subr.bf16.mxu0 %v5384
        %6811 = vmatpush1.bf16.msra.mxu0 %v5383
        %6812 = vmatprep.subr.bf16.mxu0 %v5392
        %6813 = vmatpush1.bf16.msra.mxu0 %v5391
        %6814 = vmatprep.subr.bf16.mxu0 %v5400
        %6815 = vmatpush1.bf16.msra.mxu0 %v5399
        %6816 = vmatprep.subr.bf16.mxu0 %v5408
        %6817 = vmatpush1.bf16.msra.mxu0 %v5407
        %6818 = vmatprep.subr.bf16.mxu0 %v5416
        %6819 = vmatpush1.bf16.msra.mxu0 %v5415
        %6820 = vmatprep.subr.bf16.mxu0 %v5424
        %6821 = vmatpush1.bf16.msra.mxu0 %v5423
        %6822 = vmatprep.subr.bf16.mxu0 %v5432
        %6823 = vmatpush1.bf16.msra.mxu0 %v5431
        %6824 = vmatprep.subr.bf16.mxu0 %v5440
        %6825 = vmatpush1.bf16.msra.mxu0 %v5439
        %6826 = vmatprep.subr.bf16.mxu0 %v5448
        %6827 = vmatpush1.bf16.msra.mxu0 %v5447
        %6828 = vmatprep.subr.bf16.mxu0 %v5456
        %6829 = vmatpush1.bf16.msra.mxu0 %v5455
        %6830 = vmatprep.subr.bf16.mxu0 %v5464
        %6831 = vmatpush1.bf16.msra.mxu0 %v5463
        %6832 = vmatprep.subr.bf16.mxu0 %v5472
        %6833 = vmatpush1.bf16.msra.mxu0 %v5471
        %6834 = vmatprep.subr.bf16.mxu0 %v5480
        %6835 = vmatpush1.bf16.msra.mxu0 %v5479
        %6836 = vmatprep.subr.bf16.mxu0 %v5488
        %6837 = vmatpush1.bf16.msra.mxu0 %v5487
        %6838 = vmatprep.mubr.bf16.mxu0 %v1382
        %6839 = vmatmul.mubr.bf16.gmra.mrb[0].mxu0 %v1380
        %v6840 = vpop.f32.mrb[0].mxu0
        %v6841 = vadd.f32 %v6800, %v6840
        %v6842 = vpop.f32.mrb[0].mxu0
        %v6843 = vadd.f32 %v6802, %v6842
        %v6844 = vpop.f32.mrb[0].mxu0
        %v6845 = vpop.f32.mrb[0].mxu0
        %6846 = vdwg.mxu0
        %6847 = vmatprep.subr.bf16.mxu0 %v4474
        %6848 = vmatpush1.bf16.msra.mxu0 %v4473
        %6849 = vmatprep.subr.bf16.mxu0 %v4482
        %6850 = vmatpush1.bf16.msra.mxu0 %v4481
        %6851 = vmatprep.subr.bf16.mxu0 %v4490
        %6852 = vmatpush1.bf16.msra.mxu0 %v4489
        %6853 = vmatprep.subr.bf16.mxu0 %v4498
        %6854 = vmatpush1.bf16.msra.mxu0 %v4497
        %6855 = vmatprep.subr.bf16.mxu0 %v4506
        %6856 = vmatpush1.bf16.msra.mxu0 %v4505
        %6857 = vmatprep.subr.bf16.mxu0 %v4514
        %6858 = vmatpush1.bf16.msra.mxu0 %v4513
        %6859 = vmatprep.subr.bf16.mxu0 %v4522
        %6860 = vmatpush1.bf16.msra.mxu0 %v4521
        %6861 = vmatprep.subr.bf16.mxu0 %v4530
        %6862 = vmatpush1.bf16.msra.mxu0 %v4529
        %6863 = vmatprep.subr.bf16.mxu0 %v4538
        %6864 = vmatpush1.bf16.msra.mxu0 %v4537
        %6865 = vmatprep.subr.bf16.mxu0 %v4546
        %6866 = vmatpush1.bf16.msra.mxu0 %v4545
        %6867 = vmatprep.subr.bf16.mxu0 %v4554
        %6868 = vmatpush1.bf16.msra.mxu0 %v4553
        %6869 = vmatprep.subr.bf16.mxu0 %v4562
        %6870 = vmatpush1.bf16.msra.mxu0 %v4561
        %6871 = vmatprep.subr.bf16.mxu0 %v4570
        %6872 = vmatpush1.bf16.msra.mxu0 %v4569
        %6873 = vmatprep.subr.bf16.mxu0 %v4578
        %6874 = vmatpush1.bf16.msra.mxu0 %v4577
        %6875 = vmatprep.subr.bf16.mxu0 %v4586
        %6876 = vmatpush1.bf16.msra.mxu0 %v4585
        %6877 = vmatprep.subr.bf16.mxu0 %v4594
        %6878 = vmatpush1.bf16.msra.mxu0 %v4593
        %6879 = vmatprep.mubr.bf16.mxu0 %v1322
        %6880 = vmatmul.mubr.bf16.gmra.mrb[0].mxu0 %v1308
        %v6881 = vpop.f32.mrb[0].mxu0
        %v6882 = vadd.f32 0.0, %v6881
        %v6883 = vpop.f32.mrb[0].mxu0
        %v6884 = vadd.f32 0.0, %v6883
        %v6885 = vpop.f32.mrb[0].mxu0
        %v6886 = vpop.f32.mrb[0].mxu0
        %6887 = vdwg.mxu0
        %6888 = vmatprep.subr.bf16.mxu0 %v4602
        %6889 = vmatpush1.bf16.msra.mxu0 %v4601
        %6890 = vmatprep.subr.bf16.mxu0 %v4610
        %6891 = vmatpush1.bf16.msra.mxu0 %v4609
        %6892 = vmatprep.subr.bf16.mxu0 %v4618
        %6893 = vmatpush1.bf16.msra.mxu0 %v4617
        %6894 = vmatprep.subr.bf16.mxu0 %v4626
        %6895 = vmatpush1.bf16.msra.mxu0 %v4625
        %6896 = vmatprep.subr.bf16.mxu0 %v4634
        %6897 = vmatpush1.bf16.msra.mxu0 %v4633
        %6898 = vmatprep.subr.bf16.mxu0 %v4642
        %6899 = vmatpush1.bf16.msra.mxu0 %v4641
        %6900 = vmatprep.subr.bf16.mxu0 %v4650
        %6901 = vmatpush1.bf16.msra.mxu0 %v4649
        %6902 = vmatprep.subr.bf16.mxu0 %v4658
        %6903 = vmatpush1.bf16.msra.mxu0 %v4657
        %6904 = vmatprep.subr.bf16.mxu0 %v4666
        %6905 = vmatpush1.bf16.msra.mxu0 %v4665
        %6906 = vmatprep.subr.bf16.mxu0 %v4674
        %6907 = vmatpush1.bf16.msra.mxu0 %v4673
        %6908 = vmatprep.subr.bf16.mxu0 %v4682
        %6909 = vmatpush1.bf16.msra.mxu0 %v4681
        %6910 = vmatprep.subr.bf16.mxu0 %v4690
        %6911 = vmatpush1.bf16.msra.mxu0 %v4689
        %6912 = vmatprep.subr.bf16.mxu0 %v4698
        %6913 = vmatpush1.bf16.msra.mxu0 %v4697
        %6914 = vmatprep.subr.bf16.mxu0 %v4706
        %6915 = vmatpush1.bf16.msra.mxu0 %v4705
        %6916 = vmatprep.subr.bf16.mxu0 %v4714
        %6917 = vmatpush1.bf16.msra.mxu0 %v4713
        %6918 = vmatprep.subr.bf16.mxu0 %v4722
        %6919 = vmatpush1.bf16.msra.mxu0 %v4721
        %6920 = vmatprep.mubr.bf16.mxu0 %v1332
        %6921 = vmatmul.mubr.bf16.gmra.mrb[0].mxu0 %v1330
        %v6922 = vpop.f32.mrb[0].mxu0
        %v6923 = vadd.f32 %v6882, %v6922
        %v6924 = vpop.f32.mrb[0].mxu0
        %v6925 = vadd.f32 %v6884, %v6924
        %v6926 = vpop.f32.mrb[0].mxu0
        %v6927 = vpop.f32.mrb[0].mxu0
        %6928 = vdwg.mxu0
        %6929 = vmatprep.subr.bf16.mxu0 %v4730
        %6930 = vmatpush1.bf16.msra.mxu0 %v4729
        %6931 = vmatprep.subr.bf16.mxu0 %v4738
        %6932 = vmatpush1.bf16.msra.mxu0 %v4737
        %6933 = vmatprep.subr.bf16.mxu0 %v4746
        %6934 = vmatpush1.bf16.msra.mxu0 %v4745
        %6935 = vmatprep.subr.bf16.mxu0 %v4754
        %6936 = vmatpush1.bf16.msra.mxu0 %v4753
        %6937 = vmatprep.subr.bf16.mxu0 %v4762
        %6938 = vmatpush1.bf16.msra.mxu0 %v4761
        %6939 = vmatprep.subr.bf16.mxu0 %v4770
        %6940 = vmatpush1.bf16.msra.mxu0 %v4769
        %6941 = vmatprep.subr.bf16.mxu0 %v4778
        %6942 = vmatpush1.bf16.msra.mxu0 %v4777
        %6943 = vmatprep.subr.bf16.mxu0 %v4786
        %6944 = vmatpush1.bf16.msra.mxu0 %v4785
        %6945 = vmatprep.subr.bf16.mxu0 %v4794
        %6946 = vmatpush1.bf16.msra.mxu0 %v4793
        %6947 = vmatprep.subr.bf16.mxu0 %v4802
        %6948 = vmatpush1.bf16.msra.mxu0 %v4801
        %6949 = vmatprep.subr.bf16.mxu0 %v4810
        %6950 = vmatpush1.bf16.msra.mxu0 %v4809
        %6951 = vmatprep.subr.bf16.mxu0 %v4818
        %6952 = vmatpush1.bf16.msra.mxu0 %v4817
        %6953 = vmatprep.subr.bf16.mxu0 %v4826
        %6954 = vmatpush1.bf16.msra.mxu0 %v4825
        %6955 = vmatprep.subr.bf16.mxu0 %v4834
        %6956 = vmatpush1.bf16.msra.mxu0 %v4833
        %6957 = vmatprep.subr.bf16.mxu0 %v4842
        %6958 = vmatpush1.bf16.msra.mxu0 %v4841
        %6959 = vmatprep.subr.bf16.mxu0 %v4850
        %6960 = vmatpush1.bf16.msra.mxu0 %v4849
        %6961 = vmatprep.mubr.bf16.mxu0 %v1329
        %6962 = vmatmul.mubr.bf16.gmra.mrb[0].mxu0 %v1315
        %v6963 = vpop.f32.mrb[0].mxu0
        %v6964 = vadd.f32 %v6923, %v6963
        %v6965 = vpop.f32.mrb[0].mxu0
        %v6966 = vadd.f32 %v6925, %v6965
        %v6967 = vpop.f32.mrb[0].mxu0
        %v6968 = vpop.f32.mrb[0].mxu0
        %6969 = vdwg.mxu0
        %6970 = vmatprep.subr.bf16.mxu0 %v4858
        %6971 = vmatpush1.bf16.msra.mxu0 %v4857
        %6972 = vmatprep.subr.bf16.mxu0 %v4866
        %6973 = vmatpush1.bf16.msra.mxu0 %v4865
        %6974 = vmatprep.subr.bf16.mxu0 %v4874
        %6975 = vmatpush1.bf16.msra.mxu0 %v4873
        %6976 = vmatprep.subr.bf16.mxu0 %v4882
        %6977 = vmatpush1.bf16.msra.mxu0 %v4881
        %6978 = vmatprep.subr.bf16.mxu0 %v4890
        %6979 = vmatpush1.bf16.msra.mxu0 %v4889
        %6980 = vmatprep.subr.bf16.mxu0 %v4898
        %6981 = vmatpush1.bf16.msra.mxu0 %v4897
        %6982 = vmatprep.subr.bf16.mxu0 %v4906
        %6983 = vmatpush1.bf16.msra.mxu0 %v4905
        %6984 = vmatprep.subr.bf16.mxu0 %v4914
        %6985 = vmatpush1.bf16.msra.mxu0 %v4913
        %6986 = vmatprep.subr.bf16.mxu0 %v4922
        %6987 = vmatpush1.bf16.msra.mxu0 %v4921
        %6988 = vmatprep.subr.bf16.mxu0 %v4930
        %6989 = vmatpush1.bf16.msra.mxu0 %v4929
        %6990 = vmatprep.subr.bf16.mxu0 %v4938
        %6991 = vmatpush1.bf16.msra.mxu0 %v4937
        %6992 = vmatprep.subr.bf16.mxu0 %v4946
        %6993 = vmatpush1.bf16.msra.mxu0 %v4945
        %6994 = vmatprep.subr.bf16.mxu0 %v4954
        %6995 = vmatpush1.bf16.msra.mxu0 %v4953
        %6996 = vmatprep.subr.bf16.mxu0 %v4962
        %6997 = vmatpush1.bf16.msra.mxu0 %v4961
        %6998 = vmatprep.subr.bf16.mxu0 %v4970
        %6999 = vmatpush1.bf16.msra.mxu0 %v4969
        %7000 = vmatprep.subr.bf16.mxu0 %v4978
        %7001 = vmatpush1.bf16.msra.mxu0 %v4977
        %7002 = vmatprep.mubr.bf16.mxu0 %v1333
        %7003 = vmatmul.mubr.bf16.gmra.mrb[0].mxu0 %v1331
        %v7004 = vpop.f32.mrb[0].mxu0
        %v7005 = vadd.f32 %v6964, %v7004
        %v7006 = vpop.f32.mrb[0].mxu0
        %v7007 = vadd.f32 %v6966, %v7006
        %v7008 = vpop.f32.mrb[0].mxu0
        %v7009 = vpop.f32.mrb[0].mxu0
        %7010 = vdwg.mxu0
        %7011 = vmatprep.subr.bf16.mxu0 %v4986
        %7012 = vmatpush1.bf16.msra.mxu0 %v4985
        %7013 = vmatprep.subr.bf16.mxu0 %v4994
        %7014 = vmatpush1.bf16.msra.mxu0 %v4993
        %7015 = vmatprep.subr.bf16.mxu0 %v5002
        %7016 = vmatpush1.bf16.msra.mxu0 %v5001
        %7017 = vmatprep.subr.bf16.mxu0 %v5010
        %7018 = vmatpush1.bf16.msra.mxu0 %v5009
        %7019 = vmatprep.subr.bf16.mxu0 %v5018
        %7020 = vmatpush1.bf16.msra.mxu0 %v5017
        %7021 = vmatprep.subr.bf16.mxu0 %v5026
        %7022 = vmatpush1.bf16.msra.mxu0 %v5025
        %7023 = vmatprep.subr.bf16.mxu0 %v5034
        %7024 = vmatpush1.bf16.msra.mxu0 %v5033
        %7025 = vmatprep.subr.bf16.mxu0 %v5042
        %7026 = vmatpush1.bf16.msra.mxu0 %v5041
        %7027 = vmatprep.subr.bf16.mxu0 %v5050
        %7028 = vmatpush1.bf16.msra.mxu0 %v5049
        %7029 = vmatprep.subr.bf16.mxu0 %v5058
        %7030 = vmatpush1.bf16.msra.mxu0 %v5057
        %7031 = vmatprep.subr.bf16.mxu0 %v5066
        %7032 = vmatpush1.bf16.msra.mxu0 %v5065
        %7033 = vmatprep.subr.bf16.mxu0 %v5074
        %7034 = vmatpush1.bf16.msra.mxu0 %v5073
        %7035 = vmatprep.subr.bf16.mxu0 %v5082
        %7036 = vmatpush1.bf16.msra.mxu0 %v5081
        %7037 = vmatprep.subr.bf16.mxu0 %v5090
        %7038 = vmatpush1.bf16.msra.mxu0 %v5089
        %7039 = vmatprep.subr.bf16.mxu0 %v5098
        %7040 = vmatpush1.bf16.msra.mxu0 %v5097
        %7041 = vmatprep.subr.bf16.mxu0 %v5106
        %7042 = vmatpush1.bf16.msra.mxu0 %v5105
        %7043 = vmatprep.mubr.bf16.mxu0 %v1371
        %7044 = vmatmul.mubr.bf16.gmra.mrb[0].mxu0 %v1357
        %v7045 = vpop.f32.mrb[0].mxu0
        %v7046 = vadd.f32 %v7005, %v7045
        %v7047 = vpop.f32.mrb[0].mxu0
        %v7048 = vadd.f32 %v7007, %v7047
        %v7049 = vpop.f32.mrb[0].mxu0
        %v7050 = vpop.f32.mrb[0].mxu0
        %7051 = vdwg.mxu0
        %7052 = vmatprep.subr.bf16.mxu0 %v5114
        %7053 = vmatpush1.bf16.msra.mxu0 %v5113
        %7054 = vmatprep.subr.bf16.mxu0 %v5122
        %7055 = vmatpush1.bf16.msra.mxu0 %v5121
        %7056 = vmatprep.subr.bf16.mxu0 %v5130
        %7057 = vmatpush1.bf16.msra.mxu0 %v5129
        %7058 = vmatprep.subr.bf16.mxu0 %v5138
        %7059 = vmatpush1.bf16.msra.mxu0 %v5137
        %7060 = vmatprep.subr.bf16.mxu0 %v5146
        %7061 = vmatpush1.bf16.msra.mxu0 %v5145
        %7062 = vmatprep.subr.bf16.mxu0 %v5154
        %7063 = vmatpush1.bf16.msra.mxu0 %v5153
        %7064 = vmatprep.subr.bf16.mxu0 %v5162
        %7065 = vmatpush1.bf16.msra.mxu0 %v5161
        %7066 = vmatprep.subr.bf16.mxu0 %v5170
        %7067 = vmatpush1.bf16.msra.mxu0 %v5169
        %7068 = vmatprep.subr.bf16.mxu0 %v5178
        %7069 = vmatpush1.bf16.msra.mxu0 %v5177
        %7070 = vmatprep.subr.bf16.mxu0 %v5186
        %7071 = vmatpush1.bf16.msra.mxu0 %v5185
        %7072 = vmatprep.subr.bf16.mxu0 %v5194
        %7073 = vmatpush1.bf16.msra.mxu0 %v5193
        %7074 = vmatprep.subr.bf16.mxu0 %v5202
        %7075 = vmatpush1.bf16.msra.mxu0 %v5201
        %7076 = vmatprep.subr.bf16.mxu0 %v5210
        %7077 = vmatpush1.bf16.msra.mxu0 %v5209
        %7078 = vmatprep.subr.bf16.mxu0 %v5218
        %7079 = vmatpush1.bf16.msra.mxu0 %v5217
        %7080 = vmatprep.subr.bf16.mxu0 %v5226
        %7081 = vmatpush1.bf16.msra.mxu0 %v5225
        %7082 = vmatprep.subr.bf16.mxu0 %v5234
        %7083 = vmatpush1.bf16.msra.mxu0 %v5233
        %7084 = vmatprep.mubr.bf16.mxu0 %v1381
        %7085 = vmatmul.mubr.bf16.gmra.mrb[0].mxu0 %v1379
        %v7086 = vpop.f32.mrb[0].mxu0
        %v7087 = vadd.f32 %v7046, %v7086
        %v7088 = vpop.f32.mrb[0].mxu0
        %v7089 = vadd.f32 %v7048, %v7088
        %v7090 = vpop.f32.mrb[0].mxu0
        %v7091 = vpop.f32.mrb[0].mxu0
        %7092 = vdwg.mxu0
        %7093 = vmatprep.subr.bf16.mxu0 %v5242
        %7094 = vmatpush1.bf16.msra.mxu0 %v5241
        %7095 = vmatprep.subr.bf16.mxu0 %v5250
        %7096 = vmatpush1.bf16.msra.mxu0 %v5249
        %7097 = vmatprep.subr.bf16.mxu0 %v5258
        %7098 = vmatpush1.bf16.msra.mxu0 %v5257
        %7099 = vmatprep.subr.bf16.mxu0 %v5266
        %7100 = vmatpush1.bf16.msra.mxu0 %v5265
        %7101 = vmatprep.subr.bf16.mxu0 %v5274
        %7102 = vmatpush1.bf16.msra.mxu0 %v5273
        %7103 = vmatprep.subr.bf16.mxu0 %v5282
        %7104 = vmatpush1.bf16.msra.mxu0 %v5281
        %7105 = vmatprep.subr.bf16.mxu0 %v5290
        %7106 = vmatpush1.bf16.msra.mxu0 %v5289
        %7107 = vmatprep.subr.bf16.mxu0 %v5298
        %7108 = vmatpush1.bf16.msra.mxu0 %v5297
        %7109 = vmatprep.subr.bf16.mxu0 %v5306
        %7110 = vmatpush1.bf16.msra.mxu0 %v5305
        %7111 = vmatprep.subr.bf16.mxu0 %v5314
        %7112 = vmatpush1.bf16.msra.mxu0 %v5313
        %7113 = vmatprep.subr.bf16.mxu0 %v5322
        %7114 = vmatpush1.bf16.msra.mxu0 %v5321
        %7115 = vmatprep.subr.bf16.mxu0 %v5330
        %7116 = vmatpush1.bf16.msra.mxu0 %v5329
        %7117 = vmatprep.subr.bf16.mxu0 %v5338
        %7118 = vmatpush1.bf16.msra.mxu0 %v5337
        %7119 = vmatprep.subr.bf16.mxu0 %v5346
        %7120 = vmatpush1.bf16.msra.mxu0 %v5345
        %7121 = vmatprep.subr.bf16.mxu0 %v5354
        %7122 = vmatpush1.bf16.msra.mxu0 %v5353
        %7123 = vmatprep.subr.bf16.mxu0 %v5362
        %7124 = vmatpush1.bf16.msra.mxu0 %v5361
        %7125 = vmatprep.mubr.bf16.mxu0 %v1378
        %7126 = vmatmul.mubr.bf16.gmra.mrb[0].mxu0 %v1364
        %v7127 = vpop.f32.mrb[0].mxu0
        %v7128 = vadd.f32 %v7087, %v7127
        %v7129 = vpop.f32.mrb[0].mxu0
        %v7130 = vadd.f32 %v7089, %v7129
        %v7131 = vpop.f32.mrb[0].mxu0
        %v7132 = vpop.f32.mrb[0].mxu0
        %7133 = vdwg.mxu0
        %7134 = vmatprep.subr.bf16.mxu0 %v5370
        %7135 = vmatpush1.bf16.msra.mxu0 %v5369
        %7136 = vmatprep.subr.bf16.mxu0 %v5378
        %7137 = vmatpush1.bf16.msra.mxu0 %v5377
        %7138 = vmatprep.subr.bf16.mxu0 %v5386
        %7139 = vmatpush1.bf16.msra.mxu0 %v5385
        %7140 = vmatprep.subr.bf16.mxu0 %v5394
        %7141 = vmatpush1.bf16.msra.mxu0 %v5393
        %7142 = vmatprep.subr.bf16.mxu0 %v5402
        %7143 = vmatpush1.bf16.msra.mxu0 %v5401
        %7144 = vmatprep.subr.bf16.mxu0 %v5410
        %7145 = vmatpush1.bf16.msra.mxu0 %v5409
        %7146 = vmatprep.subr.bf16.mxu0 %v5418
        %7147 = vmatpush1.bf16.msra.mxu0 %v5417
        %7148 = vmatprep.subr.bf16.mxu0 %v5426
        %7149 = vmatpush1.bf16.msra.mxu0 %v5425
        %7150 = vmatprep.subr.bf16.mxu0 %v5434
        %7151 = vmatpush1.bf16.msra.mxu0 %v5433
        %7152 = vmatprep.subr.bf16.mxu0 %v5442
        %7153 = vmatpush1.bf16.msra.mxu0 %v5441
        %7154 = vmatprep.subr.bf16.mxu0 %v5450
        %7155 = vmatpush1.bf16.msra.mxu0 %v5449
        %7156 = vmatprep.subr.bf16.mxu0 %v5458
        %7157 = vmatpush1.bf16.msra.mxu0 %v5457
        %7158 = vmatprep.subr.bf16.mxu0 %v5466
        %7159 = vmatpush1.bf16.msra.mxu0 %v5465
        %7160 = vmatprep.subr.bf16.mxu0 %v5474
        %7161 = vmatpush1.bf16.msra.mxu0 %v5473
        %7162 = vmatprep.subr.bf16.mxu0 %v5482
        %7163 = vmatpush1.bf16.msra.mxu0 %v5481
        %7164 = vmatprep.subr.bf16.mxu0 %v5490
        %7165 = vmatpush1.bf16.msra.mxu0 %v5489
        %7166 = vmatprep.mubr.bf16.mxu0 %v1382
        %7167 = vmatmul.mubr.bf16.gmra.mrb[0].mxu0 %v1380
        %v7168 = vpop.f32.mrb[0].mxu0
        %v7169 = vadd.f32 %v7128, %v7168
        %v7170 = vpop.f32.mrb[0].mxu0
        %v7171 = vadd.f32 %v7130, %v7170
        %v7172 = vpop.f32.mrb[0].mxu0
        %v7173 = vpop.f32.mrb[0].mxu0
        %7174 = vdwg.mxu0
        %7175 = vmatprep.subr.bf16.mxu0 %v4476
        %7176 = vmatpush1.bf16.msra.mxu0 %v4475
        %7177 = vmatprep.subr.bf16.mxu0 %v4484
        %7178 = vmatpush1.bf16.msra.mxu0 %v4483
        %7179 = vmatprep.subr.bf16.mxu0 %v4492
        %7180 = vmatpush1.bf16.msra.mxu0 %v4491
        %7181 = vmatprep.subr.bf16.mxu0 %v4500
        %7182 = vmatpush1.bf16.msra.mxu0 %v4499
        %7183 = vmatprep.subr.bf16.mxu0 %v4508
        %7184 = vmatpush1.bf16.msra.mxu0 %v4507
        %7185 = vmatprep.subr.bf16.mxu0 %v4516
        %7186 = vmatpush1.bf16.msra.mxu0 %v4515
        %7187 = vmatprep.subr.bf16.mxu0 %v4524
        %7188 = vmatpush1.bf16.msra.mxu0 %v4523
        %7189 = vmatprep.subr.bf16.mxu0 %v4532
        %7190 = vmatpush1.bf16.msra.mxu0 %v4531
        %7191 = vmatprep.subr.bf16.mxu0 %v4540
        %7192 = vmatpush1.bf16.msra.mxu0 %v4539
        %7193 = vmatprep.subr.bf16.mxu0 %v4548
        %7194 = vmatpush1.bf16.msra.mxu0 %v4547
        %7195 = vmatprep.subr.bf16.mxu0 %v4556
        %7196 = vmatpush1.bf16.msra.mxu0 %v4555
        %7197 = vmatprep.subr.bf16.mxu0 %v4564
        %7198 = vmatpush1.bf16.msra.mxu0 %v4563
        %7199 = vmatprep.subr.bf16.mxu0 %v4572
        %7200 = vmatpush1.bf16.msra.mxu0 %v4571
        %7201 = vmatprep.subr.bf16.mxu0 %v4580
        %7202 = vmatpush1.bf16.msra.mxu0 %v4579
        %7203 = vmatprep.subr.bf16.mxu0 %v4588
        %7204 = vmatpush1.bf16.msra.mxu0 %v4587
        %7205 = vmatprep.subr.bf16.mxu0 %v4596
        %7206 = vmatpush1.bf16.msra.mxu0 %v4595
        %7207 = vmatprep.mubr.bf16.mxu0 %v1322
        %7208 = vmatmul.mubr.bf16.gmra.mrb[0].mxu0 %v1308
        %v7209 = vpop.f32.mrb[0].mxu0
        %v7210 = vadd.f32 0.0, %v7209
        %v7211 = vpop.f32.mrb[0].mxu0
        %v7212 = vadd.f32 0.0, %v7211
        %v7213 = vpop.f32.mrb[0].mxu0
        %v7214 = vpop.f32.mrb[0].mxu0
        %7215 = vdwg.mxu0
        %7216 = vmatprep.subr.bf16.mxu0 %v4604
        %7217 = vmatpush1.bf16.msra.mxu0 %v4603
        %7218 = vmatprep.subr.bf16.mxu0 %v4612
        %7219 = vmatpush1.bf16.msra.mxu0 %v4611
        %7220 = vmatprep.subr.bf16.mxu0 %v4620
        %7221 = vmatpush1.bf16.msra.mxu0 %v4619
        %7222 = vmatprep.subr.bf16.mxu0 %v4628
        %7223 = vmatpush1.bf16.msra.mxu0 %v4627
        %7224 = vmatprep.subr.bf16.mxu0 %v4636
        %7225 = vmatpush1.bf16.msra.mxu0 %v4635
        %7226 = vmatprep.subr.bf16.mxu0 %v4644
        %7227 = vmatpush1.bf16.msra.mxu0 %v4643
        %7228 = vmatprep.subr.bf16.mxu0 %v4652
        %7229 = vmatpush1.bf16.msra.mxu0 %v4651
        %7230 = vmatprep.subr.bf16.mxu0 %v4660
        %7231 = vmatpush1.bf16.msra.mxu0 %v4659
        %7232 = vmatprep.subr.bf16.mxu0 %v4668
        %7233 = vmatpush1.bf16.msra.mxu0 %v4667
        %7234 = vmatprep.subr.bf16.mxu0 %v4676
        %7235 = vmatpush1.bf16.msra.mxu0 %v4675
        %7236 = vmatprep.subr.bf16.mxu0 %v4684
        %7237 = vmatpush1.bf16.msra.mxu0 %v4683
        %7238 = vmatprep.subr.bf16.mxu0 %v4692
        %7239 = vmatpush1.bf16.msra.mxu0 %v4691
        %7240 = vmatprep.subr.bf16.mxu0 %v4700
        %7241 = vmatpush1.bf16.msra.mxu0 %v4699
        %7242 = vmatprep.subr.bf16.mxu0 %v4708
        %7243 = vmatpush1.bf16.msra.mxu0 %v4707
        %7244 = vmatprep.subr.bf16.mxu0 %v4716
        %7245 = vmatpush1.bf16.msra.mxu0 %v4715
        %7246 = vmatprep.subr.bf16.mxu0 %v4724
        %7247 = vmatpush1.bf16.msra.mxu0 %v4723
        %7248 = vmatprep.mubr.bf16.mxu0 %v1332
        %7249 = vmatmul.mubr.bf16.gmra.mrb[0].mxu0 %v1330
        %v7250 = vpop.f32.mrb[0].mxu0
        %v7251 = vadd.f32 %v7210, %v7250
        %v7252 = vpop.f32.mrb[0].mxu0
        %v7253 = vadd.f32 %v7212, %v7252
        %v7254 = vpop.f32.mrb[0].mxu0
        %v7255 = vpop.f32.mrb[0].mxu0
        %7256 = vdwg.mxu0
        %7257 = vmatprep.subr.bf16.mxu0 %v4732
        %7258 = vmatpush1.bf16.msra.mxu0 %v4731
        %7259 = vmatprep.subr.bf16.mxu0 %v4740
        %7260 = vmatpush1.bf16.msra.mxu0 %v4739
        %7261 = vmatprep.subr.bf16.mxu0 %v4748
        %7262 = vmatpush1.bf16.msra.mxu0 %v4747
        %7263 = vmatprep.subr.bf16.mxu0 %v4756
        %7264 = vmatpush1.bf16.msra.mxu0 %v4755
        %7265 = vmatprep.subr.bf16.mxu0 %v4764
        %7266 = vmatpush1.bf16.msra.mxu0 %v4763
        %7267 = vmatprep.subr.bf16.mxu0 %v4772
        %7268 = vmatpush1.bf16.msra.mxu0 %v4771
        %7269 = vmatprep.subr.bf16.mxu0 %v4780
        %7270 = vmatpush1.bf16.msra.mxu0 %v4779
        %7271 = vmatprep.subr.bf16.mxu0 %v4788
        %7272 = vmatpush1.bf16.msra.mxu0 %v4787
        %7273 = vmatprep.subr.bf16.mxu0 %v4796
        %7274 = vmatpush1.bf16.msra.mxu0 %v4795
        %7275 = vmatprep.subr.bf16.mxu0 %v4804
        %7276 = vmatpush1.bf16.msra.mxu0 %v4803
        %7277 = vmatprep.subr.bf16.mxu0 %v4812
        %7278 = vmatpush1.bf16.msra.mxu0 %v4811
        %7279 = vmatprep.subr.bf16.mxu0 %v4820
        %7280 = vmatpush1.bf16.msra.mxu0 %v4819
        %7281 = vmatprep.subr.bf16.mxu0 %v4828
        %7282 = vmatpush1.bf16.msra.mxu0 %v4827
        %7283 = vmatprep.subr.bf16.mxu0 %v4836
        %7284 = vmatpush1.bf16.msra.mxu0 %v4835
        %7285 = vmatprep.subr.bf16.mxu0 %v4844
        %7286 = vmatpush1.bf16.msra.mxu0 %v4843
        %7287 = vmatprep.subr.bf16.mxu0 %v4852
        %7288 = vmatpush1.bf16.msra.mxu0 %v4851
        %7289 = vmatprep.mubr.bf16.mxu0 %v1329
        %7290 = vmatmul.mubr.bf16.gmra.mrb[0].mxu0 %v1315
        %v7291 = vpop.f32.mrb[0].mxu0
        %v7292 = vadd.f32 %v7251, %v7291
        %v7293 = vpop.f32.mrb[0].mxu0
        %v7294 = vadd.f32 %v7253, %v7293
        %v7295 = vpop.f32.mrb[0].mxu0
        %v7296 = vpop.f32.mrb[0].mxu0
        %7297 = vdwg.mxu0
        %7298 = vmatprep.subr.bf16.mxu0 %v4860
        %7299 = vmatpush1.bf16.msra.mxu0 %v4859
        %7300 = vmatprep.subr.bf16.mxu0 %v4868
        %7301 = vmatpush1.bf16.msra.mxu0 %v4867
        %7302 = vmatprep.subr.bf16.mxu0 %v4876
        %7303 = vmatpush1.bf16.msra.mxu0 %v4875
        %7304 = vmatprep.subr.bf16.mxu0 %v4884
        %7305 = vmatpush1.bf16.msra.mxu0 %v4883
        %7306 = vmatprep.subr.bf16.mxu0 %v4892
        %7307 = vmatpush1.bf16.msra.mxu0 %v4891
        %7308 = vmatprep.subr.bf16.mxu0 %v4900
        %7309 = vmatpush1.bf16.msra.mxu0 %v4899
        %7310 = vmatprep.subr.bf16.mxu0 %v4908
        %7311 = vmatpush1.bf16.msra.mxu0 %v4907
        %7312 = vmatprep.subr.bf16.mxu0 %v4916
        %7313 = vmatpush1.bf16.msra.mxu0 %v4915
        %7314 = vmatprep.subr.bf16.mxu0 %v4924
        %7315 = vmatpush1.bf16.msra.mxu0 %v4923
        %7316 = vmatprep.subr.bf16.mxu0 %v4932
        %7317 = vmatpush1.bf16.msra.mxu0 %v4931
        %7318 = vmatprep.subr.bf16.mxu0 %v4940
        %7319 = vmatpush1.bf16.msra.mxu0 %v4939
        %7320 = vmatprep.subr.bf16.mxu0 %v4948
        %7321 = vmatpush1.bf16.msra.mxu0 %v4947
        %7322 = vmatprep.subr.bf16.mxu0 %v4956
        %7323 = vmatpush1.bf16.msra.mxu0 %v4955
        %7324 = vmatprep.subr.bf16.mxu0 %v4964
        %7325 = vmatpush1.bf16.msra.mxu0 %v4963
        %7326 = vmatprep.subr.bf16.mxu0 %v4972
        %7327 = vmatpush1.bf16.msra.mxu0 %v4971
        %7328 = vmatprep.subr.bf16.mxu0 %v4980
        %7329 = vmatpush1.bf16.msra.mxu0 %v4979
        %7330 = vmatprep.mubr.bf16.mxu0 %v1333
        %7331 = vmatmul.mubr.bf16.gmra.mrb[0].mxu0 %v1331
        %v7332 = vpop.f32.mrb[0].mxu0
        %v7333 = vadd.f32 %v7292, %v7332
        %v7334 = vpop.f32.mrb[0].mxu0
        %v7335 = vadd.f32 %v7294, %v7334
        %v7336 = vpop.f32.mrb[0].mxu0
        %v7337 = vpop.f32.mrb[0].mxu0
        %7338 = vdwg.mxu0
        %7339 = vmatprep.subr.bf16.mxu0 %v4988
        %7340 = vmatpush1.bf16.msra.mxu0 %v4987
        %7341 = vmatprep.subr.bf16.mxu0 %v4996
        %7342 = vmatpush1.bf16.msra.mxu0 %v4995
        %7343 = vmatprep.subr.bf16.mxu0 %v5004
        %7344 = vmatpush1.bf16.msra.mxu0 %v5003
        %7345 = vmatprep.subr.bf16.mxu0 %v5012
        %7346 = vmatpush1.bf16.msra.mxu0 %v5011
        %7347 = vmatprep.subr.bf16.mxu0 %v5020
        %7348 = vmatpush1.bf16.msra.mxu0 %v5019
        %7349 = vmatprep.subr.bf16.mxu0 %v5028
        %7350 = vmatpush1.bf16.msra.mxu0 %v5027
        %7351 = vmatprep.subr.bf16.mxu0 %v5036
        %7352 = vmatpush1.bf16.msra.mxu0 %v5035
        %7353 = vmatprep.subr.bf16.mxu0 %v5044
        %7354 = vmatpush1.bf16.msra.mxu0 %v5043
        %7355 = vmatprep.subr.bf16.mxu0 %v5052
        %7356 = vmatpush1.bf16.msra.mxu0 %v5051
        %7357 = vmatprep.subr.bf16.mxu0 %v5060
        %7358 = vmatpush1.bf16.msra.mxu0 %v5059
        %7359 = vmatprep.subr.bf16.mxu0 %v5068
        %7360 = vmatpush1.bf16.msra.mxu0 %v5067
        %7361 = vmatprep.subr.bf16.mxu0 %v5076
        %7362 = vmatpush1.bf16.msra.mxu0 %v5075
        %7363 = vmatprep.subr.bf16.mxu0 %v5084
        %7364 = vmatpush1.bf16.msra.mxu0 %v5083
        %7365 = vmatprep.subr.bf16.mxu0 %v5092
        %7366 = vmatpush1.bf16.msra.mxu0 %v5091
        %7367 = vmatprep.subr.bf16.mxu0 %v5100
        %7368 = vmatpush1.bf16.msra.mxu0 %v5099
        %7369 = vmatprep.subr.bf16.mxu0 %v5108
        %7370 = vmatpush1.bf16.msra.mxu0 %v5107
        %7371 = vmatprep.mubr.bf16.mxu0 %v1371
        %7372 = vmatmul.mubr.bf16.gmra.mrb[0].mxu0 %v1357
        %v7373 = vpop.f32.mrb[0].mxu0
        %v7374 = vadd.f32 %v7333, %v7373
        %v7375 = vpop.f32.mrb[0].mxu0
        %v7376 = vadd.f32 %v7335, %v7375
        %v7377 = vpop.f32.mrb[0].mxu0
        %v7378 = vpop.f32.mrb[0].mxu0
        %7379 = vdwg.mxu0
        %7380 = vmatprep.subr.bf16.mxu0 %v5116
        %7381 = vmatpush1.bf16.msra.mxu0 %v5115
        %7382 = vmatprep.subr.bf16.mxu0 %v5124
        %7383 = vmatpush1.bf16.msra.mxu0 %v5123
        %7384 = vmatprep.subr.bf16.mxu0 %v5132
        %7385 = vmatpush1.bf16.msra.mxu0 %v5131
        %7386 = vmatprep.subr.bf16.mxu0 %v5140
        %7387 = vmatpush1.bf16.msra.mxu0 %v5139
        %7388 = vmatprep.subr.bf16.mxu0 %v5148
        %7389 = vmatpush1.bf16.msra.mxu0 %v5147
        %7390 = vmatprep.subr.bf16.mxu0 %v5156
        %7391 = vmatpush1.bf16.msra.mxu0 %v5155
        %7392 = vmatprep.subr.bf16.mxu0 %v5164
        %7393 = vmatpush1.bf16.msra.mxu0 %v5163
        %7394 = vmatprep.subr.bf16.mxu0 %v5172
        %7395 = vmatpush1.bf16.msra.mxu0 %v5171
        %7396 = vmatprep.subr.bf16.mxu0 %v5180
        %7397 = vmatpush1.bf16.msra.mxu0 %v5179
        %7398 = vmatprep.subr.bf16.mxu0 %v5188
        %7399 = vmatpush1.bf16.msra.mxu0 %v5187
        %7400 = vmatprep.subr.bf16.mxu0 %v5196
        %7401 = vmatpush1.bf16.msra.mxu0 %v5195
        %7402 = vmatprep.subr.bf16.mxu0 %v5204
        %7403 = vmatpush1.bf16.msra.mxu0 %v5203
        %7404 = vmatprep.subr.bf16.mxu0 %v5212
        %7405 = vmatpush1.bf16.msra.mxu0 %v5211
        %7406 = vmatprep.subr.bf16.mxu0 %v5220
        %7407 = vmatpush1.bf16.msra.mxu0 %v5219
        %7408 = vmatprep.subr.bf16.mxu0 %v5228
        %7409 = vmatpush1.bf16.msra.mxu0 %v5227
        %7410 = vmatprep.subr.bf16.mxu0 %v5236
        %7411 = vmatpush1.bf16.msra.mxu0 %v5235
        %7412 = vmatprep.mubr.bf16.mxu0 %v1381
        %7413 = vmatmul.mubr.bf16.gmra.mrb[0].mxu0 %v1379
        %v7414 = vpop.f32.mrb[0].mxu0
        %v7415 = vadd.f32 %v7374, %v7414
        %v7416 = vpop.f32.mrb[0].mxu0
        %v7417 = vadd.f32 %v7376, %v7416
        %v7418 = vpop.f32.mrb[0].mxu0
        %v7419 = vpop.f32.mrb[0].mxu0
        %7420 = vdwg.mxu0
        %7421 = vmatprep.subr.bf16.mxu0 %v5244
        %7422 = vmatpush1.bf16.msra.mxu0 %v5243
        %7423 = vmatprep.subr.bf16.mxu0 %v5252
        %7424 = vmatpush1.bf16.msra.mxu0 %v5251
        %7425 = vmatprep.subr.bf16.mxu0 %v5260
        %7426 = vmatpush1.bf16.msra.mxu0 %v5259
        %7427 = vmatprep.subr.bf16.mxu0 %v5268
        %7428 = vmatpush1.bf16.msra.mxu0 %v5267
        %7429 = vmatprep.subr.bf16.mxu0 %v5276
        %7430 = vmatpush1.bf16.msra.mxu0 %v5275
        %7431 = vmatprep.subr.bf16.mxu0 %v5284
        %7432 = vmatpush1.bf16.msra.mxu0 %v5283
        %7433 = vmatprep.subr.bf16.mxu0 %v5292
        %7434 = vmatpush1.bf16.msra.mxu0 %v5291
        %7435 = vmatprep.subr.bf16.mxu0 %v5300
        %7436 = vmatpush1.bf16.msra.mxu0 %v5299
        %7437 = vmatprep.subr.bf16.mxu0 %v5308
        %7438 = vmatpush1.bf16.msra.mxu0 %v5307
        %7439 = vmatprep.subr.bf16.mxu0 %v5316
        %7440 = vmatpush1.bf16.msra.mxu0 %v5315
        %7441 = vmatprep.subr.bf16.mxu0 %v5324
        %7442 = vmatpush1.bf16.msra.mxu0 %v5323
        %7443 = vmatprep.subr.bf16.mxu0 %v5332
        %7444 = vmatpush1.bf16.msra.mxu0 %v5331
        %7445 = vmatprep.subr.bf16.mxu0 %v5340
        %7446 = vmatpush1.bf16.msra.mxu0 %v5339
        %7447 = vmatprep.subr.bf16.mxu0 %v5348
        %7448 = vmatpush1.bf16.msra.mxu0 %v5347
        %7449 = vmatprep.subr.bf16.mxu0 %v5356
        %7450 = vmatpush1.bf16.msra.mxu0 %v5355
        %7451 = vmatprep.subr.bf16.mxu0 %v5364
        %7452 = vmatpush1.bf16.msra.mxu0 %v5363
        %7453 = vmatprep.mubr.bf16.mxu0 %v1378
        %7454 = vmatmul.mubr.bf16.gmra.mrb[0].mxu0 %v1364
        %v7455 = vpop.f32.mrb[0].mxu0
        %v7456 = vadd.f32 %v7415, %v7455
        %v7457 = vpop.f32.mrb[0].mxu0
        %v7458 = vadd.f32 %v7417, %v7457
        %v7459 = vpop.f32.mrb[0].mxu0
        %v7460 = vpop.f32.mrb[0].mxu0
        %7461 = vdwg.mxu0
        %7462 = vmatprep.subr.bf16.mxu0 %v5372
        %7463 = vmatpush1.bf16.msra.mxu0 %v5371
        %7464 = vmatprep.subr.bf16.mxu0 %v5380
        %7465 = vmatpush1.bf16.msra.mxu0 %v5379
        %7466 = vmatprep.subr.bf16.mxu0 %v5388
        %7467 = vmatpush1.bf16.msra.mxu0 %v5387
        %7468 = vmatprep.subr.bf16.mxu0 %v5396
        %7469 = vmatpush1.bf16.msra.mxu0 %v5395
        %7470 = vmatprep.subr.bf16.mxu0 %v5404
        %7471 = vmatpush1.bf16.msra.mxu0 %v5403
        %7472 = vmatprep.subr.bf16.mxu0 %v5412
        %7473 = vmatpush1.bf16.msra.mxu0 %v5411
        %7474 = vmatprep.subr.bf16.mxu0 %v5420
        %7475 = vmatpush1.bf16.msra.mxu0 %v5419
        %7476 = vmatprep.subr.bf16.mxu0 %v5428
        %7477 = vmatpush1.bf16.msra.mxu0 %v5427
        %7478 = vmatprep.subr.bf16.mxu0 %v5436
        %7479 = vmatpush1.bf16.msra.mxu0 %v5435
        %7480 = vmatprep.subr.bf16.mxu0 %v5444
        %7481 = vmatpush1.bf16.msra.mxu0 %v5443
        %7482 = vmatprep.subr.bf16.mxu0 %v5452
        %7483 = vmatpush1.bf16.msra.mxu0 %v5451
        %7484 = vmatprep.subr.bf16.mxu0 %v5460
        %7485 = vmatpush1.bf16.msra.mxu0 %v5459
        %7486 = vmatprep.subr.bf16.mxu0 %v5468
        %7487 = vmatpush1.bf16.msra.mxu0 %v5467
        %7488 = vmatprep.subr.bf16.mxu0 %v5476
        %7489 = vmatpush1.bf16.msra.mxu0 %v5475
        %7490 = vmatprep.subr.bf16.mxu0 %v5484
        %7491 = vmatpush1.bf16.msra.mxu0 %v5483
        %7492 = vmatprep.subr.bf16.mxu0 %v5492
        %7493 = vmatpush1.bf16.msra.mxu0 %v5491
        %7494 = vmatprep.mubr.bf16.mxu0 %v1382
        %7495 = vmatmul.mubr.bf16.gmra.mrb[0].mxu0 %v1380
        %v7496 = vpop.f32.mrb[0].mxu0
        %v7497 = vadd.f32 %v7456, %v7496
        %v7498 = vpop.f32.mrb[0].mxu0
        %v7499 = vadd.f32 %v7458, %v7498
        %v7500 = vpop.f32.mrb[0].mxu0
        %v7501 = vpop.f32.mrb[0].mxu0
        %7502 = vdwg.mxu0
        %7503 = vmatprep.subr.bf16.mxu0 %v4478
        %7504 = vmatpush1.bf16.msra.mxu0 %v4477
        %7505 = vmatprep.subr.bf16.mxu0 %v4486
        %7506 = vmatpush1.bf16.msra.mxu0 %v4485
        %7507 = vmatprep.subr.bf16.mxu0 %v4494
        %7508 = vmatpush1.bf16.msra.mxu0 %v4493
        %7509 = vmatprep.subr.bf16.mxu0 %v4502
        %7510 = vmatpush1.bf16.msra.mxu0 %v4501
        %7511 = vmatprep.subr.bf16.mxu0 %v4510
        %7512 = vmatpush1.bf16.msra.mxu0 %v4509
        %7513 = vmatprep.subr.bf16.mxu0 %v4518
        %7514 = vmatpush1.bf16.msra.mxu0 %v4517
        %7515 = vmatprep.subr.bf16.mxu0 %v4526
        %7516 = vmatpush1.bf16.msra.mxu0 %v4525
        %7517 = vmatprep.subr.bf16.mxu0 %v4534
        %7518 = vmatpush1.bf16.msra.mxu0 %v4533
        %7519 = vmatprep.subr.bf16.mxu0 %v4542
        %7520 = vmatpush1.bf16.msra.mxu0 %v4541
        %7521 = vmatprep.subr.bf16.mxu0 %v4550
        %7522 = vmatpush1.bf16.msra.mxu0 %v4549
        %7523 = vmatprep.subr.bf16.mxu0 %v4558
        %7524 = vmatpush1.bf16.msra.mxu0 %v4557
        %7525 = vmatprep.subr.bf16.mxu0 %v4566
        %7526 = vmatpush1.bf16.msra.mxu0 %v4565
        %7527 = vmatprep.subr.bf16.mxu0 %v4574
        %7528 = vmatpush1.bf16.msra.mxu0 %v4573
        %7529 = vmatprep.subr.bf16.mxu0 %v4582
        %7530 = vmatpush1.bf16.msra.mxu0 %v4581
        %7531 = vmatprep.subr.bf16.mxu0 %v4590
        %7532 = vmatpush1.bf16.msra.mxu0 %v4589
        %7533 = vmatprep.subr.bf16.mxu0 %v4598
        %7534 = vmatpush1.bf16.msra.mxu0 %v4597
        %7535 = vmatprep.mubr.bf16.mxu0 %v1322
        %7536 = vmatmul.mubr.bf16.gmra.mrb[0].mxu0 %v1308
        %v7537 = vpop.f32.mrb[0].mxu0
        %v7538 = vadd.f32 0.0, %v7537
        %v7539 = vpop.f32.mrb[0].mxu0
        %v7540 = vadd.f32 0.0, %v7539
        %v7541 = vpop.f32.mrb[0].mxu0
        %v7542 = vpop.f32.mrb[0].mxu0
        %7543 = vdwg.mxu0
        %7544 = vmatprep.subr.bf16.mxu0 %v4606
        %7545 = vmatpush1.bf16.msra.mxu0 %v4605
        %7546 = vmatprep.subr.bf16.mxu0 %v4614
        %7547 = vmatpush1.bf16.msra.mxu0 %v4613
        %7548 = vmatprep.subr.bf16.mxu0 %v4622
        %7549 = vmatpush1.bf16.msra.mxu0 %v4621
        %7550 = vmatprep.subr.bf16.mxu0 %v4630
        %7551 = vmatpush1.bf16.msra.mxu0 %v4629
        %7552 = vmatprep.subr.bf16.mxu0 %v4638
        %7553 = vmatpush1.bf16.msra.mxu0 %v4637
        %7554 = vmatprep.subr.bf16.mxu0 %v4646
        %7555 = vmatpush1.bf16.msra.mxu0 %v4645
        %7556 = vmatprep.subr.bf16.mxu0 %v4654
        %7557 = vmatpush1.bf16.msra.mxu0 %v4653
        %7558 = vmatprep.subr.bf16.mxu0 %v4662
        %7559 = vmatpush1.bf16.msra.mxu0 %v4661
        %7560 = vmatprep.subr.bf16.mxu0 %v4670
        %7561 = vmatpush1.bf16.msra.mxu0 %v4669
        %7562 = vmatprep.subr.bf16.mxu0 %v4678
        %7563 = vmatpush1.bf16.msra.mxu0 %v4677
        %7564 = vmatprep.subr.bf16.mxu0 %v4686
        %7565 = vmatpush1.bf16.msra.mxu0 %v4685
        %7566 = vmatprep.subr.bf16.mxu0 %v4694
        %7567 = vmatpush1.bf16.msra.mxu0 %v4693
        %7568 = vmatprep.subr.bf16.mxu0 %v4702
        %7569 = vmatpush1.bf16.msra.mxu0 %v4701
        %7570 = vmatprep.subr.bf16.mxu0 %v4710
        %7571 = vmatpush1.bf16.msra.mxu0 %v4709
        %7572 = vmatprep.subr.bf16.mxu0 %v4718
        %7573 = vmatpush1.bf16.msra.mxu0 %v4717
        %7574 = vmatprep.subr.bf16.mxu0 %v4726
        %7575 = vmatpush1.bf16.msra.mxu0 %v4725
        %7576 = vmatprep.mubr.bf16.mxu0 %v1332
        %7577 = vmatmul.mubr.bf16.gmra.mrb[0].mxu0 %v1330
        %v7578 = vpop.f32.mrb[0].mxu0
        %v7579 = vadd.f32 %v7538, %v7578
        %v7580 = vpop.f32.mrb[0].mxu0
        %v7581 = vadd.f32 %v7540, %v7580
        %v7582 = vpop.f32.mrb[0].mxu0
        %v7583 = vpop.f32.mrb[0].mxu0
        %7584 = vdwg.mxu0
        %7585 = vmatprep.subr.bf16.mxu0 %v4734
        %7586 = vmatpush1.bf16.msra.mxu0 %v4733
        %7587 = vmatprep.subr.bf16.mxu0 %v4742
        %7588 = vmatpush1.bf16.msra.mxu0 %v4741
        %7589 = vmatprep.subr.bf16.mxu0 %v4750
        %7590 = vmatpush1.bf16.msra.mxu0 %v4749
        %7591 = vmatprep.subr.bf16.mxu0 %v4758
        %7592 = vmatpush1.bf16.msra.mxu0 %v4757
        %7593 = vmatprep.subr.bf16.mxu0 %v4766
        %7594 = vmatpush1.bf16.msra.mxu0 %v4765
        %7595 = vmatprep.subr.bf16.mxu0 %v4774
        %7596 = vmatpush1.bf16.msra.mxu0 %v4773
        %7597 = vmatprep.subr.bf16.mxu0 %v4782
        %7598 = vmatpush1.bf16.msra.mxu0 %v4781
        %7599 = vmatprep.subr.bf16.mxu0 %v4790
        %7600 = vmatpush1.bf16.msra.mxu0 %v4789
        %7601 = vmatprep.subr.bf16.mxu0 %v4798
        %7602 = vmatpush1.bf16.msra.mxu0 %v4797
        %7603 = vmatprep.subr.bf16.mxu0 %v4806
        %7604 = vmatpush1.bf16.msra.mxu0 %v4805
        %7605 = vmatprep.subr.bf16.mxu0 %v4814
        %7606 = vmatpush1.bf16.msra.mxu0 %v4813
        %7607 = vmatprep.subr.bf16.mxu0 %v4822
        %7608 = vmatpush1.bf16.msra.mxu0 %v4821
        %7609 = vmatprep.subr.bf16.mxu0 %v4830
        %7610 = vmatpush1.bf16.msra.mxu0 %v4829
        %7611 = vmatprep.subr.bf16.mxu0 %v4838
        %7612 = vmatpush1.bf16.msra.mxu0 %v4837
        %7613 = vmatprep.subr.bf16.mxu0 %v4846
        %7614 = vmatpush1.bf16.msra.mxu0 %v4845
        %7615 = vmatprep.subr.bf16.mxu0 %v4854
        %7616 = vmatpush1.bf16.msra.mxu0 %v4853
        %7617 = vmatprep.mubr.bf16.mxu0 %v1329
        %7618 = vmatmul.mubr.bf16.gmra.mrb[0].mxu0 %v1315
        %v7619 = vpop.f32.mrb[0].mxu0
        %v7620 = vadd.f32 %v7579, %v7619
        %v7621 = vpop.f32.mrb[0].mxu0
        %v7622 = vadd.f32 %v7581, %v7621
        %v7623 = vpop.f32.mrb[0].mxu0
        %v7624 = vpop.f32.mrb[0].mxu0
        %7625 = vdwg.mxu0
        %7626 = vmatprep.subr.bf16.mxu0 %v4862
        %7627 = vmatpush1.bf16.msra.mxu0 %v4861
        %7628 = vmatprep.subr.bf16.mxu0 %v4870
        %7629 = vmatpush1.bf16.msra.mxu0 %v4869
        %7630 = vmatprep.subr.bf16.mxu0 %v4878
        %7631 = vmatpush1.bf16.msra.mxu0 %v4877
        %7632 = vmatprep.subr.bf16.mxu0 %v4886
        %7633 = vmatpush1.bf16.msra.mxu0 %v4885
        %7634 = vmatprep.subr.bf16.mxu0 %v4894
        %7635 = vmatpush1.bf16.msra.mxu0 %v4893
        %7636 = vmatprep.subr.bf16.mxu0 %v4902
        %7637 = vmatpush1.bf16.msra.mxu0 %v4901
        %7638 = vmatprep.subr.bf16.mxu0 %v4910
        %7639 = vmatpush1.bf16.msra.mxu0 %v4909
        %7640 = vmatprep.subr.bf16.mxu0 %v4918
        %7641 = vmatpush1.bf16.msra.mxu0 %v4917
        %7642 = vmatprep.subr.bf16.mxu0 %v4926
        %7643 = vmatpush1.bf16.msra.mxu0 %v4925
        %7644 = vmatprep.subr.bf16.mxu0 %v4934
        %7645 = vmatpush1.bf16.msra.mxu0 %v4933
        %7646 = vmatprep.subr.bf16.mxu0 %v4942
        %7647 = vmatpush1.bf16.msra.mxu0 %v4941
        %7648 = vmatprep.subr.bf16.mxu0 %v4950
        %7649 = vmatpush1.bf16.msra.mxu0 %v4949
        %7650 = vmatprep.subr.bf16.mxu0 %v4958
        %7651 = vmatpush1.bf16.msra.mxu0 %v4957
        %7652 = vmatprep.subr.bf16.mxu0 %v4966
        %7653 = vmatpush1.bf16.msra.mxu0 %v4965
        %7654 = vmatprep.subr.bf16.mxu0 %v4974
        %7655 = vmatpush1.bf16.msra.mxu0 %v4973
        %7656 = vmatprep.subr.bf16.mxu0 %v4982
        %7657 = vmatpush1.bf16.msra.mxu0 %v4981
        %7658 = vmatprep.mubr.bf16.mxu0 %v1333
        %7659 = vmatmul.mubr.bf16.gmra.mrb[0].mxu0 %v1331
        %v7660 = vpop.f32.mrb[0].mxu0
        %v7661 = vadd.f32 %v7620, %v7660
        %v7662 = vpop.f32.mrb[0].mxu0
        %v7663 = vadd.f32 %v7622, %v7662
        %v7664 = vpop.f32.mrb[0].mxu0
        %v7665 = vpop.f32.mrb[0].mxu0
        %7666 = vdwg.mxu0
        %7667 = vmatprep.subr.bf16.mxu0 %v4990
        %7668 = vmatpush1.bf16.msra.mxu0 %v4989
        %7669 = vmatprep.subr.bf16.mxu0 %v4998
        %7670 = vmatpush1.bf16.msra.mxu0 %v4997
        %7671 = vmatprep.subr.bf16.mxu0 %v5006
        %7672 = vmatpush1.bf16.msra.mxu0 %v5005
        %7673 = vmatprep.subr.bf16.mxu0 %v5014
        %7674 = vmatpush1.bf16.msra.mxu0 %v5013
        %7675 = vmatprep.subr.bf16.mxu0 %v5022
        %7676 = vmatpush1.bf16.msra.mxu0 %v5021
        %7677 = vmatprep.subr.bf16.mxu0 %v5030
        %7678 = vmatpush1.bf16.msra.mxu0 %v5029
        %7679 = vmatprep.subr.bf16.mxu0 %v5038
        %7680 = vmatpush1.bf16.msra.mxu0 %v5037
        %7681 = vmatprep.subr.bf16.mxu0 %v5046
        %7682 = vmatpush1.bf16.msra.mxu0 %v5045
        %7683 = vmatprep.subr.bf16.mxu0 %v5054
        %7684 = vmatpush1.bf16.msra.mxu0 %v5053
        %7685 = vmatprep.subr.bf16.mxu0 %v5062
        %7686 = vmatpush1.bf16.msra.mxu0 %v5061
        %7687 = vmatprep.subr.bf16.mxu0 %v5070
        %7688 = vmatpush1.bf16.msra.mxu0 %v5069
        %7689 = vmatprep.subr.bf16.mxu0 %v5078
        %7690 = vmatpush1.bf16.msra.mxu0 %v5077
        %7691 = vmatprep.subr.bf16.mxu0 %v5086
        %7692 = vmatpush1.bf16.msra.mxu0 %v5085
        %7693 = vmatprep.subr.bf16.mxu0 %v5094
        %7694 = vmatpush1.bf16.msra.mxu0 %v5093
        %7695 = vmatprep.subr.bf16.mxu0 %v5102
        %7696 = vmatpush1.bf16.msra.mxu0 %v5101
        %7697 = vmatprep.subr.bf16.mxu0 %v5110
        %7698 = vmatpush1.bf16.msra.mxu0 %v5109
        %7699 = vmatprep.mubr.bf16.mxu0 %v1371
        %7700 = vmatmul.mubr.bf16.gmra.mrb[0].mxu0 %v1357
        %v7701 = vpop.f32.mrb[0].mxu0
        %v7702 = vadd.f32 %v7661, %v7701
        %v7703 = vpop.f32.mrb[0].mxu0
        %v7704 = vadd.f32 %v7663, %v7703
        %v7705 = vpop.f32.mrb[0].mxu0
        %v7706 = vpop.f32.mrb[0].mxu0
        %7707 = vdwg.mxu0
        %7708 = vmatprep.subr.bf16.mxu0 %v5118
        %7709 = vmatpush1.bf16.msra.mxu0 %v5117
        %7710 = vmatprep.subr.bf16.mxu0 %v5126
        %7711 = vmatpush1.bf16.msra.mxu0 %v5125
        %7712 = vmatprep.subr.bf16.mxu0 %v5134
        %7713 = vmatpush1.bf16.msra.mxu0 %v5133
        %7714 = vmatprep.subr.bf16.mxu0 %v5142
        %7715 = vmatpush1.bf16.msra.mxu0 %v5141
        %7716 = vmatprep.subr.bf16.mxu0 %v5150
        %7717 = vmatpush1.bf16.msra.mxu0 %v5149
        %7718 = vmatprep.subr.bf16.mxu0 %v5158
        %7719 = vmatpush1.bf16.msra.mxu0 %v5157
        %7720 = vmatprep.subr.bf16.mxu0 %v5166
        %7721 = vmatpush1.bf16.msra.mxu0 %v5165
        %7722 = vmatprep.subr.bf16.mxu0 %v5174
        %7723 = vmatpush1.bf16.msra.mxu0 %v5173
        %7724 = vmatprep.subr.bf16.mxu0 %v5182
        %7725 = vmatpush1.bf16.msra.mxu0 %v5181
        %7726 = vmatprep.subr.bf16.mxu0 %v5190
        %7727 = vmatpush1.bf16.msra.mxu0 %v5189
        %7728 = vmatprep.subr.bf16.mxu0 %v5198
        %7729 = vmatpush1.bf16.msra.mxu0 %v5197
        %7730 = vmatprep.subr.bf16.mxu0 %v5206
        %7731 = vmatpush1.bf16.msra.mxu0 %v5205
        %7732 = vmatprep.subr.bf16.mxu0 %v5214
        %7733 = vmatpush1.bf16.msra.mxu0 %v5213
        %7734 = vmatprep.subr.bf16.mxu0 %v5222
        %7735 = vmatpush1.bf16.msra.mxu0 %v5221
        %7736 = vmatprep.subr.bf16.mxu0 %v5230
        %7737 = vmatpush1.bf16.msra.mxu0 %v5229
        %7738 = vmatprep.subr.bf16.mxu0 %v5238
        %7739 = vmatpush1.bf16.msra.mxu0 %v5237
        %7740 = vmatprep.mubr.bf16.mxu0 %v1381
        %7741 = vmatmul.mubr.bf16.gmra.mrb[0].mxu0 %v1379
        %v7742 = vpop.f32.mrb[0].mxu0
        %v7743 = vadd.f32 %v7702, %v7742
        %v7744 = vpop.f32.mrb[0].mxu0
        %v7745 = vadd.f32 %v7704, %v7744
        %v7746 = vpop.f32.mrb[0].mxu0
        %v7747 = vpop.f32.mrb[0].mxu0
        %7748 = vdwg.mxu0
        %7749 = vmatprep.subr.bf16.mxu0 %v5246
        %7750 = vmatpush1.bf16.msra.mxu0 %v5245
        %7751 = vmatprep.subr.bf16.mxu0 %v5254
        %7752 = vmatpush1.bf16.msra.mxu0 %v5253
        %7753 = vmatprep.subr.bf16.mxu0 %v5262
        %7754 = vmatpush1.bf16.msra.mxu0 %v5261
        %7755 = vmatprep.subr.bf16.mxu0 %v5270
        %7756 = vmatpush1.bf16.msra.mxu0 %v5269
        %7757 = vmatprep.subr.bf16.mxu0 %v5278
        %7758 = vmatpush1.bf16.msra.mxu0 %v5277
        %7759 = vmatprep.subr.bf16.mxu0 %v5286
        %7760 = vmatpush1.bf16.msra.mxu0 %v5285
        %7761 = vmatprep.subr.bf16.mxu0 %v5294
        %7762 = vmatpush1.bf16.msra.mxu0 %v5293
        %7763 = vmatprep.subr.bf16.mxu0 %v5302
        %7764 = vmatpush1.bf16.msra.mxu0 %v5301
        %7765 = vmatprep.subr.bf16.mxu0 %v5310
        %7766 = vmatpush1.bf16.msra.mxu0 %v5309
        %7767 = vmatprep.subr.bf16.mxu0 %v5318
        %7768 = vmatpush1.bf16.msra.mxu0 %v5317
        %7769 = vmatprep.subr.bf16.mxu0 %v5326
        %7770 = vmatpush1.bf16.msra.mxu0 %v5325
        %7771 = vmatprep.subr.bf16.mxu0 %v5334
        %7772 = vmatpush1.bf16.msra.mxu0 %v5333
        %7773 = vmatprep.subr.bf16.mxu0 %v5342
        %7774 = vmatpush1.bf16.msra.mxu0 %v5341
        %7775 = vmatprep.subr.bf16.mxu0 %v5350
        %7776 = vmatpush1.bf16.msra.mxu0 %v5349
        %7777 = vmatprep.subr.bf16.mxu0 %v5358
        %7778 = vmatpush1.bf16.msra.mxu0 %v5357
        %7779 = vmatprep.subr.bf16.mxu0 %v5366
        %7780 = vmatpush1.bf16.msra.mxu0 %v5365
        %7781 = vmatprep.mubr.bf16.mxu0 %v1378
        %7782 = vmatmul.mubr.bf16.gmra.mrb[0].mxu0 %v1364
        %v7783 = vpop.f32.mrb[0].mxu0
        %v7784 = vadd.f32 %v7743, %v7783
        %v7785 = vpop.f32.mrb[0].mxu0
        %v7786 = vadd.f32 %v7745, %v7785
        %v7787 = vpop.f32.mrb[0].mxu0
        %v7788 = vpop.f32.mrb[0].mxu0
        %7789 = vdwg.mxu0
        %7790 = vmatprep.subr.bf16.mxu0 %v5374
        %7791 = vmatpush1.bf16.msra.mxu0 %v5373
        %7792 = vmatprep.subr.bf16.mxu0 %v5382
        %7793 = vmatpush1.bf16.msra.mxu0 %v5381
        %7794 = vmatprep.subr.bf16.mxu0 %v5390
        %7795 = vmatpush1.bf16.msra.mxu0 %v5389
        %7796 = vmatprep.subr.bf16.mxu0 %v5398
        %7797 = vmatpush1.bf16.msra.mxu0 %v5397
        %7798 = vmatprep.subr.bf16.mxu0 %v5406
        %7799 = vmatpush1.bf16.msra.mxu0 %v5405
        %7800 = vmatprep.subr.bf16.mxu0 %v5414
        %7801 = vmatpush1.bf16.msra.mxu0 %v5413
        %7802 = vmatprep.subr.bf16.mxu0 %v5422
        %7803 = vmatpush1.bf16.msra.mxu0 %v5421
        %7804 = vmatprep.subr.bf16.mxu0 %v5430
        %7805 = vmatpush1.bf16.msra.mxu0 %v5429
        %7806 = vmatprep.subr.bf16.mxu0 %v5438
        %7807 = vmatpush1.bf16.msra.mxu0 %v5437
        %7808 = vmatprep.subr.bf16.mxu0 %v5446
        %7809 = vmatpush1.bf16.msra.mxu0 %v5445
        %7810 = vmatprep.subr.bf16.mxu0 %v5454
        %7811 = vmatpush1.bf16.msra.mxu0 %v5453
        %7812 = vmatprep.subr.bf16.mxu0 %v5462
        %7813 = vmatpush1.bf16.msra.mxu0 %v5461
        %7814 = vmatprep.subr.bf16.mxu0 %v5470
        %7815 = vmatpush1.bf16.msra.mxu0 %v5469
        %7816 = vmatprep.subr.bf16.mxu0 %v5478
        %7817 = vmatpush1.bf16.msra.mxu0 %v5477
        %7818 = vmatprep.subr.bf16.mxu0 %v5486
        %7819 = vmatpush1.bf16.msra.mxu0 %v5485
        %7820 = vmatprep.subr.bf16.mxu0 %v5494
        %7821 = vmatpush1.bf16.msra.mxu0 %v5493
        %7822 = vmatprep.mubr.bf16.mxu0 %v1382
        %7823 = vmatmul.mubr.bf16.gmra.mrb[0].mxu0 %v1380
        %v7824 = vpop.f32.mrb[0].mxu0
        %v7825 = vadd.f32 %v7784, %v7824
        %v7826 = vpop.f32.mrb[0].mxu0
        %v7827 = vadd.f32 %v7786, %v7826
        %v7828 = vpop.f32.mrb[0].mxu0
        %v7829 = vpop.f32.mrb[0].mxu0
        %7830 = vdwg.mxu0
        %v7839 = vcombine.low %v6841, %v6843
        %v7840 = vcombine.low %v7169, %v7171
        %v7842 = vunpack.c.l.s4 1983009808
        %v7843 = vunpack.c.0.s8 %v7842
        %v7844 = vlaneseq
        %v7845 = vshrl.u32 %v7844, 7
        %v7846 = vsub.s32 %v7843, %v7845
        %v7847 = vrot.slane %v7839, %v7846
        %v7849 = vunpack.c.l.s4 1983009808
        %v7850 = vunpack.c.0.s8 %v7849
        %v7851 = vlaneseq
        %v7852 = vshrl.u32 %v7851, 7
        %v7853 = vsub.s32 %v7850, %v7852
        %v7854 = vrot.slane %v7840, %v7853
        %v7855 = vcombine.low %v7847, %v7854
        %v7856 = vcombine.low %v7497, %v7499
        %v7857 = vcombine.low %v7825, %v7827
        %v7859 = vunpack.c.l.s4 1983009808
        %v7860 = vunpack.c.0.s8 %v7859
        %v7861 = vlaneseq
        %v7862 = vshrl.u32 %v7861, 7
        %v7863 = vsub.s32 %v7860, %v7862
        %v7864 = vrot.slane %v7856, %v7863
        %v7866 = vunpack.c.l.s4 1983009808
        %v7867 = vunpack.c.0.s8 %v7866
        %v7868 = vlaneseq
        %v7869 = vshrl.u32 %v7868, 7
        %v7870 = vsub.s32 %v7867, %v7869
        %v7871 = vrot.slane %v7857, %v7870
        %v7872 = vcombine.low %v7864, %v7871
        %v7875 = vadd.f32 %v255, %v7855
        %v7876 = vadd.f32 %v256, %v7872
        %7877 = vst [vmem:[#allocation2] sm:$0xff] %v7875
        %7878 = vst [vmem:[#allocation2 + $0x8] sm:$0xff] %v7876
        %p7879 = scmp.eq.s32.totalorder %s23, 3
        // Predicated region
        $region45: #{vgg_forward.6} parent=31 // pred_check
          %p7880 = pneg %p7879
        $region46: #{vgg_forward.6} parent=31 // pred_check_branch
          %7882 = sbr.rel (%p7880) target = $region48
        $region47: #{vgg_forward.6} parent=31 // pred_region
          %v7883 = vld [vmem:[#allocation2] sm:$0xff]
          %v7884 = vld [vmem:[#allocation2 + $0x8] sm:$0xff]
          %v7885 = vld [vmem:[#allocation5] sm:$0xff]
          %v7887 = vlaneseq
          %v7888 = vshrl.u32 %v7887, 7
          %v7889 = vsub.s32 0, %v7888
          %v7890 = vrot.slane %v7885, %v7889
          %v7891 = vlaneseq
          %v7892 = vshrl.u32 %v7891, 7
          %v7893 = vsub.s32 1, %v7892
          %v7894 = vrot.slane %v7885, %v7893
          %v7895 = vlaneseq
          %v7896 = vshrl.u32 %v7895, 7
          %v7897 = vsub.s32 2, %v7896
          %v7898 = vrot.slane %v7885, %v7897
          %v7899 = vlaneseq
          %v7900 = vshrl.u32 %v7899, 7
          %v7901 = vsub.s32 3, %v7900
          %v7902 = vrot.slane %v7885, %v7901
          %v7903 = vlaneseq
          %v7904 = vshrl.u32 %v7903, 7
          %v7905 = vsub.s32 4, %v7904
          %v7906 = vrot.slane %v7885, %v7905
          %v7907 = vlaneseq
          %v7908 = vshrl.u32 %v7907, 7
          %v7909 = vsub.s32 5, %v7908
          %v7910 = vrot.slane %v7885, %v7909
          %v7911 = vlaneseq
          %v7912 = vshrl.u32 %v7911, 7
          %v7913 = vsub.s32 6, %v7912
          %v7914 = vrot.slane %v7885, %v7913
          %v7915 = vlaneseq
          %v7916 = vshrl.u32 %v7915, 7
          %v7917 = vsub.s32 7, %v7916
          %v7918 = vrot.slane %v7885, %v7917
          %v7919 = vcombine.low %v7890, %v7894
          %v7920 = vcombine.low %v7898, %v7902
          %v7922 = vunpack.c.l.s4 1983009808
          %v7923 = vunpack.c.0.s8 %v7922
          %v7924 = vlaneseq
          %v7925 = vshrl.u32 %v7924, 7
          %v7926 = vsub.s32 %v7923, %v7925
          %v7927 = vrot.slane %v7919, %v7926
          %v7929 = vunpack.c.l.s4 1983009808
          %v7930 = vunpack.c.0.s8 %v7929
          %v7931 = vlaneseq
          %v7932 = vshrl.u32 %v7931, 7
          %v7933 = vsub.s32 %v7930, %v7932
          %v7934 = vrot.slane %v7920, %v7933
          %v7935 = vcombine.low %v7927, %v7934
          %v7936 = vcombine.low %v7906, %v7910
          %v7937 = vcombine.low %v7914, %v7918
          %v7939 = vunpack.c.l.s4 1983009808
          %v7940 = vunpack.c.0.s8 %v7939
          %v7941 = vlaneseq
          %v7942 = vshrl.u32 %v7941, 7
          %v7943 = vsub.s32 %v7940, %v7942
          %v7944 = vrot.slane %v7936, %v7943
          %v7946 = vunpack.c.l.s4 1983009808
          %v7947 = vunpack.c.0.s8 %v7946
          %v7948 = vlaneseq
          %v7949 = vshrl.u32 %v7948, 7
          %v7950 = vsub.s32 %v7947, %v7949
          %v7951 = vrot.slane %v7937, %v7950
          %v7952 = vcombine.low %v7944, %v7951
          %v7955 = vadd.f32 %v7883, %v7935
          %v7956 = vadd.f32 %v7884, %v7952
          %v7957 = vmax.f32 %v7955, 0.0
          %v7958 = vmax.f32 %v7956, 0.0
          %v7961 = vcombine.high %v7957, %v7957
          %v7963 = vunpack.c.l.s4 1983009808
          %v7964 = vunpack.c.0.s8 %v7963
          %v7965 = vlaneseq
          %v7966 = vshrl.u32 %v7965, 7
          %v7967 = vsub.s32 %v7964, %v7966
          %v7968 = vrot.slane %v7957, %v7967
          %v7970 = vunpack.c.l.s4 1983009808
          %v7971 = vunpack.c.0.s8 %v7970
          %v7972 = vlaneseq
          %v7973 = vshrl.u32 %v7972, 7
          %v7974 = vsub.s32 %v7971, %v7973
          %v7975 = vrot.slane %v7961, %v7974
          %v7976 = vcombine.high %v7968, %v7968
          %v7977 = vcombine.high %v7975, %v7975
          %v7978 = vcombine.high %v7958, %v7958
          %v7980 = vunpack.c.l.s4 1983009808
          %v7981 = vunpack.c.0.s8 %v7980
          %v7982 = vlaneseq
          %v7983 = vshrl.u32 %v7982, 7
          %v7984 = vsub.s32 %v7981, %v7983
          %v7985 = vrot.slane %v7958, %v7984
          %v7987 = vunpack.c.l.s4 1983009808
          %v7988 = vunpack.c.0.s8 %v7987
          %v7989 = vlaneseq
          %v7990 = vshrl.u32 %v7989, 7
          %v7991 = vsub.s32 %v7988, %v7990
          %v7992 = vrot.slane %v7978, %v7991
          %v7993 = vcombine.high %v7985, %v7985
          %v7994 = vcombine.high %v7992, %v7992
          %v8003 = vpack.c.bf16 %v7968, %v7968
          %v8004 = vpack.c.bf16 %v7976, %v7976
          %v8005 = vpack.c.bf16 %v7975, %v7975
          %v8006 = vpack.c.bf16 %v7977, %v7977
          %v8007 = vpack.c.bf16 %v7985, %v7985
          %v8008 = vpack.c.bf16 %v7993, %v7993
          %v8009 = vpack.c.bf16 %v7992, %v7992
          %v8010 = vpack.c.bf16 %v7994, %v7994
          %v8019 = vcombine.low %v8003, %v8004
          %v8020 = vcombine.low %v8005, %v8006
          %v8021 = vcombine.low %v8007, %v8008
          %v8022 = vcombine.low %v8009, %v8010
          %v8024 = vunpack.c.l.s4 1966171168
          %v8025 = vunpack.c.0.s8 %v8024
          %v8026 = vlaneseq
          %v8027 = vshrl.u32 %v8026, 7
          %v8028 = vsub.s32 %v8025, %v8027
          %v8029 = vrot.slane %v8019, %v8028
          %v8031 = vunpack.c.l.s4 1966171168
          %v8032 = vunpack.c.0.s8 %v8031
          %v8033 = vlaneseq
          %v8034 = vshrl.u32 %v8033, 7
          %v8035 = vsub.s32 %v8032, %v8034
          %v8036 = vrot.slane %v8020, %v8035
          %v8038 = vunpack.c.l.s4 1966171168
          %v8039 = vunpack.c.0.s8 %v8038
          %v8040 = vlaneseq
          %v8041 = vshrl.u32 %v8040, 7
          %v8042 = vsub.s32 %v8039, %v8041
          %v8043 = vrot.slane %v8021, %v8042
          %v8045 = vunpack.c.l.s4 1966171168
          %v8046 = vunpack.c.0.s8 %v8045
          %v8047 = vlaneseq
          %v8048 = vshrl.u32 %v8047, 7
          %v8049 = vsub.s32 %v8046, %v8048
          %v8050 = vrot.slane %v8022, %v8049
          %v8051 = vcombine.low %v8029, %v8036
          %v8052 = vcombine.low %v8043, %v8050
          %v8054 = vunpack.c.l.s4 1966171168
          %v8055 = vunpack.c.0.s8 %v8054
          %v8056 = vlaneseq
          %v8057 = vshrl.u32 %v8056, 7
          %v8058 = vsub.s32 %v8055, %v8057
          %v8059 = vrot.slane %v8051, %v8058
          %v8061 = vunpack.c.l.s4 1966171168
          %v8062 = vunpack.c.0.s8 %v8061
          %v8063 = vlaneseq
          %v8064 = vshrl.u32 %v8063, 7
          %v8065 = vsub.s32 %v8062, %v8064
          %v8066 = vrot.slane %v8052, %v8065
          %v8067 = vcombine.low %v8059, %v8066
          %8069 = vst [vmem:[%s248] sm:$0xff] %v8067
        $region48: #{vgg_forward.6} parent=31 // pred_fallthru
          _
        %p8070 = scmp.lt.s32.totalorder %s22, 0
        %s8071 = scalar_select %p8070, %s22, 0
        %s8072 = smul.addr %s8071, 8
        %s8073 = scalar_lea.vmem %s3, %s8072
        // Predicated region
        $region49: #{vgg_forward.6} parent=31 // pred_check
          %p8074 = pneg %p123
        $region50: #{vgg_forward.6} parent=31 // pred_check_branch
          %8076 = sbr.rel (%p8074) target = $region52
        $region51: #{vgg_forward.6} parent=31 // pred_region
          _
        $region52: #{vgg_forward.6} parent=31 // pred_fallthru
          _
        // Predicated region
        $region53: #{vgg_forward.6} parent=31 // pred_check
          %p8077 = pneg %p123
        $region54: #{vgg_forward.6} parent=31 // pred_check_branch
          %8079 = sbr.rel (%p8077) target = $region56
        $region55: #{vgg_forward.6} parent=31 // pred_region
          %p8080 = scmp.lt.s32.totalorder %s22, 0
          %s8081 = scalar_select %p8080, %s22, 0
          %s8082 = smul.addr %s8081, 8
          %s8083 = scalar_lea.vmem %s3, %s8082
        $region56: #{vgg_forward.6} parent=31 // pred_fallthru
          _
      $region32: #{vgg_forward.6} parent=5 // pred_fallthru
        _
      %p8084 = scmp.le.s32.totalorder 2, %s13
      // Predicated region
      $region57: #{vgg_forward.6} parent=5 // pred_check
        %p8085 = pneg %p8084
      $region58: #{vgg_forward.6} parent=5 // pred_check_branch
        %8087 = sbr.rel (%p8085) target = $region60
      $region59: #{vgg_forward.6} parent=5 // pred_region
        %s8088 = ssub.s32 %s13, 2
      $region60: #{vgg_forward.6} parent=5 // pred_fallthru
        _
    $region6: #{vgg_forward.6} parent=1 // loop_footer
      %s17 = sadd.s32 1, %s13
    $region7: #{vgg_forward.6} parent=1 // loop_footer_branch
      %12 = sbr.rel target = $region3
    $region8: #{vgg_forward.6} parent=1 // loop_exit
      _
    %8089 = vsyncpa [#allocation4], 1
    %s8090 = scalar_lea.sflag [#allocation4], 1
    %8091 = vsyncpa %s8090, 1
    %8092 = vsyncpa [#allocation6], 1

</llo_original>
